<compile_context>
chip_gen: v7x
topology: tpu7x:2x2x1
jax: 0.10.0
libtpu: 0.0.40
codegen_flags: <defaults>
</compile_context>

<pallas_src>
import functools
import numpy as np
import jax
import jax.numpy as jnp
from jax.experimental import pallas as pl
from jax.experimental.pallas import tpu as pltpu

EPS_BN2D = 1e-3   # BasicConv2d: nn.BatchNorm2d(..., eps=0.001)
EPS_BN3D = 1e-5   # nn.BatchNorm3d default eps


def _num_lane_chunks():
    """Lane-axis grid chunks: 1 on single-TC chips (v5e/v6e), 2 on v7x."""
    try:
        kind = jax.devices()[0].device_kind.lower()
    except Exception:
        return 1
    # TODO(synk): on v7x verify in a trace that the 2-step "parallel" grid
    # actually lands on both TensorCores (else switch to CORE_PARALLEL).
    return 2 if "7" in kind else 1


# ------------------------------ Pallas kernels ------------------------------

def _conv_mm_kernel(apply_relu, a_ref, w_ref, s_ref, b_ref, o_ref):
    """o = relu?((w @ a) * scale + bias); one wide lane-dense matmul.

    a: (K, L)   w: (CO, K)   s, b: (CO, 1)   o: (CO, L)
    """
    y = jnp.dot(w_ref[...], a_ref[...], preferred_element_type=jnp.float32)
    y = y * s_ref[...] + b_ref[...]
    if apply_relu:
        y = jnp.maximum(y, 0.0)
    o_ref[...] = y


def conv_mm(cols, wmat, scale, bias, apply_relu=True, nb=1):
    """cols: (K, L) channel-major im2col (batch folded into lanes) -> (CO, L)."""
    K, L = cols.shape
    CO = wmat.shape[0]
    if L % (nb * 128) != 0:
        nb = 1
    Lb = L // nb
    return pl.pallas_call(
        functools.partial(_conv_mm_kernel, apply_relu),
        out_shape=jax.ShapeDtypeStruct((CO, L), jnp.float32),
        grid=(nb,),
        in_specs=[
            pl.BlockSpec((K, Lb), lambda i: (0, i)),
            pl.BlockSpec((CO, K), lambda i: (0, 0)),
            pl.BlockSpec((CO, 1), lambda i: (0, 0)),
            pl.BlockSpec((CO, 1), lambda i: (0, 0)),
        ],
        out_specs=pl.BlockSpec((CO, Lb), lambda i: (0, i)),
        compiler_params=pltpu.CompilerParams(dimension_semantics=("parallel",)),
    )(cols, wmat, scale.reshape(CO, 1), bias.reshape(CO, 1))


def _conv_mm2_kernel(a1_ref, a2_ref, w1_ref, w2_ref,
                     s1_ref, b1_ref, s2_ref, b2_ref, o1_ref, o2_ref):
    """Two independent conv-matmuls (same lane extent) in one kernel."""
    o1_ref[...] = jnp.maximum(
        jnp.dot(w1_ref[...], a1_ref[...], preferred_element_type=jnp.float32)
        * s1_ref[...] + b1_ref[...], 0.0)
    o2_ref[...] = jnp.maximum(
        jnp.dot(w2_ref[...], a2_ref[...], preferred_element_type=jnp.float32)
        * s2_ref[...] + b2_ref[...], 0.0)


def conv_mm2(cols1, w1, sc1, bi1, cols2, w2, sc2, bi2, nb=1):
    K1, L = cols1.shape
    K2, L2 = cols2.shape
    assert L == L2
    CO1, CO2 = w1.shape[0], w2.shape[0]
    if L % (nb * 128) != 0:
        nb = 1
    Lb = L // nb
    return pl.pallas_call(
        _conv_mm2_kernel,
        out_shape=(jax.ShapeDtypeStruct((CO1, L), jnp.float32),
                   jax.ShapeDtypeStruct((CO2, L), jnp.float32)),
        grid=(nb,),
        in_specs=[
            pl.BlockSpec((K1, Lb), lambda i: (0, i)),
            pl.BlockSpec((K2, Lb), lambda i: (0, i)),
            pl.BlockSpec((CO1, K1), lambda i: (0, 0)),
            pl.BlockSpec((CO2, K2), lambda i: (0, 0)),
            pl.BlockSpec((CO1, 1), lambda i: (0, 0)),
            pl.BlockSpec((CO1, 1), lambda i: (0, 0)),
            pl.BlockSpec((CO2, 1), lambda i: (0, 0)),
            pl.BlockSpec((CO2, 1), lambda i: (0, 0)),
        ],
        out_specs=(pl.BlockSpec((CO1, Lb), lambda i: (0, i)),
                   pl.BlockSpec((CO2, Lb), lambda i: (0, i))),
        compiler_params=pltpu.CompilerParams(dimension_semantics=("parallel",)),
    )(cols1, cols2, w1, w2, sc1.reshape(CO1, 1), bi1.reshape(CO1, 1),
      sc2.reshape(CO2, 1), bi2.reshape(CO2, 1))


def _temporal_kernel(t_len, co, y_ref, w_ref, s_ref, b_ref, o_ref, a_ref):
    """Fused BatchNorm3d + ReLU + temporal (3,1,1) conv, batch in lanes.

    y: (t, CO, L)  w: (CO, 3*CO) = [W_dt0 | W_dt1 | W_dt2]
    s, b: (CO, 1)  o: (t, CO, L)  a (scratch): ((t+2)*CO, L) zero-padded.
    """
    L = a_ref.shape[1]
    s_b = jnp.broadcast_to(s_ref[...], (co, L))     # hoisted out of the loop
    b_b = jnp.broadcast_to(b_ref[...], (co, L))
    zeros = jnp.zeros((co, L), jnp.float32)
    a_ref[0:co, :] = zeros                           # time padding (front)
    a_ref[(t_len + 1) * co:(t_len + 2) * co, :] = zeros   # time padding (back)
    for ts in range(t_len):                          # BN+ReLU once per step
        a_ref[(ts + 1) * co:(ts + 2) * co, :] = jnp.maximum(
            y_ref[ts] * s_b + b_b, 0.0)
    w = w_ref[...]
    for t2 in range(t_len):                          # one K=3*CO matmul / step
        o_ref[t2] = jnp.dot(w, a_ref[t2 * co:(t2 + 3) * co, :],
                            preferred_element_type=jnp.float32)


def temporal_conv_bn_relu(y_t, w_flat, sc3, bi3, nb=1):
    t, CO, L = y_t.shape
    if L % (nb * 128) != 0:
        nb = 1
    Lb = L // nb
    return pl.pallas_call(
        functools.partial(_temporal_kernel, t, CO),
        out_shape=jax.ShapeDtypeStruct((t, CO, L), jnp.float32),
        grid=(nb,),
        in_specs=[
            pl.BlockSpec((t, CO, Lb), lambda i: (0, 0, i)),
            pl.BlockSpec((CO, 3 * CO), lambda i: (0, 0)),
            pl.BlockSpec((CO, 1), lambda i: (0, 0)),
            pl.BlockSpec((CO, 1), lambda i: (0, 0)),
        ],
        out_specs=pl.BlockSpec((t, CO, Lb), lambda i: (0, 0, i)),
        scratch_shapes=[pltpu.VMEM(((t + 2) * CO, Lb), jnp.float32)],
        compiler_params=pltpu.CompilerParams(dimension_semantics=("parallel",)),
    )(y_t, w_flat, sc3.reshape(CO, 1), bi3.reshape(CO, 1))


# -------------------------------- conv glue ---------------------------------

def fold_bn(bnp, eps):
    sc = bnp["gamma"] / jnp.sqrt(bnp["var"] + eps)
    return sc, bnp["beta"] - bnp["mean"] * sc


def im2col_cm(x_cm, kh, kw, stride, pad):
    """(C, B, D1, D2) channel-major -> (kh*kw*C, B*O1*O2), plus (O1, O2)."""
    C, B, D1, D2 = x_cm.shape
    xp = jnp.pad(x_cm, ((0, 0), (0, 0), (pad, pad), (pad, pad)))
    O1 = (D1 + 2 * pad - kh) // stride + 1
    O2 = (D2 + 2 * pad - kw) // stride + 1
    pats = []
    for ih in range(kh):
        for iw in range(kw):
            pats.append(jax.lax.slice(
                xp, (0, 0, ih, iw),
                (C, B, ih + (O1 - 1) * stride + 1, iw + (O2 - 1) * stride + 1),
                (1, 1, stride, stride)))
    cols = jnp.stack(pats, axis=0).reshape(kh * kw * C, B * O1 * O2)
    return cols, O1, O2


def w2mat(w_oihw):
    """(CO, CI, KH, KW) -> (CO, KH*KW*CI), matching im2col_cm row order."""
    return jnp.transpose(w_oihw, (0, 2, 3, 1)).reshape(w_oihw.shape[0], -1)


def _subsample_cm(rows2d, B, W, H, s):
    if s == 1:
        return rows2d
    C = rows2d.shape[0]
    return rows2d.reshape(C, B, W, H)[:, :, ::s, ::s].reshape(C, -1)


# --------------------------- parameters (synthetic) --------------------------

def init_params(key, in_planes, out_planes):
    ck = out_planes // 8
    keys = iter(jax.random.split(key, 64))

    def conv_w(co, ci, kh, kw):
        return jax.random.normal(next(keys), (co, ci, kh, kw), jnp.float32) * 0.1

    def bn(c):
        return dict(
            gamma=jax.random.uniform(next(keys), (c,), jnp.float32, 0.5, 1.5),
            beta=jax.random.normal(next(keys), (c,), jnp.float32) * 0.1,
            mean=jax.random.normal(next(keys), (c,), jnp.float32) * 0.1,
            var=jax.random.uniform(next(keys), (c,), jnp.float32, 0.5, 1.5),
        )

    p = {}
    p["b1x1_w"] = conv_w(ck, in_planes, 1, 1);      p["b1x1_bn"] = bn(ck)
    p["b5x5_1_w"] = conv_w(ck, in_planes, 1, 1);    p["b5x5_1_bn"] = bn(ck)
    p["b5x5_2_w"] = conv_w(4 * ck, ck, 5, 5);       p["b5x5_2_bn"] = bn(4 * ck)
    p["b3x3_1_w"] = conv_w(ck, in_planes, 1, 1);    p["b3x3_1_bn"] = bn(ck)
    p["b3x3_2_w"] = conv_w(2 * ck, ck, 3, 3);       p["b3x3_2_bn"] = bn(2 * ck)
    p["b3x3_3_w"] = conv_w(2 * ck, 2 * ck, 3, 3);   p["b3x3_3_bn"] = bn(2 * ck)
    p["bpool_w"] = conv_w(ck, in_planes, 1, 1);     p["bpool_bn"] = bn(ck)
    p["bn3"] = bn(out_planes)
    p["temp_w"] = jax.random.normal(
        next(keys), (out_planes, out_planes, 3, 1, 1), jnp.float32) * 0.1
    return p


# -------------------------------- forward pass -------------------------------

def conv2plus1d_forward(params, x, stride=1):
    """x: (N, C, T, W, H) -> (N, out_planes, T, W', H')."""
    n, c, t, w, h = x.shape
    B = n * t
    s = stride
    nb = _num_lane_chunks()

    # torch: x.view(-1, c, w, h); then to channel-major (C, B, W, H).
    x_cm = jnp.transpose(jnp.reshape(x, (B, c, w, h)), (1, 0, 2, 3))

    # avg_pool2d(k=3, s=1, p=1, count_include_pad=True) -- tiny XLA glue.
    xp = jnp.pad(x_cm, ((0, 0), (0, 0), (1, 1), (1, 1)))
    pooled_cm = jax.lax.reduce_window(xp, 0.0, jax.lax.add,
                                      (1, 1, 3, 3), (1, 1, 1, 1), "VALID") / 9.0

    # ---- Stage 1: all four 1x1 convs as ONE wide matmul over [x ; pool(x)].
    ck = params["b1x1_w"].shape[0]
    w1 = params["b1x1_w"][:, :, 0, 0]
    w5a = params["b5x5_1_w"][:, :, 0, 0]
    w3a = params["b3x3_1_w"][:, :, 0, 0]
    wpl = params["bpool_w"][:, :, 0, 0]
    zc = jnp.zeros_like(w1)
    wfused = jnp.concatenate([
        jnp.concatenate([w1, zc], axis=1),
        jnp.concatenate([w5a, zc], axis=1),
        jnp.concatenate([w3a, zc], axis=1),
        jnp.concatenate([zc, wpl], axis=1)], axis=0)          # (4ck, 2c)
    sc1, bi1 = fold_bn(params["b1x1_bn"], EPS_BN2D)
    sc5a, bi5a = fold_bn(params["b5x5_1_bn"], EPS_BN2D)
    sc3a, bi3a = fold_bn(params["b3x3_1_bn"], EPS_BN2D)
    scp, bip = fold_bn(params["bpool_bn"], EPS_BN2D)
    sc_f = jnp.concatenate([sc1, sc5a, sc3a, scp])
    bi_f = jnp.concatenate([bi1, bi5a, bi3a, bip])

    P = w * h
    xcat = jnp.concatenate([x_cm, pooled_cm], axis=0).reshape(2 * c, B * P)
    stage1 = conv_mm(xcat, wfused, sc_f, bi_f, True, nb=nb)   # (4ck, B*P)

    # Branch slices (channel-major).  1x1 stride-s conv == spatial subsample.
    # TODO(synk): for stride>1, b1/bpool are computed at full resolution then
    # subsampled (correct, but wasted MACs).
    b1 = _subsample_cm(stage1[0 * ck:1 * ck], B, w, h, s)
    y5a = stage1[1 * ck:2 * ck].reshape(ck, B, w, h)
    y3a = stage1[2 * ck:3 * ck].reshape(ck, B, w, h)
    bp = _subsample_cm(stage1[3 * ck:4 * ck], B, w, h, s)

    # ---- Stage 2: 5x5 branch + first 3x3 of the double branch, one call.
    sc5, bi5 = fold_bn(params["b5x5_2_bn"], EPS_BN2D)
    sc3b, bi3b = fold_bn(params["b3x3_2_bn"], EPS_BN2D)
    cols5, Wo, Ho = im2col_cm(y5a, 5, 5, s, 2)
    cols3b, _, _ = im2col_cm(y3a, 3, 3, 1, 1)
    w5m = w2mat(params["b5x5_2_w"])
    w3bm = w2mat(params["b3x3_2_w"])
    if cols5.shape[1] == cols3b.shape[1]:                     # stride == 1
        b5, y3b = conv_mm2(cols5, w5m, sc5, bi5,
                           cols3b, w3bm, sc3b, bi3b, nb=nb)
    else:
        b5 = conv_mm(cols5, w5m, sc5, bi5, True, nb=nb)
        y3b = conv_mm(cols3b, w3bm, sc3b, bi3b, True, nb=nb)

    sc3c, bi3c = fold_bn(params["b3x3_3_bn"], EPS_BN2D)
    cols3c, _, _ = im2col_cm(y3b.reshape(2 * ck, B, w, h), 3, 3, s, 1)
    b3 = conv_mm(cols3c, w2mat(params["b3x3_3_w"]), sc3c, bi3c, True, nb=nb)

    # ---- torch.cat along channels + the raw .view channel/time scramble
    # (reproduced bit-exactly by row-major jnp.reshape).
    y_cm = jnp.concatenate([b1, b5, b3, bp], axis=0)          # (CO, B*Wo*Ho)
    CO = y_cm.shape[0]
    PS = Wo * Ho
    y_b = jnp.transpose(y_cm.reshape(CO, B, PS), (1, 0, 2))   # (B, CO, PS)
    y5 = jnp.reshape(y_b, (n, CO, t, PS))                     # exact torch .view
    y_t = jnp.transpose(y5, (2, 1, 0, 3)).reshape(t, CO, n * PS)

    # ---- BatchNorm3d + ReLU + temp_cov (Conv3d (3,1,1), pad (1,0,0)):
    # one kernel, n folded into the lane axis, stacked K=3*CO weights.
    # TODO(synk): training-mode batch statistics for the BatchNorms are not
    # implemented; inference-mode (running stats) semantics are used.
    sc3, bi3 = fold_bn(params["bn3"], EPS_BN3D)
    wt = params["temp_w"][:, :, :, 0, 0]                      # (CO, CO, 3)
    w_flat = jnp.concatenate([wt[:, :, 0], wt[:, :, 1], wt[:, :, 2]], axis=1)
    out_t = temporal_conv_bn_relu(y_t, w_flat, sc3, bi3, nb=nb)   # (t, CO, n*PS)

    out = jnp.transpose(out_t.reshape(t, CO, n, Wo, Ho), (2, 1, 0, 3, 4))
    return out


# -------------------------- pure-JAX reference (check) -----------------------

def ref_forward(params, x, stride=1):
    def conv2d(xin, wgt, st, pad):
        return jax.lax.conv_general_dilated(
            xin, wgt, (st, st), [(pad, pad), (pad, pad)],
            dimension_numbers=("NCHW", "OIHW", "NCHW"))

    def bn_relu(xin, bnp, eps):
        shp = (1, -1) + (1,) * (xin.ndim - 2)
        y = (xin - bnp["mean"].reshape(shp)) / jnp.sqrt(bnp["var"].reshape(shp) + eps)
        y = y * bnp["gamma"].reshape(shp) + bnp["beta"].reshape(shp)
        return jnp.maximum(y, 0.0)

    def block(name, xin, st, pad):
        return bn_relu(conv2d(xin, params[name + "_w"], st, pad),
                       params[name + "_bn"], EPS_BN2D)

    n, c, t, w, h = x.shape
    x4 = x.reshape(n * t, c, w, h)
    s = stride
    b1 = block("b1x1", x4, s, 0)
    b5 = block("b5x5_2", block("b5x5_1", x4, 1, 0), s, 2)
    b3 = block("b3x3_3", block("b3x3_2", block("b3x3_1", x4, 1, 0), 1, 1), s, 1)
    xp = jnp.pad(x4, ((0, 0), (0, 0), (1, 1), (1, 1)))
    pooled = jax.lax.reduce_window(xp, 0.0, jax.lax.add,
                                   (1, 1, 3, 3), (1, 1, 1, 1), "VALID") / 9.0
    bp = block("bpool", pooled, s, 0)
    y = jnp.concatenate([b1, b5, b3, bp], axis=1)
    CO = y.shape[1]
    y5 = y.reshape(n, CO, t, y.shape[2], y.shape[3])
    y5 = bn_relu(y5, params["bn3"], EPS_BN3D)
    return jax.lax.conv_general_dilated(
        y5, params["temp_w"], (1, 1, 1), [(1, 1), (0, 0), (0, 0)],
        dimension_numbers=("NCDHW", "OIDHW", "NCDHW"))


# ------------------------------------ main -----------------------------------

if __name__ == "__main__":
    key = jax.random.PRNGKey(0)
    kx, kp = jax.random.split(key)

    N, C, T, W, H = 2, 4, 8, 16, 16
    in_planes, out_planes, midplanes = C, 32, 8   # midplanes unused by forward
    stride = 1

    x = jax.random.normal(kx, (N, C, T, W, H), jnp.float32)
    params = init_params(kp, in_planes, out_planes)

    fwd = jax.jit(functools.partial(conv2plus1d_forward, stride=stride))
    out = jax.block_until_ready(fwd(params, x))

    assert out.shape == (N, out_planes, T, W, H), out.shape
    ref = ref_forward(params, x, stride=stride)
    np.testing.assert_allclose(np.asarray(out), np.asarray(ref),
                               rtol=1e-2, atol=1e-2)
    print("KERNEL_OK")
</pallas_src>

<mosaic_0001>
module attributes {stable_mosaic.version = 11 : i64} {
  func.func @_conv_mm_kernel(%arg0: i32, %arg1: memref<8x4096xf32, #tpu.memory_space<vmem>>, %arg2: memref<16x8xf32, #tpu.memory_space<vmem>>, %arg3: memref<16x1xf32, #tpu.memory_space<vmem>>, %arg4: memref<16x1xf32, #tpu.memory_space<vmem>>, %arg5: memref<16x4096xf32, #tpu.memory_space<vmem>>) attributes {dimension_semantics = [#tpu.dimension_semantics<parallel>], iteration_bounds = array<i64: 1>, scalar_prefetch = 0 : i64, scratch_operands = 0 : i64, tpu.core_type = #tpu.core_type<tc>, window_params = [{transform_indices = @transform_0, window_bounds = array<i64: 8, 4096>}, {pipeline_mode = #tpu.pipeline_mode<synchronous>, transform_indices = @transform_1, window_bounds = array<i64: 16, 8>}, {pipeline_mode = #tpu.pipeline_mode<synchronous>, transform_indices = @transform_2, window_bounds = array<i64: 16, 1>}, {pipeline_mode = #tpu.pipeline_mode<synchronous>, transform_indices = @transform_3, window_bounds = array<i64: 16, 1>}, {transform_indices = @transform_4, window_bounds = array<i64: 16, 4096>}]} {
    %c0 = arith.constant 0 : index
    %c0_0 = arith.constant 0 : index
    %0 = vector.load %arg2[%c0, %c0_0] : memref<16x8xf32, #tpu.memory_space<vmem>>, vector<16x8xf32>
    %c0_1 = arith.constant 0 : index
    %c0_2 = arith.constant 0 : index
    %1 = vector.load %arg1[%c0_1, %c0_2] : memref<8x4096xf32, #tpu.memory_space<vmem>>, vector<8x4096xf32>
    %cst = arith.constant dense<0.000000e+00> : vector<16x4096xf32>
    %2 = tpu.matmul %0, %1, %cst {dimension_numbers = #tpu.dot_dimension_numbers<[1], [0], [0], [1], [0, 0, 1, 1], [], []>} : vector<16x8xf32>, vector<8x4096xf32>, vector<16x4096xf32> -> vector<16x4096xf32>
    %c0_3 = arith.constant 0 : index
    %c0_4 = arith.constant 0 : index
    %3 = vector.load %arg3[%c0_3, %c0_4] : memref<16x1xf32, #tpu.memory_space<vmem>>, vector<16x1xf32>
    %4 = vector.broadcast %3 : vector<16x1xf32> to vector<16x4096xf32>
    %5 = arith.mulf %2, %4 : vector<16x4096xf32>
    %c0_5 = arith.constant 0 : index
    %c0_6 = arith.constant 0 : index
    %6 = vector.load %arg4[%c0_5, %c0_6] : memref<16x1xf32, #tpu.memory_space<vmem>>, vector<16x1xf32>
    %7 = vector.broadcast %6 : vector<16x1xf32> to vector<16x4096xf32>
    %8 = arith.addf %5, %7 : vector<16x4096xf32>
    %cst_7 = arith.constant 0.000000e+00 : f32
    %9 = vector.broadcast %cst_7 : f32 to vector<16x4096xf32>
    %10 = arith.maximumf %8, %9 : vector<16x4096xf32>
    %c0_8 = arith.constant 0 : index
    %c0_9 = arith.constant 0 : index
    %11 = vector.load %arg5[%c0_8, %c0_9] : memref<16x4096xf32, #tpu.memory_space<vmem>>, vector<16x4096xf32>
    tpu.vector_store %arg5[%c0_8, %c0_9], %10 {strides = array<i32>} : memref<16x4096xf32, #tpu.memory_space<vmem>>, vector<16x4096xf32>,
    return
  }
  func.func @transform_0(%arg0: i32) -> (i32, i32) {
    %c0_i32 = arith.constant 0 : i32
    %c0_i32_0 = arith.constant 0 : i32
    return %c0_i32, %arg0 : i32, i32
  }
  func.func @transform_1(%arg0: i32) -> (i32, i32) {
    %c0_i32 = arith.constant 0 : i32
    %c0_i32_0 = arith.constant 0 : i32
    %c0_i32_1 = arith.constant 0 : i32
    return %c0_i32, %c0_i32_0 : i32, i32
  }
  func.func @transform_2(%arg0: i32) -> (i32, i32) {
    %c0_i32 = arith.constant 0 : i32
    %c0_i32_0 = arith.constant 0 : i32
    %c0_i32_1 = arith.constant 0 : i32
    return %c0_i32, %c0_i32_0 : i32, i32
  }
  func.func @transform_3(%arg0: i32) -> (i32, i32) {
    %c0_i32 = arith.constant 0 : i32
    %c0_i32_0 = arith.constant 0 : i32
    %c0_i32_1 = arith.constant 0 : i32
    return %c0_i32, %c0_i32_0 : i32, i32
  }
  func.func @transform_4(%arg0: i32) -> (i32, i32) {
    %c0_i32 = arith.constant 0 : i32
    %c0_i32_0 = arith.constant 0 : i32
    return %c0_i32, %arg0 : i32, i32
  }
}

module attributes {stable_mosaic.version = 11 : i64} {
  func.func @_conv_mm2_kernel(%arg0: i32, %arg1: memref<100x4096xf32, #tpu.memory_space<vmem>>, %arg2: memref<36x4096xf32, #tpu.memory_space<vmem>>, %arg3: memref<16x100xf32, #tpu.memory_space<vmem>>, %arg4: memref<8x36xf32, #tpu.memory_space<vmem>>, %arg5: memref<16x1xf32, #tpu.memory_space<vmem>>, %arg6: memref<16x1xf32, #tpu.memory_space<vmem>>, %arg7: memref<8x1xf32, #tpu.memory_space<vmem>>, %arg8: memref<8x1xf32, #tpu.memory_space<vmem>>, %arg9: memref<16x4096xf32, #tpu.memory_space<vmem>>, %arg10: memref<8x4096xf32, #tpu.memory_space<vmem>>) attributes {dimension_semantics = [#tpu.dimension_semantics<parallel>], iteration_bounds = array<i64: 1>, scalar_prefetch = 0 : i64, scratch_operands = 0 : i64, tpu.core_type = #tpu.core_type<tc>, window_params = [{transform_indices = @transform_0, window_bounds = array<i64: 100, 4096>}, {transform_indices = @transform_1, window_bounds = array<i64: 36, 4096>}, {pipeline_mode = #tpu.pipeline_mode<synchronous>, transform_indices = @transform_2, window_bounds = array<i64: 16, 100>}, {pipeline_mode = #tpu.pipeline_mode<synchronous>, transform_indices = @transform_3, window_bounds = array<i64: 8, 36>}, {pipeline_mode = #tpu.pipeline_mode<synchronous>, transform_indices = @transform_4, window_bounds = array<i64: 16, 1>}, {pipeline_mode = #tpu.pipeline_mode<synchronous>, transform_indices = @transform_5, window_bounds = array<i64: 16, 1>}, {pipeline_mode = #tpu.pipeline_mode<synchronous>, transform_indices = @transform_6, window_bounds = array<i64: 8, 1>}, {pipeline_mode = #tpu.pipeline_mode<synchronous>, transform_indices = @transform_7, window_bounds = array<i64: 8, 1>}, {transform_indices = @transform_8, window_bounds = array<i64: 16, 4096>}, {transform_indices = @transform_9, window_bounds = array<i64: 8, 4096>}]} {
    %c0 = arith.constant 0 : index
    %c0_0 = arith.constant 0 : index
    %0 = vector.load %arg3[%c0, %c0_0] : memref<16x100xf32, #tpu.memory_space<vmem>>, vector<16x100xf32>
    %c0_1 = arith.constant 0 : index
    %c0_2 = arith.constant 0 : index
    %1 = vector.load %arg1[%c0_1, %c0_2] : memref<100x4096xf32, #tpu.memory_space<vmem>>, vector<100x4096xf32>
    %cst = arith.constant dense<0.000000e+00> : vector<16x4096xf32>
    %2 = tpu.matmul %0, %1, %cst {dimension_numbers = #tpu.dot_dimension_numbers<[1], [0], [0], [1], [0, 0, 1, 1], [], []>} : vector<16x100xf32>, vector<100x4096xf32>, vector<16x4096xf32> -> vector<16x4096xf32>
    %c0_3 = arith.constant 0 : index
    %c0_4 = arith.constant 0 : index
    %3 = vector.load %arg5[%c0_3, %c0_4] : memref<16x1xf32, #tpu.memory_space<vmem>>, vector<16x1xf32>
    %4 = vector.broadcast %3 : vector<16x1xf32> to vector<16x4096xf32>
    %5 = arith.mulf %2, %4 : vector<16x4096xf32>
    %c0_5 = arith.constant 0 : index
    %c0_6 = arith.constant 0 : index
    %6 = vector.load %arg6[%c0_5, %c0_6] : memref<16x1xf32, #tpu.memory_space<vmem>>, vector<16x1xf32>
    %7 = vector.broadcast %6 : vector<16x1xf32> to vector<16x4096xf32>
    %8 = arith.addf %5, %7 : vector<16x4096xf32>
    %cst_7 = arith.constant 0.000000e+00 : f32
    %9 = vector.broadcast %cst_7 : f32 to vector<16x4096xf32>
    %10 = arith.maximumf %8, %9 : vector<16x4096xf32>
    %c0_8 = arith.constant 0 : index
    %c0_9 = arith.constant 0 : index
    %11 = vector.load %arg9[%c0_8, %c0_9] : memref<16x4096xf32, #tpu.memory_space<vmem>>, vector<16x4096xf32>
    tpu.vector_store %arg9[%c0_8, %c0_9], %10 {strides = array<i32>} : memref<16x4096xf32, #tpu.memory_space<vmem>>, vector<16x4096xf32>,
    %c0_10 = arith.constant 0 : index
    %c0_11 = arith.constant 0 : index
    %12 = vector.load %arg4[%c0_10, %c0_11] : memref<8x36xf32, #tpu.memory_space<vmem>>, vector<8x36xf32>
    %c0_12 = arith.constant 0 : index
    %c0_13 = arith.constant 0 : index
    %13 = vector.load %arg2[%c0_12, %c0_13] : memref<36x4096xf32, #tpu.memory_space<vmem>>, vector<36x4096xf32>
    %cst_14 = arith.constant dense<0.000000e+00> : vector<8x4096xf32>
    %14 = tpu.matmul %12, %13, %cst_14 {dimension_numbers = #tpu.dot_dimension_numbers<[1], [0], [0], [1], [0, 0, 1, 1], [], []>} : vector<8x36xf32>, vector<36x4096xf32>, vector<8x4096xf32> -> vector<8x4096xf32>
    %c0_15 = arith.constant 0 : index
    %c0_16 = arith.constant 0 : index
    %15 = vector.load %arg7[%c0_15, %c0_16] : memref<8x1xf32, #tpu.memory_space<vmem>>, vector<8x1xf32>
    %16 = vector.broadcast %15 : vector<8x1xf32> to vector<8x4096xf32>
    %17 = arith.mulf %14, %16 : vector<8x4096xf32>
    %c0_17 = arith.constant 0 : index
    %c0_18 = arith.constant 0 : index
    %18 = vector.load %arg8[%c0_17, %c0_18] : memref<8x1xf32, #tpu.memory_space<vmem>>, vector<8x1xf32>
    %19 = vector.broadcast %18 : vector<8x1xf32> to vector<8x4096xf32>
    %20 = arith.addf %17, %19 : vector<8x4096xf32>
    %cst_19 = arith.constant 0.000000e+00 : f32
    %21 = vector.broadcast %cst_19 : f32 to vector<8x4096xf32>
    %22 = arith.maximumf %20, %21 : vector<8x4096xf32>
    %c0_20 = arith.constant 0 : index
    %c0_21 = arith.constant 0 : index
    %23 = vector.load %arg10[%c0_20, %c0_21] : memref<8x4096xf32, #tpu.memory_space<vmem>>, vector<8x4096xf32>
    tpu.vector_store %arg10[%c0_20, %c0_21], %22 {strides = array<i32>} : memref<8x4096xf32, #tpu.memory_space<vmem>>, vector<8x4096xf32>,
    return
  }
  func.func @transform_0(%arg0: i32) -> (i32, i32) {
    %c0_i32 = arith.constant 0 : i32
    %c0_i32_0 = arith.constant 0 : i32
    return %c0_i32, %arg0 : i32, i32
  }
  func.func @transform_1(%arg0: i32) -> (i32, i32) {
    %c0_i32 = arith.constant 0 : i32
    %c0_i32_0 = arith.constant 0 : i32
    return %c0_i32, %arg0 : i32, i32
  }
  func.func @transform_2(%arg0: i32) -> (i32, i32) {
    %c0_i32 = arith.constant 0 : i32
    %c0_i32_0 = arith.constant 0 : i32
    %c0_i32_1 = arith.constant 0 : i32
    return %c0_i32, %c0_i32_0 : i32, i32
  }
  func.func @transform_3(%arg0: i32) -> (i32, i32) {
    %c0_i32 = arith.constant 0 : i32
    %c0_i32_0 = arith.constant 0 : i32
    %c0_i32_1 = arith.constant 0 : i32
    return %c0_i32, %c0_i32_0 : i32, i32
  }
  func.func @transform_4(%arg0: i32) -> (i32, i32) {
    %c0_i32 = arith.constant 0 : i32
    %c0_i32_0 = arith.constant 0 : i32
    %c0_i32_1 = arith.constant 0 : i32
    return %c0_i32, %c0_i32_0 : i32, i32
  }
  func.func @transform_5(%arg0: i32) -> (i32, i32) {
    %c0_i32 = arith.constant 0 : i32
    %c0_i32_0 = arith.constant 0 : i32
    %c0_i32_1 = arith.constant 0 : i32
    return %c0_i32, %c0_i32_0 : i32, i32
  }
  func.func @transform_6(%arg0: i32) -> (i32, i32) {
    %c0_i32 = arith.constant 0 : i32
    %c0_i32_0 = arith.constant 0 : i32
    %c0_i32_1 = arith.constant 0 : i32
    return %c0_i32, %c0_i32_0 : i32, i32
  }
  func.func @transform_7(%arg0: i32) -> (i32, i32) {
    %c0_i32 = arith.constant 0 : i32
    %c0_i32_0 = arith.constant 0 : i32
    %c0_i32_1 = arith.constant 0 : i32
    return %c0_i32, %c0_i32_0 : i32, i32
  }
  func.func @transform_8(%arg0: i32) -> (i32, i32) {
    %c0_i32 = arith.constant 0 : i32
    %c0_i32_0 = arith.constant 0 : i32
    return %c0_i32, %arg0 : i32, i32
  }
  func.func @transform_9(%arg0: i32) -> (i32, i32) {
    %c0_i32 = arith.constant 0 : i32
    %c0_i32_0 = arith.constant 0 : i32
    return %c0_i32, %arg0 : i32, i32
  }
}

module attributes {stable_mosaic.version = 11 : i64} {
  func.func @_conv_mm_kernel(%arg0: i32, %arg1: memref<72x4096xf32, #tpu.memory_space<vmem>>, %arg2: memref<8x72xf32, #tpu.memory_space<vmem>>, %arg3: memref<8x1xf32, #tpu.memory_space<vmem>>, %arg4: memref<8x1xf32, #tpu.memory_space<vmem>>, %arg5: memref<8x4096xf32, #tpu.memory_space<vmem>>) attributes {dimension_semantics = [#tpu.dimension_semantics<parallel>], iteration_bounds = array<i64: 1>, scalar_prefetch = 0 : i64, scratch_operands = 0 : i64, tpu.core_type = #tpu.core_type<tc>, window_params = [{transform_indices = @transform_0, window_bounds = array<i64: 72, 4096>}, {pipeline_mode = #tpu.pipeline_mode<synchronous>, transform_indices = @transform_1, window_bounds = array<i64: 8, 72>}, {pipeline_mode = #tpu.pipeline_mode<synchronous>, transform_indices = @transform_2, window_bounds = array<i64: 8, 1>}, {pipeline_mode = #tpu.pipeline_mode<synchronous>, transform_indices = @transform_3, window_bounds = array<i64: 8, 1>}, {transform_indices = @transform_4, window_bounds = array<i64: 8, 4096>}]} {
    %c0 = arith.constant 0 : index
    %c0_0 = arith.constant 0 : index
    %0 = vector.load %arg2[%c0, %c0_0] : memref<8x72xf32, #tpu.memory_space<vmem>>, vector<8x72xf32>
    %c0_1 = arith.constant 0 : index
    %c0_2 = arith.constant 0 : index
    %1 = vector.load %arg1[%c0_1, %c0_2] : memref<72x4096xf32, #tpu.memory_space<vmem>>, vector<72x4096xf32>
    %cst = arith.constant dense<0.000000e+00> : vector<8x4096xf32>
    %2 = tpu.matmul %0, %1, %cst {dimension_numbers = #tpu.dot_dimension_numbers<[1], [0], [0], [1], [0, 0, 1, 1], [], []>} : vector<8x72xf32>, vector<72x4096xf32>, vector<8x4096xf32> -> vector<8x4096xf32>
    %c0_3 = arith.constant 0 : index
    %c0_4 = arith.constant 0 : index
    %3 = vector.load %arg3[%c0_3, %c0_4] : memref<8x1xf32, #tpu.memory_space<vmem>>, vector<8x1xf32>
    %4 = vector.broadcast %3 : vector<8x1xf32> to vector<8x4096xf32>
    %5 = arith.mulf %2, %4 : vector<8x4096xf32>
    %c0_5 = arith.constant 0 : index
    %c0_6 = arith.constant 0 : index
    %6 = vector.load %arg4[%c0_5, %c0_6] : memref<8x1xf32, #tpu.memory_space<vmem>>, vector<8x1xf32>
    %7 = vector.broadcast %6 : vector<8x1xf32> to vector<8x4096xf32>
    %8 = arith.addf %5, %7 : vector<8x4096xf32>
    %cst_7 = arith.constant 0.000000e+00 : f32
    %9 = vector.broadcast %cst_7 : f32 to vector<8x4096xf32>
    %10 = arith.maximumf %8, %9 : vector<8x4096xf32>
    %c0_8 = arith.constant 0 : index
    %c0_9 = arith.constant 0 : index
    %11 = vector.load %arg5[%c0_8, %c0_9] : memref<8x4096xf32, #tpu.memory_space<vmem>>, vector<8x4096xf32>
    tpu.vector_store %arg5[%c0_8, %c0_9], %10 {strides = array<i32>} : memref<8x4096xf32, #tpu.memory_space<vmem>>, vector<8x4096xf32>,
    return
  }
  func.func @transform_0(%arg0: i32) -> (i32, i32) {
    %c0_i32 = arith.constant 0 : i32
    %c0_i32_0 = arith.constant 0 : i32
    return %c0_i32, %arg0 : i32, i32
  }
  func.func @transform_1(%arg0: i32) -> (i32, i32) {
    %c0_i32 = arith.constant 0 : i32
    %c0_i32_0 = arith.constant 0 : i32
    %c0_i32_1 = arith.constant 0 : i32
    return %c0_i32, %c0_i32_0 : i32, i32
  }
  func.func @transform_2(%arg0: i32) -> (i32, i32) {
    %c0_i32 = arith.constant 0 : i32
    %c0_i32_0 = arith.constant 0 : i32
    %c0_i32_1 = arith.constant 0 : i32
    return %c0_i32, %c0_i32_0 : i32, i32
  }
  func.func @transform_3(%arg0: i32) -> (i32, i32) {
    %c0_i32 = arith.constant 0 : i32
    %c0_i32_0 = arith.constant 0 : i32
    %c0_i32_1 = arith.constant 0 : i32
    return %c0_i32, %c0_i32_0 : i32, i32
  }
  func.func @transform_4(%arg0: i32) -> (i32, i32) {
    %c0_i32 = arith.constant 0 : i32
    %c0_i32_0 = arith.constant 0 : i32
    return %c0_i32, %arg0 : i32, i32
  }
}

module attributes {stable_mosaic.version = 11 : i64} {
  func.func @_temporal_kernel(%arg0: i32, %arg1: memref<8x32x512xf32, #tpu.memory_space<vmem>>, %arg2: memref<32x96xf32, #tpu.memory_space<vmem>>, %arg3: memref<32x1xf32, #tpu.memory_space<vmem>>, %arg4: memref<32x1xf32, #tpu.memory_space<vmem>>, %arg5: memref<8x32x512xf32, #tpu.memory_space<vmem>>, %arg6: memref<320x512xf32, #tpu.memory_space<vmem>>) attributes {dimension_semantics = [#tpu.dimension_semantics<parallel>], iteration_bounds = array<i64: 1>, scalar_prefetch = 0 : i64, scratch_operands = 1 : i64, tpu.core_type = #tpu.core_type<tc>, window_params = [{transform_indices = @transform_0, window_bounds = array<i64: 8, 32, 512>}, {pipeline_mode = #tpu.pipeline_mode<synchronous>, transform_indices = @transform_1, window_bounds = array<i64: 32, 96>}, {pipeline_mode = #tpu.pipeline_mode<synchronous>, transform_indices = @transform_2, window_bounds = array<i64: 32, 1>}, {pipeline_mode = #tpu.pipeline_mode<synchronous>, transform_indices = @transform_3, window_bounds = array<i64: 32, 1>}, {transform_indices = @transform_4, window_bounds = array<i64: 8, 32, 512>}]} {
    %c0 = arith.constant 0 : index
    %c0_0 = arith.constant 0 : index
    %0 = vector.load %arg3[%c0, %c0_0] : memref<32x1xf32, #tpu.memory_space<vmem>>, vector<32x1xf32>
    %1 = vector.shape_cast %0 : vector<32x1xf32> to vector<32x1xf32>
    %2 = vector.broadcast %1 : vector<32x1xf32> to vector<32x512xf32>
    %c0_1 = arith.constant 0 : index
    %c0_2 = arith.constant 0 : index
    %3 = vector.load %arg4[%c0_1, %c0_2] : memref<32x1xf32, #tpu.memory_space<vmem>>, vector<32x1xf32>
    %4 = vector.shape_cast %3 : vector<32x1xf32> to vector<32x1xf32>
    %5 = vector.broadcast %4 : vector<32x1xf32> to vector<32x512xf32>
    %cst = arith.constant 0.000000e+00 : f32
    %6 = vector.broadcast %cst : f32 to vector<32x512xf32>
    %c0_3 = arith.constant 0 : index
    %c0_4 = arith.constant 0 : index
    %7 = vector.load %arg6[%c0_3, %c0_4] : memref<320x512xf32, #tpu.memory_space<vmem>>, vector<32x512xf32>
    tpu.vector_store %arg6[%c0_3, %c0_4], %6 {strides = array<i32>} : memref<320x512xf32, #tpu.memory_space<vmem>>, vector<32x512xf32>,
    %c288 = arith.constant 288 : index
    %c0_5 = arith.constant 0 : index
    %8 = vector.load %arg6[%c288, %c0_5] : memref<320x512xf32, #tpu.memory_space<vmem>>, vector<32x512xf32>
    tpu.vector_store %arg6[%c288, %c0_5], %6 {strides = array<i32>} : memref<320x512xf32, #tpu.memory_space<vmem>>, vector<32x512xf32>,
    %c0_6 = arith.constant 0 : index
    %c0_7 = arith.constant 0 : index
    %c0_8 = arith.constant 0 : index
    %9 = vector.load %arg1[%c0_6, %c0_7, %c0_8] : memref<8x32x512xf32, #tpu.memory_space<vmem>>, vector<1x32x512xf32>
    %10 = vector.shape_cast %9 : vector<1x32x512xf32> to vector<32x512xf32>
    %11 = arith.mulf %10, %2 : vector<32x512xf32>
    %12 = arith.addf %11, %5 : vector<32x512xf32>
    %cst_9 = arith.constant 0.000000e+00 : f32
    %13 = vector.broadcast %cst_9 : f32 to vector<32x512xf32>
    %14 = arith.maximumf %12, %13 : vector<32x512xf32>
    %c32 = arith.constant 32 : index
    %c0_10 = arith.constant 0 : index
    %15 = vector.load %arg6[%c32, %c0_10] : memref<320x512xf32, #tpu.memory_space<vmem>>, vector<32x512xf32>
    tpu.vector_store %arg6[%c32, %c0_10], %14 {strides = array<i32>} : memref<320x512xf32, #tpu.memory_space<vmem>>, vector<32x512xf32>,
    %c1 = arith.constant 1 : index
    %c0_11 = arith.constant 0 : index
    %c0_12 = arith.constant 0 : index
    %16 = vector.load %arg1[%c1, %c0_11, %c0_12] : memref<8x32x512xf32, #tpu.memory_space<vmem>>, vector<1x32x512xf32>
    %17 = vector.shape_cast %16 : vector<1x32x512xf32> to vector<32x512xf32>
    %18 = arith.mulf %17, %2 : vector<32x512xf32>
    %19 = arith.addf %18, %5 : vector<32x512xf32>
    %cst_13 = arith.constant 0.000000e+00 : f32
    %20 = vector.broadcast %cst_13 : f32 to vector<32x512xf32>
    %21 = arith.maximumf %19, %20 : vector<32x512xf32>
    %c64 = arith.constant 64 : index
    %c0_14 = arith.constant 0 : index
    %22 = vector.load %arg6[%c64, %c0_14] : memref<320x512xf32, #tpu.memory_space<vmem>>, vector<32x512xf32>
    tpu.vector_store %arg6[%c64, %c0_14], %21 {strides = array<i32>} : memref<320x512xf32, #tpu.memory_space<vmem>>, vector<32x512xf32>,
    %c2 = arith.constant 2 : index
    %c0_15 = arith.constant 0 : index
    %c0_16 = arith.constant 0 : index
    %23 = vector.load %arg1[%c2, %c0_15, %c0_16] : memref<8x32x512xf32, #tpu.memory_space<vmem>>, vector<1x32x512xf32>
    %24 = vector.shape_cast %23 : vector<1x32x512xf32> to vector<32x512xf32>
    %25 = arith.mulf %24, %2 : vector<32x512xf32>
    %26 = arith.addf %25, %5 : vector<32x512xf32>
    %cst_17 = arith.constant 0.000000e+00 : f32
    %27 = vector.broadcast %cst_17 : f32 to vector<32x512xf32>
    %28 = arith.maximumf %26, %27 : vector<32x512xf32>
    %c96 = arith.constant 96 : index
    %c0_18 = arith.constant 0 : index
    %29 = vector.load %arg6[%c96, %c0_18] : memref<320x512xf32, #tpu.memory_space<vmem>>, vector<32x512xf32>
    tpu.vector_store %arg6[%c96, %c0_18], %28 {strides = array<i32>} : memref<320x512xf32, #tpu.memory_space<vmem>>, vector<32x512xf32>,
    %c3 = arith.constant 3 : index
    %c0_19 = arith.constant 0 : index
    %c0_20 = arith.constant 0 : index
    %30 = vector.load %arg1[%c3, %c0_19, %c0_20] : memref<8x32x512xf32, #tpu.memory_space<vmem>>, vector<1x32x512xf32>
    %31 = vector.shape_cast %30 : vector<1x32x512xf32> to vector<32x512xf32>
    %32 = arith.mulf %31, %2 : vector<32x512xf32>
    %33 = arith.addf %32, %5 : vector<32x512xf32>
    %cst_21 = arith.constant 0.000000e+00 : f32
    %34 = vector.broadcast %cst_21 : f32 to vector<32x512xf32>
    %35 = arith.maximumf %33, %34 : vector<32x512xf32>
    %c128 = arith.constant 128 : index
    %c0_22 = arith.constant 0 : index
    %36 = vector.load %arg6[%c128, %c0_22] : memref<320x512xf32, #tpu.memory_space<vmem>>, vector<32x512xf32>
    tpu.vector_store %arg6[%c128, %c0_22], %35 {strides = array<i32>} : memref<320x512xf32, #tpu.memory_space<vmem>>, vector<32x512xf32>,
    %c4 = arith.constant 4 : index
    %c0_23 = arith.constant 0 : index
    %c0_24 = arith.constant 0 : index
    %37 = vector.load %arg1[%c4, %c0_23, %c0_24] : memref<8x32x512xf32, #tpu.memory_space<vmem>>, vector<1x32x512xf32>
    %38 = vector.shape_cast %37 : vector<1x32x512xf32> to vector<32x512xf32>
    %39 = arith.mulf %38, %2 : vector<32x512xf32>
    %40 = arith.addf %39, %5 : vector<32x512xf32>
    %cst_25 = arith.constant 0.000000e+00 : f32
    %41 = vector.broadcast %cst_25 : f32 to vector<32x512xf32>
    %42 = arith.maximumf %40, %41 : vector<32x512xf32>
    %c160 = arith.constant 160 : index
    %c0_26 = arith.constant 0 : index
    %43 = vector.load %arg6[%c160, %c0_26] : memref<320x512xf32, #tpu.memory_space<vmem>>, vector<32x512xf32>
    tpu.vector_store %arg6[%c160, %c0_26], %42 {strides = array<i32>} : memref<320x512xf32, #tpu.memory_space<vmem>>, vector<32x512xf32>,
    %c5 = arith.constant 5 : index
    %c0_27 = arith.constant 0 : index
    %c0_28 = arith.constant 0 : index
    %44 = vector.load %arg1[%c5, %c0_27, %c0_28] : memref<8x32x512xf32, #tpu.memory_space<vmem>>, vector<1x32x512xf32>
    %45 = vector.shape_cast %44 : vector<1x32x512xf32> to vector<32x512xf32>
    %46 = arith.mulf %45, %2 : vector<32x512xf32>
    %47 = arith.addf %46, %5 : vector<32x512xf32>
    %cst_29 = arith.constant 0.000000e+00 : f32
    %48 = vector.broadcast %cst_29 : f32 to vector<32x512xf32>
    %49 = arith.maximumf %47, %48 : vector<32x512xf32>
    %c192 = arith.constant 192 : index
    %c0_30 = arith.constant 0 : index
    %50 = vector.load %arg6[%c192, %c0_30] : memref<320x512xf32, #tpu.memory_space<vmem>>, vector<32x512xf32>
    tpu.vector_store %arg6[%c192, %c0_30], %49 {strides = array<i32>} : memref<320x512xf32, #tpu.memory_space<vmem>>, vector<32x512xf32>,
    %c6 = arith.constant 6 : index
    %c0_31 = arith.constant 0 : index
    %c0_32 = arith.constant 0 : index
    %51 = vector.load %arg1[%c6, %c0_31, %c0_32] : memref<8x32x512xf32, #tpu.memory_space<vmem>>, vector<1x32x512xf32>
    %52 = vector.shape_cast %51 : vector<1x32x512xf32> to vector<32x512xf32>
    %53 = arith.mulf %52, %2 : vector<32x512xf32>
    %54 = arith.addf %53, %5 : vector<32x512xf32>
    %cst_33 = arith.constant 0.000000e+00 : f32
    %55 = vector.broadcast %cst_33 : f32 to vector<32x512xf32>
    %56 = arith.maximumf %54, %55 : vector<32x512xf32>
    %c224 = arith.constant 224 : index
    %c0_34 = arith.constant 0 : index
    %57 = vector.load %arg6[%c224, %c0_34] : memref<320x512xf32, #tpu.memory_space<vmem>>, vector<32x512xf32>
    tpu.vector_store %arg6[%c224, %c0_34], %56 {strides = array<i32>} : memref<320x512xf32, #tpu.memory_space<vmem>>, vector<32x512xf32>,
    %c7 = arith.constant 7 : index
    %c0_35 = arith.constant 0 : index
    %c0_36 = arith.constant 0 : index
    %58 = vector.load %arg1[%c7, %c0_35, %c0_36] : memref<8x32x512xf32, #tpu.memory_space<vmem>>, vector<1x32x512xf32>
    %59 = vector.shape_cast %58 : vector<1x32x512xf32> to vector<32x512xf32>
    %60 = arith.mulf %59, %2 : vector<32x512xf32>
    %61 = arith.addf %60, %5 : vector<32x512xf32>
    %cst_37 = arith.constant 0.000000e+00 : f32
    %62 = vector.broadcast %cst_37 : f32 to vector<32x512xf32>
    %63 = arith.maximumf %61, %62 : vector<32x512xf32>
    %c256 = arith.constant 256 : index
    %c0_38 = arith.constant 0 : index
    %64 = vector.load %arg6[%c256, %c0_38] : memref<320x512xf32, #tpu.memory_space<vmem>>, vector<32x512xf32>
    tpu.vector_store %arg6[%c256, %c0_38], %63 {strides = array<i32>} : memref<320x512xf32, #tpu.memory_space<vmem>>, vector<32x512xf32>,
    %c0_39 = arith.constant 0 : index
    %c0_40 = arith.constant 0 : index
    %65 = vector.load %arg2[%c0_39, %c0_40] : memref<32x96xf32, #tpu.memory_space<vmem>>, vector<32x96xf32>
    %c0_41 = arith.constant 0 : index
    %c0_42 = arith.constant 0 : index
    %66 = vector.load %arg6[%c0_41, %c0_42] : memref<320x512xf32, #tpu.memory_space<vmem>>, vector<96x512xf32>
    %cst_43 = arith.constant dense<0.000000e+00> : vector<32x512xf32>
    %67 = tpu.matmul %65, %66, %cst_43 {dimension_numbers = #tpu.dot_dimension_numbers<[1], [0], [0], [1], [0, 0, 1, 1], [], []>} : vector<32x96xf32>, vector<96x512xf32>, vector<32x512xf32> -> vector<32x512xf32>
    %c0_44 = arith.constant 0 : index
    %c0_45 = arith.constant 0 : index
    %c0_46 = arith.constant 0 : index
    %68 = vector.load %arg5[%c0_44, %c0_45, %c0_46] : memref<8x32x512xf32, #tpu.memory_space<vmem>>, vector<1x32x512xf32>
    %69 = vector.shape_cast %68 : vector<1x32x512xf32> to vector<32x512xf32>
    %70 = vector.shape_cast %67 : vector<32x512xf32> to vector<1x32x512xf32>
    tpu.vector_store %arg5[%c0_44, %c0_45, %c0_46], %70 {strides = array<i32>} : memref<8x32x512xf32, #tpu.memory_space<vmem>>, vector<1x32x512xf32>,
    %c32_47 = arith.constant 32 : index
    %c0_48 = arith.constant 0 : index
    %71 = vector.load %arg6[%c32_47, %c0_48] : memref<320x512xf32, #tpu.memory_space<vmem>>, vector<96x512xf32>
    %cst_49 = arith.constant dense<0.000000e+00> : vector<32x512xf32>
    %72 = tpu.matmul %65, %71, %cst_49 {dimension_numbers = #tpu.dot_dimension_numbers<[1], [0], [0], [1], [0, 0, 1, 1], [], []>} : vector<32x96xf32>, vector<96x512xf32>, vector<32x512xf32> -> vector<32x512xf32>
    %c1_50 = arith.constant 1 : index
    %c0_51 = arith.constant 0 : index
    %c0_52 = arith.constant 0 : index
    %73 = vector.load %arg5[%c1_50, %c0_51, %c0_52] : memref<8x32x512xf32, #tpu.memory_space<vmem>>, vector<1x32x512xf32>
    %74 = vector.shape_cast %73 : vector<1x32x512xf32> to vector<32x512xf32>
    %75 = vector.shape_cast %72 : vector<32x512xf32> to vector<1x32x512xf32>
    tpu.vector_store %arg5[%c1_50, %c0_51, %c0_52], %75 {strides = array<i32>} : memref<8x32x512xf32, #tpu.memory_space<vmem>>, vector<1x32x512xf32>,
    %c64_53 = arith.constant 64 : index
    %c0_54 = arith.constant 0 : index
    %76 = vector.load %arg6[%c64_53, %c0_54] : memref<320x512xf32, #tpu.memory_space<vmem>>, vector<96x512xf32>
    %cst_55 = arith.constant dense<0.000000e+00> : vector<32x512xf32>
    %77 = tpu.matmul %65, %76, %cst_55 {dimension_numbers = #tpu.dot_dimension_numbers<[1], [0], [0], [1], [0, 0, 1, 1], [], []>} : vector<32x96xf32>, vector<96x512xf32>, vector<32x512xf32> -> vector<32x512xf32>
    %c2_56 = arith.constant 2 : index
    %c0_57 = arith.constant 0 : index
    %c0_58 = arith.constant 0 : index
    %78 = vector.load %arg5[%c2_56, %c0_57, %c0_58] : memref<8x32x512xf32, #tpu.memory_space<vmem>>, vector<1x32x512xf32>
    %79 = vector.shape_cast %78 : vector<1x32x512xf32> to vector<32x512xf32>
    %80 = vector.shape_cast %77 : vector<32x512xf32> to vector<1x32x512xf32>
    tpu.vector_store %arg5[%c2_56, %c0_57, %c0_58], %80 {strides = array<i32>} : memref<8x32x512xf32, #tpu.memory_space<vmem>>, vector<1x32x512xf32>,
    %c96_59 = arith.constant 96 : index
    %c0_60 = arith.constant 0 : index
    %81 = vector.load %arg6[%c96_59, %c0_60] : memref<320x512xf32, #tpu.memory_space<vmem>>, vector<96x512xf32>
    %cst_61 = arith.constant dense<0.000000e+00> : vector<32x512xf32>
    %82 = tpu.matmul %65, %81, %cst_61 {dimension_numbers = #tpu.dot_dimension_numbers<[1], [0], [0], [1], [0, 0, 1, 1], [], []>} : vector<32x96xf32>, vector<96x512xf32>, vector<32x512xf32> -> vector<32x512xf32>
    %c3_62 = arith.constant 3 : index
    %c0_63 = arith.constant 0 : index
    %c0_64 = arith.constant 0 : index
    %83 = vector.load %arg5[%c3_62, %c0_63, %c0_64] : memref<8x32x512xf32, #tpu.memory_space<vmem>>, vector<1x32x512xf32>
    %84 = vector.shape_cast %83 : vector<1x32x512xf32> to vector<32x512xf32>
    %85 = vector.shape_cast %82 : vector<32x512xf32> to vector<1x32x512xf32>
    tpu.vector_store %arg5[%c3_62, %c0_63, %c0_64], %85 {strides = array<i32>} : memref<8x32x512xf32, #tpu.memory_space<vmem>>, vector<1x32x512xf32>,
    %c128_65 = arith.constant 128 : index
    %c0_66 = arith.constant 0 : index
    %86 = vector.load %arg6[%c128_65, %c0_66] : memref<320x512xf32, #tpu.memory_space<vmem>>, vector<96x512xf32>
    %cst_67 = arith.constant dense<0.000000e+00> : vector<32x512xf32>
    %87 = tpu.matmul %65, %86, %cst_67 {dimension_numbers = #tpu.dot_dimension_numbers<[1], [0], [0], [1], [0, 0, 1, 1], [], []>} : vector<32x96xf32>, vector<96x512xf32>, vector<32x512xf32> -> vector<32x512xf32>
    %c4_68 = arith.constant 4 : index
    %c0_69 = arith.constant 0 : index
    %c0_70 = arith.constant 0 : index
    %88 = vector.load %arg5[%c4_68, %c0_69, %c0_70] : memref<8x32x512xf32, #tpu.memory_space<vmem>>, vector<1x32x512xf32>
    %89 = vector.shape_cast %88 : vector<1x32x512xf32> to vector<32x512xf32>
    %90 = vector.shape_cast %87 : vector<32x512xf32> to vector<1x32x512xf32>
    tpu.vector_store %arg5[%c4_68, %c0_69, %c0_70], %90 {strides = array<i32>} : memref<8x32x512xf32, #tpu.memory_space<vmem>>, vector<1x32x512xf32>,
    %c160_71 = arith.constant 160 : index
    %c0_72 = arith.constant 0 : index
    %91 = vector.load %arg6[%c160_71, %c0_72] : memref<320x512xf32, #tpu.memory_space<vmem>>, vector<96x512xf32>
    %cst_73 = arith.constant dense<0.000000e+00> : vector<32x512xf32>
    %92 = tpu.matmul %65, %91, %cst_73 {dimension_numbers = #tpu.dot_dimension_numbers<[1], [0], [0], [1], [0, 0, 1, 1], [], []>} : vector<32x96xf32>, vector<96x512xf32>, vector<32x512xf32> -> vector<32x512xf32>
    %c5_74 = arith.constant 5 : index
    %c0_75 = arith.constant 0 : index
    %c0_76 = arith.constant 0 : index
    %93 = vector.load %arg5[%c5_74, %c0_75, %c0_76] : memref<8x32x512xf32, #tpu.memory_space<vmem>>, vector<1x32x512xf32>
    %94 = vector.shape_cast %93 : vector<1x32x512xf32> to vector<32x512xf32>
    %95 = vector.shape_cast %92 : vector<32x512xf32> to vector<1x32x512xf32>
    tpu.vector_store %arg5[%c5_74, %c0_75, %c0_76], %95 {strides = array<i32>} : memref<8x32x512xf32, #tpu.memory_space<vmem>>, vector<1x32x512xf32>,
    %c192_77 = arith.constant 192 : index
    %c0_78 = arith.constant 0 : index
    %96 = vector.load %arg6[%c192_77, %c0_78] : memref<320x512xf32, #tpu.memory_space<vmem>>, vector<96x512xf32>
    %cst_79 = arith.constant dense<0.000000e+00> : vector<32x512xf32>
    %97 = tpu.matmul %65, %96, %cst_79 {dimension_numbers = #tpu.dot_dimension_numbers<[1], [0], [0], [1], [0, 0, 1, 1], [], []>} : vector<32x96xf32>, vector<96x512xf32>, vector<32x512xf32> -> vector<32x512xf32>
    %c6_80 = arith.constant 6 : index
    %c0_81 = arith.constant 0 : index
    %c0_82 = arith.constant 0 : index
    %98 = vector.load %arg5[%c6_80, %c0_81, %c0_82] : memref<8x32x512xf32, #tpu.memory_space<vmem>>, vector<1x32x512xf32>
    %99 = vector.shape_cast %98 : vector<1x32x512xf32> to vector<32x512xf32>
    %100 = vector.shape_cast %97 : vector<32x512xf32> to vector<1x32x512xf32>
    tpu.vector_store %arg5[%c6_80, %c0_81, %c0_82], %100 {strides = array<i32>} : memref<8x32x512xf32, #tpu.memory_space<vmem>>, vector<1x32x512xf32>,
    %c224_83 = arith.constant 224 : index
    %c0_84 = arith.constant 0 : index
    %101 = vector.load %arg6[%c224_83, %c0_84] : memref<320x512xf32, #tpu.memory_space<vmem>>, vector<96x512xf32>
    %cst_85 = arith.constant dense<0.000000e+00> : vector<32x512xf32>
    %102 = tpu.matmul %65, %101, %cst_85 {dimension_numbers = #tpu.dot_dimension_numbers<[1], [0], [0], [1], [0, 0, 1, 1], [], []>} : vector<32x96xf32>, vector<96x512xf32>, vector<32x512xf32> -> vector<32x512xf32>
    %c7_86 = arith.constant 7 : index
    %c0_87 = arith.constant 0 : index
    %c0_88 = arith.constant 0 : index
    %103 = vector.load %arg5[%c7_86, %c0_87, %c0_88] : memref<8x32x512xf32, #tpu.memory_space<vmem>>, vector<1x32x512xf32>
    %104 = vector.shape_cast %103 : vector<1x32x512xf32> to vector<32x512xf32>
    %105 = vector.shape_cast %102 : vector<32x512xf32> to vector<1x32x512xf32>
    tpu.vector_store %arg5[%c7_86, %c0_87, %c0_88], %105 {strides = array<i32>} : memref<8x32x512xf32, #tpu.memory_space<vmem>>, vector<1x32x512xf32>,
    return
  }
  func.func @transform_0(%arg0: i32) -> (i32, i32, i32) {
    %c0_i32 = arith.constant 0 : i32
    %c0_i32_0 = arith.constant 0 : i32
    %c0_i32_1 = arith.constant 0 : i32
    return %c0_i32, %c0_i32_0, %arg0 : i32, i32, i32
  }
  func.func @transform_1(%arg0: i32) -> (i32, i32) {
    %c0_i32 = arith.constant 0 : i32
    %c0_i32_0 = arith.constant 0 : i32
    %c0_i32_1 = arith.constant 0 : i32
    return %c0_i32, %c0_i32_0 : i32, i32
  }
  func.func @transform_2(%arg0: i32) -> (i32, i32) {
    %c0_i32 = arith.constant 0 : i32
    %c0_i32_0 = arith.constant 0 : i32
    %c0_i32_1 = arith.constant 0 : i32
    return %c0_i32, %c0_i32_0 : i32, i32
  }
  func.func @transform_3(%arg0: i32) -> (i32, i32) {
    %c0_i32 = arith.constant 0 : i32
    %c0_i32_0 = arith.constant 0 : i32
    %c0_i32_1 = arith.constant 0 : i32
    return %c0_i32, %c0_i32_0 : i32, i32
  }
  func.func @transform_4(%arg0: i32) -> (i32, i32, i32) {
    %c0_i32 = arith.constant 0 : i32
    %c0_i32_0 = arith.constant 0 : i32
    %c0_i32_1 = arith.constant 0 : i32
    return %c0_i32, %c0_i32_0, %arg0 : i32, i32, i32
  }
}

</mosaic_0001>

<llo_original>
// kernel: conv2plus1d_forward.4
$region0: #{conv2plus1d_forward.4}
  #allocation0 [shape = 'u32[]', space=smem, size = 0x4, offset = 0x4, fixed_abs, tag = 'smem constant byte address 0x4 - core index']
  #allocation1 [shape = 'u32[144,128]{1,0:T(1,128)}', space=vmem, size = 0x12000, scoped, tag = 'internal scratch']
  %s0 = inlined_call_operand.vmem [shape: f32[8,4096], index: 0, kind: input, shape index: {}]
  %s1 = inlined_call_operand.vmem [shape: f32[16,8], index: 1, kind: input, shape index: {}]
  %s2 = inlined_call_operand.vmem [shape: f32[16,1], index: 2, kind: input, shape index: {}]
  %s3 = inlined_call_operand.vmem [shape: f32[16,1], index: 3, kind: input, shape index: {}]
  %s4 = inlined_call_operand.vmem [shape: f32[16,4096], index: 4, kind: output, shape index: {}]
  %s5 = sld [smem:[#allocation0]]
  $region26: #{conv2plus1d_forward.4} parent=0
    _
  %s7 = ssub.s32 1, %s5
  %s8 = scalar_select 0, %s7, %s5
  // Predicated region
  $region2: #{conv2plus1d_forward.4} parent=0 // pred_check
    _
  $region3: #{conv2plus1d_forward.4} parent=0 // pred_check_branch
    %10 = sbr.rel (0) target = $region5
  $region4: #{conv2plus1d_forward.4} parent=0 // pred_region
    _
  $region5: #{conv2plus1d_forward.4} parent=0 // pred_fallthru
    _
  // Predicated region
  $region6: #{conv2plus1d_forward.4} parent=0 // pred_check
    _
  $region7: #{conv2plus1d_forward.4} parent=0 // pred_check_branch
    %12 = sbr.rel (0) target = $region9
  $region8: #{conv2plus1d_forward.4} parent=0 // pred_region
    _
  $region9: #{conv2plus1d_forward.4} parent=0 // pred_fallthru
    _
  // Predicated region
  $region10: #{conv2plus1d_forward.4} parent=0 // pred_check
    _
  $region11: #{conv2plus1d_forward.4} parent=0 // pred_check_branch
    %14 = sbr.rel (0) target = $region13
  $region12: #{conv2plus1d_forward.4} parent=0 // pred_region
    _
  $region13: #{conv2plus1d_forward.4} parent=0 // pred_fallthru
    _
  // Predicated region
  $region14: #{conv2plus1d_forward.4} parent=0 // pred_check
    _
  $region15: #{conv2plus1d_forward.4} parent=0 // pred_check_branch
    %16 = sbr.rel (0) target = $region17
  $region16: #{conv2plus1d_forward.4} parent=0 // pred_region
    _
  $region17: #{conv2plus1d_forward.4} parent=0 // pred_fallthru
    _
  %v17 = vld [vmem:[%s1] sm:$0xff]
  %v18 = vld [vmem:[%s1 + $0x8] sm:$0xff]
  %v19 = vld [vmem:[%s0] sm:$0xff]
  %v20 = vld [vmem:[%s0 + $0x8] sm:$0xff]
  %v21 = vld [vmem:[%s0 + $0x10] sm:$0xff]
  %v22 = vld [vmem:[%s0 + $0x18] sm:$0xff]
  %v23 = vld [vmem:[%s0 + $0x20] sm:$0xff]
  %v24 = vld [vmem:[%s0 + $0x28] sm:$0xff]
  %v25 = vld [vmem:[%s0 + $0x30] sm:$0xff]
  %v26 = vld [vmem:[%s0 + $0x38] sm:$0xff]
  %v27 = vld [vmem:[%s0 + $0x40] sm:$0xff]
  %v28 = vld [vmem:[%s0 + $0x48] sm:$0xff]
  %v29 = vld [vmem:[%s0 + $0x50] sm:$0xff]
  %v30 = vld [vmem:[%s0 + $0x58] sm:$0xff]
  %v31 = vld [vmem:[%s0 + $0x60] sm:$0xff]
  %v32 = vld [vmem:[%s0 + $0x68] sm:$0xff]
  %v33 = vld [vmem:[%s0 + $0x70] sm:$0xff]
  %v34 = vld [vmem:[%s0 + $0x78] sm:$0xff]
  %v35 = vld [vmem:[%s0 + $0x80] sm:$0xff]
  %v36 = vld [vmem:[%s0 + $0x88] sm:$0xff]
  %v37 = vld [vmem:[%s0 + $0x90] sm:$0xff]
  %v38 = vld [vmem:[%s0 + $0x98] sm:$0xff]
  %v39 = vld [vmem:[%s0 + $0xa0] sm:$0xff]
  %v40 = vld [vmem:[%s0 + $0xa8] sm:$0xff]
  %v41 = vld [vmem:[%s0 + $0xb0] sm:$0xff]
  %v42 = vld [vmem:[%s0 + $0xb8] sm:$0xff]
  %v43 = vld [vmem:[%s0 + $0xc0] sm:$0xff]
  %v44 = vld [vmem:[%s0 + $0xc8] sm:$0xff]
  %v45 = vld [vmem:[%s0 + $0xd0] sm:$0xff]
  %v46 = vld [vmem:[%s0 + $0xd8] sm:$0xff]
  %v47 = vld [vmem:[%s0 + $0xe0] sm:$0xff]
  %v48 = vld [vmem:[%s0 + $0xe8] sm:$0xff]
  %v49 = vld [vmem:[%s0 + $0xf0] sm:$0xff]
  %v50 = vld [vmem:[%s0 + $0xf8] sm:$0xff]
  %vm51 = vcmask 64512
  %v53 = vsel %vm51, %v17, 0
  %v56 = vsel %vm51, %v18, 0
  %58 = vmatprep.subr.mxu0 %v20
  %59 = vmatpush1.msra.mxu0 %v19
  %60 = vmatprep.subr.mxu0 0.0
  %61 = vmatpush1.msra.mxu0 0.0
  %62 = vmatprep.subr.mxu0 0.0
  %63 = vmatpush1.msra.mxu0 0.0
  %64 = vmatprep.subr.mxu0 0.0
  %65 = vmatpush1.msra.mxu0 0.0
  %66 = vmatprep.subr.mxu0 0.0
  %67 = vmatpush1.msra.mxu0 0.0
  %68 = vmatprep.subr.mxu0 0.0
  %69 = vmatpush1.msra.mxu0 0.0
  %70 = vmatprep.subr.mxu0 0.0
  %71 = vmatpush1.msra.mxu0 0.0
  %72 = vmatprep.subr.mxu0 0.0
  %73 = vmatpush1.msra.mxu0 0.0
  %74 = vmatprep.subr.mxu0 0.0
  %75 = vmatpush1.msra.mxu0 0.0
  %76 = vmatprep.subr.mxu0 0.0
  %77 = vmatpush1.msra.mxu0 0.0
  %78 = vmatprep.subr.mxu0 0.0
  %79 = vmatpush1.msra.mxu0 0.0
  %80 = vmatprep.subr.mxu0 0.0
  %81 = vmatpush1.msra.mxu0 0.0
  %82 = vmatprep.subr.mxu0 0.0
  %83 = vmatpush1.msra.mxu0 0.0
  %84 = vmatprep.subr.mxu0 0.0
  %85 = vmatpush1.msra.mxu0 0.0
  %86 = vmatprep.subr.mxu0 0.0
  %87 = vmatpush1.msra.mxu0 0.0
  %88 = vmatprep.subr.mxu0 0.0
  %89 = vmatpush1.msra.mxu0 0.0
  %90 = vmatprep.subr.mxu0 0.0
  %91 = vmatpush1.msra.mxu0 0.0
  %92 = vmatprep.subr.mxu0 0.0
  %93 = vmatpush1.msra.mxu0 0.0
  %94 = vmatprep.subr.mxu0 0.0
  %95 = vmatpush1.msra.mxu0 0.0
  %96 = vmatprep.subr.mxu0 0.0
  %97 = vmatpush1.msra.mxu0 0.0
  %98 = vmatprep.subr.mxu0 0.0
  %99 = vmatpush1.msra.mxu0 0.0
  %100 = vmatprep.subr.mxu0 0.0
  %101 = vmatpush1.msra.mxu0 0.0
  %102 = vmatprep.subr.mxu0 0.0
  %103 = vmatpush1.msra.mxu0 0.0
  %104 = vmatprep.subr.mxu0 0.0
  %105 = vmatpush1.msra.mxu0 0.0
  %106 = vmatprep.subr.mxu0 0.0
  %107 = vmatpush1.msra.mxu0 0.0
  %108 = vmatprep.subr.mxu0 0.0
  %109 = vmatpush1.msra.mxu0 0.0
  %110 = vmatprep.subr.mxu0 0.0
  %111 = vmatpush1.msra.mxu0 0.0
  %112 = vmatprep.subr.mxu0 0.0
  %113 = vmatpush1.msra.mxu0 0.0
  %114 = vmatprep.subr.mxu0 0.0
  %115 = vmatpush1.msra.mxu0 0.0
  %116 = vmatprep.subr.mxu0 0.0
  %117 = vmatpush1.msra.mxu0 0.0
  %118 = vmatprep.subr.mxu0 0.0
  %119 = vmatpush1.msra.mxu0 0.0
  %120 = vmatprep.subr.mxu0 0.0
  %121 = vmatpush1.msra.mxu0 0.0
  %122 = vmatprep.mubr.f32.mxu0 0.0
  %123 = vmatmul.mubr.f32.gmra.mrb[0].mxu0 %v53
  %v124 = vpop.f32.mrb[0].mxu0
  %v125 = vadd.f32 0.0, %v124
  %v126 = vpop.f32.mrb[0].mxu0
  %v127 = vadd.f32 0.0, %v126
  %128 = vmatprep.mubr.f32.mxu0 0.0
  %129 = vmatmul.mubr.f32.gmra.mrb[0].mxu0 %v56
  %v130 = vpop.f32.mrb[0].mxu0
  %v131 = vadd.f32 0.0, %v130
  %v132 = vpop.f32.mrb[0].mxu0
  %v133 = vadd.f32 0.0, %v132
  %134 = vdwg.mxu0
  %135 = vmatprep.subr.mxu0 %v22
  %136 = vmatpush1.msra.mxu0 %v21
  %137 = vmatprep.subr.mxu0 0.0
  %138 = vmatpush1.msra.mxu0 0.0
  %139 = vmatprep.subr.mxu0 0.0
  %140 = vmatpush1.msra.mxu0 0.0
  %141 = vmatprep.subr.mxu0 0.0
  %142 = vmatpush1.msra.mxu0 0.0
  %143 = vmatprep.subr.mxu0 0.0
  %144 = vmatpush1.msra.mxu0 0.0
  %145 = vmatprep.subr.mxu0 0.0
  %146 = vmatpush1.msra.mxu0 0.0
  %147 = vmatprep.subr.mxu0 0.0
  %148 = vmatpush1.msra.mxu0 0.0
  %149 = vmatprep.subr.mxu0 0.0
  %150 = vmatpush1.msra.mxu0 0.0
  %151 = vmatprep.subr.mxu0 0.0
  %152 = vmatpush1.msra.mxu0 0.0
  %153 = vmatprep.subr.mxu0 0.0
  %154 = vmatpush1.msra.mxu0 0.0
  %155 = vmatprep.subr.mxu0 0.0
  %156 = vmatpush1.msra.mxu0 0.0
  %157 = vmatprep.subr.mxu0 0.0
  %158 = vmatpush1.msra.mxu0 0.0
  %159 = vmatprep.subr.mxu0 0.0
  %160 = vmatpush1.msra.mxu0 0.0
  %161 = vmatprep.subr.mxu0 0.0
  %162 = vmatpush1.msra.mxu0 0.0
  %163 = vmatprep.subr.mxu0 0.0
  %164 = vmatpush1.msra.mxu0 0.0
  %165 = vmatprep.subr.mxu0 0.0
  %166 = vmatpush1.msra.mxu0 0.0
  %167 = vmatprep.subr.mxu0 0.0
  %168 = vmatpush1.msra.mxu0 0.0
  %169 = vmatprep.subr.mxu0 0.0
  %170 = vmatpush1.msra.mxu0 0.0
  %171 = vmatprep.subr.mxu0 0.0
  %172 = vmatpush1.msra.mxu0 0.0
  %173 = vmatprep.subr.mxu0 0.0
  %174 = vmatpush1.msra.mxu0 0.0
  %175 = vmatprep.subr.mxu0 0.0
  %176 = vmatpush1.msra.mxu0 0.0
  %177 = vmatprep.subr.mxu0 0.0
  %178 = vmatpush1.msra.mxu0 0.0
  %179 = vmatprep.subr.mxu0 0.0
  %180 = vmatpush1.msra.mxu0 0.0
  %181 = vmatprep.subr.mxu0 0.0
  %182 = vmatpush1.msra.mxu0 0.0
  %183 = vmatprep.subr.mxu0 0.0
  %184 = vmatpush1.msra.mxu0 0.0
  %185 = vmatprep.subr.mxu0 0.0
  %186 = vmatpush1.msra.mxu0 0.0
  %187 = vmatprep.subr.mxu0 0.0
  %188 = vmatpush1.msra.mxu0 0.0
  %189 = vmatprep.subr.mxu0 0.0
  %190 = vmatpush1.msra.mxu0 0.0
  %191 = vmatprep.subr.mxu0 0.0
  %192 = vmatpush1.msra.mxu0 0.0
  %193 = vmatprep.subr.mxu0 0.0
  %194 = vmatpush1.msra.mxu0 0.0
  %195 = vmatprep.subr.mxu0 0.0
  %196 = vmatpush1.msra.mxu0 0.0
  %197 = vmatprep.subr.mxu0 0.0
  %198 = vmatpush1.msra.mxu0 0.0
  %199 = vmatprep.mubr.f32.mxu0 0.0
  %200 = vmatmul.mubr.f32.gmra.mrb[0].mxu0 %v53
  %v201 = vpop.f32.mrb[0].mxu0
  %v202 = vadd.f32 0.0, %v201
  %v203 = vpop.f32.mrb[0].mxu0
  %v204 = vadd.f32 0.0, %v203
  %205 = vmatprep.mubr.f32.mxu0 0.0
  %206 = vmatmul.mubr.f32.gmra.mrb[0].mxu0 %v56
  %v207 = vpop.f32.mrb[0].mxu0
  %v208 = vadd.f32 0.0, %v207
  %v209 = vpop.f32.mrb[0].mxu0
  %v210 = vadd.f32 0.0, %v209
  %211 = vdwg.mxu0
  %212 = vmatprep.subr.mxu0 %v24
  %213 = vmatpush1.msra.mxu0 %v23
  %214 = vmatprep.subr.mxu0 0.0
  %215 = vmatpush1.msra.mxu0 0.0
  %216 = vmatprep.subr.mxu0 0.0
  %217 = vmatpush1.msra.mxu0 0.0
  %218 = vmatprep.subr.mxu0 0.0
  %219 = vmatpush1.msra.mxu0 0.0
  %220 = vmatprep.subr.mxu0 0.0
  %221 = vmatpush1.msra.mxu0 0.0
  %222 = vmatprep.subr.mxu0 0.0
  %223 = vmatpush1.msra.mxu0 0.0
  %224 = vmatprep.subr.mxu0 0.0
  %225 = vmatpush1.msra.mxu0 0.0
  %226 = vmatprep.subr.mxu0 0.0
  %227 = vmatpush1.msra.mxu0 0.0
  %228 = vmatprep.subr.mxu0 0.0
  %229 = vmatpush1.msra.mxu0 0.0
  %230 = vmatprep.subr.mxu0 0.0
  %231 = vmatpush1.msra.mxu0 0.0
  %232 = vmatprep.subr.mxu0 0.0
  %233 = vmatpush1.msra.mxu0 0.0
  %234 = vmatprep.subr.mxu0 0.0
  %235 = vmatpush1.msra.mxu0 0.0
  %236 = vmatprep.subr.mxu0 0.0
  %237 = vmatpush1.msra.mxu0 0.0
  %238 = vmatprep.subr.mxu0 0.0
  %239 = vmatpush1.msra.mxu0 0.0
  %240 = vmatprep.subr.mxu0 0.0
  %241 = vmatpush1.msra.mxu0 0.0
  %242 = vmatprep.subr.mxu0 0.0
  %243 = vmatpush1.msra.mxu0 0.0
  %244 = vmatprep.subr.mxu0 0.0
  %245 = vmatpush1.msra.mxu0 0.0
  %246 = vmatprep.subr.mxu0 0.0
  %247 = vmatpush1.msra.mxu0 0.0
  %248 = vmatprep.subr.mxu0 0.0
  %249 = vmatpush1.msra.mxu0 0.0
  %250 = vmatprep.subr.mxu0 0.0
  %251 = vmatpush1.msra.mxu0 0.0
  %252 = vmatprep.subr.mxu0 0.0
  %253 = vmatpush1.msra.mxu0 0.0
  %254 = vmatprep.subr.mxu0 0.0
  %255 = vmatpush1.msra.mxu0 0.0
  %256 = vmatprep.subr.mxu0 0.0
  %257 = vmatpush1.msra.mxu0 0.0
  %258 = vmatprep.subr.mxu0 0.0
  %259 = vmatpush1.msra.mxu0 0.0
  %260 = vmatprep.subr.mxu0 0.0
  %261 = vmatpush1.msra.mxu0 0.0
  %262 = vmatprep.subr.mxu0 0.0
  %263 = vmatpush1.msra.mxu0 0.0
  %264 = vmatprep.subr.mxu0 0.0
  %265 = vmatpush1.msra.mxu0 0.0
  %266 = vmatprep.subr.mxu0 0.0
  %267 = vmatpush1.msra.mxu0 0.0
  %268 = vmatprep.subr.mxu0 0.0
  %269 = vmatpush1.msra.mxu0 0.0
  %270 = vmatprep.subr.mxu0 0.0
  %271 = vmatpush1.msra.mxu0 0.0
  %272 = vmatprep.subr.mxu0 0.0
  %273 = vmatpush1.msra.mxu0 0.0
  %274 = vmatprep.subr.mxu0 0.0
  %275 = vmatpush1.msra.mxu0 0.0
  %276 = vmatprep.mubr.f32.mxu0 0.0
  %277 = vmatmul.mubr.f32.gmra.mrb[0].mxu0 %v53
  %v278 = vpop.f32.mrb[0].mxu0
  %v279 = vadd.f32 0.0, %v278
  %v280 = vpop.f32.mrb[0].mxu0
  %v281 = vadd.f32 0.0, %v280
  %282 = vmatprep.mubr.f32.mxu0 0.0
  %283 = vmatmul.mubr.f32.gmra.mrb[0].mxu0 %v56
  %v284 = vpop.f32.mrb[0].mxu0
  %v285 = vadd.f32 0.0, %v284
  %v286 = vpop.f32.mrb[0].mxu0
  %v287 = vadd.f32 0.0, %v286
  %288 = vdwg.mxu0
  %289 = vmatprep.subr.mxu0 %v26
  %290 = vmatpush1.msra.mxu0 %v25
  %291 = vmatprep.subr.mxu0 0.0
  %292 = vmatpush1.msra.mxu0 0.0
  %293 = vmatprep.subr.mxu0 0.0
  %294 = vmatpush1.msra.mxu0 0.0
  %295 = vmatprep.subr.mxu0 0.0
  %296 = vmatpush1.msra.mxu0 0.0
  %297 = vmatprep.subr.mxu0 0.0
  %298 = vmatpush1.msra.mxu0 0.0
  %299 = vmatprep.subr.mxu0 0.0
  %300 = vmatpush1.msra.mxu0 0.0
  %301 = vmatprep.subr.mxu0 0.0
  %302 = vmatpush1.msra.mxu0 0.0
  %303 = vmatprep.subr.mxu0 0.0
  %304 = vmatpush1.msra.mxu0 0.0
  %305 = vmatprep.subr.mxu0 0.0
  %306 = vmatpush1.msra.mxu0 0.0
  %307 = vmatprep.subr.mxu0 0.0
  %308 = vmatpush1.msra.mxu0 0.0
  %309 = vmatprep.subr.mxu0 0.0
  %310 = vmatpush1.msra.mxu0 0.0
  %311 = vmatprep.subr.mxu0 0.0
  %312 = vmatpush1.msra.mxu0 0.0
  %313 = vmatprep.subr.mxu0 0.0
  %314 = vmatpush1.msra.mxu0 0.0
  %315 = vmatprep.subr.mxu0 0.0
  %316 = vmatpush1.msra.mxu0 0.0
  %317 = vmatprep.subr.mxu0 0.0
  %318 = vmatpush1.msra.mxu0 0.0
  %319 = vmatprep.subr.mxu0 0.0
  %320 = vmatpush1.msra.mxu0 0.0
  %321 = vmatprep.subr.mxu0 0.0
  %322 = vmatpush1.msra.mxu0 0.0
  %323 = vmatprep.subr.mxu0 0.0
  %324 = vmatpush1.msra.mxu0 0.0
  %325 = vmatprep.subr.mxu0 0.0
  %326 = vmatpush1.msra.mxu0 0.0
  %327 = vmatprep.subr.mxu0 0.0
  %328 = vmatpush1.msra.mxu0 0.0
  %329 = vmatprep.subr.mxu0 0.0
  %330 = vmatpush1.msra.mxu0 0.0
  %331 = vmatprep.subr.mxu0 0.0
  %332 = vmatpush1.msra.mxu0 0.0
  %333 = vmatprep.subr.mxu0 0.0
  %334 = vmatpush1.msra.mxu0 0.0
  %335 = vmatprep.subr.mxu0 0.0
  %336 = vmatpush1.msra.mxu0 0.0
  %337 = vmatprep.subr.mxu0 0.0
  %338 = vmatpush1.msra.mxu0 0.0
  %339 = vmatprep.subr.mxu0 0.0
  %340 = vmatpush1.msra.mxu0 0.0
  %341 = vmatprep.subr.mxu0 0.0
  %342 = vmatpush1.msra.mxu0 0.0
  %343 = vmatprep.subr.mxu0 0.0
  %344 = vmatpush1.msra.mxu0 0.0
  %345 = vmatprep.subr.mxu0 0.0
  %346 = vmatpush1.msra.mxu0 0.0
  %347 = vmatprep.subr.mxu0 0.0
  %348 = vmatpush1.msra.mxu0 0.0
  %349 = vmatprep.subr.mxu0 0.0
  %350 = vmatpush1.msra.mxu0 0.0
  %351 = vmatprep.subr.mxu0 0.0
  %352 = vmatpush1.msra.mxu0 0.0
  %353 = vmatprep.mubr.f32.mxu0 0.0
  %354 = vmatmul.mubr.f32.gmra.mrb[0].mxu0 %v53
  %v355 = vpop.f32.mrb[0].mxu0
  %v356 = vadd.f32 0.0, %v355
  %v357 = vpop.f32.mrb[0].mxu0
  %v358 = vadd.f32 0.0, %v357
  %359 = vmatprep.mubr.f32.mxu0 0.0
  %360 = vmatmul.mubr.f32.gmra.mrb[0].mxu0 %v56
  %v361 = vpop.f32.mrb[0].mxu0
  %v362 = vadd.f32 0.0, %v361
  %v363 = vpop.f32.mrb[0].mxu0
  %v364 = vadd.f32 0.0, %v363
  %365 = vdwg.mxu0
  %366 = vmatprep.subr.mxu0 %v28
  %367 = vmatpush1.msra.mxu0 %v27
  %368 = vmatprep.subr.mxu0 0.0
  %369 = vmatpush1.msra.mxu0 0.0
  %370 = vmatprep.subr.mxu0 0.0
  %371 = vmatpush1.msra.mxu0 0.0
  %372 = vmatprep.subr.mxu0 0.0
  %373 = vmatpush1.msra.mxu0 0.0
  %374 = vmatprep.subr.mxu0 0.0
  %375 = vmatpush1.msra.mxu0 0.0
  %376 = vmatprep.subr.mxu0 0.0
  %377 = vmatpush1.msra.mxu0 0.0
  %378 = vmatprep.subr.mxu0 0.0
  %379 = vmatpush1.msra.mxu0 0.0
  %380 = vmatprep.subr.mxu0 0.0
  %381 = vmatpush1.msra.mxu0 0.0
  %382 = vmatprep.subr.mxu0 0.0
  %383 = vmatpush1.msra.mxu0 0.0
  %384 = vmatprep.subr.mxu0 0.0
  %385 = vmatpush1.msra.mxu0 0.0
  %386 = vmatprep.subr.mxu0 0.0
  %387 = vmatpush1.msra.mxu0 0.0
  %388 = vmatprep.subr.mxu0 0.0
  %389 = vmatpush1.msra.mxu0 0.0
  %390 = vmatprep.subr.mxu0 0.0
  %391 = vmatpush1.msra.mxu0 0.0
  %392 = vmatprep.subr.mxu0 0.0
  %393 = vmatpush1.msra.mxu0 0.0
  %394 = vmatprep.subr.mxu0 0.0
  %395 = vmatpush1.msra.mxu0 0.0
  %396 = vmatprep.subr.mxu0 0.0
  %397 = vmatpush1.msra.mxu0 0.0
  %398 = vmatprep.subr.mxu0 0.0
  %399 = vmatpush1.msra.mxu0 0.0
  %400 = vmatprep.subr.mxu0 0.0
  %401 = vmatpush1.msra.mxu0 0.0
  %402 = vmatprep.subr.mxu0 0.0
  %403 = vmatpush1.msra.mxu0 0.0
  %404 = vmatprep.subr.mxu0 0.0
  %405 = vmatpush1.msra.mxu0 0.0
  %406 = vmatprep.subr.mxu0 0.0
  %407 = vmatpush1.msra.mxu0 0.0
  %408 = vmatprep.subr.mxu0 0.0
  %409 = vmatpush1.msra.mxu0 0.0
  %410 = vmatprep.subr.mxu0 0.0
  %411 = vmatpush1.msra.mxu0 0.0
  %412 = vmatprep.subr.mxu0 0.0
  %413 = vmatpush1.msra.mxu0 0.0
  %414 = vmatprep.subr.mxu0 0.0
  %415 = vmatpush1.msra.mxu0 0.0
  %416 = vmatprep.subr.mxu0 0.0
  %417 = vmatpush1.msra.mxu0 0.0
  %418 = vmatprep.subr.mxu0 0.0
  %419 = vmatpush1.msra.mxu0 0.0
  %420 = vmatprep.subr.mxu0 0.0
  %421 = vmatpush1.msra.mxu0 0.0
  %422 = vmatprep.subr.mxu0 0.0
  %423 = vmatpush1.msra.mxu0 0.0
  %424 = vmatprep.subr.mxu0 0.0
  %425 = vmatpush1.msra.mxu0 0.0
  %426 = vmatprep.subr.mxu0 0.0
  %427 = vmatpush1.msra.mxu0 0.0
  %428 = vmatprep.subr.mxu0 0.0
  %429 = vmatpush1.msra.mxu0 0.0
  %430 = vmatprep.mubr.f32.mxu0 0.0
  %431 = vmatmul.mubr.f32.gmra.mrb[0].mxu0 %v53
  %v432 = vpop.f32.mrb[0].mxu0
  %v433 = vadd.f32 0.0, %v432
  %v434 = vpop.f32.mrb[0].mxu0
  %v435 = vadd.f32 0.0, %v434
  %436 = vmatprep.mubr.f32.mxu0 0.0
  %437 = vmatmul.mubr.f32.gmra.mrb[0].mxu0 %v56
  %v438 = vpop.f32.mrb[0].mxu0
  %v439 = vadd.f32 0.0, %v438
  %v440 = vpop.f32.mrb[0].mxu0
  %v441 = vadd.f32 0.0, %v440
  %442 = vdwg.mxu0
  %443 = vmatprep.subr.mxu0 %v30
  %444 = vmatpush1.msra.mxu0 %v29
  %445 = vmatprep.subr.mxu0 0.0
  %446 = vmatpush1.msra.mxu0 0.0
  %447 = vmatprep.subr.mxu0 0.0
  %448 = vmatpush1.msra.mxu0 0.0
  %449 = vmatprep.subr.mxu0 0.0
  %450 = vmatpush1.msra.mxu0 0.0
  %451 = vmatprep.subr.mxu0 0.0
  %452 = vmatpush1.msra.mxu0 0.0
  %453 = vmatprep.subr.mxu0 0.0
  %454 = vmatpush1.msra.mxu0 0.0
  %455 = vmatprep.subr.mxu0 0.0
  %456 = vmatpush1.msra.mxu0 0.0
  %457 = vmatprep.subr.mxu0 0.0
  %458 = vmatpush1.msra.mxu0 0.0
  %459 = vmatprep.subr.mxu0 0.0
  %460 = vmatpush1.msra.mxu0 0.0
  %461 = vmatprep.subr.mxu0 0.0
  %462 = vmatpush1.msra.mxu0 0.0
  %463 = vmatprep.subr.mxu0 0.0
  %464 = vmatpush1.msra.mxu0 0.0
  %465 = vmatprep.subr.mxu0 0.0
  %466 = vmatpush1.msra.mxu0 0.0
  %467 = vmatprep.subr.mxu0 0.0
  %468 = vmatpush1.msra.mxu0 0.0
  %469 = vmatprep.subr.mxu0 0.0
  %470 = vmatpush1.msra.mxu0 0.0
  %471 = vmatprep.subr.mxu0 0.0
  %472 = vmatpush1.msra.mxu0 0.0
  %473 = vmatprep.subr.mxu0 0.0
  %474 = vmatpush1.msra.mxu0 0.0
  %475 = vmatprep.subr.mxu0 0.0
  %476 = vmatpush1.msra.mxu0 0.0
  %477 = vmatprep.subr.mxu0 0.0
  %478 = vmatpush1.msra.mxu0 0.0
  %479 = vmatprep.subr.mxu0 0.0
  %480 = vmatpush1.msra.mxu0 0.0
  %481 = vmatprep.subr.mxu0 0.0
  %482 = vmatpush1.msra.mxu0 0.0
  %483 = vmatprep.subr.mxu0 0.0
  %484 = vmatpush1.msra.mxu0 0.0
  %485 = vmatprep.subr.mxu0 0.0
  %486 = vmatpush1.msra.mxu0 0.0
  %487 = vmatprep.subr.mxu0 0.0
  %488 = vmatpush1.msra.mxu0 0.0
  %489 = vmatprep.subr.mxu0 0.0
  %490 = vmatpush1.msra.mxu0 0.0
  %491 = vmatprep.subr.mxu0 0.0
  %492 = vmatpush1.msra.mxu0 0.0
  %493 = vmatprep.subr.mxu0 0.0
  %494 = vmatpush1.msra.mxu0 0.0
  %495 = vmatprep.subr.mxu0 0.0
  %496 = vmatpush1.msra.mxu0 0.0
  %497 = vmatprep.subr.mxu0 0.0
  %498 = vmatpush1.msra.mxu0 0.0
  %499 = vmatprep.subr.mxu0 0.0
  %500 = vmatpush1.msra.mxu0 0.0
  %501 = vmatprep.subr.mxu0 0.0
  %502 = vmatpush1.msra.mxu0 0.0
  %503 = vmatprep.subr.mxu0 0.0
  %504 = vmatpush1.msra.mxu0 0.0
  %505 = vmatprep.subr.mxu0 0.0
  %506 = vmatpush1.msra.mxu0 0.0
  %507 = vmatprep.mubr.f32.mxu0 0.0
  %508 = vmatmul.mubr.f32.gmra.mrb[0].mxu0 %v53
  %v509 = vpop.f32.mrb[0].mxu0
  %v510 = vadd.f32 0.0, %v509
  %v511 = vpop.f32.mrb[0].mxu0
  %v512 = vadd.f32 0.0, %v511
  %513 = vmatprep.mubr.f32.mxu0 0.0
  %514 = vmatmul.mubr.f32.gmra.mrb[0].mxu0 %v56
  %v515 = vpop.f32.mrb[0].mxu0
  %v516 = vadd.f32 0.0, %v515
  %v517 = vpop.f32.mrb[0].mxu0
  %v518 = vadd.f32 0.0, %v517
  %519 = vdwg.mxu0
  %520 = vmatprep.subr.mxu0 %v32
  %521 = vmatpush1.msra.mxu0 %v31
  %522 = vmatprep.subr.mxu0 0.0
  %523 = vmatpush1.msra.mxu0 0.0
  %524 = vmatprep.subr.mxu0 0.0
  %525 = vmatpush1.msra.mxu0 0.0
  %526 = vmatprep.subr.mxu0 0.0
  %527 = vmatpush1.msra.mxu0 0.0
  %528 = vmatprep.subr.mxu0 0.0
  %529 = vmatpush1.msra.mxu0 0.0
  %530 = vmatprep.subr.mxu0 0.0
  %531 = vmatpush1.msra.mxu0 0.0
  %532 = vmatprep.subr.mxu0 0.0
  %533 = vmatpush1.msra.mxu0 0.0
  %534 = vmatprep.subr.mxu0 0.0
  %535 = vmatpush1.msra.mxu0 0.0
  %536 = vmatprep.subr.mxu0 0.0
  %537 = vmatpush1.msra.mxu0 0.0
  %538 = vmatprep.subr.mxu0 0.0
  %539 = vmatpush1.msra.mxu0 0.0
  %540 = vmatprep.subr.mxu0 0.0
  %541 = vmatpush1.msra.mxu0 0.0
  %542 = vmatprep.subr.mxu0 0.0
  %543 = vmatpush1.msra.mxu0 0.0
  %544 = vmatprep.subr.mxu0 0.0
  %545 = vmatpush1.msra.mxu0 0.0
  %546 = vmatprep.subr.mxu0 0.0
  %547 = vmatpush1.msra.mxu0 0.0
  %548 = vmatprep.subr.mxu0 0.0
  %549 = vmatpush1.msra.mxu0 0.0
  %550 = vmatprep.subr.mxu0 0.0
  %551 = vmatpush1.msra.mxu0 0.0
  %552 = vmatprep.subr.mxu0 0.0
  %553 = vmatpush1.msra.mxu0 0.0
  %554 = vmatprep.subr.mxu0 0.0
  %555 = vmatpush1.msra.mxu0 0.0
  %556 = vmatprep.subr.mxu0 0.0
  %557 = vmatpush1.msra.mxu0 0.0
  %558 = vmatprep.subr.mxu0 0.0
  %559 = vmatpush1.msra.mxu0 0.0
  %560 = vmatprep.subr.mxu0 0.0
  %561 = vmatpush1.msra.mxu0 0.0
  %562 = vmatprep.subr.mxu0 0.0
  %563 = vmatpush1.msra.mxu0 0.0
  %564 = vmatprep.subr.mxu0 0.0
  %565 = vmatpush1.msra.mxu0 0.0
  %566 = vmatprep.subr.mxu0 0.0
  %567 = vmatpush1.msra.mxu0 0.0
  %568 = vmatprep.subr.mxu0 0.0
  %569 = vmatpush1.msra.mxu0 0.0
  %570 = vmatprep.subr.mxu0 0.0
  %571 = vmatpush1.msra.mxu0 0.0
  %572 = vmatprep.subr.mxu0 0.0
  %573 = vmatpush1.msra.mxu0 0.0
  %574 = vmatprep.subr.mxu0 0.0
  %575 = vmatpush1.msra.mxu0 0.0
  %576 = vmatprep.subr.mxu0 0.0
  %577 = vmatpush1.msra.mxu0 0.0
  %578 = vmatprep.subr.mxu0 0.0
  %579 = vmatpush1.msra.mxu0 0.0
  %580 = vmatprep.subr.mxu0 0.0
  %581 = vmatpush1.msra.mxu0 0.0
  %582 = vmatprep.subr.mxu0 0.0
  %583 = vmatpush1.msra.mxu0 0.0
  %584 = vmatprep.mubr.f32.mxu0 0.0
  %585 = vmatmul.mubr.f32.gmra.mrb[0].mxu0 %v53
  %v586 = vpop.f32.mrb[0].mxu0
  %v587 = vadd.f32 0.0, %v586
  %v588 = vpop.f32.mrb[0].mxu0
  %v589 = vadd.f32 0.0, %v588
  %590 = vmatprep.mubr.f32.mxu0 0.0
  %591 = vmatmul.mubr.f32.gmra.mrb[0].mxu0 %v56
  %v592 = vpop.f32.mrb[0].mxu0
  %v593 = vadd.f32 0.0, %v592
  %v594 = vpop.f32.mrb[0].mxu0
  %v595 = vadd.f32 0.0, %v594
  %596 = vdwg.mxu0
  %597 = vmatprep.subr.mxu0 %v34
  %598 = vmatpush1.msra.mxu0 %v33
  %599 = vmatprep.subr.mxu0 0.0
  %600 = vmatpush1.msra.mxu0 0.0
  %601 = vmatprep.subr.mxu0 0.0
  %602 = vmatpush1.msra.mxu0 0.0
  %603 = vmatprep.subr.mxu0 0.0
  %604 = vmatpush1.msra.mxu0 0.0
  %605 = vmatprep.subr.mxu0 0.0
  %606 = vmatpush1.msra.mxu0 0.0
  %607 = vmatprep.subr.mxu0 0.0
  %608 = vmatpush1.msra.mxu0 0.0
  %609 = vmatprep.subr.mxu0 0.0
  %610 = vmatpush1.msra.mxu0 0.0
  %611 = vmatprep.subr.mxu0 0.0
  %612 = vmatpush1.msra.mxu0 0.0
  %613 = vmatprep.subr.mxu0 0.0
  %614 = vmatpush1.msra.mxu0 0.0
  %615 = vmatprep.subr.mxu0 0.0
  %616 = vmatpush1.msra.mxu0 0.0
  %617 = vmatprep.subr.mxu0 0.0
  %618 = vmatpush1.msra.mxu0 0.0
  %619 = vmatprep.subr.mxu0 0.0
  %620 = vmatpush1.msra.mxu0 0.0
  %621 = vmatprep.subr.mxu0 0.0
  %622 = vmatpush1.msra.mxu0 0.0
  %623 = vmatprep.subr.mxu0 0.0
  %624 = vmatpush1.msra.mxu0 0.0
  %625 = vmatprep.subr.mxu0 0.0
  %626 = vmatpush1.msra.mxu0 0.0
  %627 = vmatprep.subr.mxu0 0.0
  %628 = vmatpush1.msra.mxu0 0.0
  %629 = vmatprep.subr.mxu0 0.0
  %630 = vmatpush1.msra.mxu0 0.0
  %631 = vmatprep.subr.mxu0 0.0
  %632 = vmatpush1.msra.mxu0 0.0
  %633 = vmatprep.subr.mxu0 0.0
  %634 = vmatpush1.msra.mxu0 0.0
  %635 = vmatprep.subr.mxu0 0.0
  %636 = vmatpush1.msra.mxu0 0.0
  %637 = vmatprep.subr.mxu0 0.0
  %638 = vmatpush1.msra.mxu0 0.0
  %639 = vmatprep.subr.mxu0 0.0
  %640 = vmatpush1.msra.mxu0 0.0
  %641 = vmatprep.subr.mxu0 0.0
  %642 = vmatpush1.msra.mxu0 0.0
  %643 = vmatprep.subr.mxu0 0.0
  %644 = vmatpush1.msra.mxu0 0.0
  %645 = vmatprep.subr.mxu0 0.0
  %646 = vmatpush1.msra.mxu0 0.0
  %647 = vmatprep.subr.mxu0 0.0
  %648 = vmatpush1.msra.mxu0 0.0
  %649 = vmatprep.subr.mxu0 0.0
  %650 = vmatpush1.msra.mxu0 0.0
  %651 = vmatprep.subr.mxu0 0.0
  %652 = vmatpush1.msra.mxu0 0.0
  %653 = vmatprep.subr.mxu0 0.0
  %654 = vmatpush1.msra.mxu0 0.0
  %655 = vmatprep.subr.mxu0 0.0
  %656 = vmatpush1.msra.mxu0 0.0
  %657 = vmatprep.subr.mxu0 0.0
  %658 = vmatpush1.msra.mxu0 0.0
  %659 = vmatprep.subr.mxu0 0.0
  %660 = vmatpush1.msra.mxu0 0.0
  %661 = vmatprep.mubr.f32.mxu0 0.0
  %662 = vmatmul.mubr.f32.gmra.mrb[0].mxu0 %v53
  %v663 = vpop.f32.mrb[0].mxu0
  %v664 = vadd.f32 0.0, %v663
  %v665 = vpop.f32.mrb[0].mxu0
  %v666 = vadd.f32 0.0, %v665
  %667 = vmatprep.mubr.f32.mxu0 0.0
  %668 = vmatmul.mubr.f32.gmra.mrb[0].mxu0 %v56
  %v669 = vpop.f32.mrb[0].mxu0
  %v670 = vadd.f32 0.0, %v669
  %v671 = vpop.f32.mrb[0].mxu0
  %v672 = vadd.f32 0.0, %v671
  %673 = vdwg.mxu0
  %674 = vmatprep.subr.mxu0 %v36
  %675 = vmatpush1.msra.mxu0 %v35
  %676 = vmatprep.subr.mxu0 0.0
  %677 = vmatpush1.msra.mxu0 0.0
  %678 = vmatprep.subr.mxu0 0.0
  %679 = vmatpush1.msra.mxu0 0.0
  %680 = vmatprep.subr.mxu0 0.0
  %681 = vmatpush1.msra.mxu0 0.0
  %682 = vmatprep.subr.mxu0 0.0
  %683 = vmatpush1.msra.mxu0 0.0
  %684 = vmatprep.subr.mxu0 0.0
  %685 = vmatpush1.msra.mxu0 0.0
  %686 = vmatprep.subr.mxu0 0.0
  %687 = vmatpush1.msra.mxu0 0.0
  %688 = vmatprep.subr.mxu0 0.0
  %689 = vmatpush1.msra.mxu0 0.0
  %690 = vmatprep.subr.mxu0 0.0
  %691 = vmatpush1.msra.mxu0 0.0
  %692 = vmatprep.subr.mxu0 0.0
  %693 = vmatpush1.msra.mxu0 0.0
  %694 = vmatprep.subr.mxu0 0.0
  %695 = vmatpush1.msra.mxu0 0.0
  %696 = vmatprep.subr.mxu0 0.0
  %697 = vmatpush1.msra.mxu0 0.0
  %698 = vmatprep.subr.mxu0 0.0
  %699 = vmatpush1.msra.mxu0 0.0
  %700 = vmatprep.subr.mxu0 0.0
  %701 = vmatpush1.msra.mxu0 0.0
  %702 = vmatprep.subr.mxu0 0.0
  %703 = vmatpush1.msra.mxu0 0.0
  %704 = vmatprep.subr.mxu0 0.0
  %705 = vmatpush1.msra.mxu0 0.0
  %706 = vmatprep.subr.mxu0 0.0
  %707 = vmatpush1.msra.mxu0 0.0
  %708 = vmatprep.subr.mxu0 0.0
  %709 = vmatpush1.msra.mxu0 0.0
  %710 = vmatprep.subr.mxu0 0.0
  %711 = vmatpush1.msra.mxu0 0.0
  %712 = vmatprep.subr.mxu0 0.0
  %713 = vmatpush1.msra.mxu0 0.0
  %714 = vmatprep.subr.mxu0 0.0
  %715 = vmatpush1.msra.mxu0 0.0
  %716 = vmatprep.subr.mxu0 0.0
  %717 = vmatpush1.msra.mxu0 0.0
  %718 = vmatprep.subr.mxu0 0.0
  %719 = vmatpush1.msra.mxu0 0.0
  %720 = vmatprep.subr.mxu0 0.0
  %721 = vmatpush1.msra.mxu0 0.0
  %722 = vmatprep.subr.mxu0 0.0
  %723 = vmatpush1.msra.mxu0 0.0
  %724 = vmatprep.subr.mxu0 0.0
  %725 = vmatpush1.msra.mxu0 0.0
  %726 = vmatprep.subr.mxu0 0.0
  %727 = vmatpush1.msra.mxu0 0.0
  %728 = vmatprep.subr.mxu0 0.0
  %729 = vmatpush1.msra.mxu0 0.0
  %730 = vmatprep.subr.mxu0 0.0
  %731 = vmatpush1.msra.mxu0 0.0
  %732 = vmatprep.subr.mxu0 0.0
  %733 = vmatpush1.msra.mxu0 0.0
  %734 = vmatprep.subr.mxu0 0.0
  %735 = vmatpush1.msra.mxu0 0.0
  %736 = vmatprep.subr.mxu0 0.0
  %737 = vmatpush1.msra.mxu0 0.0
  %738 = vmatprep.mubr.f32.mxu0 0.0
  %739 = vmatmul.mubr.f32.gmra.mrb[0].mxu0 %v53
  %v740 = vpop.f32.mrb[0].mxu0
  %v741 = vadd.f32 0.0, %v740
  %v742 = vpop.f32.mrb[0].mxu0
  %v743 = vadd.f32 0.0, %v742
  %744 = vmatprep.mubr.f32.mxu0 0.0
  %745 = vmatmul.mubr.f32.gmra.mrb[0].mxu0 %v56
  %v746 = vpop.f32.mrb[0].mxu0
  %v747 = vadd.f32 0.0, %v746
  %v748 = vpop.f32.mrb[0].mxu0
  %v749 = vadd.f32 0.0, %v748
  %750 = vdwg.mxu0
  %751 = vmatprep.subr.mxu0 %v38
  %752 = vmatpush1.msra.mxu0 %v37
  %753 = vmatprep.subr.mxu0 0.0
  %754 = vmatpush1.msra.mxu0 0.0
  %755 = vmatprep.subr.mxu0 0.0
  %756 = vmatpush1.msra.mxu0 0.0
  %757 = vmatprep.subr.mxu0 0.0
  %758 = vmatpush1.msra.mxu0 0.0
  %759 = vmatprep.subr.mxu0 0.0
  %760 = vmatpush1.msra.mxu0 0.0
  %761 = vmatprep.subr.mxu0 0.0
  %762 = vmatpush1.msra.mxu0 0.0
  %763 = vmatprep.subr.mxu0 0.0
  %764 = vmatpush1.msra.mxu0 0.0
  %765 = vmatprep.subr.mxu0 0.0
  %766 = vmatpush1.msra.mxu0 0.0
  %767 = vmatprep.subr.mxu0 0.0
  %768 = vmatpush1.msra.mxu0 0.0
  %769 = vmatprep.subr.mxu0 0.0
  %770 = vmatpush1.msra.mxu0 0.0
  %771 = vmatprep.subr.mxu0 0.0
  %772 = vmatpush1.msra.mxu0 0.0
  %773 = vmatprep.subr.mxu0 0.0
  %774 = vmatpush1.msra.mxu0 0.0
  %775 = vmatprep.subr.mxu0 0.0
  %776 = vmatpush1.msra.mxu0 0.0
  %777 = vmatprep.subr.mxu0 0.0
  %778 = vmatpush1.msra.mxu0 0.0
  %779 = vmatprep.subr.mxu0 0.0
  %780 = vmatpush1.msra.mxu0 0.0
  %781 = vmatprep.subr.mxu0 0.0
  %782 = vmatpush1.msra.mxu0 0.0
  %783 = vmatprep.subr.mxu0 0.0
  %784 = vmatpush1.msra.mxu0 0.0
  %785 = vmatprep.subr.mxu0 0.0
  %786 = vmatpush1.msra.mxu0 0.0
  %787 = vmatprep.subr.mxu0 0.0
  %788 = vmatpush1.msra.mxu0 0.0
  %789 = vmatprep.subr.mxu0 0.0
  %790 = vmatpush1.msra.mxu0 0.0
  %791 = vmatprep.subr.mxu0 0.0
  %792 = vmatpush1.msra.mxu0 0.0
  %793 = vmatprep.subr.mxu0 0.0
  %794 = vmatpush1.msra.mxu0 0.0
  %795 = vmatprep.subr.mxu0 0.0
  %796 = vmatpush1.msra.mxu0 0.0
  %797 = vmatprep.subr.mxu0 0.0
  %798 = vmatpush1.msra.mxu0 0.0
  %799 = vmatprep.subr.mxu0 0.0
  %800 = vmatpush1.msra.mxu0 0.0
  %801 = vmatprep.subr.mxu0 0.0
  %802 = vmatpush1.msra.mxu0 0.0
  %803 = vmatprep.subr.mxu0 0.0
  %804 = vmatpush1.msra.mxu0 0.0
  %805 = vmatprep.subr.mxu0 0.0
  %806 = vmatpush1.msra.mxu0 0.0
  %807 = vmatprep.subr.mxu0 0.0
  %808 = vmatpush1.msra.mxu0 0.0
  %809 = vmatprep.subr.mxu0 0.0
  %810 = vmatpush1.msra.mxu0 0.0
  %811 = vmatprep.subr.mxu0 0.0
  %812 = vmatpush1.msra.mxu0 0.0
  %813 = vmatprep.subr.mxu0 0.0
  %814 = vmatpush1.msra.mxu0 0.0
  %815 = vmatprep.mubr.f32.mxu0 0.0
  %816 = vmatmul.mubr.f32.gmra.mrb[0].mxu0 %v53
  %v817 = vpop.f32.mrb[0].mxu0
  %v818 = vadd.f32 0.0, %v817
  %v819 = vpop.f32.mrb[0].mxu0
  %v820 = vadd.f32 0.0, %v819
  %821 = vmatprep.mubr.f32.mxu0 0.0
  %822 = vmatmul.mubr.f32.gmra.mrb[0].mxu0 %v56
  %v823 = vpop.f32.mrb[0].mxu0
  %v824 = vadd.f32 0.0, %v823
  %v825 = vpop.f32.mrb[0].mxu0
  %v826 = vadd.f32 0.0, %v825
  %827 = vdwg.mxu0
  %828 = vmatprep.subr.mxu0 %v40
  %829 = vmatpush1.msra.mxu0 %v39
  %830 = vmatprep.subr.mxu0 0.0
  %831 = vmatpush1.msra.mxu0 0.0
  %832 = vmatprep.subr.mxu0 0.0
  %833 = vmatpush1.msra.mxu0 0.0
  %834 = vmatprep.subr.mxu0 0.0
  %835 = vmatpush1.msra.mxu0 0.0
  %836 = vmatprep.subr.mxu0 0.0
  %837 = vmatpush1.msra.mxu0 0.0
  %838 = vmatprep.subr.mxu0 0.0
  %839 = vmatpush1.msra.mxu0 0.0
  %840 = vmatprep.subr.mxu0 0.0
  %841 = vmatpush1.msra.mxu0 0.0
  %842 = vmatprep.subr.mxu0 0.0
  %843 = vmatpush1.msra.mxu0 0.0
  %844 = vmatprep.subr.mxu0 0.0
  %845 = vmatpush1.msra.mxu0 0.0
  %846 = vmatprep.subr.mxu0 0.0
  %847 = vmatpush1.msra.mxu0 0.0
  %848 = vmatprep.subr.mxu0 0.0
  %849 = vmatpush1.msra.mxu0 0.0
  %850 = vmatprep.subr.mxu0 0.0
  %851 = vmatpush1.msra.mxu0 0.0
  %852 = vmatprep.subr.mxu0 0.0
  %853 = vmatpush1.msra.mxu0 0.0
  %854 = vmatprep.subr.mxu0 0.0
  %855 = vmatpush1.msra.mxu0 0.0
  %856 = vmatprep.subr.mxu0 0.0
  %857 = vmatpush1.msra.mxu0 0.0
  %858 = vmatprep.subr.mxu0 0.0
  %859 = vmatpush1.msra.mxu0 0.0
  %860 = vmatprep.subr.mxu0 0.0
  %861 = vmatpush1.msra.mxu0 0.0
  %862 = vmatprep.subr.mxu0 0.0
  %863 = vmatpush1.msra.mxu0 0.0
  %864 = vmatprep.subr.mxu0 0.0
  %865 = vmatpush1.msra.mxu0 0.0
  %866 = vmatprep.subr.mxu0 0.0
  %867 = vmatpush1.msra.mxu0 0.0
  %868 = vmatprep.subr.mxu0 0.0
  %869 = vmatpush1.msra.mxu0 0.0
  %870 = vmatprep.subr.mxu0 0.0
  %871 = vmatpush1.msra.mxu0 0.0
  %872 = vmatprep.subr.mxu0 0.0
  %873 = vmatpush1.msra.mxu0 0.0
  %874 = vmatprep.subr.mxu0 0.0
  %875 = vmatpush1.msra.mxu0 0.0
  %876 = vmatprep.subr.mxu0 0.0
  %877 = vmatpush1.msra.mxu0 0.0
  %878 = vmatprep.subr.mxu0 0.0
  %879 = vmatpush1.msra.mxu0 0.0
  %880 = vmatprep.subr.mxu0 0.0
  %881 = vmatpush1.msra.mxu0 0.0
  %882 = vmatprep.subr.mxu0 0.0
  %883 = vmatpush1.msra.mxu0 0.0
  %884 = vmatprep.subr.mxu0 0.0
  %885 = vmatpush1.msra.mxu0 0.0
  %886 = vmatprep.subr.mxu0 0.0
  %887 = vmatpush1.msra.mxu0 0.0
  %888 = vmatprep.subr.mxu0 0.0
  %889 = vmatpush1.msra.mxu0 0.0
  %890 = vmatprep.subr.mxu0 0.0
  %891 = vmatpush1.msra.mxu0 0.0
  %892 = vmatprep.mubr.f32.mxu0 0.0
  %893 = vmatmul.mubr.f32.gmra.mrb[0].mxu0 %v53
  %v894 = vpop.f32.mrb[0].mxu0
  %v895 = vadd.f32 0.0, %v894
  %v896 = vpop.f32.mrb[0].mxu0
  %v897 = vadd.f32 0.0, %v896
  %898 = vmatprep.mubr.f32.mxu0 0.0
  %899 = vmatmul.mubr.f32.gmra.mrb[0].mxu0 %v56
  %v900 = vpop.f32.mrb[0].mxu0
  %v901 = vadd.f32 0.0, %v900
  %v902 = vpop.f32.mrb[0].mxu0
  %v903 = vadd.f32 0.0, %v902
  %904 = vdwg.mxu0
  %905 = vmatprep.subr.mxu0 %v42
  %906 = vmatpush1.msra.mxu0 %v41
  %907 = vmatprep.subr.mxu0 0.0
  %908 = vmatpush1.msra.mxu0 0.0
  %909 = vmatprep.subr.mxu0 0.0
  %910 = vmatpush1.msra.mxu0 0.0
  %911 = vmatprep.subr.mxu0 0.0
  %912 = vmatpush1.msra.mxu0 0.0
  %913 = vmatprep.subr.mxu0 0.0
  %914 = vmatpush1.msra.mxu0 0.0
  %915 = vmatprep.subr.mxu0 0.0
  %916 = vmatpush1.msra.mxu0 0.0
  %917 = vmatprep.subr.mxu0 0.0
  %918 = vmatpush1.msra.mxu0 0.0
  %919 = vmatprep.subr.mxu0 0.0
  %920 = vmatpush1.msra.mxu0 0.0
  %921 = vmatprep.subr.mxu0 0.0
  %922 = vmatpush1.msra.mxu0 0.0
  %923 = vmatprep.subr.mxu0 0.0
  %924 = vmatpush1.msra.mxu0 0.0
  %925 = vmatprep.subr.mxu0 0.0
  %926 = vmatpush1.msra.mxu0 0.0
  %927 = vmatprep.subr.mxu0 0.0
  %928 = vmatpush1.msra.mxu0 0.0
  %929 = vmatprep.subr.mxu0 0.0
  %930 = vmatpush1.msra.mxu0 0.0
  %931 = vmatprep.subr.mxu0 0.0
  %932 = vmatpush1.msra.mxu0 0.0
  %933 = vmatprep.subr.mxu0 0.0
  %934 = vmatpush1.msra.mxu0 0.0
  %935 = vmatprep.subr.mxu0 0.0
  %936 = vmatpush1.msra.mxu0 0.0
  %937 = vmatprep.subr.mxu0 0.0
  %938 = vmatpush1.msra.mxu0 0.0
  %939 = vmatprep.subr.mxu0 0.0
  %940 = vmatpush1.msra.mxu0 0.0
  %941 = vmatprep.subr.mxu0 0.0
  %942 = vmatpush1.msra.mxu0 0.0
  %943 = vmatprep.subr.mxu0 0.0
  %944 = vmatpush1.msra.mxu0 0.0
  %945 = vmatprep.subr.mxu0 0.0
  %946 = vmatpush1.msra.mxu0 0.0
  %947 = vmatprep.subr.mxu0 0.0
  %948 = vmatpush1.msra.mxu0 0.0
  %949 = vmatprep.subr.mxu0 0.0
  %950 = vmatpush1.msra.mxu0 0.0
  %951 = vmatprep.subr.mxu0 0.0
  %952 = vmatpush1.msra.mxu0 0.0
  %953 = vmatprep.subr.mxu0 0.0
  %954 = vmatpush1.msra.mxu0 0.0
  %955 = vmatprep.subr.mxu0 0.0
  %956 = vmatpush1.msra.mxu0 0.0
  %957 = vmatprep.subr.mxu0 0.0
  %958 = vmatpush1.msra.mxu0 0.0
  %959 = vmatprep.subr.mxu0 0.0
  %960 = vmatpush1.msra.mxu0 0.0
  %961 = vmatprep.subr.mxu0 0.0
  %962 = vmatpush1.msra.mxu0 0.0
  %963 = vmatprep.subr.mxu0 0.0
  %964 = vmatpush1.msra.mxu0 0.0
  %965 = vmatprep.subr.mxu0 0.0
  %966 = vmatpush1.msra.mxu0 0.0
  %967 = vmatprep.subr.mxu0 0.0
  %968 = vmatpush1.msra.mxu0 0.0
  %969 = vmatprep.mubr.f32.mxu0 0.0
  %970 = vmatmul.mubr.f32.gmra.mrb[0].mxu0 %v53
  %v971 = vpop.f32.mrb[0].mxu0
  %v972 = vadd.f32 0.0, %v971
  %v973 = vpop.f32.mrb[0].mxu0
  %v974 = vadd.f32 0.0, %v973
  %975 = vmatprep.mubr.f32.mxu0 0.0
  %976 = vmatmul.mubr.f32.gmra.mrb[0].mxu0 %v56
  %v977 = vpop.f32.mrb[0].mxu0
  %v978 = vadd.f32 0.0, %v977
  %v979 = vpop.f32.mrb[0].mxu0
  %v980 = vadd.f32 0.0, %v979
  %981 = vdwg.mxu0
  %982 = vmatprep.subr.mxu0 %v44
  %983 = vmatpush1.msra.mxu0 %v43
  %984 = vmatprep.subr.mxu0 0.0
  %985 = vmatpush1.msra.mxu0 0.0
  %986 = vmatprep.subr.mxu0 0.0
  %987 = vmatpush1.msra.mxu0 0.0
  %988 = vmatprep.subr.mxu0 0.0
  %989 = vmatpush1.msra.mxu0 0.0
  %990 = vmatprep.subr.mxu0 0.0
  %991 = vmatpush1.msra.mxu0 0.0
  %992 = vmatprep.subr.mxu0 0.0
  %993 = vmatpush1.msra.mxu0 0.0
  %994 = vmatprep.subr.mxu0 0.0
  %995 = vmatpush1.msra.mxu0 0.0
  %996 = vmatprep.subr.mxu0 0.0
  %997 = vmatpush1.msra.mxu0 0.0
  %998 = vmatprep.subr.mxu0 0.0
  %999 = vmatpush1.msra.mxu0 0.0
  %1000 = vmatprep.subr.mxu0 0.0
  %1001 = vmatpush1.msra.mxu0 0.0
  %1002 = vmatprep.subr.mxu0 0.0
  %1003 = vmatpush1.msra.mxu0 0.0
  %1004 = vmatprep.subr.mxu0 0.0
  %1005 = vmatpush1.msra.mxu0 0.0
  %1006 = vmatprep.subr.mxu0 0.0
  %1007 = vmatpush1.msra.mxu0 0.0
  %1008 = vmatprep.subr.mxu0 0.0
  %1009 = vmatpush1.msra.mxu0 0.0
  %1010 = vmatprep.subr.mxu0 0.0
  %1011 = vmatpush1.msra.mxu0 0.0
  %1012 = vmatprep.subr.mxu0 0.0
  %1013 = vmatpush1.msra.mxu0 0.0
  %1014 = vmatprep.subr.mxu0 0.0
  %1015 = vmatpush1.msra.mxu0 0.0
  %1016 = vmatprep.subr.mxu0 0.0
  %1017 = vmatpush1.msra.mxu0 0.0
  %1018 = vmatprep.subr.mxu0 0.0
  %1019 = vmatpush1.msra.mxu0 0.0
  %1020 = vmatprep.subr.mxu0 0.0
  %1021 = vmatpush1.msra.mxu0 0.0
  %1022 = vmatprep.subr.mxu0 0.0
  %1023 = vmatpush1.msra.mxu0 0.0
  %1024 = vmatprep.subr.mxu0 0.0
  %1025 = vmatpush1.msra.mxu0 0.0
  %1026 = vmatprep.subr.mxu0 0.0
  %1027 = vmatpush1.msra.mxu0 0.0
  %1028 = vmatprep.subr.mxu0 0.0
  %1029 = vmatpush1.msra.mxu0 0.0
  %1030 = vmatprep.subr.mxu0 0.0
  %1031 = vmatpush1.msra.mxu0 0.0
  %1032 = vmatprep.subr.mxu0 0.0
  %1033 = vmatpush1.msra.mxu0 0.0
  %1034 = vmatprep.subr.mxu0 0.0
  %1035 = vmatpush1.msra.mxu0 0.0
  %1036 = vmatprep.subr.mxu0 0.0
  %1037 = vmatpush1.msra.mxu0 0.0
  %1038 = vmatprep.subr.mxu0 0.0
  %1039 = vmatpush1.msra.mxu0 0.0
  %1040 = vmatprep.subr.mxu0 0.0
  %1041 = vmatpush1.msra.mxu0 0.0
  %1042 = vmatprep.subr.mxu0 0.0
  %1043 = vmatpush1.msra.mxu0 0.0
  %1044 = vmatprep.subr.mxu0 0.0
  %1045 = vmatpush1.msra.mxu0 0.0
  %1046 = vmatprep.mubr.f32.mxu0 0.0
  %1047 = vmatmul.mubr.f32.gmra.mrb[0].mxu0 %v53
  %v1048 = vpop.f32.mrb[0].mxu0
  %v1049 = vadd.f32 0.0, %v1048
  %v1050 = vpop.f32.mrb[0].mxu0
  %v1051 = vadd.f32 0.0, %v1050
  %1052 = vmatprep.mubr.f32.mxu0 0.0
  %1053 = vmatmul.mubr.f32.gmra.mrb[0].mxu0 %v56
  %v1054 = vpop.f32.mrb[0].mxu0
  %v1055 = vadd.f32 0.0, %v1054
  %v1056 = vpop.f32.mrb[0].mxu0
  %v1057 = vadd.f32 0.0, %v1056
  %1058 = vdwg.mxu0
  %1059 = vmatprep.subr.mxu0 %v46
  %1060 = vmatpush1.msra.mxu0 %v45
  %1061 = vmatprep.subr.mxu0 0.0
  %1062 = vmatpush1.msra.mxu0 0.0
  %1063 = vmatprep.subr.mxu0 0.0
  %1064 = vmatpush1.msra.mxu0 0.0
  %1065 = vmatprep.subr.mxu0 0.0
  %1066 = vmatpush1.msra.mxu0 0.0
  %1067 = vmatprep.subr.mxu0 0.0
  %1068 = vmatpush1.msra.mxu0 0.0
  %1069 = vmatprep.subr.mxu0 0.0
  %1070 = vmatpush1.msra.mxu0 0.0
  %1071 = vmatprep.subr.mxu0 0.0
  %1072 = vmatpush1.msra.mxu0 0.0
  %1073 = vmatprep.subr.mxu0 0.0
  %1074 = vmatpush1.msra.mxu0 0.0
  %1075 = vmatprep.subr.mxu0 0.0
  %1076 = vmatpush1.msra.mxu0 0.0
  %1077 = vmatprep.subr.mxu0 0.0
  %1078 = vmatpush1.msra.mxu0 0.0
  %1079 = vmatprep.subr.mxu0 0.0
  %1080 = vmatpush1.msra.mxu0 0.0
  %1081 = vmatprep.subr.mxu0 0.0
  %1082 = vmatpush1.msra.mxu0 0.0
  %1083 = vmatprep.subr.mxu0 0.0
  %1084 = vmatpush1.msra.mxu0 0.0
  %1085 = vmatprep.subr.mxu0 0.0
  %1086 = vmatpush1.msra.mxu0 0.0
  %1087 = vmatprep.subr.mxu0 0.0
  %1088 = vmatpush1.msra.mxu0 0.0
  %1089 = vmatprep.subr.mxu0 0.0
  %1090 = vmatpush1.msra.mxu0 0.0
  %1091 = vmatprep.subr.mxu0 0.0
  %1092 = vmatpush1.msra.mxu0 0.0
  %1093 = vmatprep.subr.mxu0 0.0
  %1094 = vmatpush1.msra.mxu0 0.0
  %1095 = vmatprep.subr.mxu0 0.0
  %1096 = vmatpush1.msra.mxu0 0.0
  %1097 = vmatprep.subr.mxu0 0.0
  %1098 = vmatpush1.msra.mxu0 0.0
  %1099 = vmatprep.subr.mxu0 0.0
  %1100 = vmatpush1.msra.mxu0 0.0
  %1101 = vmatprep.subr.mxu0 0.0
  %1102 = vmatpush1.msra.mxu0 0.0
  %1103 = vmatprep.subr.mxu0 0.0
  %1104 = vmatpush1.msra.mxu0 0.0
  %1105 = vmatprep.subr.mxu0 0.0
  %1106 = vmatpush1.msra.mxu0 0.0
  %1107 = vmatprep.subr.mxu0 0.0
  %1108 = vmatpush1.msra.mxu0 0.0
  %1109 = vmatprep.subr.mxu0 0.0
  %1110 = vmatpush1.msra.mxu0 0.0
  %1111 = vmatprep.subr.mxu0 0.0
  %1112 = vmatpush1.msra.mxu0 0.0
  %1113 = vmatprep.subr.mxu0 0.0
  %1114 = vmatpush1.msra.mxu0 0.0
  %1115 = vmatprep.subr.mxu0 0.0
  %1116 = vmatpush1.msra.mxu0 0.0
  %1117 = vmatprep.subr.mxu0 0.0
  %1118 = vmatpush1.msra.mxu0 0.0
  %1119 = vmatprep.subr.mxu0 0.0
  %1120 = vmatpush1.msra.mxu0 0.0
  %1121 = vmatprep.subr.mxu0 0.0
  %1122 = vmatpush1.msra.mxu0 0.0
  %1123 = vmatprep.mubr.f32.mxu0 0.0
  %1124 = vmatmul.mubr.f32.gmra.mrb[0].mxu0 %v53
  %v1125 = vpop.f32.mrb[0].mxu0
  %v1126 = vadd.f32 0.0, %v1125
  %v1127 = vpop.f32.mrb[0].mxu0
  %v1128 = vadd.f32 0.0, %v1127
  %1129 = vmatprep.mubr.f32.mxu0 0.0
  %1130 = vmatmul.mubr.f32.gmra.mrb[0].mxu0 %v56
  %v1131 = vpop.f32.mrb[0].mxu0
  %v1132 = vadd.f32 0.0, %v1131
  %v1133 = vpop.f32.mrb[0].mxu0
  %v1134 = vadd.f32 0.0, %v1133
  %1135 = vdwg.mxu0
  %1136 = vmatprep.subr.mxu0 %v48
  %1137 = vmatpush1.msra.mxu0 %v47
  %1138 = vmatprep.subr.mxu0 0.0
  %1139 = vmatpush1.msra.mxu0 0.0
  %1140 = vmatprep.subr.mxu0 0.0
  %1141 = vmatpush1.msra.mxu0 0.0
  %1142 = vmatprep.subr.mxu0 0.0
  %1143 = vmatpush1.msra.mxu0 0.0
  %1144 = vmatprep.subr.mxu0 0.0
  %1145 = vmatpush1.msra.mxu0 0.0
  %1146 = vmatprep.subr.mxu0 0.0
  %1147 = vmatpush1.msra.mxu0 0.0
  %1148 = vmatprep.subr.mxu0 0.0
  %1149 = vmatpush1.msra.mxu0 0.0
  %1150 = vmatprep.subr.mxu0 0.0
  %1151 = vmatpush1.msra.mxu0 0.0
  %1152 = vmatprep.subr.mxu0 0.0
  %1153 = vmatpush1.msra.mxu0 0.0
  %1154 = vmatprep.subr.mxu0 0.0
  %1155 = vmatpush1.msra.mxu0 0.0
  %1156 = vmatprep.subr.mxu0 0.0
  %1157 = vmatpush1.msra.mxu0 0.0
  %1158 = vmatprep.subr.mxu0 0.0
  %1159 = vmatpush1.msra.mxu0 0.0
  %1160 = vmatprep.subr.mxu0 0.0
  %1161 = vmatpush1.msra.mxu0 0.0
  %1162 = vmatprep.subr.mxu0 0.0
  %1163 = vmatpush1.msra.mxu0 0.0
  %1164 = vmatprep.subr.mxu0 0.0
  %1165 = vmatpush1.msra.mxu0 0.0
  %1166 = vmatprep.subr.mxu0 0.0
  %1167 = vmatpush1.msra.mxu0 0.0
  %1168 = vmatprep.subr.mxu0 0.0
  %1169 = vmatpush1.msra.mxu0 0.0
  %1170 = vmatprep.subr.mxu0 0.0
  %1171 = vmatpush1.msra.mxu0 0.0
  %1172 = vmatprep.subr.mxu0 0.0
  %1173 = vmatpush1.msra.mxu0 0.0
  %1174 = vmatprep.subr.mxu0 0.0
  %1175 = vmatpush1.msra.mxu0 0.0
  %1176 = vmatprep.subr.mxu0 0.0
  %1177 = vmatpush1.msra.mxu0 0.0
  %1178 = vmatprep.subr.mxu0 0.0
  %1179 = vmatpush1.msra.mxu0 0.0
  %1180 = vmatprep.subr.mxu0 0.0
  %1181 = vmatpush1.msra.mxu0 0.0
  %1182 = vmatprep.subr.mxu0 0.0
  %1183 = vmatpush1.msra.mxu0 0.0
  %1184 = vmatprep.subr.mxu0 0.0
  %1185 = vmatpush1.msra.mxu0 0.0
  %1186 = vmatprep.subr.mxu0 0.0
  %1187 = vmatpush1.msra.mxu0 0.0
  %1188 = vmatprep.subr.mxu0 0.0
  %1189 = vmatpush1.msra.mxu0 0.0
  %1190 = vmatprep.subr.mxu0 0.0
  %1191 = vmatpush1.msra.mxu0 0.0
  %1192 = vmatprep.subr.mxu0 0.0
  %1193 = vmatpush1.msra.mxu0 0.0
  %1194 = vmatprep.subr.mxu0 0.0
  %1195 = vmatpush1.msra.mxu0 0.0
  %1196 = vmatprep.subr.mxu0 0.0
  %1197 = vmatpush1.msra.mxu0 0.0
  %1198 = vmatprep.subr.mxu0 0.0
  %1199 = vmatpush1.msra.mxu0 0.0
  %1200 = vmatprep.mubr.f32.mxu0 0.0
  %1201 = vmatmul.mubr.f32.gmra.mrb[0].mxu0 %v53
  %v1202 = vpop.f32.mrb[0].mxu0
  %v1203 = vadd.f32 0.0, %v1202
  %v1204 = vpop.f32.mrb[0].mxu0
  %v1205 = vadd.f32 0.0, %v1204
  %1206 = vmatprep.mubr.f32.mxu0 0.0
  %1207 = vmatmul.mubr.f32.gmra.mrb[0].mxu0 %v56
  %v1208 = vpop.f32.mrb[0].mxu0
  %v1209 = vadd.f32 0.0, %v1208
  %v1210 = vpop.f32.mrb[0].mxu0
  %v1211 = vadd.f32 0.0, %v1210
  %1212 = vdwg.mxu0
  %1213 = vmatprep.subr.mxu0 %v50
  %1214 = vmatpush1.msra.mxu0 %v49
  %1215 = vmatprep.subr.mxu0 0.0
  %1216 = vmatpush1.msra.mxu0 0.0
  %1217 = vmatprep.subr.mxu0 0.0
  %1218 = vmatpush1.msra.mxu0 0.0
  %1219 = vmatprep.subr.mxu0 0.0
  %1220 = vmatpush1.msra.mxu0 0.0
  %1221 = vmatprep.subr.mxu0 0.0
  %1222 = vmatpush1.msra.mxu0 0.0
  %1223 = vmatprep.subr.mxu0 0.0
  %1224 = vmatpush1.msra.mxu0 0.0
  %1225 = vmatprep.subr.mxu0 0.0
  %1226 = vmatpush1.msra.mxu0 0.0
  %1227 = vmatprep.subr.mxu0 0.0
  %1228 = vmatpush1.msra.mxu0 0.0
  %1229 = vmatprep.subr.mxu0 0.0
  %1230 = vmatpush1.msra.mxu0 0.0
  %1231 = vmatprep.subr.mxu0 0.0
  %1232 = vmatpush1.msra.mxu0 0.0
  %1233 = vmatprep.subr.mxu0 0.0
  %1234 = vmatpush1.msra.mxu0 0.0
  %1235 = vmatprep.subr.mxu0 0.0
  %1236 = vmatpush1.msra.mxu0 0.0
  %1237 = vmatprep.subr.mxu0 0.0
  %1238 = vmatpush1.msra.mxu0 0.0
  %1239 = vmatprep.subr.mxu0 0.0
  %1240 = vmatpush1.msra.mxu0 0.0
  %1241 = vmatprep.subr.mxu0 0.0
  %1242 = vmatpush1.msra.mxu0 0.0
  %1243 = vmatprep.subr.mxu0 0.0
  %1244 = vmatpush1.msra.mxu0 0.0
  %1245 = vmatprep.subr.mxu0 0.0
  %1246 = vmatpush1.msra.mxu0 0.0
  %1247 = vmatprep.subr.mxu0 0.0
  %1248 = vmatpush1.msra.mxu0 0.0
  %1249 = vmatprep.subr.mxu0 0.0
  %1250 = vmatpush1.msra.mxu0 0.0
  %1251 = vmatprep.subr.mxu0 0.0
  %1252 = vmatpush1.msra.mxu0 0.0
  %1253 = vmatprep.subr.mxu0 0.0
  %1254 = vmatpush1.msra.mxu0 0.0
  %1255 = vmatprep.subr.mxu0 0.0
  %1256 = vmatpush1.msra.mxu0 0.0
  %1257 = vmatprep.subr.mxu0 0.0
  %1258 = vmatpush1.msra.mxu0 0.0
  %1259 = vmatprep.subr.mxu0 0.0
  %1260 = vmatpush1.msra.mxu0 0.0
  %1261 = vmatprep.subr.mxu0 0.0
  %1262 = vmatpush1.msra.mxu0 0.0
  %1263 = vmatprep.subr.mxu0 0.0
  %1264 = vmatpush1.msra.mxu0 0.0
  %1265 = vmatprep.subr.mxu0 0.0
  %1266 = vmatpush1.msra.mxu0 0.0
  %1267 = vmatprep.subr.mxu0 0.0
  %1268 = vmatpush1.msra.mxu0 0.0
  %1269 = vmatprep.subr.mxu0 0.0
  %1270 = vmatpush1.msra.mxu0 0.0
  %1271 = vmatprep.subr.mxu0 0.0
  %1272 = vmatpush1.msra.mxu0 0.0
  %1273 = vmatprep.subr.mxu0 0.0
  %1274 = vmatpush1.msra.mxu0 0.0
  %1275 = vmatprep.subr.mxu0 0.0
  %1276 = vmatpush1.msra.mxu0 0.0
  %1277 = vmatprep.mubr.f32.mxu0 0.0
  %1278 = vmatmul.mubr.f32.gmra.mrb[0].mxu0 %v53
  %v1279 = vpop.f32.mrb[0].mxu0
  %v1280 = vadd.f32 0.0, %v1279
  %v1281 = vpop.f32.mrb[0].mxu0
  %v1282 = vadd.f32 0.0, %v1281
  %1283 = vmatprep.mubr.f32.mxu0 0.0
  %1284 = vmatmul.mubr.f32.gmra.mrb[0].mxu0 %v56
  %v1285 = vpop.f32.mrb[0].mxu0
  %v1286 = vadd.f32 0.0, %v1285
  %v1287 = vpop.f32.mrb[0].mxu0
  %v1288 = vadd.f32 0.0, %v1287
  %1289 = vdwg.mxu0
  %v1290 = vld [vmem:[%s2] sm:$0xff]
  %v1291 = vld [vmem:[%s2 + $0x8] sm:$0xff]
  %1293 = vset.pattern.permute.xlu0 0
  %1294 = vperm.xlu0 %1293, %v1290
  %v1295 = vpop.permute.xlu0 %1294
  %1298 = vset.pattern.permute.xlu0 0
  %1299 = vperm.xlu0 %1298, %v1291
  %v1300 = vpop.permute.xlu0 %1299
  %v1302 = vmul.f32 %v125, %v1295
  %v1303 = vmul.f32 %v127, %v1295
  %v1304 = vmul.f32 %v202, %v1295
  %v1305 = vmul.f32 %v204, %v1295
  %v1306 = vmul.f32 %v279, %v1295
  %v1307 = vmul.f32 %v281, %v1295
  %v1308 = vmul.f32 %v356, %v1295
  %v1309 = vmul.f32 %v358, %v1295
  %v1310 = vmul.f32 %v433, %v1295
  %v1311 = vmul.f32 %v435, %v1295
  %v1312 = vmul.f32 %v510, %v1295
  %v1313 = vmul.f32 %v512, %v1295
  %v1314 = vmul.f32 %v587, %v1295
  %v1315 = vmul.f32 %v589, %v1295
  %v1316 = vmul.f32 %v664, %v1295
  %v1317 = vmul.f32 %v666, %v1295
  %v1318 = vmul.f32 %v741, %v1295
  %v1319 = vmul.f32 %v743, %v1295
  %v1320 = vmul.f32 %v818, %v1295
  %v1321 = vmul.f32 %v820, %v1295
  %v1322 = vmul.f32 %v895, %v1295
  %v1323 = vmul.f32 %v897, %v1295
  %v1324 = vmul.f32 %v972, %v1295
  %v1325 = vmul.f32 %v974, %v1295
  %v1326 = vmul.f32 %v1049, %v1295
  %v1327 = vmul.f32 %v1051, %v1295
  %v1328 = vmul.f32 %v1126, %v1295
  %v1329 = vmul.f32 %v1128, %v1295
  %v1330 = vmul.f32 %v1203, %v1295
  %v1331 = vmul.f32 %v1205, %v1295
  %v1332 = vmul.f32 %v1280, %v1295
  %v1333 = vmul.f32 %v1282, %v1295
  %v1334 = vmul.f32 %v131, %v1300
  %v1335 = vmul.f32 %v133, %v1300
  %v1336 = vmul.f32 %v208, %v1300
  %v1337 = vmul.f32 %v210, %v1300
  %v1338 = vmul.f32 %v285, %v1300
  %v1339 = vmul.f32 %v287, %v1300
  %v1340 = vmul.f32 %v362, %v1300
  %v1341 = vmul.f32 %v364, %v1300
  %v1342 = vmul.f32 %v439, %v1300
  %v1343 = vmul.f32 %v441, %v1300
  %v1344 = vmul.f32 %v516, %v1300
  %v1345 = vmul.f32 %v518, %v1300
  %v1346 = vmul.f32 %v593, %v1300
  %v1347 = vmul.f32 %v595, %v1300
  %v1348 = vmul.f32 %v670, %v1300
  %v1349 = vmul.f32 %v672, %v1300
  %v1350 = vmul.f32 %v747, %v1300
  %v1351 = vmul.f32 %v749, %v1300
  %v1352 = vmul.f32 %v824, %v1300
  %v1353 = vmul.f32 %v826, %v1300
  %v1354 = vmul.f32 %v901, %v1300
  %v1355 = vmul.f32 %v903, %v1300
  %v1356 = vmul.f32 %v978, %v1300
  %v1357 = vmul.f32 %v980, %v1300
  %v1358 = vmul.f32 %v1055, %v1300
  %v1359 = vmul.f32 %v1057, %v1300
  %v1360 = vmul.f32 %v1132, %v1300
  %v1361 = vmul.f32 %v1134, %v1300
  %v1362 = vmul.f32 %v1209, %v1300
  %v1363 = vmul.f32 %v1211, %v1300
  %v1364 = vmul.f32 %v1286, %v1300
  %v1365 = vmul.f32 %v1288, %v1300
  %v1366 = vld [vmem:[%s3] sm:$0xff]
  %v1367 = vld [vmem:[%s3 + $0x8] sm:$0xff]
  %1369 = vset.pattern.permute.xlu0 0
  %1370 = vperm.xlu0 %1369, %v1366
  %v1371 = vpop.permute.xlu0 %1370
  %1374 = vset.pattern.permute.xlu0 0
  %1375 = vperm.xlu0 %1374, %v1367
  %v1376 = vpop.permute.xlu0 %1375
  %v1378 = vadd.f32 %v1302, %v1371
  %v1379 = vadd.f32 %v1303, %v1371
  %v1380 = vadd.f32 %v1304, %v1371
  %v1381 = vadd.f32 %v1305, %v1371
  %v1382 = vadd.f32 %v1306, %v1371
  %v1383 = vadd.f32 %v1307, %v1371
  %v1384 = vadd.f32 %v1308, %v1371
  %v1385 = vadd.f32 %v1309, %v1371
  %v1386 = vadd.f32 %v1310, %v1371
  %v1387 = vadd.f32 %v1311, %v1371
  %v1388 = vadd.f32 %v1312, %v1371
  %v1389 = vadd.f32 %v1313, %v1371
  %v1390 = vadd.f32 %v1314, %v1371
  %v1391 = vadd.f32 %v1315, %v1371
  %v1392 = vadd.f32 %v1316, %v1371
  %v1393 = vadd.f32 %v1317, %v1371
  %v1394 = vadd.f32 %v1318, %v1371
  %v1395 = vadd.f32 %v1319, %v1371
  %v1396 = vadd.f32 %v1320, %v1371
  %v1397 = vadd.f32 %v1321, %v1371
  %v1398 = vadd.f32 %v1322, %v1371
  %v1399 = vadd.f32 %v1323, %v1371
  %v1400 = vadd.f32 %v1324, %v1371
  %v1401 = vadd.f32 %v1325, %v1371
  %v1402 = vadd.f32 %v1326, %v1371
  %v1403 = vadd.f32 %v1327, %v1371
  %v1404 = vadd.f32 %v1328, %v1371
  %v1405 = vadd.f32 %v1329, %v1371
  %v1406 = vadd.f32 %v1330, %v1371
  %v1407 = vadd.f32 %v1331, %v1371
  %v1408 = vadd.f32 %v1332, %v1371
  %v1409 = vadd.f32 %v1333, %v1371
  %v1410 = vadd.f32 %v1334, %v1376
  %v1411 = vadd.f32 %v1335, %v1376
  %v1412 = vadd.f32 %v1336, %v1376
  %v1413 = vadd.f32 %v1337, %v1376
  %v1414 = vadd.f32 %v1338, %v1376
  %v1415 = vadd.f32 %v1339, %v1376
  %v1416 = vadd.f32 %v1340, %v1376
  %v1417 = vadd.f32 %v1341, %v1376
  %v1418 = vadd.f32 %v1342, %v1376
  %v1419 = vadd.f32 %v1343, %v1376
  %v1420 = vadd.f32 %v1344, %v1376
  %v1421 = vadd.f32 %v1345, %v1376
  %v1422 = vadd.f32 %v1346, %v1376
  %v1423 = vadd.f32 %v1347, %v1376
  %v1424 = vadd.f32 %v1348, %v1376
  %v1425 = vadd.f32 %v1349, %v1376
  %v1426 = vadd.f32 %v1350, %v1376
  %v1427 = vadd.f32 %v1351, %v1376
  %v1428 = vadd.f32 %v1352, %v1376
  %v1429 = vadd.f32 %v1353, %v1376
  %v1430 = vadd.f32 %v1354, %v1376
  %v1431 = vadd.f32 %v1355, %v1376
  %v1432 = vadd.f32 %v1356, %v1376
  %v1433 = vadd.f32 %v1357, %v1376
  %v1434 = vadd.f32 %v1358, %v1376
  %v1435 = vadd.f32 %v1359, %v1376
  %v1436 = vadd.f32 %v1360, %v1376
  %v1437 = vadd.f32 %v1361, %v1376
  %v1438 = vadd.f32 %v1362, %v1376
  %v1439 = vadd.f32 %v1363, %v1376
  %v1440 = vadd.f32 %v1364, %v1376
  %v1441 = vadd.f32 %v1365, %v1376
  %v1442 = vmax.f32 %v1378, 0.0
  %v1443 = vmax.f32 %v1379, 0.0
  %v1444 = vmax.f32 %v1380, 0.0
  %v1445 = vmax.f32 %v1381, 0.0
  %v1446 = vmax.f32 %v1382, 0.0
  %v1447 = vmax.f32 %v1383, 0.0
  %v1448 = vmax.f32 %v1384, 0.0
  %v1449 = vmax.f32 %v1385, 0.0
  %v1450 = vmax.f32 %v1386, 0.0
  %v1451 = vmax.f32 %v1387, 0.0
  %v1452 = vmax.f32 %v1388, 0.0
  %v1453 = vmax.f32 %v1389, 0.0
  %v1454 = vmax.f32 %v1390, 0.0
  %v1455 = vmax.f32 %v1391, 0.0
  %v1456 = vmax.f32 %v1392, 0.0
  %v1457 = vmax.f32 %v1393, 0.0
  %v1458 = vmax.f32 %v1394, 0.0
  %v1459 = vmax.f32 %v1395, 0.0
  %v1460 = vmax.f32 %v1396, 0.0
  %v1461 = vmax.f32 %v1397, 0.0
  %v1462 = vmax.f32 %v1398, 0.0
  %v1463 = vmax.f32 %v1399, 0.0
  %v1464 = vmax.f32 %v1400, 0.0
  %v1465 = vmax.f32 %v1401, 0.0
  %v1466 = vmax.f32 %v1402, 0.0
  %v1467 = vmax.f32 %v1403, 0.0
  %v1468 = vmax.f32 %v1404, 0.0
  %v1469 = vmax.f32 %v1405, 0.0
  %v1470 = vmax.f32 %v1406, 0.0
  %v1471 = vmax.f32 %v1407, 0.0
  %v1472 = vmax.f32 %v1408, 0.0
  %v1473 = vmax.f32 %v1409, 0.0
  %v1474 = vmax.f32 %v1410, 0.0
  %v1475 = vmax.f32 %v1411, 0.0
  %v1476 = vmax.f32 %v1412, 0.0
  %v1477 = vmax.f32 %v1413, 0.0
  %v1478 = vmax.f32 %v1414, 0.0
  %v1479 = vmax.f32 %v1415, 0.0
  %v1480 = vmax.f32 %v1416, 0.0
  %v1481 = vmax.f32 %v1417, 0.0
  %v1482 = vmax.f32 %v1418, 0.0
  %v1483 = vmax.f32 %v1419, 0.0
  %v1484 = vmax.f32 %v1420, 0.0
  %v1485 = vmax.f32 %v1421, 0.0
  %v1486 = vmax.f32 %v1422, 0.0
  %v1487 = vmax.f32 %v1423, 0.0
  %v1488 = vmax.f32 %v1424, 0.0
  %v1489 = vmax.f32 %v1425, 0.0
  %v1490 = vmax.f32 %v1426, 0.0
  %v1491 = vmax.f32 %v1427, 0.0
  %v1492 = vmax.f32 %v1428, 0.0
  %v1493 = vmax.f32 %v1429, 0.0
  %v1494 = vmax.f32 %v1430, 0.0
  %v1495 = vmax.f32 %v1431, 0.0
  %v1496 = vmax.f32 %v1432, 0.0
  %v1497 = vmax.f32 %v1433, 0.0
  %v1498 = vmax.f32 %v1434, 0.0
  %v1499 = vmax.f32 %v1435, 0.0
  %v1500 = vmax.f32 %v1436, 0.0
  %v1501 = vmax.f32 %v1437, 0.0
  %v1502 = vmax.f32 %v1438, 0.0
  %v1503 = vmax.f32 %v1439, 0.0
  %v1504 = vmax.f32 %v1440, 0.0
  %v1505 = vmax.f32 %v1441, 0.0
  %1506 = vst [vmem:[%s4] sm:$0xff] %v1442
  %1507 = vst [vmem:[%s4 + $0x8] sm:$0xff] %v1443
  %1508 = vst [vmem:[%s4 + $0x10] sm:$0xff] %v1444
  %1509 = vst [vmem:[%s4 + $0x18] sm:$0xff] %v1445
  %1510 = vst [vmem:[%s4 + $0x20] sm:$0xff] %v1446
  %1511 = vst [vmem:[%s4 + $0x28] sm:$0xff] %v1447
  %1512 = vst [vmem:[%s4 + $0x30] sm:$0xff] %v1448
  %1513 = vst [vmem:[%s4 + $0x38] sm:$0xff] %v1449
  %1514 = vst [vmem:[%s4 + $0x40] sm:$0xff] %v1450
  %1515 = vst [vmem:[%s4 + $0x48] sm:$0xff] %v1451
  %1516 = vst [vmem:[%s4 + $0x50] sm:$0xff] %v1452
  %1517 = vst [vmem:[%s4 + $0x58] sm:$0xff] %v1453
  %1518 = vst [vmem:[%s4 + $0x60] sm:$0xff] %v1454
  %1519 = vst [vmem:[%s4 + $0x68] sm:$0xff] %v1455
  %1520 = vst [vmem:[%s4 + $0x70] sm:$0xff] %v1456
  %1521 = vst [vmem:[%s4 + $0x78] sm:$0xff] %v1457
  %1522 = vst [vmem:[%s4 + $0x80] sm:$0xff] %v1458
  %1523 = vst [vmem:[%s4 + $0x88] sm:$0xff] %v1459
  %1524 = vst [vmem:[%s4 + $0x90] sm:$0xff] %v1460
  %1525 = vst [vmem:[%s4 + $0x98] sm:$0xff] %v1461
  %1526 = vst [vmem:[%s4 + $0xa0] sm:$0xff] %v1462
  %1527 = vst [vmem:[%s4 + $0xa8] sm:$0xff] %v1463
  %1528 = vst [vmem:[%s4 + $0xb0] sm:$0xff] %v1464
  %1529 = vst [vmem:[%s4 + $0xb8] sm:$0xff] %v1465
  %1530 = vst [vmem:[%s4 + $0xc0] sm:$0xff] %v1466
  %1531 = vst [vmem:[%s4 + $0xc8] sm:$0xff] %v1467
  %1532 = vst [vmem:[%s4 + $0xd0] sm:$0xff] %v1468
  %1533 = vst [vmem:[%s4 + $0xd8] sm:$0xff] %v1469
  %1534 = vst [vmem:[%s4 + $0xe0] sm:$0xff] %v1470
  %1535 = vst [vmem:[%s4 + $0xe8] sm:$0xff] %v1471
  %1536 = vst [vmem:[%s4 + $0xf0] sm:$0xff] %v1472
  %1537 = vst [vmem:[%s4 + $0xf8] sm:$0xff] %v1473
  %1538 = vst [vmem:[%s4 + $0x100] sm:$0xff] %v1474
  %1539 = vst [vmem:[%s4 + $0x108] sm:$0xff] %v1475
  %1540 = vst [vmem:[%s4 + $0x110] sm:$0xff] %v1476
  %1541 = vst [vmem:[%s4 + $0x118] sm:$0xff] %v1477
  %1542 = vst [vmem:[%s4 + $0x120] sm:$0xff] %v1478
  %1543 = vst [vmem:[%s4 + $0x128] sm:$0xff] %v1479
  %1544 = vst [vmem:[%s4 + $0x130] sm:$0xff] %v1480
  %1545 = vst [vmem:[%s4 + $0x138] sm:$0xff] %v1481
  %1546 = vst [vmem:[%s4 + $0x140] sm:$0xff] %v1482
  %1547 = vst [vmem:[%s4 + $0x148] sm:$0xff] %v1483
  %1548 = vst [vmem:[%s4 + $0x150] sm:$0xff] %v1484
  %1549 = vst [vmem:[%s4 + $0x158] sm:$0xff] %v1485
  %1550 = vst [vmem:[%s4 + $0x160] sm:$0xff] %v1486
  %1551 = vst [vmem:[%s4 + $0x168] sm:$0xff] %v1487
  %1552 = vst [vmem:[%s4 + $0x170] sm:$0xff] %v1488
  %1553 = vst [vmem:[%s4 + $0x178] sm:$0xff] %v1489
  %1554 = vst [vmem:[%s4 + $0x180] sm:$0xff] %v1490
  %1555 = vst [vmem:[%s4 + $0x188] sm:$0xff] %v1491
  %1556 = vst [vmem:[%s4 + $0x190] sm:$0xff] %v1492
  %1557 = vst [vmem:[%s4 + $0x198] sm:$0xff] %v1493
  %1558 = vst [vmem:[%s4 + $0x1a0] sm:$0xff] %v1494
  %1559 = vst [vmem:[%s4 + $0x1a8] sm:$0xff] %v1495
  %1560 = vst [vmem:[%s4 + $0x1b0] sm:$0xff] %v1496
  %1561 = vst [vmem:[%s4 + $0x1b8] sm:$0xff] %v1497
  %1562 = vst [vmem:[%s4 + $0x1c0] sm:$0xff] %v1498
  %1563 = vst [vmem:[%s4 + $0x1c8] sm:$0xff] %v1499
  %1564 = vst [vmem:[%s4 + $0x1d0] sm:$0xff] %v1500
  %1565 = vst [vmem:[%s4 + $0x1d8] sm:$0xff] %v1501
  %1566 = vst [vmem:[%s4 + $0x1e0] sm:$0xff] %v1502
  %1567 = vst [vmem:[%s4 + $0x1e8] sm:$0xff] %v1503
  %1568 = vst [vmem:[%s4 + $0x1f0] sm:$0xff] %v1504
  %1569 = vst [vmem:[%s4 + $0x1f8] sm:$0xff] %v1505
  // Predicated region
  $region18: #{conv2plus1d_forward.4} parent=0 // pred_check
    _
  $region19: #{conv2plus1d_forward.4} parent=0 // pred_check_branch
    %1571 = sbr.rel (0) target = $region21
  $region20: #{conv2plus1d_forward.4} parent=0 // pred_region
    _
  $region21: #{conv2plus1d_forward.4} parent=0 // pred_fallthru
    _
  // Predicated region
  $region22: #{conv2plus1d_forward.4} parent=0 // pred_check
    _
  $region23: #{conv2plus1d_forward.4} parent=0 // pred_check_branch
    %1573 = sbr.rel (0) target = $region25
  $region24: #{conv2plus1d_forward.4} parent=0 // pred_region
    _
  $region25: #{conv2plus1d_forward.4} parent=0 // pred_fallthru
    _

// kernel: conv2plus1d_forward.5
$region0: #{conv2plus1d_forward.5}
  #allocation0 [shape = 'u32[]', space=smem, size = 0x4, offset = 0x4, fixed_abs, tag = 'smem constant byte address 0x4 - core index']
  #allocation1 [shape = 'u32[144,128]{1,0:T(1,128)}', space=vmem, size = 0x12000, scoped, tag = 'internal scratch']
  %s0 = inlined_call_operand.vmem [shape: f32[100,4096], index: 0, kind: input, shape index: {}]
  %s1 = inlined_call_operand.vmem [shape: f32[36,4096], index: 1, kind: input, shape index: {}]
  %s2 = inlined_call_operand.vmem [shape: f32[16,100], index: 2, kind: input, shape index: {}]
  %s3 = inlined_call_operand.vmem [shape: f32[8,36], index: 3, kind: input, shape index: {}]
  %s4 = inlined_call_operand.vmem [shape: f32[16,1], index: 4, kind: input, shape index: {}]
  %s5 = inlined_call_operand.vmem [shape: f32[16,1], index: 5, kind: input, shape index: {}]
  %s6 = inlined_call_operand.vmem [shape: f32[8,1], index: 6, kind: input, shape index: {}]
  %s7 = inlined_call_operand.vmem [shape: f32[8,1], index: 7, kind: input, shape index: {}]
  %s8 = inlined_call_operand.vmem [shape: f32[16,4096], index: 8, kind: output, shape index: {0}]
  %s9 = inlined_call_operand.vmem [shape: f32[8,4096], index: 9, kind: output, shape index: {1}]
  %10 = xla_tuple %s8, %s9
  %s11 = sld [smem:[#allocation0]]
  $region50: #{conv2plus1d_forward.5} parent=0
    _
  %s13 = ssub.s32 1, %s11
  %s14 = scalar_select 0, %s13, %s11
  // Predicated region
  $region2: #{conv2plus1d_forward.5} parent=0 // pred_check
    _
  $region3: #{conv2plus1d_forward.5} parent=0 // pred_check_branch
    %16 = sbr.rel (0) target = $region5
  $region4: #{conv2plus1d_forward.5} parent=0 // pred_region
    _
  $region5: #{conv2plus1d_forward.5} parent=0 // pred_fallthru
    _
  // Predicated region
  $region6: #{conv2plus1d_forward.5} parent=0 // pred_check
    _
  $region7: #{conv2plus1d_forward.5} parent=0 // pred_check_branch
    %18 = sbr.rel (0) target = $region9
  $region8: #{conv2plus1d_forward.5} parent=0 // pred_region
    _
  $region9: #{conv2plus1d_forward.5} parent=0 // pred_fallthru
    _
  // Predicated region
  $region10: #{conv2plus1d_forward.5} parent=0 // pred_check
    _
  $region11: #{conv2plus1d_forward.5} parent=0 // pred_check_branch
    %20 = sbr.rel (0) target = $region13
  $region12: #{conv2plus1d_forward.5} parent=0 // pred_region
    _
  $region13: #{conv2plus1d_forward.5} parent=0 // pred_fallthru
    _
  // Predicated region
  $region14: #{conv2plus1d_forward.5} parent=0 // pred_check
    _
  $region15: #{conv2plus1d_forward.5} parent=0 // pred_check_branch
    %22 = sbr.rel (0) target = $region17
  $region16: #{conv2plus1d_forward.5} parent=0 // pred_region
    _
  $region17: #{conv2plus1d_forward.5} parent=0 // pred_fallthru
    _
  // Predicated region
  $region18: #{conv2plus1d_forward.5} parent=0 // pred_check
    _
  $region19: #{conv2plus1d_forward.5} parent=0 // pred_check_branch
    %24 = sbr.rel (0) target = $region21
  $region20: #{conv2plus1d_forward.5} parent=0 // pred_region
    _
  $region21: #{conv2plus1d_forward.5} parent=0 // pred_fallthru
    _
  // Predicated region
  $region22: #{conv2plus1d_forward.5} parent=0 // pred_check
    _
  $region23: #{conv2plus1d_forward.5} parent=0 // pred_check_branch
    %26 = sbr.rel (0) target = $region25
  $region24: #{conv2plus1d_forward.5} parent=0 // pred_region
    _
  $region25: #{conv2plus1d_forward.5} parent=0 // pred_fallthru
    _
  // Predicated region
  $region26: #{conv2plus1d_forward.5} parent=0 // pred_check
    _
  $region27: #{conv2plus1d_forward.5} parent=0 // pred_check_branch
    %28 = sbr.rel (0) target = $region29
  $region28: #{conv2plus1d_forward.5} parent=0 // pred_region
    _
  $region29: #{conv2plus1d_forward.5} parent=0 // pred_fallthru
    _
  // Predicated region
  $region30: #{conv2plus1d_forward.5} parent=0 // pred_check
    _
  $region31: #{conv2plus1d_forward.5} parent=0 // pred_check_branch
    %30 = sbr.rel (0) target = $region33
  $region32: #{conv2plus1d_forward.5} parent=0 // pred_region
    _
  $region33: #{conv2plus1d_forward.5} parent=0 // pred_fallthru
    _
  %v31 = vld [vmem:[%s2] sm:$0xff]
  %v32 = vld [vmem:[%s2 + $0x8] sm:$0xff]
  %v33 = vld [vmem:[%s0] sm:$0xff]
  %v34 = vld [vmem:[%s0 + $0x8] sm:$0xff]
  %v35 = vld [vmem:[%s0 + $0x10] sm:$0xff]
  %v36 = vld [vmem:[%s0 + $0x18] sm:$0xff]
  %v37 = vld [vmem:[%s0 + $0x20] sm:$0xff]
  %v38 = vld [vmem:[%s0 + $0x28] sm:$0xff]
  %v39 = vld [vmem:[%s0 + $0x30] sm:$0xff]
  %v40 = vld [vmem:[%s0 + $0x38] sm:$0xff]
  %v41 = vld [vmem:[%s0 + $0x40] sm:$0xff]
  %v42 = vld [vmem:[%s0 + $0x48] sm:$0xff]
  %v43 = vld [vmem:[%s0 + $0x50] sm:$0xff]
  %v44 = vld [vmem:[%s0 + $0x58] sm:$0xff]
  %v45 = vld [vmem:[%s0 + $0x60] sm:$0xff]
  %v46 = vld [vmem:[%s0 + $0x68] sm:$0xff]
  %v47 = vld [vmem:[%s0 + $0x70] sm:$0xff]
  %v48 = vld [vmem:[%s0 + $0x78] sm:$0xff]
  %v49 = vld [vmem:[%s0 + $0x80] sm:$0xff]
  %v50 = vld [vmem:[%s0 + $0x88] sm:$0xff]
  %v51 = vld [vmem:[%s0 + $0x90] sm:$0xff]
  %v52 = vld [vmem:[%s0 + $0x98] sm:$0xff]
  %v53 = vld [vmem:[%s0 + $0xa0] sm:$0xff]
  %v54 = vld [vmem:[%s0 + $0xa8] sm:$0xff]
  %v55 = vld [vmem:[%s0 + $0xb0] sm:$0xff]
  %v56 = vld [vmem:[%s0 + $0xb8] sm:$0xff]
  %v57 = vld [vmem:[%s0 + $0xc0] sm:$0xff]
  %v58 = vld [vmem:[%s0 + $0xc8] sm:$0xff]
  %v59 = vld [vmem:[%s0 + $0xd0] sm:$0xff]
  %v60 = vld [vmem:[%s0 + $0xd8] sm:$0xff]
  %v61 = vld [vmem:[%s0 + $0xe0] sm:$0xff]
  %v62 = vld [vmem:[%s0 + $0xe8] sm:$0xff]
  %v63 = vld [vmem:[%s0 + $0xf0] sm:$0xff]
  %v64 = vld [vmem:[%s0 + $0xf8] sm:$0xff]
  %v65 = vld [vmem:[%s0 + $0x100] sm:$0xff]
  %v66 = vld [vmem:[%s0 + $0x108] sm:$0xff]
  %v67 = vld [vmem:[%s0 + $0x110] sm:$0xff]
  %v68 = vld [vmem:[%s0 + $0x118] sm:$0xff]
  %v69 = vld [vmem:[%s0 + $0x120] sm:$0xff]
  %v70 = vld [vmem:[%s0 + $0x128] sm:$0xff]
  %v71 = vld [vmem:[%s0 + $0x130] sm:$0xff]
  %v72 = vld [vmem:[%s0 + $0x138] sm:$0xff]
  %v73 = vld [vmem:[%s0 + $0x140] sm:$0xff]
  %v74 = vld [vmem:[%s0 + $0x148] sm:$0xff]
  %v75 = vld [vmem:[%s0 + $0x150] sm:$0xff]
  %v76 = vld [vmem:[%s0 + $0x158] sm:$0xff]
  %v77 = vld [vmem:[%s0 + $0x160] sm:$0xff]
  %v78 = vld [vmem:[%s0 + $0x168] sm:$0xff]
  %v79 = vld [vmem:[%s0 + $0x170] sm:$0xff]
  %v80 = vld [vmem:[%s0 + $0x178] sm:$0xff]
  %v81 = vld [vmem:[%s0 + $0x180] sm:$0xff]
  %v82 = vld [vmem:[%s0 + $0x188] sm:$0xff]
  %v83 = vld [vmem:[%s0 + $0x190] sm:$0xff]
  %v84 = vld [vmem:[%s0 + $0x198] sm:$0xff]
  %v85 = vld [vmem:[%s0 + $0x1a0] sm:$0xff]
  %v86 = vld [vmem:[%s0 + $0x1a8] sm:$0xff]
  %v87 = vld [vmem:[%s0 + $0x1b0] sm:$0xff]
  %v88 = vld [vmem:[%s0 + $0x1b8] sm:$0xff]
  %v89 = vld [vmem:[%s0 + $0x1c0] sm:$0xff]
  %v90 = vld [vmem:[%s0 + $0x1c8] sm:$0xff]
  %v91 = vld [vmem:[%s0 + $0x1d0] sm:$0xff]
  %v92 = vld [vmem:[%s0 + $0x1d8] sm:$0xff]
  %v93 = vld [vmem:[%s0 + $0x1e0] sm:$0xff]
  %v94 = vld [vmem:[%s0 + $0x1e8] sm:$0xff]
  %v95 = vld [vmem:[%s0 + $0x1f0] sm:$0xff]
  %v96 = vld [vmem:[%s0 + $0x1f8] sm:$0xff]
  %v97 = vld [vmem:[%s0 + $0x200] sm:$0xff]
  %v98 = vld [vmem:[%s0 + $0x208] sm:$0xff]
  %v99 = vld [vmem:[%s0 + $0x210] sm:$0xff]
  %v100 = vld [vmem:[%s0 + $0x218] sm:$0xff]
  %v101 = vld [vmem:[%s0 + $0x220] sm:$0xff]
  %v102 = vld [vmem:[%s0 + $0x228] sm:$0xff]
  %v103 = vld [vmem:[%s0 + $0x230] sm:$0xff]
  %v104 = vld [vmem:[%s0 + $0x238] sm:$0xff]
  %v105 = vld [vmem:[%s0 + $0x240] sm:$0xff]
  %v106 = vld [vmem:[%s0 + $0x248] sm:$0xff]
  %v107 = vld [vmem:[%s0 + $0x250] sm:$0xff]
  %v108 = vld [vmem:[%s0 + $0x258] sm:$0xff]
  %v109 = vld [vmem:[%s0 + $0x260] sm:$0xff]
  %v110 = vld [vmem:[%s0 + $0x268] sm:$0xff]
  %v111 = vld [vmem:[%s0 + $0x270] sm:$0xff]
  %v112 = vld [vmem:[%s0 + $0x278] sm:$0xff]
  %v113 = vld [vmem:[%s0 + $0x280] sm:$0xff]
  %v114 = vld [vmem:[%s0 + $0x288] sm:$0xff]
  %v115 = vld [vmem:[%s0 + $0x290] sm:$0xff]
  %v116 = vld [vmem:[%s0 + $0x298] sm:$0xff]
  %v117 = vld [vmem:[%s0 + $0x2a0] sm:$0xff]
  %v118 = vld [vmem:[%s0 + $0x2a8] sm:$0xff]
  %v119 = vld [vmem:[%s0 + $0x2b0] sm:$0xff]
  %v120 = vld [vmem:[%s0 + $0x2b8] sm:$0xff]
  %v121 = vld [vmem:[%s0 + $0x2c0] sm:$0xff]
  %v122 = vld [vmem:[%s0 + $0x2c8] sm:$0xff]
  %v123 = vld [vmem:[%s0 + $0x2d0] sm:$0xff]
  %v124 = vld [vmem:[%s0 + $0x2d8] sm:$0xff]
  %v125 = vld [vmem:[%s0 + $0x2e0] sm:$0xff]
  %v126 = vld [vmem:[%s0 + $0x2e8] sm:$0xff]
  %v127 = vld [vmem:[%s0 + $0x2f0] sm:$0xff]
  %v128 = vld [vmem:[%s0 + $0x2f8] sm:$0xff]
  %v129 = vld [vmem:[%s0 + $0x300] sm:$0xff]
  %v130 = vld [vmem:[%s0 + $0x308] sm:$0xff]
  %v131 = vld [vmem:[%s0 + $0x310] sm:$0xff]
  %v132 = vld [vmem:[%s0 + $0x318] sm:$0xff]
  %v133 = vld [vmem:[%s0 + $0x320] sm:$0xff]
  %v134 = vld [vmem:[%s0 + $0x328] sm:$0xff]
  %v135 = vld [vmem:[%s0 + $0x330] sm:$0xff]
  %v136 = vld [vmem:[%s0 + $0x338] sm:$0xff]
  %v137 = vld [vmem:[%s0 + $0x340] sm:$0xff]
  %v138 = vld [vmem:[%s0 + $0x348] sm:$0xff]
  %v139 = vld [vmem:[%s0 + $0x350] sm:$0xff]
  %v140 = vld [vmem:[%s0 + $0x358] sm:$0xff]
  %v141 = vld [vmem:[%s0 + $0x360] sm:$0xff]
  %v142 = vld [vmem:[%s0 + $0x368] sm:$0xff]
  %v143 = vld [vmem:[%s0 + $0x370] sm:$0xff]
  %v144 = vld [vmem:[%s0 + $0x378] sm:$0xff]
  %v145 = vld [vmem:[%s0 + $0x380] sm:$0xff]
  %v146 = vld [vmem:[%s0 + $0x388] sm:$0xff]
  %v147 = vld [vmem:[%s0 + $0x390] sm:$0xff]
  %v148 = vld [vmem:[%s0 + $0x398] sm:$0xff]
  %v149 = vld [vmem:[%s0 + $0x3a0] sm:$0xff]
  %v150 = vld [vmem:[%s0 + $0x3a8] sm:$0xff]
  %v151 = vld [vmem:[%s0 + $0x3b0] sm:$0xff]
  %v152 = vld [vmem:[%s0 + $0x3b8] sm:$0xff]
  %v153 = vld [vmem:[%s0 + $0x3c0] sm:$0xff]
  %v154 = vld [vmem:[%s0 + $0x3c8] sm:$0xff]
  %v155 = vld [vmem:[%s0 + $0x3d0] sm:$0xff]
  %v156 = vld [vmem:[%s0 + $0x3d8] sm:$0xff]
  %v157 = vld [vmem:[%s0 + $0x3e0] sm:$0xff]
  %v158 = vld [vmem:[%s0 + $0x3e8] sm:$0xff]
  %v159 = vld [vmem:[%s0 + $0x3f0] sm:$0xff]
  %v160 = vld [vmem:[%s0 + $0x3f8] sm:$0xff]
  %v161 = vld [vmem:[%s0 + $0x400] sm:$0xff]
  %v162 = vld [vmem:[%s0 + $0x408] sm:$0xff]
  %v163 = vld [vmem:[%s0 + $0x410] sm:$0xff]
  %v164 = vld [vmem:[%s0 + $0x418] sm:$0xff]
  %v165 = vld [vmem:[%s0 + $0x420] sm:$0xff]
  %v166 = vld [vmem:[%s0 + $0x428] sm:$0xff]
  %v167 = vld [vmem:[%s0 + $0x430] sm:$0xff]
  %v168 = vld [vmem:[%s0 + $0x438] sm:$0xff]
  %v169 = vld [vmem:[%s0 + $0x440] sm:$0xff]
  %v170 = vld [vmem:[%s0 + $0x448] sm:$0xff]
  %v171 = vld [vmem:[%s0 + $0x450] sm:$0xff]
  %v172 = vld [vmem:[%s0 + $0x458] sm:$0xff]
  %v173 = vld [vmem:[%s0 + $0x460] sm:$0xff]
  %v174 = vld [vmem:[%s0 + $0x468] sm:$0xff]
  %v175 = vld [vmem:[%s0 + $0x470] sm:$0xff]
  %v176 = vld [vmem:[%s0 + $0x478] sm:$0xff]
  %v177 = vld [vmem:[%s0 + $0x480] sm:$0xff]
  %v178 = vld [vmem:[%s0 + $0x488] sm:$0xff]
  %v179 = vld [vmem:[%s0 + $0x490] sm:$0xff]
  %v180 = vld [vmem:[%s0 + $0x498] sm:$0xff]
  %v181 = vld [vmem:[%s0 + $0x4a0] sm:$0xff]
  %v182 = vld [vmem:[%s0 + $0x4a8] sm:$0xff]
  %v183 = vld [vmem:[%s0 + $0x4b0] sm:$0xff]
  %v184 = vld [vmem:[%s0 + $0x4b8] sm:$0xff]
  %v185 = vld [vmem:[%s0 + $0x4c0] sm:$0xff]
  %v186 = vld [vmem:[%s0 + $0x4c8] sm:$0xff]
  %v187 = vld [vmem:[%s0 + $0x4d0] sm:$0xff]
  %v188 = vld [vmem:[%s0 + $0x4d8] sm:$0xff]
  %v189 = vld [vmem:[%s0 + $0x4e0] sm:$0xff]
  %v190 = vld [vmem:[%s0 + $0x4e8] sm:$0xff]
  %v191 = vld [vmem:[%s0 + $0x4f0] sm:$0xff]
  %v192 = vld [vmem:[%s0 + $0x4f8] sm:$0xff]
  %v193 = vld [vmem:[%s0 + $0x500] sm:$0xff]
  %v194 = vld [vmem:[%s0 + $0x508] sm:$0xff]
  %v195 = vld [vmem:[%s0 + $0x510] sm:$0xff]
  %v196 = vld [vmem:[%s0 + $0x518] sm:$0xff]
  %v197 = vld [vmem:[%s0 + $0x520] sm:$0xff]
  %v198 = vld [vmem:[%s0 + $0x528] sm:$0xff]
  %v199 = vld [vmem:[%s0 + $0x530] sm:$0xff]
  %v200 = vld [vmem:[%s0 + $0x538] sm:$0xff]
  %v201 = vld [vmem:[%s0 + $0x540] sm:$0xff]
  %v202 = vld [vmem:[%s0 + $0x548] sm:$0xff]
  %v203 = vld [vmem:[%s0 + $0x550] sm:$0xff]
  %v204 = vld [vmem:[%s0 + $0x558] sm:$0xff]
  %v205 = vld [vmem:[%s0 + $0x560] sm:$0xff]
  %v206 = vld [vmem:[%s0 + $0x568] sm:$0xff]
  %v207 = vld [vmem:[%s0 + $0x570] sm:$0xff]
  %v208 = vld [vmem:[%s0 + $0x578] sm:$0xff]
  %v209 = vld [vmem:[%s0 + $0x580] sm:$0xff]
  %v210 = vld [vmem:[%s0 + $0x588] sm:$0xff]
  %v211 = vld [vmem:[%s0 + $0x590] sm:$0xff]
  %v212 = vld [vmem:[%s0 + $0x598] sm:$0xff]
  %v213 = vld [vmem:[%s0 + $0x5a0] sm:$0xff]
  %v214 = vld [vmem:[%s0 + $0x5a8] sm:$0xff]
  %v215 = vld [vmem:[%s0 + $0x5b0] sm:$0xff]
  %v216 = vld [vmem:[%s0 + $0x5b8] sm:$0xff]
  %v217 = vld [vmem:[%s0 + $0x5c0] sm:$0xff]
  %v218 = vld [vmem:[%s0 + $0x5c8] sm:$0xff]
  %v219 = vld [vmem:[%s0 + $0x5d0] sm:$0xff]
  %v220 = vld [vmem:[%s0 + $0x5d8] sm:$0xff]
  %v221 = vld [vmem:[%s0 + $0x5e0] sm:$0xff]
  %v222 = vld [vmem:[%s0 + $0x5e8] sm:$0xff]
  %v223 = vld [vmem:[%s0 + $0x5f0] sm:$0xff]
  %v224 = vld [vmem:[%s0 + $0x5f8] sm:$0xff]
  %v225 = vld [vmem:[%s0 + $0x600] sm:$0xff]
  %v226 = vld [vmem:[%s0 + $0x608] sm:$0xff]
  %v227 = vld [vmem:[%s0 + $0x610] sm:$0xff]
  %v228 = vld [vmem:[%s0 + $0x618] sm:$0xff]
  %v229 = vld [vmem:[%s0 + $0x620] sm:$0xff]
  %v230 = vld [vmem:[%s0 + $0x628] sm:$0xff]
  %v231 = vld [vmem:[%s0 + $0x630] sm:$0xff]
  %v232 = vld [vmem:[%s0 + $0x638] sm:$0xff]
  %v233 = vld [vmem:[%s0 + $0x640] sm:$0xff]
  %v234 = vld [vmem:[%s0 + $0x648] sm:$0xff]
  %v235 = vld [vmem:[%s0 + $0x650] sm:$0xff]
  %v236 = vld [vmem:[%s0 + $0x658] sm:$0xff]
  %v237 = vld [vmem:[%s0 + $0x660] sm:$0xff]
  %v238 = vld [vmem:[%s0 + $0x668] sm:$0xff]
  %v239 = vld [vmem:[%s0 + $0x670] sm:$0xff]
  %v240 = vld [vmem:[%s0 + $0x678] sm:$0xff]
  %v241 = vld [vmem:[%s0 + $0x680] sm:$0xff]
  %v242 = vld [vmem:[%s0 + $0x688] sm:$0xff]
  %v243 = vld [vmem:[%s0 + $0x690] sm:$0xff]
  %v244 = vld [vmem:[%s0 + $0x698] sm:$0xff]
  %v245 = vld [vmem:[%s0 + $0x6a0] sm:$0xff]
  %v246 = vld [vmem:[%s0 + $0x6a8] sm:$0xff]
  %v247 = vld [vmem:[%s0 + $0x6b0] sm:$0xff]
  %v248 = vld [vmem:[%s0 + $0x6b8] sm:$0xff]
  %v249 = vld [vmem:[%s0 + $0x6c0] sm:$0xff]
  %v250 = vld [vmem:[%s0 + $0x6c8] sm:$0xff]
  %v251 = vld [vmem:[%s0 + $0x6d0] sm:$0xff]
  %v252 = vld [vmem:[%s0 + $0x6d8] sm:$0xff]
  %v253 = vld [vmem:[%s0 + $0x6e0] sm:$0xff]
  %v254 = vld [vmem:[%s0 + $0x6e8] sm:$0xff]
  %v255 = vld [vmem:[%s0 + $0x6f0] sm:$0xff]
  %v256 = vld [vmem:[%s0 + $0x6f8] sm:$0xff]
  %v257 = vld [vmem:[%s0 + $0x700] sm:$0xff]
  %v258 = vld [vmem:[%s0 + $0x708] sm:$0xff]
  %v259 = vld [vmem:[%s0 + $0x710] sm:$0xff]
  %v260 = vld [vmem:[%s0 + $0x718] sm:$0xff]
  %v261 = vld [vmem:[%s0 + $0x720] sm:$0xff]
  %v262 = vld [vmem:[%s0 + $0x728] sm:$0xff]
  %v263 = vld [vmem:[%s0 + $0x730] sm:$0xff]
  %v264 = vld [vmem:[%s0 + $0x738] sm:$0xff]
  %v265 = vld [vmem:[%s0 + $0x740] sm:$0xff]
  %v266 = vld [vmem:[%s0 + $0x748] sm:$0xff]
  %v267 = vld [vmem:[%s0 + $0x750] sm:$0xff]
  %v268 = vld [vmem:[%s0 + $0x758] sm:$0xff]
  %v269 = vld [vmem:[%s0 + $0x760] sm:$0xff]
  %v270 = vld [vmem:[%s0 + $0x768] sm:$0xff]
  %v271 = vld [vmem:[%s0 + $0x770] sm:$0xff]
  %v272 = vld [vmem:[%s0 + $0x778] sm:$0xff]
  %v273 = vld [vmem:[%s0 + $0x780] sm:$0xff]
  %v274 = vld [vmem:[%s0 + $0x788] sm:$0xff]
  %v275 = vld [vmem:[%s0 + $0x790] sm:$0xff]
  %v276 = vld [vmem:[%s0 + $0x798] sm:$0xff]
  %v277 = vld [vmem:[%s0 + $0x7a0] sm:$0xff]
  %v278 = vld [vmem:[%s0 + $0x7a8] sm:$0xff]
  %v279 = vld [vmem:[%s0 + $0x7b0] sm:$0xff]
  %v280 = vld [vmem:[%s0 + $0x7b8] sm:$0xff]
  %v281 = vld [vmem:[%s0 + $0x7c0] sm:$0xff]
  %v282 = vld [vmem:[%s0 + $0x7c8] sm:$0xff]
  %v283 = vld [vmem:[%s0 + $0x7d0] sm:$0xff]
  %v284 = vld [vmem:[%s0 + $0x7d8] sm:$0xff]
  %v285 = vld [vmem:[%s0 + $0x7e0] sm:$0xff]
  %v286 = vld [vmem:[%s0 + $0x7e8] sm:$0xff]
  %v287 = vld [vmem:[%s0 + $0x7f0] sm:$0xff]
  %v288 = vld [vmem:[%s0 + $0x7f8] sm:$0xff]
  %v289 = vld [vmem:[%s0 + $0x800] sm:$0xff]
  %v290 = vld [vmem:[%s0 + $0x808] sm:$0xff]
  %v291 = vld [vmem:[%s0 + $0x810] sm:$0xff]
  %v292 = vld [vmem:[%s0 + $0x818] sm:$0xff]
  %v293 = vld [vmem:[%s0 + $0x820] sm:$0xff]
  %v294 = vld [vmem:[%s0 + $0x828] sm:$0xff]
  %v295 = vld [vmem:[%s0 + $0x830] sm:$0xff]
  %v296 = vld [vmem:[%s0 + $0x838] sm:$0xff]
  %v297 = vld [vmem:[%s0 + $0x840] sm:$0xff]
  %v298 = vld [vmem:[%s0 + $0x848] sm:$0xff]
  %v299 = vld [vmem:[%s0 + $0x850] sm:$0xff]
  %v300 = vld [vmem:[%s0 + $0x858] sm:$0xff]
  %v301 = vld [vmem:[%s0 + $0x860] sm:$0xff]
  %v302 = vld [vmem:[%s0 + $0x868] sm:$0xff]
  %v303 = vld [vmem:[%s0 + $0x870] sm:$0xff]
  %v304 = vld [vmem:[%s0 + $0x878] sm:$0xff]
  %v305 = vld [vmem:[%s0 + $0x880] sm:$0xff]
  %v306 = vld [vmem:[%s0 + $0x888] sm:$0xff]
  %v307 = vld [vmem:[%s0 + $0x890] sm:$0xff]
  %v308 = vld [vmem:[%s0 + $0x898] sm:$0xff]
  %v309 = vld [vmem:[%s0 + $0x8a0] sm:$0xff]
  %v310 = vld [vmem:[%s0 + $0x8a8] sm:$0xff]
  %v311 = vld [vmem:[%s0 + $0x8b0] sm:$0xff]
  %v312 = vld [vmem:[%s0 + $0x8b8] sm:$0xff]
  %v313 = vld [vmem:[%s0 + $0x8c0] sm:$0xff]
  %v314 = vld [vmem:[%s0 + $0x8c8] sm:$0xff]
  %v315 = vld [vmem:[%s0 + $0x8d0] sm:$0xff]
  %v316 = vld [vmem:[%s0 + $0x8d8] sm:$0xff]
  %v317 = vld [vmem:[%s0 + $0x8e0] sm:$0xff]
  %v318 = vld [vmem:[%s0 + $0x8e8] sm:$0xff]
  %v319 = vld [vmem:[%s0 + $0x8f0] sm:$0xff]
  %v320 = vld [vmem:[%s0 + $0x8f8] sm:$0xff]
  %v321 = vld [vmem:[%s0 + $0x900] sm:$0xff]
  %v322 = vld [vmem:[%s0 + $0x908] sm:$0xff]
  %v323 = vld [vmem:[%s0 + $0x910] sm:$0xff]
  %v324 = vld [vmem:[%s0 + $0x918] sm:$0xff]
  %v325 = vld [vmem:[%s0 + $0x920] sm:$0xff]
  %v326 = vld [vmem:[%s0 + $0x928] sm:$0xff]
  %v327 = vld [vmem:[%s0 + $0x930] sm:$0xff]
  %v328 = vld [vmem:[%s0 + $0x938] sm:$0xff]
  %v329 = vld [vmem:[%s0 + $0x940] sm:$0xff]
  %v330 = vld [vmem:[%s0 + $0x948] sm:$0xff]
  %v331 = vld [vmem:[%s0 + $0x950] sm:$0xff]
  %v332 = vld [vmem:[%s0 + $0x958] sm:$0xff]
  %v333 = vld [vmem:[%s0 + $0x960] sm:$0xff]
  %v334 = vld [vmem:[%s0 + $0x968] sm:$0xff]
  %v335 = vld [vmem:[%s0 + $0x970] sm:$0xff]
  %v336 = vld [vmem:[%s0 + $0x978] sm:$0xff]
  %v337 = vld [vmem:[%s0 + $0x980] sm:$0xff]
  %v338 = vld [vmem:[%s0 + $0x988] sm:$0xff]
  %v339 = vld [vmem:[%s0 + $0x990] sm:$0xff]
  %v340 = vld [vmem:[%s0 + $0x998] sm:$0xff]
  %v341 = vld [vmem:[%s0 + $0x9a0] sm:$0xff]
  %v342 = vld [vmem:[%s0 + $0x9a8] sm:$0xff]
  %v343 = vld [vmem:[%s0 + $0x9b0] sm:$0xff]
  %v344 = vld [vmem:[%s0 + $0x9b8] sm:$0xff]
  %v345 = vld [vmem:[%s0 + $0x9c0] sm:$0xff]
  %v346 = vld [vmem:[%s0 + $0x9c8] sm:$0xff]
  %v347 = vld [vmem:[%s0 + $0x9d0] sm:$0xff]
  %v348 = vld [vmem:[%s0 + $0x9d8] sm:$0xff]
  %v349 = vld [vmem:[%s0 + $0x9e0] sm:$0xff]
  %v350 = vld [vmem:[%s0 + $0x9e8] sm:$0xff]
  %v351 = vld [vmem:[%s0 + $0x9f0] sm:$0xff]
  %v352 = vld [vmem:[%s0 + $0x9f8] sm:$0xff]
  %v353 = vld [vmem:[%s0 + $0xa00] sm:$0xff]
  %v354 = vld [vmem:[%s0 + $0xa08] sm:$0xff]
  %v355 = vld [vmem:[%s0 + $0xa10] sm:$0xff]
  %v356 = vld [vmem:[%s0 + $0xa18] sm:$0xff]
  %v357 = vld [vmem:[%s0 + $0xa20] sm:$0xff]
  %v358 = vld [vmem:[%s0 + $0xa28] sm:$0xff]
  %v359 = vld [vmem:[%s0 + $0xa30] sm:$0xff]
  %v360 = vld [vmem:[%s0 + $0xa38] sm:$0xff]
  %v361 = vld [vmem:[%s0 + $0xa40] sm:$0xff]
  %v362 = vld [vmem:[%s0 + $0xa48] sm:$0xff]
  %v363 = vld [vmem:[%s0 + $0xa50] sm:$0xff]
  %v364 = vld [vmem:[%s0 + $0xa58] sm:$0xff]
  %v365 = vld [vmem:[%s0 + $0xa60] sm:$0xff]
  %v366 = vld [vmem:[%s0 + $0xa68] sm:$0xff]
  %v367 = vld [vmem:[%s0 + $0xa70] sm:$0xff]
  %v368 = vld [vmem:[%s0 + $0xa78] sm:$0xff]
  %v369 = vld [vmem:[%s0 + $0xa80] sm:$0xff]
  %v370 = vld [vmem:[%s0 + $0xa88] sm:$0xff]
  %v371 = vld [vmem:[%s0 + $0xa90] sm:$0xff]
  %v372 = vld [vmem:[%s0 + $0xa98] sm:$0xff]
  %v373 = vld [vmem:[%s0 + $0xaa0] sm:$0xff]
  %v374 = vld [vmem:[%s0 + $0xaa8] sm:$0xff]
  %v375 = vld [vmem:[%s0 + $0xab0] sm:$0xff]
  %v376 = vld [vmem:[%s0 + $0xab8] sm:$0xff]
  %v377 = vld [vmem:[%s0 + $0xac0] sm:$0xff]
  %v378 = vld [vmem:[%s0 + $0xac8] sm:$0xff]
  %v379 = vld [vmem:[%s0 + $0xad0] sm:$0xff]
  %v380 = vld [vmem:[%s0 + $0xad8] sm:$0xff]
  %v381 = vld [vmem:[%s0 + $0xae0] sm:$0xff]
  %v382 = vld [vmem:[%s0 + $0xae8] sm:$0xff]
  %v383 = vld [vmem:[%s0 + $0xaf0] sm:$0xff]
  %v384 = vld [vmem:[%s0 + $0xaf8] sm:$0xff]
  %v385 = vld [vmem:[%s0 + $0xb00] sm:$0xff]
  %v386 = vld [vmem:[%s0 + $0xb08] sm:$0xff]
  %v387 = vld [vmem:[%s0 + $0xb10] sm:$0xff]
  %v388 = vld [vmem:[%s0 + $0xb18] sm:$0xff]
  %v389 = vld [vmem:[%s0 + $0xb20] sm:$0xff]
  %v390 = vld [vmem:[%s0 + $0xb28] sm:$0xff]
  %v391 = vld [vmem:[%s0 + $0xb30] sm:$0xff]
  %v392 = vld [vmem:[%s0 + $0xb38] sm:$0xff]
  %v393 = vld [vmem:[%s0 + $0xb40] sm:$0xff]
  %v394 = vld [vmem:[%s0 + $0xb48] sm:$0xff]
  %v395 = vld [vmem:[%s0 + $0xb50] sm:$0xff]
  %v396 = vld [vmem:[%s0 + $0xb58] sm:$0xff]
  %v397 = vld [vmem:[%s0 + $0xb60] sm:$0xff]
  %v398 = vld [vmem:[%s0 + $0xb68] sm:$0xff]
  %v399 = vld [vmem:[%s0 + $0xb70] sm:$0xff]
  %v400 = vld [vmem:[%s0 + $0xb78] sm:$0xff]
  %v401 = vld [vmem:[%s0 + $0xb80] sm:$0xff]
  %v402 = vld [vmem:[%s0 + $0xb88] sm:$0xff]
  %v403 = vld [vmem:[%s0 + $0xb90] sm:$0xff]
  %v404 = vld [vmem:[%s0 + $0xb98] sm:$0xff]
  %v405 = vld [vmem:[%s0 + $0xba0] sm:$0xff]
  %v406 = vld [vmem:[%s0 + $0xba8] sm:$0xff]
  %v407 = vld [vmem:[%s0 + $0xbb0] sm:$0xff]
  %v408 = vld [vmem:[%s0 + $0xbb8] sm:$0xff]
  %v409 = vld [vmem:[%s0 + $0xbc0] sm:$0xff]
  %v410 = vld [vmem:[%s0 + $0xbc8] sm:$0xff]
  %v411 = vld [vmem:[%s0 + $0xbd0] sm:$0xff]
  %v412 = vld [vmem:[%s0 + $0xbd8] sm:$0xff]
  %v413 = vld [vmem:[%s0 + $0xbe0] sm:$0xff]
  %v414 = vld [vmem:[%s0 + $0xbe8] sm:$0xff]
  %v415 = vld [vmem:[%s0 + $0xbf0] sm:$0xff]
  %v416 = vld [vmem:[%s0 + $0xbf8] sm:$0xff]
  %v417 = vld [vmem:[%s0 + $0xc00] sm:$0xf]
  %v418 = vld [vmem:[%s0 + $0xc08] sm:$0xf]
  %v419 = vld [vmem:[%s0 + $0xc10] sm:$0xf]
  %v420 = vld [vmem:[%s0 + $0xc18] sm:$0xf]
  %v421 = vld [vmem:[%s0 + $0xc20] sm:$0xf]
  %v422 = vld [vmem:[%s0 + $0xc28] sm:$0xf]
  %v423 = vld [vmem:[%s0 + $0xc30] sm:$0xf]
  %v424 = vld [vmem:[%s0 + $0xc38] sm:$0xf]
  %v425 = vld [vmem:[%s0 + $0xc40] sm:$0xf]
  %v426 = vld [vmem:[%s0 + $0xc48] sm:$0xf]
  %v427 = vld [vmem:[%s0 + $0xc50] sm:$0xf]
  %v428 = vld [vmem:[%s0 + $0xc58] sm:$0xf]
  %v429 = vld [vmem:[%s0 + $0xc60] sm:$0xf]
  %v430 = vld [vmem:[%s0 + $0xc68] sm:$0xf]
  %v431 = vld [vmem:[%s0 + $0xc70] sm:$0xf]
  %v432 = vld [vmem:[%s0 + $0xc78] sm:$0xf]
  %v433 = vld [vmem:[%s0 + $0xc80] sm:$0xf]
  %v434 = vld [vmem:[%s0 + $0xc88] sm:$0xf]
  %v435 = vld [vmem:[%s0 + $0xc90] sm:$0xf]
  %v436 = vld [vmem:[%s0 + $0xc98] sm:$0xf]
  %v437 = vld [vmem:[%s0 + $0xca0] sm:$0xf]
  %v438 = vld [vmem:[%s0 + $0xca8] sm:$0xf]
  %v439 = vld [vmem:[%s0 + $0xcb0] sm:$0xf]
  %v440 = vld [vmem:[%s0 + $0xcb8] sm:$0xf]
  %v441 = vld [vmem:[%s0 + $0xcc0] sm:$0xf]
  %v442 = vld [vmem:[%s0 + $0xcc8] sm:$0xf]
  %v443 = vld [vmem:[%s0 + $0xcd0] sm:$0xf]
  %v444 = vld [vmem:[%s0 + $0xcd8] sm:$0xf]
  %v445 = vld [vmem:[%s0 + $0xce0] sm:$0xf]
  %v446 = vld [vmem:[%s0 + $0xce8] sm:$0xf]
  %v447 = vld [vmem:[%s0 + $0xcf0] sm:$0xf]
  %v448 = vld [vmem:[%s0 + $0xcf8] sm:$0xf]
  %vm449 = vcmask 818176
  %v451 = vsel %vm449, %v31, 0
  %v454 = vsel %vm449, %v32, 0
  %vm456 = vcmask 1043456
  %v458 = vsel %vm456, %v417, 0
  %v461 = vsel %vm456, %v418, 0
  %v464 = vsel %vm456, %v419, 0
  %v467 = vsel %vm456, %v420, 0
  %v470 = vsel %vm456, %v421, 0
  %v473 = vsel %vm456, %v422, 0
  %v476 = vsel %vm456, %v423, 0
  %v479 = vsel %vm456, %v424, 0
  %v482 = vsel %vm456, %v425, 0
  %v485 = vsel %vm456, %v426, 0
  %v488 = vsel %vm456, %v427, 0
  %v491 = vsel %vm456, %v428, 0
  %v494 = vsel %vm456, %v429, 0
  %v497 = vsel %vm456, %v430, 0
  %v500 = vsel %vm456, %v431, 0
  %v503 = vsel %vm456, %v432, 0
  %v506 = vsel %vm456, %v433, 0
  %v509 = vsel %vm456, %v434, 0
  %v512 = vsel %vm456, %v435, 0
  %v515 = vsel %vm456, %v436, 0
  %v518 = vsel %vm456, %v437, 0
  %v521 = vsel %vm456, %v438, 0
  %v524 = vsel %vm456, %v439, 0
  %v527 = vsel %vm456, %v440, 0
  %v530 = vsel %vm456, %v441, 0
  %v533 = vsel %vm456, %v442, 0
  %v536 = vsel %vm456, %v443, 0
  %v539 = vsel %vm456, %v444, 0
  %v542 = vsel %vm456, %v445, 0
  %v545 = vsel %vm456, %v446, 0
  %v548 = vsel %vm456, %v447, 0
  %v551 = vsel %vm456, %v448, 0
  %553 = vmatprep.subr.mxu0 %v34
  %554 = vmatpush1.msra.mxu0 %v33
  %555 = vmatprep.subr.mxu0 %v66
  %556 = vmatpush1.msra.mxu0 %v65
  %557 = vmatprep.subr.mxu0 %v98
  %558 = vmatpush1.msra.mxu0 %v97
  %559 = vmatprep.subr.mxu0 %v130
  %560 = vmatpush1.msra.mxu0 %v129
  %561 = vmatprep.subr.mxu0 %v162
  %562 = vmatpush1.msra.mxu0 %v161
  %563 = vmatprep.subr.mxu0 %v194
  %564 = vmatpush1.msra.mxu0 %v193
  %565 = vmatprep.subr.mxu0 %v226
  %566 = vmatpush1.msra.mxu0 %v225
  %567 = vmatprep.subr.mxu0 %v258
  %568 = vmatpush1.msra.mxu0 %v257
  %569 = vmatprep.subr.mxu0 %v290
  %570 = vmatpush1.msra.mxu0 %v289
  %571 = vmatprep.subr.mxu0 %v322
  %572 = vmatpush1.msra.mxu0 %v321
  %573 = vmatprep.subr.mxu0 %v354
  %574 = vmatpush1.msra.mxu0 %v353
  %575 = vmatprep.subr.mxu0 %v386
  %576 = vmatpush1.msra.mxu0 %v385
  %577 = vmatprep.subr.mxu0 %v461
  %578 = vmatpush1.msra.mxu0 %v458
  %579 = vmatprep.subr.mxu0 0.0
  %580 = vmatpush1.msra.mxu0 0.0
  %581 = vmatprep.subr.mxu0 0.0
  %582 = vmatpush1.msra.mxu0 0.0
  %583 = vmatprep.subr.mxu0 0.0
  %584 = vmatpush1.msra.mxu0 0.0
  %585 = vmatprep.subr.mxu0 0.0
  %586 = vmatpush1.msra.mxu0 0.0
  %587 = vmatprep.subr.mxu0 0.0
  %588 = vmatpush1.msra.mxu0 0.0
  %589 = vmatprep.subr.mxu0 0.0
  %590 = vmatpush1.msra.mxu0 0.0
  %591 = vmatprep.subr.mxu0 0.0
  %592 = vmatpush1.msra.mxu0 0.0
  %593 = vmatprep.subr.mxu0 0.0
  %594 = vmatpush1.msra.mxu0 0.0
  %595 = vmatprep.subr.mxu0 0.0
  %596 = vmatpush1.msra.mxu0 0.0
  %597 = vmatprep.subr.mxu0 0.0
  %598 = vmatpush1.msra.mxu0 0.0
  %599 = vmatprep.subr.mxu0 0.0
  %600 = vmatpush1.msra.mxu0 0.0
  %601 = vmatprep.subr.mxu0 0.0
  %602 = vmatpush1.msra.mxu0 0.0
  %603 = vmatprep.subr.mxu0 0.0
  %604 = vmatpush1.msra.mxu0 0.0
  %605 = vmatprep.subr.mxu0 0.0
  %606 = vmatpush1.msra.mxu0 0.0
  %607 = vmatprep.subr.mxu0 0.0
  %608 = vmatpush1.msra.mxu0 0.0
  %609 = vmatprep.subr.mxu0 0.0
  %610 = vmatpush1.msra.mxu0 0.0
  %611 = vmatprep.subr.mxu0 0.0
  %612 = vmatpush1.msra.mxu0 0.0
  %613 = vmatprep.subr.mxu0 0.0
  %614 = vmatpush1.msra.mxu0 0.0
  %615 = vmatprep.subr.mxu0 0.0
  %616 = vmatpush1.msra.mxu0 0.0
  %617 = vmatprep.mubr.f32.mxu0 0.0
  %618 = vmatmul.mubr.f32.gmra.mrb[0].mxu0 %v451
  %v619 = vpop.f32.mrb[0].mxu0
  %v620 = vadd.f32 0.0, %v619
  %v621 = vpop.f32.mrb[0].mxu0
  %v622 = vadd.f32 0.0, %v621
  %623 = vmatprep.mubr.f32.mxu0 0.0
  %624 = vmatmul.mubr.f32.gmra.mrb[0].mxu0 %v454
  %v625 = vpop.f32.mrb[0].mxu0
  %v626 = vadd.f32 0.0, %v625
  %v627 = vpop.f32.mrb[0].mxu0
  %v628 = vadd.f32 0.0, %v627
  %629 = vdwg.mxu0
  %630 = vmatprep.subr.mxu0 %v36
  %631 = vmatpush1.msra.mxu0 %v35
  %632 = vmatprep.subr.mxu0 %v68
  %633 = vmatpush1.msra.mxu0 %v67
  %634 = vmatprep.subr.mxu0 %v100
  %635 = vmatpush1.msra.mxu0 %v99
  %636 = vmatprep.subr.mxu0 %v132
  %637 = vmatpush1.msra.mxu0 %v131
  %638 = vmatprep.subr.mxu0 %v164
  %639 = vmatpush1.msra.mxu0 %v163
  %640 = vmatprep.subr.mxu0 %v196
  %641 = vmatpush1.msra.mxu0 %v195
  %642 = vmatprep.subr.mxu0 %v228
  %643 = vmatpush1.msra.mxu0 %v227
  %644 = vmatprep.subr.mxu0 %v260
  %645 = vmatpush1.msra.mxu0 %v259
  %646 = vmatprep.subr.mxu0 %v292
  %647 = vmatpush1.msra.mxu0 %v291
  %648 = vmatprep.subr.mxu0 %v324
  %649 = vmatpush1.msra.mxu0 %v323
  %650 = vmatprep.subr.mxu0 %v356
  %651 = vmatpush1.msra.mxu0 %v355
  %652 = vmatprep.subr.mxu0 %v388
  %653 = vmatpush1.msra.mxu0 %v387
  %654 = vmatprep.subr.mxu0 %v467
  %655 = vmatpush1.msra.mxu0 %v464
  %656 = vmatprep.subr.mxu0 0.0
  %657 = vmatpush1.msra.mxu0 0.0
  %658 = vmatprep.subr.mxu0 0.0
  %659 = vmatpush1.msra.mxu0 0.0
  %660 = vmatprep.subr.mxu0 0.0
  %661 = vmatpush1.msra.mxu0 0.0
  %662 = vmatprep.subr.mxu0 0.0
  %663 = vmatpush1.msra.mxu0 0.0
  %664 = vmatprep.subr.mxu0 0.0
  %665 = vmatpush1.msra.mxu0 0.0
  %666 = vmatprep.subr.mxu0 0.0
  %667 = vmatpush1.msra.mxu0 0.0
  %668 = vmatprep.subr.mxu0 0.0
  %669 = vmatpush1.msra.mxu0 0.0
  %670 = vmatprep.subr.mxu0 0.0
  %671 = vmatpush1.msra.mxu0 0.0
  %672 = vmatprep.subr.mxu0 0.0
  %673 = vmatpush1.msra.mxu0 0.0
  %674 = vmatprep.subr.mxu0 0.0
  %675 = vmatpush1.msra.mxu0 0.0
  %676 = vmatprep.subr.mxu0 0.0
  %677 = vmatpush1.msra.mxu0 0.0
  %678 = vmatprep.subr.mxu0 0.0
  %679 = vmatpush1.msra.mxu0 0.0
  %680 = vmatprep.subr.mxu0 0.0
  %681 = vmatpush1.msra.mxu0 0.0
  %682 = vmatprep.subr.mxu0 0.0
  %683 = vmatpush1.msra.mxu0 0.0
  %684 = vmatprep.subr.mxu0 0.0
  %685 = vmatpush1.msra.mxu0 0.0
  %686 = vmatprep.subr.mxu0 0.0
  %687 = vmatpush1.msra.mxu0 0.0
  %688 = vmatprep.subr.mxu0 0.0
  %689 = vmatpush1.msra.mxu0 0.0
  %690 = vmatprep.subr.mxu0 0.0
  %691 = vmatpush1.msra.mxu0 0.0
  %692 = vmatprep.subr.mxu0 0.0
  %693 = vmatpush1.msra.mxu0 0.0
  %694 = vmatprep.mubr.f32.mxu0 0.0
  %695 = vmatmul.mubr.f32.gmra.mrb[0].mxu0 %v451
  %v696 = vpop.f32.mrb[0].mxu0
  %v697 = vadd.f32 0.0, %v696
  %v698 = vpop.f32.mrb[0].mxu0
  %v699 = vadd.f32 0.0, %v698
  %700 = vmatprep.mubr.f32.mxu0 0.0
  %701 = vmatmul.mubr.f32.gmra.mrb[0].mxu0 %v454
  %v702 = vpop.f32.mrb[0].mxu0
  %v703 = vadd.f32 0.0, %v702
  %v704 = vpop.f32.mrb[0].mxu0
  %v705 = vadd.f32 0.0, %v704
  %706 = vdwg.mxu0
  %707 = vmatprep.subr.mxu0 %v38
  %708 = vmatpush1.msra.mxu0 %v37
  %709 = vmatprep.subr.mxu0 %v70
  %710 = vmatpush1.msra.mxu0 %v69
  %711 = vmatprep.subr.mxu0 %v102
  %712 = vmatpush1.msra.mxu0 %v101
  %713 = vmatprep.subr.mxu0 %v134
  %714 = vmatpush1.msra.mxu0 %v133
  %715 = vmatprep.subr.mxu0 %v166
  %716 = vmatpush1.msra.mxu0 %v165
  %717 = vmatprep.subr.mxu0 %v198
  %718 = vmatpush1.msra.mxu0 %v197
  %719 = vmatprep.subr.mxu0 %v230
  %720 = vmatpush1.msra.mxu0 %v229
  %721 = vmatprep.subr.mxu0 %v262
  %722 = vmatpush1.msra.mxu0 %v261
  %723 = vmatprep.subr.mxu0 %v294
  %724 = vmatpush1.msra.mxu0 %v293
  %725 = vmatprep.subr.mxu0 %v326
  %726 = vmatpush1.msra.mxu0 %v325
  %727 = vmatprep.subr.mxu0 %v358
  %728 = vmatpush1.msra.mxu0 %v357
  %729 = vmatprep.subr.mxu0 %v390
  %730 = vmatpush1.msra.mxu0 %v389
  %731 = vmatprep.subr.mxu0 %v473
  %732 = vmatpush1.msra.mxu0 %v470
  %733 = vmatprep.subr.mxu0 0.0
  %734 = vmatpush1.msra.mxu0 0.0
  %735 = vmatprep.subr.mxu0 0.0
  %736 = vmatpush1.msra.mxu0 0.0
  %737 = vmatprep.subr.mxu0 0.0
  %738 = vmatpush1.msra.mxu0 0.0
  %739 = vmatprep.subr.mxu0 0.0
  %740 = vmatpush1.msra.mxu0 0.0
  %741 = vmatprep.subr.mxu0 0.0
  %742 = vmatpush1.msra.mxu0 0.0
  %743 = vmatprep.subr.mxu0 0.0
  %744 = vmatpush1.msra.mxu0 0.0
  %745 = vmatprep.subr.mxu0 0.0
  %746 = vmatpush1.msra.mxu0 0.0
  %747 = vmatprep.subr.mxu0 0.0
  %748 = vmatpush1.msra.mxu0 0.0
  %749 = vmatprep.subr.mxu0 0.0
  %750 = vmatpush1.msra.mxu0 0.0
  %751 = vmatprep.subr.mxu0 0.0
  %752 = vmatpush1.msra.mxu0 0.0
  %753 = vmatprep.subr.mxu0 0.0
  %754 = vmatpush1.msra.mxu0 0.0
  %755 = vmatprep.subr.mxu0 0.0
  %756 = vmatpush1.msra.mxu0 0.0
  %757 = vmatprep.subr.mxu0 0.0
  %758 = vmatpush1.msra.mxu0 0.0
  %759 = vmatprep.subr.mxu0 0.0
  %760 = vmatpush1.msra.mxu0 0.0
  %761 = vmatprep.subr.mxu0 0.0
  %762 = vmatpush1.msra.mxu0 0.0
  %763 = vmatprep.subr.mxu0 0.0
  %764 = vmatpush1.msra.mxu0 0.0
  %765 = vmatprep.subr.mxu0 0.0
  %766 = vmatpush1.msra.mxu0 0.0
  %767 = vmatprep.subr.mxu0 0.0
  %768 = vmatpush1.msra.mxu0 0.0
  %769 = vmatprep.subr.mxu0 0.0
  %770 = vmatpush1.msra.mxu0 0.0
  %771 = vmatprep.mubr.f32.mxu0 0.0
  %772 = vmatmul.mubr.f32.gmra.mrb[0].mxu0 %v451
  %v773 = vpop.f32.mrb[0].mxu0
  %v774 = vadd.f32 0.0, %v773
  %v775 = vpop.f32.mrb[0].mxu0
  %v776 = vadd.f32 0.0, %v775
  %777 = vmatprep.mubr.f32.mxu0 0.0
  %778 = vmatmul.mubr.f32.gmra.mrb[0].mxu0 %v454
  %v779 = vpop.f32.mrb[0].mxu0
  %v780 = vadd.f32 0.0, %v779
  %v781 = vpop.f32.mrb[0].mxu0
  %v782 = vadd.f32 0.0, %v781
  %783 = vdwg.mxu0
  %784 = vmatprep.subr.mxu0 %v40
  %785 = vmatpush1.msra.mxu0 %v39
  %786 = vmatprep.subr.mxu0 %v72
  %787 = vmatpush1.msra.mxu0 %v71
  %788 = vmatprep.subr.mxu0 %v104
  %789 = vmatpush1.msra.mxu0 %v103
  %790 = vmatprep.subr.mxu0 %v136
  %791 = vmatpush1.msra.mxu0 %v135
  %792 = vmatprep.subr.mxu0 %v168
  %793 = vmatpush1.msra.mxu0 %v167
  %794 = vmatprep.subr.mxu0 %v200
  %795 = vmatpush1.msra.mxu0 %v199
  %796 = vmatprep.subr.mxu0 %v232
  %797 = vmatpush1.msra.mxu0 %v231
  %798 = vmatprep.subr.mxu0 %v264
  %799 = vmatpush1.msra.mxu0 %v263
  %800 = vmatprep.subr.mxu0 %v296
  %801 = vmatpush1.msra.mxu0 %v295
  %802 = vmatprep.subr.mxu0 %v328
  %803 = vmatpush1.msra.mxu0 %v327
  %804 = vmatprep.subr.mxu0 %v360
  %805 = vmatpush1.msra.mxu0 %v359
  %806 = vmatprep.subr.mxu0 %v392
  %807 = vmatpush1.msra.mxu0 %v391
  %808 = vmatprep.subr.mxu0 %v479
  %809 = vmatpush1.msra.mxu0 %v476
  %810 = vmatprep.subr.mxu0 0.0
  %811 = vmatpush1.msra.mxu0 0.0
  %812 = vmatprep.subr.mxu0 0.0
  %813 = vmatpush1.msra.mxu0 0.0
  %814 = vmatprep.subr.mxu0 0.0
  %815 = vmatpush1.msra.mxu0 0.0
  %816 = vmatprep.subr.mxu0 0.0
  %817 = vmatpush1.msra.mxu0 0.0
  %818 = vmatprep.subr.mxu0 0.0
  %819 = vmatpush1.msra.mxu0 0.0
  %820 = vmatprep.subr.mxu0 0.0
  %821 = vmatpush1.msra.mxu0 0.0
  %822 = vmatprep.subr.mxu0 0.0
  %823 = vmatpush1.msra.mxu0 0.0
  %824 = vmatprep.subr.mxu0 0.0
  %825 = vmatpush1.msra.mxu0 0.0
  %826 = vmatprep.subr.mxu0 0.0
  %827 = vmatpush1.msra.mxu0 0.0
  %828 = vmatprep.subr.mxu0 0.0
  %829 = vmatpush1.msra.mxu0 0.0
  %830 = vmatprep.subr.mxu0 0.0
  %831 = vmatpush1.msra.mxu0 0.0
  %832 = vmatprep.subr.mxu0 0.0
  %833 = vmatpush1.msra.mxu0 0.0
  %834 = vmatprep.subr.mxu0 0.0
  %835 = vmatpush1.msra.mxu0 0.0
  %836 = vmatprep.subr.mxu0 0.0
  %837 = vmatpush1.msra.mxu0 0.0
  %838 = vmatprep.subr.mxu0 0.0
  %839 = vmatpush1.msra.mxu0 0.0
  %840 = vmatprep.subr.mxu0 0.0
  %841 = vmatpush1.msra.mxu0 0.0
  %842 = vmatprep.subr.mxu0 0.0
  %843 = vmatpush1.msra.mxu0 0.0
  %844 = vmatprep.subr.mxu0 0.0
  %845 = vmatpush1.msra.mxu0 0.0
  %846 = vmatprep.subr.mxu0 0.0
  %847 = vmatpush1.msra.mxu0 0.0
  %848 = vmatprep.mubr.f32.mxu0 0.0
  %849 = vmatmul.mubr.f32.gmra.mrb[0].mxu0 %v451
  %v850 = vpop.f32.mrb[0].mxu0
  %v851 = vadd.f32 0.0, %v850
  %v852 = vpop.f32.mrb[0].mxu0
  %v853 = vadd.f32 0.0, %v852
  %854 = vmatprep.mubr.f32.mxu0 0.0
  %855 = vmatmul.mubr.f32.gmra.mrb[0].mxu0 %v454
  %v856 = vpop.f32.mrb[0].mxu0
  %v857 = vadd.f32 0.0, %v856
  %v858 = vpop.f32.mrb[0].mxu0
  %v859 = vadd.f32 0.0, %v858
  %860 = vdwg.mxu0
  %861 = vmatprep.subr.mxu0 %v42
  %862 = vmatpush1.msra.mxu0 %v41
  %863 = vmatprep.subr.mxu0 %v74
  %864 = vmatpush1.msra.mxu0 %v73
  %865 = vmatprep.subr.mxu0 %v106
  %866 = vmatpush1.msra.mxu0 %v105
  %867 = vmatprep.subr.mxu0 %v138
  %868 = vmatpush1.msra.mxu0 %v137
  %869 = vmatprep.subr.mxu0 %v170
  %870 = vmatpush1.msra.mxu0 %v169
  %871 = vmatprep.subr.mxu0 %v202
  %872 = vmatpush1.msra.mxu0 %v201
  %873 = vmatprep.subr.mxu0 %v234
  %874 = vmatpush1.msra.mxu0 %v233
  %875 = vmatprep.subr.mxu0 %v266
  %876 = vmatpush1.msra.mxu0 %v265
  %877 = vmatprep.subr.mxu0 %v298
  %878 = vmatpush1.msra.mxu0 %v297
  %879 = vmatprep.subr.mxu0 %v330
  %880 = vmatpush1.msra.mxu0 %v329
  %881 = vmatprep.subr.mxu0 %v362
  %882 = vmatpush1.msra.mxu0 %v361
  %883 = vmatprep.subr.mxu0 %v394
  %884 = vmatpush1.msra.mxu0 %v393
  %885 = vmatprep.subr.mxu0 %v485
  %886 = vmatpush1.msra.mxu0 %v482
  %887 = vmatprep.subr.mxu0 0.0
  %888 = vmatpush1.msra.mxu0 0.0
  %889 = vmatprep.subr.mxu0 0.0
  %890 = vmatpush1.msra.mxu0 0.0
  %891 = vmatprep.subr.mxu0 0.0
  %892 = vmatpush1.msra.mxu0 0.0
  %893 = vmatprep.subr.mxu0 0.0
  %894 = vmatpush1.msra.mxu0 0.0
  %895 = vmatprep.subr.mxu0 0.0
  %896 = vmatpush1.msra.mxu0 0.0
  %897 = vmatprep.subr.mxu0 0.0
  %898 = vmatpush1.msra.mxu0 0.0
  %899 = vmatprep.subr.mxu0 0.0
  %900 = vmatpush1.msra.mxu0 0.0
  %901 = vmatprep.subr.mxu0 0.0
  %902 = vmatpush1.msra.mxu0 0.0
  %903 = vmatprep.subr.mxu0 0.0
  %904 = vmatpush1.msra.mxu0 0.0
  %905 = vmatprep.subr.mxu0 0.0
  %906 = vmatpush1.msra.mxu0 0.0
  %907 = vmatprep.subr.mxu0 0.0
  %908 = vmatpush1.msra.mxu0 0.0
  %909 = vmatprep.subr.mxu0 0.0
  %910 = vmatpush1.msra.mxu0 0.0
  %911 = vmatprep.subr.mxu0 0.0
  %912 = vmatpush1.msra.mxu0 0.0
  %913 = vmatprep.subr.mxu0 0.0
  %914 = vmatpush1.msra.mxu0 0.0
  %915 = vmatprep.subr.mxu0 0.0
  %916 = vmatpush1.msra.mxu0 0.0
  %917 = vmatprep.subr.mxu0 0.0
  %918 = vmatpush1.msra.mxu0 0.0
  %919 = vmatprep.subr.mxu0 0.0
  %920 = vmatpush1.msra.mxu0 0.0
  %921 = vmatprep.subr.mxu0 0.0
  %922 = vmatpush1.msra.mxu0 0.0
  %923 = vmatprep.subr.mxu0 0.0
  %924 = vmatpush1.msra.mxu0 0.0
  %925 = vmatprep.mubr.f32.mxu0 0.0
  %926 = vmatmul.mubr.f32.gmra.mrb[0].mxu0 %v451
  %v927 = vpop.f32.mrb[0].mxu0
  %v928 = vadd.f32 0.0, %v927
  %v929 = vpop.f32.mrb[0].mxu0
  %v930 = vadd.f32 0.0, %v929
  %931 = vmatprep.mubr.f32.mxu0 0.0
  %932 = vmatmul.mubr.f32.gmra.mrb[0].mxu0 %v454
  %v933 = vpop.f32.mrb[0].mxu0
  %v934 = vadd.f32 0.0, %v933
  %v935 = vpop.f32.mrb[0].mxu0
  %v936 = vadd.f32 0.0, %v935
  %937 = vdwg.mxu0
  %938 = vmatprep.subr.mxu0 %v44
  %939 = vmatpush1.msra.mxu0 %v43
  %940 = vmatprep.subr.mxu0 %v76
  %941 = vmatpush1.msra.mxu0 %v75
  %942 = vmatprep.subr.mxu0 %v108
  %943 = vmatpush1.msra.mxu0 %v107
  %944 = vmatprep.subr.mxu0 %v140
  %945 = vmatpush1.msra.mxu0 %v139
  %946 = vmatprep.subr.mxu0 %v172
  %947 = vmatpush1.msra.mxu0 %v171
  %948 = vmatprep.subr.mxu0 %v204
  %949 = vmatpush1.msra.mxu0 %v203
  %950 = vmatprep.subr.mxu0 %v236
  %951 = vmatpush1.msra.mxu0 %v235
  %952 = vmatprep.subr.mxu0 %v268
  %953 = vmatpush1.msra.mxu0 %v267
  %954 = vmatprep.subr.mxu0 %v300
  %955 = vmatpush1.msra.mxu0 %v299
  %956 = vmatprep.subr.mxu0 %v332
  %957 = vmatpush1.msra.mxu0 %v331
  %958 = vmatprep.subr.mxu0 %v364
  %959 = vmatpush1.msra.mxu0 %v363
  %960 = vmatprep.subr.mxu0 %v396
  %961 = vmatpush1.msra.mxu0 %v395
  %962 = vmatprep.subr.mxu0 %v491
  %963 = vmatpush1.msra.mxu0 %v488
  %964 = vmatprep.subr.mxu0 0.0
  %965 = vmatpush1.msra.mxu0 0.0
  %966 = vmatprep.subr.mxu0 0.0
  %967 = vmatpush1.msra.mxu0 0.0
  %968 = vmatprep.subr.mxu0 0.0
  %969 = vmatpush1.msra.mxu0 0.0
  %970 = vmatprep.subr.mxu0 0.0
  %971 = vmatpush1.msra.mxu0 0.0
  %972 = vmatprep.subr.mxu0 0.0
  %973 = vmatpush1.msra.mxu0 0.0
  %974 = vmatprep.subr.mxu0 0.0
  %975 = vmatpush1.msra.mxu0 0.0
  %976 = vmatprep.subr.mxu0 0.0
  %977 = vmatpush1.msra.mxu0 0.0
  %978 = vmatprep.subr.mxu0 0.0
  %979 = vmatpush1.msra.mxu0 0.0
  %980 = vmatprep.subr.mxu0 0.0
  %981 = vmatpush1.msra.mxu0 0.0
  %982 = vmatprep.subr.mxu0 0.0
  %983 = vmatpush1.msra.mxu0 0.0
  %984 = vmatprep.subr.mxu0 0.0
  %985 = vmatpush1.msra.mxu0 0.0
  %986 = vmatprep.subr.mxu0 0.0
  %987 = vmatpush1.msra.mxu0 0.0
  %988 = vmatprep.subr.mxu0 0.0
  %989 = vmatpush1.msra.mxu0 0.0
  %990 = vmatprep.subr.mxu0 0.0
  %991 = vmatpush1.msra.mxu0 0.0
  %992 = vmatprep.subr.mxu0 0.0
  %993 = vmatpush1.msra.mxu0 0.0
  %994 = vmatprep.subr.mxu0 0.0
  %995 = vmatpush1.msra.mxu0 0.0
  %996 = vmatprep.subr.mxu0 0.0
  %997 = vmatpush1.msra.mxu0 0.0
  %998 = vmatprep.subr.mxu0 0.0
  %999 = vmatpush1.msra.mxu0 0.0
  %1000 = vmatprep.subr.mxu0 0.0
  %1001 = vmatpush1.msra.mxu0 0.0
  %1002 = vmatprep.mubr.f32.mxu0 0.0
  %1003 = vmatmul.mubr.f32.gmra.mrb[0].mxu0 %v451
  %v1004 = vpop.f32.mrb[0].mxu0
  %v1005 = vadd.f32 0.0, %v1004
  %v1006 = vpop.f32.mrb[0].mxu0
  %v1007 = vadd.f32 0.0, %v1006
  %1008 = vmatprep.mubr.f32.mxu0 0.0
  %1009 = vmatmul.mubr.f32.gmra.mrb[0].mxu0 %v454
  %v1010 = vpop.f32.mrb[0].mxu0
  %v1011 = vadd.f32 0.0, %v1010
  %v1012 = vpop.f32.mrb[0].mxu0
  %v1013 = vadd.f32 0.0, %v1012
  %1014 = vdwg.mxu0
  %1015 = vmatprep.subr.mxu0 %v46
  %1016 = vmatpush1.msra.mxu0 %v45
  %1017 = vmatprep.subr.mxu0 %v78
  %1018 = vmatpush1.msra.mxu0 %v77
  %1019 = vmatprep.subr.mxu0 %v110
  %1020 = vmatpush1.msra.mxu0 %v109
  %1021 = vmatprep.subr.mxu0 %v142
  %1022 = vmatpush1.msra.mxu0 %v141
  %1023 = vmatprep.subr.mxu0 %v174
  %1024 = vmatpush1.msra.mxu0 %v173
  %1025 = vmatprep.subr.mxu0 %v206
  %1026 = vmatpush1.msra.mxu0 %v205
  %1027 = vmatprep.subr.mxu0 %v238
  %1028 = vmatpush1.msra.mxu0 %v237
  %1029 = vmatprep.subr.mxu0 %v270
  %1030 = vmatpush1.msra.mxu0 %v269
  %1031 = vmatprep.subr.mxu0 %v302
  %1032 = vmatpush1.msra.mxu0 %v301
  %1033 = vmatprep.subr.mxu0 %v334
  %1034 = vmatpush1.msra.mxu0 %v333
  %1035 = vmatprep.subr.mxu0 %v366
  %1036 = vmatpush1.msra.mxu0 %v365
  %1037 = vmatprep.subr.mxu0 %v398
  %1038 = vmatpush1.msra.mxu0 %v397
  %1039 = vmatprep.subr.mxu0 %v497
  %1040 = vmatpush1.msra.mxu0 %v494
  %1041 = vmatprep.subr.mxu0 0.0
  %1042 = vmatpush1.msra.mxu0 0.0
  %1043 = vmatprep.subr.mxu0 0.0
  %1044 = vmatpush1.msra.mxu0 0.0
  %1045 = vmatprep.subr.mxu0 0.0
  %1046 = vmatpush1.msra.mxu0 0.0
  %1047 = vmatprep.subr.mxu0 0.0
  %1048 = vmatpush1.msra.mxu0 0.0
  %1049 = vmatprep.subr.mxu0 0.0
  %1050 = vmatpush1.msra.mxu0 0.0
  %1051 = vmatprep.subr.mxu0 0.0
  %1052 = vmatpush1.msra.mxu0 0.0
  %1053 = vmatprep.subr.mxu0 0.0
  %1054 = vmatpush1.msra.mxu0 0.0
  %1055 = vmatprep.subr.mxu0 0.0
  %1056 = vmatpush1.msra.mxu0 0.0
  %1057 = vmatprep.subr.mxu0 0.0
  %1058 = vmatpush1.msra.mxu0 0.0
  %1059 = vmatprep.subr.mxu0 0.0
  %1060 = vmatpush1.msra.mxu0 0.0
  %1061 = vmatprep.subr.mxu0 0.0
  %1062 = vmatpush1.msra.mxu0 0.0
  %1063 = vmatprep.subr.mxu0 0.0
  %1064 = vmatpush1.msra.mxu0 0.0
  %1065 = vmatprep.subr.mxu0 0.0
  %1066 = vmatpush1.msra.mxu0 0.0
  %1067 = vmatprep.subr.mxu0 0.0
  %1068 = vmatpush1.msra.mxu0 0.0
  %1069 = vmatprep.subr.mxu0 0.0
  %1070 = vmatpush1.msra.mxu0 0.0
  %1071 = vmatprep.subr.mxu0 0.0
  %1072 = vmatpush1.msra.mxu0 0.0
  %1073 = vmatprep.subr.mxu0 0.0
  %1074 = vmatpush1.msra.mxu0 0.0
  %1075 = vmatprep.subr.mxu0 0.0
  %1076 = vmatpush1.msra.mxu0 0.0
  %1077 = vmatprep.subr.mxu0 0.0
  %1078 = vmatpush1.msra.mxu0 0.0
  %1079 = vmatprep.mubr.f32.mxu0 0.0
  %1080 = vmatmul.mubr.f32.gmra.mrb[0].mxu0 %v451
  %v1081 = vpop.f32.mrb[0].mxu0
  %v1082 = vadd.f32 0.0, %v1081
  %v1083 = vpop.f32.mrb[0].mxu0
  %v1084 = vadd.f32 0.0, %v1083
  %1085 = vmatprep.mubr.f32.mxu0 0.0
  %1086 = vmatmul.mubr.f32.gmra.mrb[0].mxu0 %v454
  %v1087 = vpop.f32.mrb[0].mxu0
  %v1088 = vadd.f32 0.0, %v1087
  %v1089 = vpop.f32.mrb[0].mxu0
  %v1090 = vadd.f32 0.0, %v1089
  %1091 = vdwg.mxu0
  %1092 = vmatprep.subr.mxu0 %v48
  %1093 = vmatpush1.msra.mxu0 %v47
  %1094 = vmatprep.subr.mxu0 %v80
  %1095 = vmatpush1.msra.mxu0 %v79
  %1096 = vmatprep.subr.mxu0 %v112
  %1097 = vmatpush1.msra.mxu0 %v111
  %1098 = vmatprep.subr.mxu0 %v144
  %1099 = vmatpush1.msra.mxu0 %v143
  %1100 = vmatprep.subr.mxu0 %v176
  %1101 = vmatpush1.msra.mxu0 %v175
  %1102 = vmatprep.subr.mxu0 %v208
  %1103 = vmatpush1.msra.mxu0 %v207
  %1104 = vmatprep.subr.mxu0 %v240
  %1105 = vmatpush1.msra.mxu0 %v239
  %1106 = vmatprep.subr.mxu0 %v272
  %1107 = vmatpush1.msra.mxu0 %v271
  %1108 = vmatprep.subr.mxu0 %v304
  %1109 = vmatpush1.msra.mxu0 %v303
  %1110 = vmatprep.subr.mxu0 %v336
  %1111 = vmatpush1.msra.mxu0 %v335
  %1112 = vmatprep.subr.mxu0 %v368
  %1113 = vmatpush1.msra.mxu0 %v367
  %1114 = vmatprep.subr.mxu0 %v400
  %1115 = vmatpush1.msra.mxu0 %v399
  %1116 = vmatprep.subr.mxu0 %v503
  %1117 = vmatpush1.msra.mxu0 %v500
  %1118 = vmatprep.subr.mxu0 0.0
  %1119 = vmatpush1.msra.mxu0 0.0
  %1120 = vmatprep.subr.mxu0 0.0
  %1121 = vmatpush1.msra.mxu0 0.0
  %1122 = vmatprep.subr.mxu0 0.0
  %1123 = vmatpush1.msra.mxu0 0.0
  %1124 = vmatprep.subr.mxu0 0.0
  %1125 = vmatpush1.msra.mxu0 0.0
  %1126 = vmatprep.subr.mxu0 0.0
  %1127 = vmatpush1.msra.mxu0 0.0
  %1128 = vmatprep.subr.mxu0 0.0
  %1129 = vmatpush1.msra.mxu0 0.0
  %1130 = vmatprep.subr.mxu0 0.0
  %1131 = vmatpush1.msra.mxu0 0.0
  %1132 = vmatprep.subr.mxu0 0.0
  %1133 = vmatpush1.msra.mxu0 0.0
  %1134 = vmatprep.subr.mxu0 0.0
  %1135 = vmatpush1.msra.mxu0 0.0
  %1136 = vmatprep.subr.mxu0 0.0
  %1137 = vmatpush1.msra.mxu0 0.0
  %1138 = vmatprep.subr.mxu0 0.0
  %1139 = vmatpush1.msra.mxu0 0.0
  %1140 = vmatprep.subr.mxu0 0.0
  %1141 = vmatpush1.msra.mxu0 0.0
  %1142 = vmatprep.subr.mxu0 0.0
  %1143 = vmatpush1.msra.mxu0 0.0
  %1144 = vmatprep.subr.mxu0 0.0
  %1145 = vmatpush1.msra.mxu0 0.0
  %1146 = vmatprep.subr.mxu0 0.0
  %1147 = vmatpush1.msra.mxu0 0.0
  %1148 = vmatprep.subr.mxu0 0.0
  %1149 = vmatpush1.msra.mxu0 0.0
  %1150 = vmatprep.subr.mxu0 0.0
  %1151 = vmatpush1.msra.mxu0 0.0
  %1152 = vmatprep.subr.mxu0 0.0
  %1153 = vmatpush1.msra.mxu0 0.0
  %1154 = vmatprep.subr.mxu0 0.0
  %1155 = vmatpush1.msra.mxu0 0.0
  %1156 = vmatprep.mubr.f32.mxu0 0.0
  %1157 = vmatmul.mubr.f32.gmra.mrb[0].mxu0 %v451
  %v1158 = vpop.f32.mrb[0].mxu0
  %v1159 = vadd.f32 0.0, %v1158
  %v1160 = vpop.f32.mrb[0].mxu0
  %v1161 = vadd.f32 0.0, %v1160
  %1162 = vmatprep.mubr.f32.mxu0 0.0
  %1163 = vmatmul.mubr.f32.gmra.mrb[0].mxu0 %v454
  %v1164 = vpop.f32.mrb[0].mxu0
  %v1165 = vadd.f32 0.0, %v1164
  %v1166 = vpop.f32.mrb[0].mxu0
  %v1167 = vadd.f32 0.0, %v1166
  %1168 = vdwg.mxu0
  %1169 = vmatprep.subr.mxu0 %v50
  %1170 = vmatpush1.msra.mxu0 %v49
  %1171 = vmatprep.subr.mxu0 %v82
  %1172 = vmatpush1.msra.mxu0 %v81
  %1173 = vmatprep.subr.mxu0 %v114
  %1174 = vmatpush1.msra.mxu0 %v113
  %1175 = vmatprep.subr.mxu0 %v146
  %1176 = vmatpush1.msra.mxu0 %v145
  %1177 = vmatprep.subr.mxu0 %v178
  %1178 = vmatpush1.msra.mxu0 %v177
  %1179 = vmatprep.subr.mxu0 %v210
  %1180 = vmatpush1.msra.mxu0 %v209
  %1181 = vmatprep.subr.mxu0 %v242
  %1182 = vmatpush1.msra.mxu0 %v241
  %1183 = vmatprep.subr.mxu0 %v274
  %1184 = vmatpush1.msra.mxu0 %v273
  %1185 = vmatprep.subr.mxu0 %v306
  %1186 = vmatpush1.msra.mxu0 %v305
  %1187 = vmatprep.subr.mxu0 %v338
  %1188 = vmatpush1.msra.mxu0 %v337
  %1189 = vmatprep.subr.mxu0 %v370
  %1190 = vmatpush1.msra.mxu0 %v369
  %1191 = vmatprep.subr.mxu0 %v402
  %1192 = vmatpush1.msra.mxu0 %v401
  %1193 = vmatprep.subr.mxu0 %v509
  %1194 = vmatpush1.msra.mxu0 %v506
  %1195 = vmatprep.subr.mxu0 0.0
  %1196 = vmatpush1.msra.mxu0 0.0
  %1197 = vmatprep.subr.mxu0 0.0
  %1198 = vmatpush1.msra.mxu0 0.0
  %1199 = vmatprep.subr.mxu0 0.0
  %1200 = vmatpush1.msra.mxu0 0.0
  %1201 = vmatprep.subr.mxu0 0.0
  %1202 = vmatpush1.msra.mxu0 0.0
  %1203 = vmatprep.subr.mxu0 0.0
  %1204 = vmatpush1.msra.mxu0 0.0
  %1205 = vmatprep.subr.mxu0 0.0
  %1206 = vmatpush1.msra.mxu0 0.0
  %1207 = vmatprep.subr.mxu0 0.0
  %1208 = vmatpush1.msra.mxu0 0.0
  %1209 = vmatprep.subr.mxu0 0.0
  %1210 = vmatpush1.msra.mxu0 0.0
  %1211 = vmatprep.subr.mxu0 0.0
  %1212 = vmatpush1.msra.mxu0 0.0
  %1213 = vmatprep.subr.mxu0 0.0
  %1214 = vmatpush1.msra.mxu0 0.0
  %1215 = vmatprep.subr.mxu0 0.0
  %1216 = vmatpush1.msra.mxu0 0.0
  %1217 = vmatprep.subr.mxu0 0.0
  %1218 = vmatpush1.msra.mxu0 0.0
  %1219 = vmatprep.subr.mxu0 0.0
  %1220 = vmatpush1.msra.mxu0 0.0
  %1221 = vmatprep.subr.mxu0 0.0
  %1222 = vmatpush1.msra.mxu0 0.0
  %1223 = vmatprep.subr.mxu0 0.0
  %1224 = vmatpush1.msra.mxu0 0.0
  %1225 = vmatprep.subr.mxu0 0.0
  %1226 = vmatpush1.msra.mxu0 0.0
  %1227 = vmatprep.subr.mxu0 0.0
  %1228 = vmatpush1.msra.mxu0 0.0
  %1229 = vmatprep.subr.mxu0 0.0
  %1230 = vmatpush1.msra.mxu0 0.0
  %1231 = vmatprep.subr.mxu0 0.0
  %1232 = vmatpush1.msra.mxu0 0.0
  %1233 = vmatprep.mubr.f32.mxu0 0.0
  %1234 = vmatmul.mubr.f32.gmra.mrb[0].mxu0 %v451
  %v1235 = vpop.f32.mrb[0].mxu0
  %v1236 = vadd.f32 0.0, %v1235
  %v1237 = vpop.f32.mrb[0].mxu0
  %v1238 = vadd.f32 0.0, %v1237
  %1239 = vmatprep.mubr.f32.mxu0 0.0
  %1240 = vmatmul.mubr.f32.gmra.mrb[0].mxu0 %v454
  %v1241 = vpop.f32.mrb[0].mxu0
  %v1242 = vadd.f32 0.0, %v1241
  %v1243 = vpop.f32.mrb[0].mxu0
  %v1244 = vadd.f32 0.0, %v1243
  %1245 = vdwg.mxu0
  %1246 = vmatprep.subr.mxu0 %v52
  %1247 = vmatpush1.msra.mxu0 %v51
  %1248 = vmatprep.subr.mxu0 %v84
  %1249 = vmatpush1.msra.mxu0 %v83
  %1250 = vmatprep.subr.mxu0 %v116
  %1251 = vmatpush1.msra.mxu0 %v115
  %1252 = vmatprep.subr.mxu0 %v148
  %1253 = vmatpush1.msra.mxu0 %v147
  %1254 = vmatprep.subr.mxu0 %v180
  %1255 = vmatpush1.msra.mxu0 %v179
  %1256 = vmatprep.subr.mxu0 %v212
  %1257 = vmatpush1.msra.mxu0 %v211
  %1258 = vmatprep.subr.mxu0 %v244
  %1259 = vmatpush1.msra.mxu0 %v243
  %1260 = vmatprep.subr.mxu0 %v276
  %1261 = vmatpush1.msra.mxu0 %v275
  %1262 = vmatprep.subr.mxu0 %v308
  %1263 = vmatpush1.msra.mxu0 %v307
  %1264 = vmatprep.subr.mxu0 %v340
  %1265 = vmatpush1.msra.mxu0 %v339
  %1266 = vmatprep.subr.mxu0 %v372
  %1267 = vmatpush1.msra.mxu0 %v371
  %1268 = vmatprep.subr.mxu0 %v404
  %1269 = vmatpush1.msra.mxu0 %v403
  %1270 = vmatprep.subr.mxu0 %v515
  %1271 = vmatpush1.msra.mxu0 %v512
  %1272 = vmatprep.subr.mxu0 0.0
  %1273 = vmatpush1.msra.mxu0 0.0
  %1274 = vmatprep.subr.mxu0 0.0
  %1275 = vmatpush1.msra.mxu0 0.0
  %1276 = vmatprep.subr.mxu0 0.0
  %1277 = vmatpush1.msra.mxu0 0.0
  %1278 = vmatprep.subr.mxu0 0.0
  %1279 = vmatpush1.msra.mxu0 0.0
  %1280 = vmatprep.subr.mxu0 0.0
  %1281 = vmatpush1.msra.mxu0 0.0
  %1282 = vmatprep.subr.mxu0 0.0
  %1283 = vmatpush1.msra.mxu0 0.0
  %1284 = vmatprep.subr.mxu0 0.0
  %1285 = vmatpush1.msra.mxu0 0.0
  %1286 = vmatprep.subr.mxu0 0.0
  %1287 = vmatpush1.msra.mxu0 0.0
  %1288 = vmatprep.subr.mxu0 0.0
  %1289 = vmatpush1.msra.mxu0 0.0
  %1290 = vmatprep.subr.mxu0 0.0
  %1291 = vmatpush1.msra.mxu0 0.0
  %1292 = vmatprep.subr.mxu0 0.0
  %1293 = vmatpush1.msra.mxu0 0.0
  %1294 = vmatprep.subr.mxu0 0.0
  %1295 = vmatpush1.msra.mxu0 0.0
  %1296 = vmatprep.subr.mxu0 0.0
  %1297 = vmatpush1.msra.mxu0 0.0
  %1298 = vmatprep.subr.mxu0 0.0
  %1299 = vmatpush1.msra.mxu0 0.0
  %1300 = vmatprep.subr.mxu0 0.0
  %1301 = vmatpush1.msra.mxu0 0.0
  %1302 = vmatprep.subr.mxu0 0.0
  %1303 = vmatpush1.msra.mxu0 0.0
  %1304 = vmatprep.subr.mxu0 0.0
  %1305 = vmatpush1.msra.mxu0 0.0
  %1306 = vmatprep.subr.mxu0 0.0
  %1307 = vmatpush1.msra.mxu0 0.0
  %1308 = vmatprep.subr.mxu0 0.0
  %1309 = vmatpush1.msra.mxu0 0.0
  %1310 = vmatprep.mubr.f32.mxu0 0.0
  %1311 = vmatmul.mubr.f32.gmra.mrb[0].mxu0 %v451
  %v1312 = vpop.f32.mrb[0].mxu0
  %v1313 = vadd.f32 0.0, %v1312
  %v1314 = vpop.f32.mrb[0].mxu0
  %v1315 = vadd.f32 0.0, %v1314
  %1316 = vmatprep.mubr.f32.mxu0 0.0
  %1317 = vmatmul.mubr.f32.gmra.mrb[0].mxu0 %v454
  %v1318 = vpop.f32.mrb[0].mxu0
  %v1319 = vadd.f32 0.0, %v1318
  %v1320 = vpop.f32.mrb[0].mxu0
  %v1321 = vadd.f32 0.0, %v1320
  %1322 = vdwg.mxu0
  %1323 = vmatprep.subr.mxu0 %v54
  %1324 = vmatpush1.msra.mxu0 %v53
  %1325 = vmatprep.subr.mxu0 %v86
  %1326 = vmatpush1.msra.mxu0 %v85
  %1327 = vmatprep.subr.mxu0 %v118
  %1328 = vmatpush1.msra.mxu0 %v117
  %1329 = vmatprep.subr.mxu0 %v150
  %1330 = vmatpush1.msra.mxu0 %v149
  %1331 = vmatprep.subr.mxu0 %v182
  %1332 = vmatpush1.msra.mxu0 %v181
  %1333 = vmatprep.subr.mxu0 %v214
  %1334 = vmatpush1.msra.mxu0 %v213
  %1335 = vmatprep.subr.mxu0 %v246
  %1336 = vmatpush1.msra.mxu0 %v245
  %1337 = vmatprep.subr.mxu0 %v278
  %1338 = vmatpush1.msra.mxu0 %v277
  %1339 = vmatprep.subr.mxu0 %v310
  %1340 = vmatpush1.msra.mxu0 %v309
  %1341 = vmatprep.subr.mxu0 %v342
  %1342 = vmatpush1.msra.mxu0 %v341
  %1343 = vmatprep.subr.mxu0 %v374
  %1344 = vmatpush1.msra.mxu0 %v373
  %1345 = vmatprep.subr.mxu0 %v406
  %1346 = vmatpush1.msra.mxu0 %v405
  %1347 = vmatprep.subr.mxu0 %v521
  %1348 = vmatpush1.msra.mxu0 %v518
  %1349 = vmatprep.subr.mxu0 0.0
  %1350 = vmatpush1.msra.mxu0 0.0
  %1351 = vmatprep.subr.mxu0 0.0
  %1352 = vmatpush1.msra.mxu0 0.0
  %1353 = vmatprep.subr.mxu0 0.0
  %1354 = vmatpush1.msra.mxu0 0.0
  %1355 = vmatprep.subr.mxu0 0.0
  %1356 = vmatpush1.msra.mxu0 0.0
  %1357 = vmatprep.subr.mxu0 0.0
  %1358 = vmatpush1.msra.mxu0 0.0
  %1359 = vmatprep.subr.mxu0 0.0
  %1360 = vmatpush1.msra.mxu0 0.0
  %1361 = vmatprep.subr.mxu0 0.0
  %1362 = vmatpush1.msra.mxu0 0.0
  %1363 = vmatprep.subr.mxu0 0.0
  %1364 = vmatpush1.msra.mxu0 0.0
  %1365 = vmatprep.subr.mxu0 0.0
  %1366 = vmatpush1.msra.mxu0 0.0
  %1367 = vmatprep.subr.mxu0 0.0
  %1368 = vmatpush1.msra.mxu0 0.0
  %1369 = vmatprep.subr.mxu0 0.0
  %1370 = vmatpush1.msra.mxu0 0.0
  %1371 = vmatprep.subr.mxu0 0.0
  %1372 = vmatpush1.msra.mxu0 0.0
  %1373 = vmatprep.subr.mxu0 0.0
  %1374 = vmatpush1.msra.mxu0 0.0
  %1375 = vmatprep.subr.mxu0 0.0
  %1376 = vmatpush1.msra.mxu0 0.0
  %1377 = vmatprep.subr.mxu0 0.0
  %1378 = vmatpush1.msra.mxu0 0.0
  %1379 = vmatprep.subr.mxu0 0.0
  %1380 = vmatpush1.msra.mxu0 0.0
  %1381 = vmatprep.subr.mxu0 0.0
  %1382 = vmatpush1.msra.mxu0 0.0
  %1383 = vmatprep.subr.mxu0 0.0
  %1384 = vmatpush1.msra.mxu0 0.0
  %1385 = vmatprep.subr.mxu0 0.0
  %1386 = vmatpush1.msra.mxu0 0.0
  %1387 = vmatprep.mubr.f32.mxu0 0.0
  %1388 = vmatmul.mubr.f32.gmra.mrb[0].mxu0 %v451
  %v1389 = vpop.f32.mrb[0].mxu0
  %v1390 = vadd.f32 0.0, %v1389
  %v1391 = vpop.f32.mrb[0].mxu0
  %v1392 = vadd.f32 0.0, %v1391
  %1393 = vmatprep.mubr.f32.mxu0 0.0
  %1394 = vmatmul.mubr.f32.gmra.mrb[0].mxu0 %v454
  %v1395 = vpop.f32.mrb[0].mxu0
  %v1396 = vadd.f32 0.0, %v1395
  %v1397 = vpop.f32.mrb[0].mxu0
  %v1398 = vadd.f32 0.0, %v1397
  %1399 = vdwg.mxu0
  %1400 = vmatprep.subr.mxu0 %v56
  %1401 = vmatpush1.msra.mxu0 %v55
  %1402 = vmatprep.subr.mxu0 %v88
  %1403 = vmatpush1.msra.mxu0 %v87
  %1404 = vmatprep.subr.mxu0 %v120
  %1405 = vmatpush1.msra.mxu0 %v119
  %1406 = vmatprep.subr.mxu0 %v152
  %1407 = vmatpush1.msra.mxu0 %v151
  %1408 = vmatprep.subr.mxu0 %v184
  %1409 = vmatpush1.msra.mxu0 %v183
  %1410 = vmatprep.subr.mxu0 %v216
  %1411 = vmatpush1.msra.mxu0 %v215
  %1412 = vmatprep.subr.mxu0 %v248
  %1413 = vmatpush1.msra.mxu0 %v247
  %1414 = vmatprep.subr.mxu0 %v280
  %1415 = vmatpush1.msra.mxu0 %v279
  %1416 = vmatprep.subr.mxu0 %v312
  %1417 = vmatpush1.msra.mxu0 %v311
  %1418 = vmatprep.subr.mxu0 %v344
  %1419 = vmatpush1.msra.mxu0 %v343
  %1420 = vmatprep.subr.mxu0 %v376
  %1421 = vmatpush1.msra.mxu0 %v375
  %1422 = vmatprep.subr.mxu0 %v408
  %1423 = vmatpush1.msra.mxu0 %v407
  %1424 = vmatprep.subr.mxu0 %v527
  %1425 = vmatpush1.msra.mxu0 %v524
  %1426 = vmatprep.subr.mxu0 0.0
  %1427 = vmatpush1.msra.mxu0 0.0
  %1428 = vmatprep.subr.mxu0 0.0
  %1429 = vmatpush1.msra.mxu0 0.0
  %1430 = vmatprep.subr.mxu0 0.0
  %1431 = vmatpush1.msra.mxu0 0.0
  %1432 = vmatprep.subr.mxu0 0.0
  %1433 = vmatpush1.msra.mxu0 0.0
  %1434 = vmatprep.subr.mxu0 0.0
  %1435 = vmatpush1.msra.mxu0 0.0
  %1436 = vmatprep.subr.mxu0 0.0
  %1437 = vmatpush1.msra.mxu0 0.0
  %1438 = vmatprep.subr.mxu0 0.0
  %1439 = vmatpush1.msra.mxu0 0.0
  %1440 = vmatprep.subr.mxu0 0.0
  %1441 = vmatpush1.msra.mxu0 0.0
  %1442 = vmatprep.subr.mxu0 0.0
  %1443 = vmatpush1.msra.mxu0 0.0
  %1444 = vmatprep.subr.mxu0 0.0
  %1445 = vmatpush1.msra.mxu0 0.0
  %1446 = vmatprep.subr.mxu0 0.0
  %1447 = vmatpush1.msra.mxu0 0.0
  %1448 = vmatprep.subr.mxu0 0.0
  %1449 = vmatpush1.msra.mxu0 0.0
  %1450 = vmatprep.subr.mxu0 0.0
  %1451 = vmatpush1.msra.mxu0 0.0
  %1452 = vmatprep.subr.mxu0 0.0
  %1453 = vmatpush1.msra.mxu0 0.0
  %1454 = vmatprep.subr.mxu0 0.0
  %1455 = vmatpush1.msra.mxu0 0.0
  %1456 = vmatprep.subr.mxu0 0.0
  %1457 = vmatpush1.msra.mxu0 0.0
  %1458 = vmatprep.subr.mxu0 0.0
  %1459 = vmatpush1.msra.mxu0 0.0
  %1460 = vmatprep.subr.mxu0 0.0
  %1461 = vmatpush1.msra.mxu0 0.0
  %1462 = vmatprep.subr.mxu0 0.0
  %1463 = vmatpush1.msra.mxu0 0.0
  %1464 = vmatprep.mubr.f32.mxu0 0.0
  %1465 = vmatmul.mubr.f32.gmra.mrb[0].mxu0 %v451
  %v1466 = vpop.f32.mrb[0].mxu0
  %v1467 = vadd.f32 0.0, %v1466
  %v1468 = vpop.f32.mrb[0].mxu0
  %v1469 = vadd.f32 0.0, %v1468
  %1470 = vmatprep.mubr.f32.mxu0 0.0
  %1471 = vmatmul.mubr.f32.gmra.mrb[0].mxu0 %v454
  %v1472 = vpop.f32.mrb[0].mxu0
  %v1473 = vadd.f32 0.0, %v1472
  %v1474 = vpop.f32.mrb[0].mxu0
  %v1475 = vadd.f32 0.0, %v1474
  %1476 = vdwg.mxu0
  %1477 = vmatprep.subr.mxu0 %v58
  %1478 = vmatpush1.msra.mxu0 %v57
  %1479 = vmatprep.subr.mxu0 %v90
  %1480 = vmatpush1.msra.mxu0 %v89
  %1481 = vmatprep.subr.mxu0 %v122
  %1482 = vmatpush1.msra.mxu0 %v121
  %1483 = vmatprep.subr.mxu0 %v154
  %1484 = vmatpush1.msra.mxu0 %v153
  %1485 = vmatprep.subr.mxu0 %v186
  %1486 = vmatpush1.msra.mxu0 %v185
  %1487 = vmatprep.subr.mxu0 %v218
  %1488 = vmatpush1.msra.mxu0 %v217
  %1489 = vmatprep.subr.mxu0 %v250
  %1490 = vmatpush1.msra.mxu0 %v249
  %1491 = vmatprep.subr.mxu0 %v282
  %1492 = vmatpush1.msra.mxu0 %v281
  %1493 = vmatprep.subr.mxu0 %v314
  %1494 = vmatpush1.msra.mxu0 %v313
  %1495 = vmatprep.subr.mxu0 %v346
  %1496 = vmatpush1.msra.mxu0 %v345
  %1497 = vmatprep.subr.mxu0 %v378
  %1498 = vmatpush1.msra.mxu0 %v377
  %1499 = vmatprep.subr.mxu0 %v410
  %1500 = vmatpush1.msra.mxu0 %v409
  %1501 = vmatprep.subr.mxu0 %v533
  %1502 = vmatpush1.msra.mxu0 %v530
  %1503 = vmatprep.subr.mxu0 0.0
  %1504 = vmatpush1.msra.mxu0 0.0
  %1505 = vmatprep.subr.mxu0 0.0
  %1506 = vmatpush1.msra.mxu0 0.0
  %1507 = vmatprep.subr.mxu0 0.0
  %1508 = vmatpush1.msra.mxu0 0.0
  %1509 = vmatprep.subr.mxu0 0.0
  %1510 = vmatpush1.msra.mxu0 0.0
  %1511 = vmatprep.subr.mxu0 0.0
  %1512 = vmatpush1.msra.mxu0 0.0
  %1513 = vmatprep.subr.mxu0 0.0
  %1514 = vmatpush1.msra.mxu0 0.0
  %1515 = vmatprep.subr.mxu0 0.0
  %1516 = vmatpush1.msra.mxu0 0.0
  %1517 = vmatprep.subr.mxu0 0.0
  %1518 = vmatpush1.msra.mxu0 0.0
  %1519 = vmatprep.subr.mxu0 0.0
  %1520 = vmatpush1.msra.mxu0 0.0
  %1521 = vmatprep.subr.mxu0 0.0
  %1522 = vmatpush1.msra.mxu0 0.0
  %1523 = vmatprep.subr.mxu0 0.0
  %1524 = vmatpush1.msra.mxu0 0.0
  %1525 = vmatprep.subr.mxu0 0.0
  %1526 = vmatpush1.msra.mxu0 0.0
  %1527 = vmatprep.subr.mxu0 0.0
  %1528 = vmatpush1.msra.mxu0 0.0
  %1529 = vmatprep.subr.mxu0 0.0
  %1530 = vmatpush1.msra.mxu0 0.0
  %1531 = vmatprep.subr.mxu0 0.0
  %1532 = vmatpush1.msra.mxu0 0.0
  %1533 = vmatprep.subr.mxu0 0.0
  %1534 = vmatpush1.msra.mxu0 0.0
  %1535 = vmatprep.subr.mxu0 0.0
  %1536 = vmatpush1.msra.mxu0 0.0
  %1537 = vmatprep.subr.mxu0 0.0
  %1538 = vmatpush1.msra.mxu0 0.0
  %1539 = vmatprep.subr.mxu0 0.0
  %1540 = vmatpush1.msra.mxu0 0.0
  %1541 = vmatprep.mubr.f32.mxu0 0.0
  %1542 = vmatmul.mubr.f32.gmra.mrb[0].mxu0 %v451
  %v1543 = vpop.f32.mrb[0].mxu0
  %v1544 = vadd.f32 0.0, %v1543
  %v1545 = vpop.f32.mrb[0].mxu0
  %v1546 = vadd.f32 0.0, %v1545
  %1547 = vmatprep.mubr.f32.mxu0 0.0
  %1548 = vmatmul.mubr.f32.gmra.mrb[0].mxu0 %v454
  %v1549 = vpop.f32.mrb[0].mxu0
  %v1550 = vadd.f32 0.0, %v1549
  %v1551 = vpop.f32.mrb[0].mxu0
  %v1552 = vadd.f32 0.0, %v1551
  %1553 = vdwg.mxu0
  %1554 = vmatprep.subr.mxu0 %v60
  %1555 = vmatpush1.msra.mxu0 %v59
  %1556 = vmatprep.subr.mxu0 %v92
  %1557 = vmatpush1.msra.mxu0 %v91
  %1558 = vmatprep.subr.mxu0 %v124
  %1559 = vmatpush1.msra.mxu0 %v123
  %1560 = vmatprep.subr.mxu0 %v156
  %1561 = vmatpush1.msra.mxu0 %v155
  %1562 = vmatprep.subr.mxu0 %v188
  %1563 = vmatpush1.msra.mxu0 %v187
  %1564 = vmatprep.subr.mxu0 %v220
  %1565 = vmatpush1.msra.mxu0 %v219
  %1566 = vmatprep.subr.mxu0 %v252
  %1567 = vmatpush1.msra.mxu0 %v251
  %1568 = vmatprep.subr.mxu0 %v284
  %1569 = vmatpush1.msra.mxu0 %v283
  %1570 = vmatprep.subr.mxu0 %v316
  %1571 = vmatpush1.msra.mxu0 %v315
  %1572 = vmatprep.subr.mxu0 %v348
  %1573 = vmatpush1.msra.mxu0 %v347
  %1574 = vmatprep.subr.mxu0 %v380
  %1575 = vmatpush1.msra.mxu0 %v379
  %1576 = vmatprep.subr.mxu0 %v412
  %1577 = vmatpush1.msra.mxu0 %v411
  %1578 = vmatprep.subr.mxu0 %v539
  %1579 = vmatpush1.msra.mxu0 %v536
  %1580 = vmatprep.subr.mxu0 0.0
  %1581 = vmatpush1.msra.mxu0 0.0
  %1582 = vmatprep.subr.mxu0 0.0
  %1583 = vmatpush1.msra.mxu0 0.0
  %1584 = vmatprep.subr.mxu0 0.0
  %1585 = vmatpush1.msra.mxu0 0.0
  %1586 = vmatprep.subr.mxu0 0.0
  %1587 = vmatpush1.msra.mxu0 0.0
  %1588 = vmatprep.subr.mxu0 0.0
  %1589 = vmatpush1.msra.mxu0 0.0
  %1590 = vmatprep.subr.mxu0 0.0
  %1591 = vmatpush1.msra.mxu0 0.0
  %1592 = vmatprep.subr.mxu0 0.0
  %1593 = vmatpush1.msra.mxu0 0.0
  %1594 = vmatprep.subr.mxu0 0.0
  %1595 = vmatpush1.msra.mxu0 0.0
  %1596 = vmatprep.subr.mxu0 0.0
  %1597 = vmatpush1.msra.mxu0 0.0
  %1598 = vmatprep.subr.mxu0 0.0
  %1599 = vmatpush1.msra.mxu0 0.0
  %1600 = vmatprep.subr.mxu0 0.0
  %1601 = vmatpush1.msra.mxu0 0.0
  %1602 = vmatprep.subr.mxu0 0.0
  %1603 = vmatpush1.msra.mxu0 0.0
  %1604 = vmatprep.subr.mxu0 0.0
  %1605 = vmatpush1.msra.mxu0 0.0
  %1606 = vmatprep.subr.mxu0 0.0
  %1607 = vmatpush1.msra.mxu0 0.0
  %1608 = vmatprep.subr.mxu0 0.0
  %1609 = vmatpush1.msra.mxu0 0.0
  %1610 = vmatprep.subr.mxu0 0.0
  %1611 = vmatpush1.msra.mxu0 0.0
  %1612 = vmatprep.subr.mxu0 0.0
  %1613 = vmatpush1.msra.mxu0 0.0
  %1614 = vmatprep.subr.mxu0 0.0
  %1615 = vmatpush1.msra.mxu0 0.0
  %1616 = vmatprep.subr.mxu0 0.0
  %1617 = vmatpush1.msra.mxu0 0.0
  %1618 = vmatprep.mubr.f32.mxu0 0.0
  %1619 = vmatmul.mubr.f32.gmra.mrb[0].mxu0 %v451
  %v1620 = vpop.f32.mrb[0].mxu0
  %v1621 = vadd.f32 0.0, %v1620
  %v1622 = vpop.f32.mrb[0].mxu0
  %v1623 = vadd.f32 0.0, %v1622
  %1624 = vmatprep.mubr.f32.mxu0 0.0
  %1625 = vmatmul.mubr.f32.gmra.mrb[0].mxu0 %v454
  %v1626 = vpop.f32.mrb[0].mxu0
  %v1627 = vadd.f32 0.0, %v1626
  %v1628 = vpop.f32.mrb[0].mxu0
  %v1629 = vadd.f32 0.0, %v1628
  %1630 = vdwg.mxu0
  %1631 = vmatprep.subr.mxu0 %v62
  %1632 = vmatpush1.msra.mxu0 %v61
  %1633 = vmatprep.subr.mxu0 %v94
  %1634 = vmatpush1.msra.mxu0 %v93
  %1635 = vmatprep.subr.mxu0 %v126
  %1636 = vmatpush1.msra.mxu0 %v125
  %1637 = vmatprep.subr.mxu0 %v158
  %1638 = vmatpush1.msra.mxu0 %v157
  %1639 = vmatprep.subr.mxu0 %v190
  %1640 = vmatpush1.msra.mxu0 %v189
  %1641 = vmatprep.subr.mxu0 %v222
  %1642 = vmatpush1.msra.mxu0 %v221
  %1643 = vmatprep.subr.mxu0 %v254
  %1644 = vmatpush1.msra.mxu0 %v253
  %1645 = vmatprep.subr.mxu0 %v286
  %1646 = vmatpush1.msra.mxu0 %v285
  %1647 = vmatprep.subr.mxu0 %v318
  %1648 = vmatpush1.msra.mxu0 %v317
  %1649 = vmatprep.subr.mxu0 %v350
  %1650 = vmatpush1.msra.mxu0 %v349
  %1651 = vmatprep.subr.mxu0 %v382
  %1652 = vmatpush1.msra.mxu0 %v381
  %1653 = vmatprep.subr.mxu0 %v414
  %1654 = vmatpush1.msra.mxu0 %v413
  %1655 = vmatprep.subr.mxu0 %v545
  %1656 = vmatpush1.msra.mxu0 %v542
  %1657 = vmatprep.subr.mxu0 0.0
  %1658 = vmatpush1.msra.mxu0 0.0
  %1659 = vmatprep.subr.mxu0 0.0
  %1660 = vmatpush1.msra.mxu0 0.0
  %1661 = vmatprep.subr.mxu0 0.0
  %1662 = vmatpush1.msra.mxu0 0.0
  %1663 = vmatprep.subr.mxu0 0.0
  %1664 = vmatpush1.msra.mxu0 0.0
  %1665 = vmatprep.subr.mxu0 0.0
  %1666 = vmatpush1.msra.mxu0 0.0
  %1667 = vmatprep.subr.mxu0 0.0
  %1668 = vmatpush1.msra.mxu0 0.0
  %1669 = vmatprep.subr.mxu0 0.0
  %1670 = vmatpush1.msra.mxu0 0.0
  %1671 = vmatprep.subr.mxu0 0.0
  %1672 = vmatpush1.msra.mxu0 0.0
  %1673 = vmatprep.subr.mxu0 0.0
  %1674 = vmatpush1.msra.mxu0 0.0
  %1675 = vmatprep.subr.mxu0 0.0
  %1676 = vmatpush1.msra.mxu0 0.0
  %1677 = vmatprep.subr.mxu0 0.0
  %1678 = vmatpush1.msra.mxu0 0.0
  %1679 = vmatprep.subr.mxu0 0.0
  %1680 = vmatpush1.msra.mxu0 0.0
  %1681 = vmatprep.subr.mxu0 0.0
  %1682 = vmatpush1.msra.mxu0 0.0
  %1683 = vmatprep.subr.mxu0 0.0
  %1684 = vmatpush1.msra.mxu0 0.0
  %1685 = vmatprep.subr.mxu0 0.0
  %1686 = vmatpush1.msra.mxu0 0.0
  %1687 = vmatprep.subr.mxu0 0.0
  %1688 = vmatpush1.msra.mxu0 0.0
  %1689 = vmatprep.subr.mxu0 0.0
  %1690 = vmatpush1.msra.mxu0 0.0
  %1691 = vmatprep.subr.mxu0 0.0
  %1692 = vmatpush1.msra.mxu0 0.0
  %1693 = vmatprep.subr.mxu0 0.0
  %1694 = vmatpush1.msra.mxu0 0.0
  %1695 = vmatprep.mubr.f32.mxu0 0.0
  %1696 = vmatmul.mubr.f32.gmra.mrb[0].mxu0 %v451
  %v1697 = vpop.f32.mrb[0].mxu0
  %v1698 = vadd.f32 0.0, %v1697
  %v1699 = vpop.f32.mrb[0].mxu0
  %v1700 = vadd.f32 0.0, %v1699
  %1701 = vmatprep.mubr.f32.mxu0 0.0
  %1702 = vmatmul.mubr.f32.gmra.mrb[0].mxu0 %v454
  %v1703 = vpop.f32.mrb[0].mxu0
  %v1704 = vadd.f32 0.0, %v1703
  %v1705 = vpop.f32.mrb[0].mxu0
  %v1706 = vadd.f32 0.0, %v1705
  %1707 = vdwg.mxu0
  %1708 = vmatprep.subr.mxu0 %v64
  %1709 = vmatpush1.msra.mxu0 %v63
  %1710 = vmatprep.subr.mxu0 %v96
  %1711 = vmatpush1.msra.mxu0 %v95
  %1712 = vmatprep.subr.mxu0 %v128
  %1713 = vmatpush1.msra.mxu0 %v127
  %1714 = vmatprep.subr.mxu0 %v160
  %1715 = vmatpush1.msra.mxu0 %v159
  %1716 = vmatprep.subr.mxu0 %v192
  %1717 = vmatpush1.msra.mxu0 %v191
  %1718 = vmatprep.subr.mxu0 %v224
  %1719 = vmatpush1.msra.mxu0 %v223
  %1720 = vmatprep.subr.mxu0 %v256
  %1721 = vmatpush1.msra.mxu0 %v255
  %1722 = vmatprep.subr.mxu0 %v288
  %1723 = vmatpush1.msra.mxu0 %v287
  %1724 = vmatprep.subr.mxu0 %v320
  %1725 = vmatpush1.msra.mxu0 %v319
  %1726 = vmatprep.subr.mxu0 %v352
  %1727 = vmatpush1.msra.mxu0 %v351
  %1728 = vmatprep.subr.mxu0 %v384
  %1729 = vmatpush1.msra.mxu0 %v383
  %1730 = vmatprep.subr.mxu0 %v416
  %1731 = vmatpush1.msra.mxu0 %v415
  %1732 = vmatprep.subr.mxu0 %v551
  %1733 = vmatpush1.msra.mxu0 %v548
  %1734 = vmatprep.subr.mxu0 0.0
  %1735 = vmatpush1.msra.mxu0 0.0
  %1736 = vmatprep.subr.mxu0 0.0
  %1737 = vmatpush1.msra.mxu0 0.0
  %1738 = vmatprep.subr.mxu0 0.0
  %1739 = vmatpush1.msra.mxu0 0.0
  %1740 = vmatprep.subr.mxu0 0.0
  %1741 = vmatpush1.msra.mxu0 0.0
  %1742 = vmatprep.subr.mxu0 0.0
  %1743 = vmatpush1.msra.mxu0 0.0
  %1744 = vmatprep.subr.mxu0 0.0
  %1745 = vmatpush1.msra.mxu0 0.0
  %1746 = vmatprep.subr.mxu0 0.0
  %1747 = vmatpush1.msra.mxu0 0.0
  %1748 = vmatprep.subr.mxu0 0.0
  %1749 = vmatpush1.msra.mxu0 0.0
  %1750 = vmatprep.subr.mxu0 0.0
  %1751 = vmatpush1.msra.mxu0 0.0
  %1752 = vmatprep.subr.mxu0 0.0
  %1753 = vmatpush1.msra.mxu0 0.0
  %1754 = vmatprep.subr.mxu0 0.0
  %1755 = vmatpush1.msra.mxu0 0.0
  %1756 = vmatprep.subr.mxu0 0.0
  %1757 = vmatpush1.msra.mxu0 0.0
  %1758 = vmatprep.subr.mxu0 0.0
  %1759 = vmatpush1.msra.mxu0 0.0
  %1760 = vmatprep.subr.mxu0 0.0
  %1761 = vmatpush1.msra.mxu0 0.0
  %1762 = vmatprep.subr.mxu0 0.0
  %1763 = vmatpush1.msra.mxu0 0.0
  %1764 = vmatprep.subr.mxu0 0.0
  %1765 = vmatpush1.msra.mxu0 0.0
  %1766 = vmatprep.subr.mxu0 0.0
  %1767 = vmatpush1.msra.mxu0 0.0
  %1768 = vmatprep.subr.mxu0 0.0
  %1769 = vmatpush1.msra.mxu0 0.0
  %1770 = vmatprep.subr.mxu0 0.0
  %1771 = vmatpush1.msra.mxu0 0.0
  %1772 = vmatprep.mubr.f32.mxu0 0.0
  %1773 = vmatmul.mubr.f32.gmra.mrb[0].mxu0 %v451
  %v1774 = vpop.f32.mrb[0].mxu0
  %v1775 = vadd.f32 0.0, %v1774
  %v1776 = vpop.f32.mrb[0].mxu0
  %v1777 = vadd.f32 0.0, %v1776
  %1778 = vmatprep.mubr.f32.mxu0 0.0
  %1779 = vmatmul.mubr.f32.gmra.mrb[0].mxu0 %v454
  %v1780 = vpop.f32.mrb[0].mxu0
  %v1781 = vadd.f32 0.0, %v1780
  %v1782 = vpop.f32.mrb[0].mxu0
  %v1783 = vadd.f32 0.0, %v1782
  %1784 = vdwg.mxu0
  %v1785 = vld [vmem:[%s4] sm:$0xff]
  %v1786 = vld [vmem:[%s4 + $0x8] sm:$0xff]
  %1788 = vset.pattern.permute.xlu0 0
  %1789 = vperm.xlu0 %1788, %v1785
  %v1790 = vpop.permute.xlu0 %1789
  %1793 = vset.pattern.permute.xlu0 0
  %1794 = vperm.xlu0 %1793, %v1786
  %v1795 = vpop.permute.xlu0 %1794
  %v1797 = vmul.f32 %v620, %v1790
  %v1798 = vmul.f32 %v622, %v1790
  %v1799 = vmul.f32 %v697, %v1790
  %v1800 = vmul.f32 %v699, %v1790
  %v1801 = vmul.f32 %v774, %v1790
  %v1802 = vmul.f32 %v776, %v1790
  %v1803 = vmul.f32 %v851, %v1790
  %v1804 = vmul.f32 %v853, %v1790
  %v1805 = vmul.f32 %v928, %v1790
  %v1806 = vmul.f32 %v930, %v1790
  %v1807 = vmul.f32 %v1005, %v1790
  %v1808 = vmul.f32 %v1007, %v1790
  %v1809 = vmul.f32 %v1082, %v1790
  %v1810 = vmul.f32 %v1084, %v1790
  %v1811 = vmul.f32 %v1159, %v1790
  %v1812 = vmul.f32 %v1161, %v1790
  %v1813 = vmul.f32 %v1236, %v1790
  %v1814 = vmul.f32 %v1238, %v1790
  %v1815 = vmul.f32 %v1313, %v1790
  %v1816 = vmul.f32 %v1315, %v1790
  %v1817 = vmul.f32 %v1390, %v1790
  %v1818 = vmul.f32 %v1392, %v1790
  %v1819 = vmul.f32 %v1467, %v1790
  %v1820 = vmul.f32 %v1469, %v1790
  %v1821 = vmul.f32 %v1544, %v1790
  %v1822 = vmul.f32 %v1546, %v1790
  %v1823 = vmul.f32 %v1621, %v1790
  %v1824 = vmul.f32 %v1623, %v1790
  %v1825 = vmul.f32 %v1698, %v1790
  %v1826 = vmul.f32 %v1700, %v1790
  %v1827 = vmul.f32 %v1775, %v1790
  %v1828 = vmul.f32 %v1777, %v1790
  %v1829 = vmul.f32 %v626, %v1795
  %v1830 = vmul.f32 %v628, %v1795
  %v1831 = vmul.f32 %v703, %v1795
  %v1832 = vmul.f32 %v705, %v1795
  %v1833 = vmul.f32 %v780, %v1795
  %v1834 = vmul.f32 %v782, %v1795
  %v1835 = vmul.f32 %v857, %v1795
  %v1836 = vmul.f32 %v859, %v1795
  %v1837 = vmul.f32 %v934, %v1795
  %v1838 = vmul.f32 %v936, %v1795
  %v1839 = vmul.f32 %v1011, %v1795
  %v1840 = vmul.f32 %v1013, %v1795
  %v1841 = vmul.f32 %v1088, %v1795
  %v1842 = vmul.f32 %v1090, %v1795
  %v1843 = vmul.f32 %v1165, %v1795
  %v1844 = vmul.f32 %v1167, %v1795
  %v1845 = vmul.f32 %v1242, %v1795
  %v1846 = vmul.f32 %v1244, %v1795
  %v1847 = vmul.f32 %v1319, %v1795
  %v1848 = vmul.f32 %v1321, %v1795
  %v1849 = vmul.f32 %v1396, %v1795
  %v1850 = vmul.f32 %v1398, %v1795
  %v1851 = vmul.f32 %v1473, %v1795
  %v1852 = vmul.f32 %v1475, %v1795
  %v1853 = vmul.f32 %v1550, %v1795
  %v1854 = vmul.f32 %v1552, %v1795
  %v1855 = vmul.f32 %v1627, %v1795
  %v1856 = vmul.f32 %v1629, %v1795
  %v1857 = vmul.f32 %v1704, %v1795
  %v1858 = vmul.f32 %v1706, %v1795
  %v1859 = vmul.f32 %v1781, %v1795
  %v1860 = vmul.f32 %v1783, %v1795
  %v1861 = vld [vmem:[%s5] sm:$0xff]
  %v1862 = vld [vmem:[%s5 + $0x8] sm:$0xff]
  %1864 = vset.pattern.permute.xlu0 0
  %1865 = vperm.xlu0 %1864, %v1861
  %v1866 = vpop.permute.xlu0 %1865
  %1869 = vset.pattern.permute.xlu0 0
  %1870 = vperm.xlu0 %1869, %v1862
  %v1871 = vpop.permute.xlu0 %1870
  %v1873 = vadd.f32 %v1797, %v1866
  %v1874 = vadd.f32 %v1798, %v1866
  %v1875 = vadd.f32 %v1799, %v1866
  %v1876 = vadd.f32 %v1800, %v1866
  %v1877 = vadd.f32 %v1801, %v1866
  %v1878 = vadd.f32 %v1802, %v1866
  %v1879 = vadd.f32 %v1803, %v1866
  %v1880 = vadd.f32 %v1804, %v1866
  %v1881 = vadd.f32 %v1805, %v1866
  %v1882 = vadd.f32 %v1806, %v1866
  %v1883 = vadd.f32 %v1807, %v1866
  %v1884 = vadd.f32 %v1808, %v1866
  %v1885 = vadd.f32 %v1809, %v1866
  %v1886 = vadd.f32 %v1810, %v1866
  %v1887 = vadd.f32 %v1811, %v1866
  %v1888 = vadd.f32 %v1812, %v1866
  %v1889 = vadd.f32 %v1813, %v1866
  %v1890 = vadd.f32 %v1814, %v1866
  %v1891 = vadd.f32 %v1815, %v1866
  %v1892 = vadd.f32 %v1816, %v1866
  %v1893 = vadd.f32 %v1817, %v1866
  %v1894 = vadd.f32 %v1818, %v1866
  %v1895 = vadd.f32 %v1819, %v1866
  %v1896 = vadd.f32 %v1820, %v1866
  %v1897 = vadd.f32 %v1821, %v1866
  %v1898 = vadd.f32 %v1822, %v1866
  %v1899 = vadd.f32 %v1823, %v1866
  %v1900 = vadd.f32 %v1824, %v1866
  %v1901 = vadd.f32 %v1825, %v1866
  %v1902 = vadd.f32 %v1826, %v1866
  %v1903 = vadd.f32 %v1827, %v1866
  %v1904 = vadd.f32 %v1828, %v1866
  %v1905 = vadd.f32 %v1829, %v1871
  %v1906 = vadd.f32 %v1830, %v1871
  %v1907 = vadd.f32 %v1831, %v1871
  %v1908 = vadd.f32 %v1832, %v1871
  %v1909 = vadd.f32 %v1833, %v1871
  %v1910 = vadd.f32 %v1834, %v1871
  %v1911 = vadd.f32 %v1835, %v1871
  %v1912 = vadd.f32 %v1836, %v1871
  %v1913 = vadd.f32 %v1837, %v1871
  %v1914 = vadd.f32 %v1838, %v1871
  %v1915 = vadd.f32 %v1839, %v1871
  %v1916 = vadd.f32 %v1840, %v1871
  %v1917 = vadd.f32 %v1841, %v1871
  %v1918 = vadd.f32 %v1842, %v1871
  %v1919 = vadd.f32 %v1843, %v1871
  %v1920 = vadd.f32 %v1844, %v1871
  %v1921 = vadd.f32 %v1845, %v1871
  %v1922 = vadd.f32 %v1846, %v1871
  %v1923 = vadd.f32 %v1847, %v1871
  %v1924 = vadd.f32 %v1848, %v1871
  %v1925 = vadd.f32 %v1849, %v1871
  %v1926 = vadd.f32 %v1850, %v1871
  %v1927 = vadd.f32 %v1851, %v1871
  %v1928 = vadd.f32 %v1852, %v1871
  %v1929 = vadd.f32 %v1853, %v1871
  %v1930 = vadd.f32 %v1854, %v1871
  %v1931 = vadd.f32 %v1855, %v1871
  %v1932 = vadd.f32 %v1856, %v1871
  %v1933 = vadd.f32 %v1857, %v1871
  %v1934 = vadd.f32 %v1858, %v1871
  %v1935 = vadd.f32 %v1859, %v1871
  %v1936 = vadd.f32 %v1860, %v1871
  %v1937 = vmax.f32 %v1873, 0.0
  %v1938 = vmax.f32 %v1874, 0.0
  %v1939 = vmax.f32 %v1875, 0.0
  %v1940 = vmax.f32 %v1876, 0.0
  %v1941 = vmax.f32 %v1877, 0.0
  %v1942 = vmax.f32 %v1878, 0.0
  %v1943 = vmax.f32 %v1879, 0.0
  %v1944 = vmax.f32 %v1880, 0.0
  %v1945 = vmax.f32 %v1881, 0.0
  %v1946 = vmax.f32 %v1882, 0.0
  %v1947 = vmax.f32 %v1883, 0.0
  %v1948 = vmax.f32 %v1884, 0.0
  %v1949 = vmax.f32 %v1885, 0.0
  %v1950 = vmax.f32 %v1886, 0.0
  %v1951 = vmax.f32 %v1887, 0.0
  %v1952 = vmax.f32 %v1888, 0.0
  %v1953 = vmax.f32 %v1889, 0.0
  %v1954 = vmax.f32 %v1890, 0.0
  %v1955 = vmax.f32 %v1891, 0.0
  %v1956 = vmax.f32 %v1892, 0.0
  %v1957 = vmax.f32 %v1893, 0.0
  %v1958 = vmax.f32 %v1894, 0.0
  %v1959 = vmax.f32 %v1895, 0.0
  %v1960 = vmax.f32 %v1896, 0.0
  %v1961 = vmax.f32 %v1897, 0.0
  %v1962 = vmax.f32 %v1898, 0.0
  %v1963 = vmax.f32 %v1899, 0.0
  %v1964 = vmax.f32 %v1900, 0.0
  %v1965 = vmax.f32 %v1901, 0.0
  %v1966 = vmax.f32 %v1902, 0.0
  %v1967 = vmax.f32 %v1903, 0.0
  %v1968 = vmax.f32 %v1904, 0.0
  %v1969 = vmax.f32 %v1905, 0.0
  %v1970 = vmax.f32 %v1906, 0.0
  %v1971 = vmax.f32 %v1907, 0.0
  %v1972 = vmax.f32 %v1908, 0.0
  %v1973 = vmax.f32 %v1909, 0.0
  %v1974 = vmax.f32 %v1910, 0.0
  %v1975 = vmax.f32 %v1911, 0.0
  %v1976 = vmax.f32 %v1912, 0.0
  %v1977 = vmax.f32 %v1913, 0.0
  %v1978 = vmax.f32 %v1914, 0.0
  %v1979 = vmax.f32 %v1915, 0.0
  %v1980 = vmax.f32 %v1916, 0.0
  %v1981 = vmax.f32 %v1917, 0.0
  %v1982 = vmax.f32 %v1918, 0.0
  %v1983 = vmax.f32 %v1919, 0.0
  %v1984 = vmax.f32 %v1920, 0.0
  %v1985 = vmax.f32 %v1921, 0.0
  %v1986 = vmax.f32 %v1922, 0.0
  %v1987 = vmax.f32 %v1923, 0.0
  %v1988 = vmax.f32 %v1924, 0.0
  %v1989 = vmax.f32 %v1925, 0.0
  %v1990 = vmax.f32 %v1926, 0.0
  %v1991 = vmax.f32 %v1927, 0.0
  %v1992 = vmax.f32 %v1928, 0.0
  %v1993 = vmax.f32 %v1929, 0.0
  %v1994 = vmax.f32 %v1930, 0.0
  %v1995 = vmax.f32 %v1931, 0.0
  %v1996 = vmax.f32 %v1932, 0.0
  %v1997 = vmax.f32 %v1933, 0.0
  %v1998 = vmax.f32 %v1934, 0.0
  %v1999 = vmax.f32 %v1935, 0.0
  %v2000 = vmax.f32 %v1936, 0.0
  %2001 = vst [vmem:[%s8] sm:$0xff] %v1937
  %2002 = vst [vmem:[%s8 + $0x8] sm:$0xff] %v1938
  %2003 = vst [vmem:[%s8 + $0x10] sm:$0xff] %v1939
  %2004 = vst [vmem:[%s8 + $0x18] sm:$0xff] %v1940
  %2005 = vst [vmem:[%s8 + $0x20] sm:$0xff] %v1941
  %2006 = vst [vmem:[%s8 + $0x28] sm:$0xff] %v1942
  %2007 = vst [vmem:[%s8 + $0x30] sm:$0xff] %v1943
  %2008 = vst [vmem:[%s8 + $0x38] sm:$0xff] %v1944
  %2009 = vst [vmem:[%s8 + $0x40] sm:$0xff] %v1945
  %2010 = vst [vmem:[%s8 + $0x48] sm:$0xff] %v1946
  %2011 = vst [vmem:[%s8 + $0x50] sm:$0xff] %v1947
  %2012 = vst [vmem:[%s8 + $0x58] sm:$0xff] %v1948
  %2013 = vst [vmem:[%s8 + $0x60] sm:$0xff] %v1949
  %2014 = vst [vmem:[%s8 + $0x68] sm:$0xff] %v1950
  %2015 = vst [vmem:[%s8 + $0x70] sm:$0xff] %v1951
  %2016 = vst [vmem:[%s8 + $0x78] sm:$0xff] %v1952
  %2017 = vst [vmem:[%s8 + $0x80] sm:$0xff] %v1953
  %2018 = vst [vmem:[%s8 + $0x88] sm:$0xff] %v1954
  %2019 = vst [vmem:[%s8 + $0x90] sm:$0xff] %v1955
  %2020 = vst [vmem:[%s8 + $0x98] sm:$0xff] %v1956
  %2021 = vst [vmem:[%s8 + $0xa0] sm:$0xff] %v1957
  %2022 = vst [vmem:[%s8 + $0xa8] sm:$0xff] %v1958
  %2023 = vst [vmem:[%s8 + $0xb0] sm:$0xff] %v1959
  %2024 = vst [vmem:[%s8 + $0xb8] sm:$0xff] %v1960
  %2025 = vst [vmem:[%s8 + $0xc0] sm:$0xff] %v1961
  %2026 = vst [vmem:[%s8 + $0xc8] sm:$0xff] %v1962
  %2027 = vst [vmem:[%s8 + $0xd0] sm:$0xff] %v1963
  %2028 = vst [vmem:[%s8 + $0xd8] sm:$0xff] %v1964
  %2029 = vst [vmem:[%s8 + $0xe0] sm:$0xff] %v1965
  %2030 = vst [vmem:[%s8 + $0xe8] sm:$0xff] %v1966
  %2031 = vst [vmem:[%s8 + $0xf0] sm:$0xff] %v1967
  %2032 = vst [vmem:[%s8 + $0xf8] sm:$0xff] %v1968
  %2033 = vst [vmem:[%s8 + $0x100] sm:$0xff] %v1969
  %2034 = vst [vmem:[%s8 + $0x108] sm:$0xff] %v1970
  %2035 = vst [vmem:[%s8 + $0x110] sm:$0xff] %v1971
  %2036 = vst [vmem:[%s8 + $0x118] sm:$0xff] %v1972
  %2037 = vst [vmem:[%s8 + $0x120] sm:$0xff] %v1973
  %2038 = vst [vmem:[%s8 + $0x128] sm:$0xff] %v1974
  %2039 = vst [vmem:[%s8 + $0x130] sm:$0xff] %v1975
  %2040 = vst [vmem:[%s8 + $0x138] sm:$0xff] %v1976
  %2041 = vst [vmem:[%s8 + $0x140] sm:$0xff] %v1977
  %2042 = vst [vmem:[%s8 + $0x148] sm:$0xff] %v1978
  %2043 = vst [vmem:[%s8 + $0x150] sm:$0xff] %v1979
  %2044 = vst [vmem:[%s8 + $0x158] sm:$0xff] %v1980
  %2045 = vst [vmem:[%s8 + $0x160] sm:$0xff] %v1981
  %2046 = vst [vmem:[%s8 + $0x168] sm:$0xff] %v1982
  %2047 = vst [vmem:[%s8 + $0x170] sm:$0xff] %v1983
  %2048 = vst [vmem:[%s8 + $0x178] sm:$0xff] %v1984
  %2049 = vst [vmem:[%s8 + $0x180] sm:$0xff] %v1985
  %2050 = vst [vmem:[%s8 + $0x188] sm:$0xff] %v1986
  %2051 = vst [vmem:[%s8 + $0x190] sm:$0xff] %v1987
  %2052 = vst [vmem:[%s8 + $0x198] sm:$0xff] %v1988
  %2053 = vst [vmem:[%s8 + $0x1a0] sm:$0xff] %v1989
  %2054 = vst [vmem:[%s8 + $0x1a8] sm:$0xff] %v1990
  %2055 = vst [vmem:[%s8 + $0x1b0] sm:$0xff] %v1991
  %2056 = vst [vmem:[%s8 + $0x1b8] sm:$0xff] %v1992
  %2057 = vst [vmem:[%s8 + $0x1c0] sm:$0xff] %v1993
  %2058 = vst [vmem:[%s8 + $0x1c8] sm:$0xff] %v1994
  %2059 = vst [vmem:[%s8 + $0x1d0] sm:$0xff] %v1995
  %2060 = vst [vmem:[%s8 + $0x1d8] sm:$0xff] %v1996
  %2061 = vst [vmem:[%s8 + $0x1e0] sm:$0xff] %v1997
  %2062 = vst [vmem:[%s8 + $0x1e8] sm:$0xff] %v1998
  %2063 = vst [vmem:[%s8 + $0x1f0] sm:$0xff] %v1999
  %2064 = vst [vmem:[%s8 + $0x1f8] sm:$0xff] %v2000
  %v2065 = vld [vmem:[%s3] sm:$0xff]
  %v2066 = vld [vmem:[%s1] sm:$0xff]
  %v2067 = vld [vmem:[%s1 + $0x8] sm:$0xff]
  %v2068 = vld [vmem:[%s1 + $0x10] sm:$0xff]
  %v2069 = vld [vmem:[%s1 + $0x18] sm:$0xff]
  %v2070 = vld [vmem:[%s1 + $0x20] sm:$0xff]
  %v2071 = vld [vmem:[%s1 + $0x28] sm:$0xff]
  %v2072 = vld [vmem:[%s1 + $0x30] sm:$0xff]
  %v2073 = vld [vmem:[%s1 + $0x38] sm:$0xff]
  %v2074 = vld [vmem:[%s1 + $0x40] sm:$0xff]
  %v2075 = vld [vmem:[%s1 + $0x48] sm:$0xff]
  %v2076 = vld [vmem:[%s1 + $0x50] sm:$0xff]
  %v2077 = vld [vmem:[%s1 + $0x58] sm:$0xff]
  %v2078 = vld [vmem:[%s1 + $0x60] sm:$0xff]
  %v2079 = vld [vmem:[%s1 + $0x68] sm:$0xff]
  %v2080 = vld [vmem:[%s1 + $0x70] sm:$0xff]
  %v2081 = vld [vmem:[%s1 + $0x78] sm:$0xff]
  %v2082 = vld [vmem:[%s1 + $0x80] sm:$0xff]
  %v2083 = vld [vmem:[%s1 + $0x88] sm:$0xff]
  %v2084 = vld [vmem:[%s1 + $0x90] sm:$0xff]
  %v2085 = vld [vmem:[%s1 + $0x98] sm:$0xff]
  %v2086 = vld [vmem:[%s1 + $0xa0] sm:$0xff]
  %v2087 = vld [vmem:[%s1 + $0xa8] sm:$0xff]
  %v2088 = vld [vmem:[%s1 + $0xb0] sm:$0xff]
  %v2089 = vld [vmem:[%s1 + $0xb8] sm:$0xff]
  %v2090 = vld [vmem:[%s1 + $0xc0] sm:$0xff]
  %v2091 = vld [vmem:[%s1 + $0xc8] sm:$0xff]
  %v2092 = vld [vmem:[%s1 + $0xd0] sm:$0xff]
  %v2093 = vld [vmem:[%s1 + $0xd8] sm:$0xff]
  %v2094 = vld [vmem:[%s1 + $0xe0] sm:$0xff]
  %v2095 = vld [vmem:[%s1 + $0xe8] sm:$0xff]
  %v2096 = vld [vmem:[%s1 + $0xf0] sm:$0xff]
  %v2097 = vld [vmem:[%s1 + $0xf8] sm:$0xff]
  %v2098 = vld [vmem:[%s1 + $0x100] sm:$0xff]
  %v2099 = vld [vmem:[%s1 + $0x108] sm:$0xff]
  %v2100 = vld [vmem:[%s1 + $0x110] sm:$0xff]
  %v2101 = vld [vmem:[%s1 + $0x118] sm:$0xff]
  %v2102 = vld [vmem:[%s1 + $0x120] sm:$0xff]
  %v2103 = vld [vmem:[%s1 + $0x128] sm:$0xff]
  %v2104 = vld [vmem:[%s1 + $0x130] sm:$0xff]
  %v2105 = vld [vmem:[%s1 + $0x138] sm:$0xff]
  %v2106 = vld [vmem:[%s1 + $0x140] sm:$0xff]
  %v2107 = vld [vmem:[%s1 + $0x148] sm:$0xff]
  %v2108 = vld [vmem:[%s1 + $0x150] sm:$0xff]
  %v2109 = vld [vmem:[%s1 + $0x158] sm:$0xff]
  %v2110 = vld [vmem:[%s1 + $0x160] sm:$0xff]
  %v2111 = vld [vmem:[%s1 + $0x168] sm:$0xff]
  %v2112 = vld [vmem:[%s1 + $0x170] sm:$0xff]
  %v2113 = vld [vmem:[%s1 + $0x178] sm:$0xff]
  %v2114 = vld [vmem:[%s1 + $0x180] sm:$0xff]
  %v2115 = vld [vmem:[%s1 + $0x188] sm:$0xff]
  %v2116 = vld [vmem:[%s1 + $0x190] sm:$0xff]
  %v2117 = vld [vmem:[%s1 + $0x198] sm:$0xff]
  %v2118 = vld [vmem:[%s1 + $0x1a0] sm:$0xff]
  %v2119 = vld [vmem:[%s1 + $0x1a8] sm:$0xff]
  %v2120 = vld [vmem:[%s1 + $0x1b0] sm:$0xff]
  %v2121 = vld [vmem:[%s1 + $0x1b8] sm:$0xff]
  %v2122 = vld [vmem:[%s1 + $0x1c0] sm:$0xff]
  %v2123 = vld [vmem:[%s1 + $0x1c8] sm:$0xff]
  %v2124 = vld [vmem:[%s1 + $0x1d0] sm:$0xff]
  %v2125 = vld [vmem:[%s1 + $0x1d8] sm:$0xff]
  %v2126 = vld [vmem:[%s1 + $0x1e0] sm:$0xff]
  %v2127 = vld [vmem:[%s1 + $0x1e8] sm:$0xff]
  %v2128 = vld [vmem:[%s1 + $0x1f0] sm:$0xff]
  %v2129 = vld [vmem:[%s1 + $0x1f8] sm:$0xff]
  %v2130 = vld [vmem:[%s1 + $0x200] sm:$0xff]
  %v2131 = vld [vmem:[%s1 + $0x208] sm:$0xff]
  %v2132 = vld [vmem:[%s1 + $0x210] sm:$0xff]
  %v2133 = vld [vmem:[%s1 + $0x218] sm:$0xff]
  %v2134 = vld [vmem:[%s1 + $0x220] sm:$0xff]
  %v2135 = vld [vmem:[%s1 + $0x228] sm:$0xff]
  %v2136 = vld [vmem:[%s1 + $0x230] sm:$0xff]
  %v2137 = vld [vmem:[%s1 + $0x238] sm:$0xff]
  %v2138 = vld [vmem:[%s1 + $0x240] sm:$0xff]
  %v2139 = vld [vmem:[%s1 + $0x248] sm:$0xff]
  %v2140 = vld [vmem:[%s1 + $0x250] sm:$0xff]
  %v2141 = vld [vmem:[%s1 + $0x258] sm:$0xff]
  %v2142 = vld [vmem:[%s1 + $0x260] sm:$0xff]
  %v2143 = vld [vmem:[%s1 + $0x268] sm:$0xff]
  %v2144 = vld [vmem:[%s1 + $0x270] sm:$0xff]
  %v2145 = vld [vmem:[%s1 + $0x278] sm:$0xff]
  %v2146 = vld [vmem:[%s1 + $0x280] sm:$0xff]
  %v2147 = vld [vmem:[%s1 + $0x288] sm:$0xff]
  %v2148 = vld [vmem:[%s1 + $0x290] sm:$0xff]
  %v2149 = vld [vmem:[%s1 + $0x298] sm:$0xff]
  %v2150 = vld [vmem:[%s1 + $0x2a0] sm:$0xff]
  %v2151 = vld [vmem:[%s1 + $0x2a8] sm:$0xff]
  %v2152 = vld [vmem:[%s1 + $0x2b0] sm:$0xff]
  %v2153 = vld [vmem:[%s1 + $0x2b8] sm:$0xff]
  %v2154 = vld [vmem:[%s1 + $0x2c0] sm:$0xff]
  %v2155 = vld [vmem:[%s1 + $0x2c8] sm:$0xff]
  %v2156 = vld [vmem:[%s1 + $0x2d0] sm:$0xff]
  %v2157 = vld [vmem:[%s1 + $0x2d8] sm:$0xff]
  %v2158 = vld [vmem:[%s1 + $0x2e0] sm:$0xff]
  %v2159 = vld [vmem:[%s1 + $0x2e8] sm:$0xff]
  %v2160 = vld [vmem:[%s1 + $0x2f0] sm:$0xff]
  %v2161 = vld [vmem:[%s1 + $0x2f8] sm:$0xff]
  %v2162 = vld [vmem:[%s1 + $0x300] sm:$0xff]
  %v2163 = vld [vmem:[%s1 + $0x308] sm:$0xff]
  %v2164 = vld [vmem:[%s1 + $0x310] sm:$0xff]
  %v2165 = vld [vmem:[%s1 + $0x318] sm:$0xff]
  %v2166 = vld [vmem:[%s1 + $0x320] sm:$0xff]
  %v2167 = vld [vmem:[%s1 + $0x328] sm:$0xff]
  %v2168 = vld [vmem:[%s1 + $0x330] sm:$0xff]
  %v2169 = vld [vmem:[%s1 + $0x338] sm:$0xff]
  %v2170 = vld [vmem:[%s1 + $0x340] sm:$0xff]
  %v2171 = vld [vmem:[%s1 + $0x348] sm:$0xff]
  %v2172 = vld [vmem:[%s1 + $0x350] sm:$0xff]
  %v2173 = vld [vmem:[%s1 + $0x358] sm:$0xff]
  %v2174 = vld [vmem:[%s1 + $0x360] sm:$0xff]
  %v2175 = vld [vmem:[%s1 + $0x368] sm:$0xff]
  %v2176 = vld [vmem:[%s1 + $0x370] sm:$0xff]
  %v2177 = vld [vmem:[%s1 + $0x378] sm:$0xff]
  %v2178 = vld [vmem:[%s1 + $0x380] sm:$0xff]
  %v2179 = vld [vmem:[%s1 + $0x388] sm:$0xff]
  %v2180 = vld [vmem:[%s1 + $0x390] sm:$0xff]
  %v2181 = vld [vmem:[%s1 + $0x398] sm:$0xff]
  %v2182 = vld [vmem:[%s1 + $0x3a0] sm:$0xff]
  %v2183 = vld [vmem:[%s1 + $0x3a8] sm:$0xff]
  %v2184 = vld [vmem:[%s1 + $0x3b0] sm:$0xff]
  %v2185 = vld [vmem:[%s1 + $0x3b8] sm:$0xff]
  %v2186 = vld [vmem:[%s1 + $0x3c0] sm:$0xff]
  %v2187 = vld [vmem:[%s1 + $0x3c8] sm:$0xff]
  %v2188 = vld [vmem:[%s1 + $0x3d0] sm:$0xff]
  %v2189 = vld [vmem:[%s1 + $0x3d8] sm:$0xff]
  %v2190 = vld [vmem:[%s1 + $0x3e0] sm:$0xff]
  %v2191 = vld [vmem:[%s1 + $0x3e8] sm:$0xff]
  %v2192 = vld [vmem:[%s1 + $0x3f0] sm:$0xff]
  %v2193 = vld [vmem:[%s1 + $0x3f8] sm:$0xff]
  %v2194 = vld [vmem:[%s1 + $0x400] sm:$0xf]
  %v2195 = vld [vmem:[%s1 + $0x408] sm:$0xf]
  %v2196 = vld [vmem:[%s1 + $0x410] sm:$0xf]
  %v2197 = vld [vmem:[%s1 + $0x418] sm:$0xf]
  %v2198 = vld [vmem:[%s1 + $0x420] sm:$0xf]
  %v2199 = vld [vmem:[%s1 + $0x428] sm:$0xf]
  %v2200 = vld [vmem:[%s1 + $0x430] sm:$0xf]
  %v2201 = vld [vmem:[%s1 + $0x438] sm:$0xf]
  %v2202 = vld [vmem:[%s1 + $0x440] sm:$0xf]
  %v2203 = vld [vmem:[%s1 + $0x448] sm:$0xf]
  %v2204 = vld [vmem:[%s1 + $0x450] sm:$0xf]
  %v2205 = vld [vmem:[%s1 + $0x458] sm:$0xf]
  %v2206 = vld [vmem:[%s1 + $0x460] sm:$0xf]
  %v2207 = vld [vmem:[%s1 + $0x468] sm:$0xf]
  %v2208 = vld [vmem:[%s1 + $0x470] sm:$0xf]
  %v2209 = vld [vmem:[%s1 + $0x478] sm:$0xf]
  %v2210 = vld [vmem:[%s1 + $0x480] sm:$0xf]
  %v2211 = vld [vmem:[%s1 + $0x488] sm:$0xf]
  %v2212 = vld [vmem:[%s1 + $0x490] sm:$0xf]
  %v2213 = vld [vmem:[%s1 + $0x498] sm:$0xf]
  %v2214 = vld [vmem:[%s1 + $0x4a0] sm:$0xf]
  %v2215 = vld [vmem:[%s1 + $0x4a8] sm:$0xf]
  %v2216 = vld [vmem:[%s1 + $0x4b0] sm:$0xf]
  %v2217 = vld [vmem:[%s1 + $0x4b8] sm:$0xf]
  %v2218 = vld [vmem:[%s1 + $0x4c0] sm:$0xf]
  %v2219 = vld [vmem:[%s1 + $0x4c8] sm:$0xf]
  %v2220 = vld [vmem:[%s1 + $0x4d0] sm:$0xf]
  %v2221 = vld [vmem:[%s1 + $0x4d8] sm:$0xf]
  %v2222 = vld [vmem:[%s1 + $0x4e0] sm:$0xf]
  %v2223 = vld [vmem:[%s1 + $0x4e8] sm:$0xf]
  %v2224 = vld [vmem:[%s1 + $0x4f0] sm:$0xf]
  %v2225 = vld [vmem:[%s1 + $0x4f8] sm:$0xf]
  %vm2226 = vcmask 293888
  %v2228 = vsel %vm2226, %v2065, 0
  %v2231 = vsel %vm456, %v2194, 0
  %v2234 = vsel %vm456, %v2195, 0
  %v2237 = vsel %vm456, %v2196, 0
  %v2240 = vsel %vm456, %v2197, 0
  %v2243 = vsel %vm456, %v2198, 0
  %v2246 = vsel %vm456, %v2199, 0
  %v2249 = vsel %vm456, %v2200, 0
  %v2252 = vsel %vm456, %v2201, 0
  %v2255 = vsel %vm456, %v2202, 0
  %v2258 = vsel %vm456, %v2203, 0
  %v2261 = vsel %vm456, %v2204, 0
  %v2264 = vsel %vm456, %v2205, 0
  %v2267 = vsel %vm456, %v2206, 0
  %v2270 = vsel %vm456, %v2207, 0
  %v2273 = vsel %vm456, %v2208, 0
  %v2276 = vsel %vm456, %v2209, 0
  %v2279 = vsel %vm456, %v2210, 0
  %v2282 = vsel %vm456, %v2211, 0
  %v2285 = vsel %vm456, %v2212, 0
  %v2288 = vsel %vm456, %v2213, 0
  %v2291 = vsel %vm456, %v2214, 0
  %v2294 = vsel %vm456, %v2215, 0
  %v2297 = vsel %vm456, %v2216, 0
  %v2300 = vsel %vm456, %v2217, 0
  %v2303 = vsel %vm456, %v2218, 0
  %v2306 = vsel %vm456, %v2219, 0
  %v2309 = vsel %vm456, %v2220, 0
  %v2312 = vsel %vm456, %v2221, 0
  %v2315 = vsel %vm456, %v2222, 0
  %v2318 = vsel %vm456, %v2223, 0
  %v2321 = vsel %vm456, %v2224, 0
  %v2324 = vsel %vm456, %v2225, 0
  %2326 = vmatprep.subr.mxu0 %v2067
  %2327 = vmatpush1.msra.mxu0 %v2066
  %2328 = vmatprep.subr.mxu0 %v2099
  %2329 = vmatpush1.msra.mxu0 %v2098
  %2330 = vmatprep.subr.mxu0 %v2131
  %2331 = vmatpush1.msra.mxu0 %v2130
  %2332 = vmatprep.subr.mxu0 %v2163
  %2333 = vmatpush1.msra.mxu0 %v2162
  %2334 = vmatprep.subr.mxu0 %v2234
  %2335 = vmatpush1.msra.mxu0 %v2231
  %2336 = vmatprep.subr.mxu0 0.0
  %2337 = vmatpush1.msra.mxu0 0.0
  %2338 = vmatprep.subr.mxu0 0.0
  %2339 = vmatpush1.msra.mxu0 0.0
  %2340 = vmatprep.subr.mxu0 0.0
  %2341 = vmatpush1.msra.mxu0 0.0
  %2342 = vmatprep.subr.mxu0 0.0
  %2343 = vmatpush1.msra.mxu0 0.0
  %2344 = vmatprep.subr.mxu0 0.0
  %2345 = vmatpush1.msra.mxu0 0.0
  %2346 = vmatprep.subr.mxu0 0.0
  %2347 = vmatpush1.msra.mxu0 0.0
  %2348 = vmatprep.subr.mxu0 0.0
  %2349 = vmatpush1.msra.mxu0 0.0
  %2350 = vmatprep.subr.mxu0 0.0
  %2351 = vmatpush1.msra.mxu0 0.0
  %2352 = vmatprep.subr.mxu0 0.0
  %2353 = vmatpush1.msra.mxu0 0.0
  %2354 = vmatprep.subr.mxu0 0.0
  %2355 = vmatpush1.msra.mxu0 0.0
  %2356 = vmatprep.subr.mxu0 0.0
  %2357 = vmatpush1.msra.mxu0 0.0
  %2358 = vmatprep.subr.mxu0 0.0
  %2359 = vmatpush1.msra.mxu0 0.0
  %2360 = vmatprep.subr.mxu0 0.0
  %2361 = vmatpush1.msra.mxu0 0.0
  %2362 = vmatprep.subr.mxu0 0.0
  %2363 = vmatpush1.msra.mxu0 0.0
  %2364 = vmatprep.subr.mxu0 0.0
  %2365 = vmatpush1.msra.mxu0 0.0
  %2366 = vmatprep.subr.mxu0 0.0
  %2367 = vmatpush1.msra.mxu0 0.0
  %2368 = vmatprep.subr.mxu0 0.0
  %2369 = vmatpush1.msra.mxu0 0.0
  %2370 = vmatprep.subr.mxu0 0.0
  %2371 = vmatpush1.msra.mxu0 0.0
  %2372 = vmatprep.subr.mxu0 0.0
  %2373 = vmatpush1.msra.mxu0 0.0
  %2374 = vmatprep.subr.mxu0 0.0
  %2375 = vmatpush1.msra.mxu0 0.0
  %2376 = vmatprep.subr.mxu0 0.0
  %2377 = vmatpush1.msra.mxu0 0.0
  %2378 = vmatprep.subr.mxu0 0.0
  %2379 = vmatpush1.msra.mxu0 0.0
  %2380 = vmatprep.subr.mxu0 0.0
  %2381 = vmatpush1.msra.mxu0 0.0
  %2382 = vmatprep.subr.mxu0 0.0
  %2383 = vmatpush1.msra.mxu0 0.0
  %2384 = vmatprep.subr.mxu0 0.0
  %2385 = vmatpush1.msra.mxu0 0.0
  %2386 = vmatprep.subr.mxu0 0.0
  %2387 = vmatpush1.msra.mxu0 0.0
  %2388 = vmatprep.subr.mxu0 0.0
  %2389 = vmatpush1.msra.mxu0 0.0
  %2390 = vmatprep.mubr.f32.mxu0 0.0
  %2391 = vmatmul.mubr.f32.gmra.mrb[0].mxu0 %v2228
  %v2392 = vpop.f32.mrb[0].mxu0
  %v2393 = vadd.f32 0.0, %v2392
  %v2394 = vpop.f32.mrb[0].mxu0
  %v2395 = vadd.f32 0.0, %v2394
  %2396 = vdwg.mxu0
  %2397 = vmatprep.subr.mxu0 %v2069
  %2398 = vmatpush1.msra.mxu0 %v2068
  %2399 = vmatprep.subr.mxu0 %v2101
  %2400 = vmatpush1.msra.mxu0 %v2100
  %2401 = vmatprep.subr.mxu0 %v2133
  %2402 = vmatpush1.msra.mxu0 %v2132
  %2403 = vmatprep.subr.mxu0 %v2165
  %2404 = vmatpush1.msra.mxu0 %v2164
  %2405 = vmatprep.subr.mxu0 %v2240
  %2406 = vmatpush1.msra.mxu0 %v2237
  %2407 = vmatprep.subr.mxu0 0.0
  %2408 = vmatpush1.msra.mxu0 0.0
  %2409 = vmatprep.subr.mxu0 0.0
  %2410 = vmatpush1.msra.mxu0 0.0
  %2411 = vmatprep.subr.mxu0 0.0
  %2412 = vmatpush1.msra.mxu0 0.0
  %2413 = vmatprep.subr.mxu0 0.0
  %2414 = vmatpush1.msra.mxu0 0.0
  %2415 = vmatprep.subr.mxu0 0.0
  %2416 = vmatpush1.msra.mxu0 0.0
  %2417 = vmatprep.subr.mxu0 0.0
  %2418 = vmatpush1.msra.mxu0 0.0
  %2419 = vmatprep.subr.mxu0 0.0
  %2420 = vmatpush1.msra.mxu0 0.0
  %2421 = vmatprep.subr.mxu0 0.0
  %2422 = vmatpush1.msra.mxu0 0.0
  %2423 = vmatprep.subr.mxu0 0.0
  %2424 = vmatpush1.msra.mxu0 0.0
  %2425 = vmatprep.subr.mxu0 0.0
  %2426 = vmatpush1.msra.mxu0 0.0
  %2427 = vmatprep.subr.mxu0 0.0
  %2428 = vmatpush1.msra.mxu0 0.0
  %2429 = vmatprep.subr.mxu0 0.0
  %2430 = vmatpush1.msra.mxu0 0.0
  %2431 = vmatprep.subr.mxu0 0.0
  %2432 = vmatpush1.msra.mxu0 0.0
  %2433 = vmatprep.subr.mxu0 0.0
  %2434 = vmatpush1.msra.mxu0 0.0
  %2435 = vmatprep.subr.mxu0 0.0
  %2436 = vmatpush1.msra.mxu0 0.0
  %2437 = vmatprep.subr.mxu0 0.0
  %2438 = vmatpush1.msra.mxu0 0.0
  %2439 = vmatprep.subr.mxu0 0.0
  %2440 = vmatpush1.msra.mxu0 0.0
  %2441 = vmatprep.subr.mxu0 0.0
  %2442 = vmatpush1.msra.mxu0 0.0
  %2443 = vmatprep.subr.mxu0 0.0
  %2444 = vmatpush1.msra.mxu0 0.0
  %2445 = vmatprep.subr.mxu0 0.0
  %2446 = vmatpush1.msra.mxu0 0.0
  %2447 = vmatprep.subr.mxu0 0.0
  %2448 = vmatpush1.msra.mxu0 0.0
  %2449 = vmatprep.subr.mxu0 0.0
  %2450 = vmatpush1.msra.mxu0 0.0
  %2451 = vmatprep.subr.mxu0 0.0
  %2452 = vmatpush1.msra.mxu0 0.0
  %2453 = vmatprep.subr.mxu0 0.0
  %2454 = vmatpush1.msra.mxu0 0.0
  %2455 = vmatprep.subr.mxu0 0.0
  %2456 = vmatpush1.msra.mxu0 0.0
  %2457 = vmatprep.subr.mxu0 0.0
  %2458 = vmatpush1.msra.mxu0 0.0
  %2459 = vmatprep.subr.mxu0 0.0
  %2460 = vmatpush1.msra.mxu0 0.0
  %2461 = vmatprep.mubr.f32.mxu0 0.0
  %2462 = vmatmul.mubr.f32.gmra.mrb[0].mxu0 %v2228
  %v2463 = vpop.f32.mrb[0].mxu0
  %v2464 = vadd.f32 0.0, %v2463
  %v2465 = vpop.f32.mrb[0].mxu0
  %v2466 = vadd.f32 0.0, %v2465
  %2467 = vdwg.mxu0
  %2468 = vmatprep.subr.mxu0 %v2071
  %2469 = vmatpush1.msra.mxu0 %v2070
  %2470 = vmatprep.subr.mxu0 %v2103
  %2471 = vmatpush1.msra.mxu0 %v2102
  %2472 = vmatprep.subr.mxu0 %v2135
  %2473 = vmatpush1.msra.mxu0 %v2134
  %2474 = vmatprep.subr.mxu0 %v2167
  %2475 = vmatpush1.msra.mxu0 %v2166
  %2476 = vmatprep.subr.mxu0 %v2246
  %2477 = vmatpush1.msra.mxu0 %v2243
  %2478 = vmatprep.subr.mxu0 0.0
  %2479 = vmatpush1.msra.mxu0 0.0
  %2480 = vmatprep.subr.mxu0 0.0
  %2481 = vmatpush1.msra.mxu0 0.0
  %2482 = vmatprep.subr.mxu0 0.0
  %2483 = vmatpush1.msra.mxu0 0.0
  %2484 = vmatprep.subr.mxu0 0.0
  %2485 = vmatpush1.msra.mxu0 0.0
  %2486 = vmatprep.subr.mxu0 0.0
  %2487 = vmatpush1.msra.mxu0 0.0
  %2488 = vmatprep.subr.mxu0 0.0
  %2489 = vmatpush1.msra.mxu0 0.0
  %2490 = vmatprep.subr.mxu0 0.0
  %2491 = vmatpush1.msra.mxu0 0.0
  %2492 = vmatprep.subr.mxu0 0.0
  %2493 = vmatpush1.msra.mxu0 0.0
  %2494 = vmatprep.subr.mxu0 0.0
  %2495 = vmatpush1.msra.mxu0 0.0
  %2496 = vmatprep.subr.mxu0 0.0
  %2497 = vmatpush1.msra.mxu0 0.0
  %2498 = vmatprep.subr.mxu0 0.0
  %2499 = vmatpush1.msra.mxu0 0.0
  %2500 = vmatprep.subr.mxu0 0.0
  %2501 = vmatpush1.msra.mxu0 0.0
  %2502 = vmatprep.subr.mxu0 0.0
  %2503 = vmatpush1.msra.mxu0 0.0
  %2504 = vmatprep.subr.mxu0 0.0
  %2505 = vmatpush1.msra.mxu0 0.0
  %2506 = vmatprep.subr.mxu0 0.0
  %2507 = vmatpush1.msra.mxu0 0.0
  %2508 = vmatprep.subr.mxu0 0.0
  %2509 = vmatpush1.msra.mxu0 0.0
  %2510 = vmatprep.subr.mxu0 0.0
  %2511 = vmatpush1.msra.mxu0 0.0
  %2512 = vmatprep.subr.mxu0 0.0
  %2513 = vmatpush1.msra.mxu0 0.0
  %2514 = vmatprep.subr.mxu0 0.0
  %2515 = vmatpush1.msra.mxu0 0.0
  %2516 = vmatprep.subr.mxu0 0.0
  %2517 = vmatpush1.msra.mxu0 0.0
  %2518 = vmatprep.subr.mxu0 0.0
  %2519 = vmatpush1.msra.mxu0 0.0
  %2520 = vmatprep.subr.mxu0 0.0
  %2521 = vmatpush1.msra.mxu0 0.0
  %2522 = vmatprep.subr.mxu0 0.0
  %2523 = vmatpush1.msra.mxu0 0.0
  %2524 = vmatprep.subr.mxu0 0.0
  %2525 = vmatpush1.msra.mxu0 0.0
  %2526 = vmatprep.subr.mxu0 0.0
  %2527 = vmatpush1.msra.mxu0 0.0
  %2528 = vmatprep.subr.mxu0 0.0
  %2529 = vmatpush1.msra.mxu0 0.0
  %2530 = vmatprep.subr.mxu0 0.0
  %2531 = vmatpush1.msra.mxu0 0.0
  %2532 = vmatprep.mubr.f32.mxu0 0.0
  %2533 = vmatmul.mubr.f32.gmra.mrb[0].mxu0 %v2228
  %v2534 = vpop.f32.mrb[0].mxu0
  %v2535 = vadd.f32 0.0, %v2534
  %v2536 = vpop.f32.mrb[0].mxu0
  %v2537 = vadd.f32 0.0, %v2536
  %2538 = vdwg.mxu0
  %2539 = vmatprep.subr.mxu0 %v2073
  %2540 = vmatpush1.msra.mxu0 %v2072
  %2541 = vmatprep.subr.mxu0 %v2105
  %2542 = vmatpush1.msra.mxu0 %v2104
  %2543 = vmatprep.subr.mxu0 %v2137
  %2544 = vmatpush1.msra.mxu0 %v2136
  %2545 = vmatprep.subr.mxu0 %v2169
  %2546 = vmatpush1.msra.mxu0 %v2168
  %2547 = vmatprep.subr.mxu0 %v2252
  %2548 = vmatpush1.msra.mxu0 %v2249
  %2549 = vmatprep.subr.mxu0 0.0
  %2550 = vmatpush1.msra.mxu0 0.0
  %2551 = vmatprep.subr.mxu0 0.0
  %2552 = vmatpush1.msra.mxu0 0.0
  %2553 = vmatprep.subr.mxu0 0.0
  %2554 = vmatpush1.msra.mxu0 0.0
  %2555 = vmatprep.subr.mxu0 0.0
  %2556 = vmatpush1.msra.mxu0 0.0
  %2557 = vmatprep.subr.mxu0 0.0
  %2558 = vmatpush1.msra.mxu0 0.0
  %2559 = vmatprep.subr.mxu0 0.0
  %2560 = vmatpush1.msra.mxu0 0.0
  %2561 = vmatprep.subr.mxu0 0.0
  %2562 = vmatpush1.msra.mxu0 0.0
  %2563 = vmatprep.subr.mxu0 0.0
  %2564 = vmatpush1.msra.mxu0 0.0
  %2565 = vmatprep.subr.mxu0 0.0
  %2566 = vmatpush1.msra.mxu0 0.0
  %2567 = vmatprep.subr.mxu0 0.0
  %2568 = vmatpush1.msra.mxu0 0.0
  %2569 = vmatprep.subr.mxu0 0.0
  %2570 = vmatpush1.msra.mxu0 0.0
  %2571 = vmatprep.subr.mxu0 0.0
  %2572 = vmatpush1.msra.mxu0 0.0
  %2573 = vmatprep.subr.mxu0 0.0
  %2574 = vmatpush1.msra.mxu0 0.0
  %2575 = vmatprep.subr.mxu0 0.0
  %2576 = vmatpush1.msra.mxu0 0.0
  %2577 = vmatprep.subr.mxu0 0.0
  %2578 = vmatpush1.msra.mxu0 0.0
  %2579 = vmatprep.subr.mxu0 0.0
  %2580 = vmatpush1.msra.mxu0 0.0
  %2581 = vmatprep.subr.mxu0 0.0
  %2582 = vmatpush1.msra.mxu0 0.0
  %2583 = vmatprep.subr.mxu0 0.0
  %2584 = vmatpush1.msra.mxu0 0.0
  %2585 = vmatprep.subr.mxu0 0.0
  %2586 = vmatpush1.msra.mxu0 0.0
  %2587 = vmatprep.subr.mxu0 0.0
  %2588 = vmatpush1.msra.mxu0 0.0
  %2589 = vmatprep.subr.mxu0 0.0
  %2590 = vmatpush1.msra.mxu0 0.0
  %2591 = vmatprep.subr.mxu0 0.0
  %2592 = vmatpush1.msra.mxu0 0.0
  %2593 = vmatprep.subr.mxu0 0.0
  %2594 = vmatpush1.msra.mxu0 0.0
  %2595 = vmatprep.subr.mxu0 0.0
  %2596 = vmatpush1.msra.mxu0 0.0
  %2597 = vmatprep.subr.mxu0 0.0
  %2598 = vmatpush1.msra.mxu0 0.0
  %2599 = vmatprep.subr.mxu0 0.0
  %2600 = vmatpush1.msra.mxu0 0.0
  %2601 = vmatprep.subr.mxu0 0.0
  %2602 = vmatpush1.msra.mxu0 0.0
  %2603 = vmatprep.mubr.f32.mxu0 0.0
  %2604 = vmatmul.mubr.f32.gmra.mrb[0].mxu0 %v2228
  %v2605 = vpop.f32.mrb[0].mxu0
  %v2606 = vadd.f32 0.0, %v2605
  %v2607 = vpop.f32.mrb[0].mxu0
  %v2608 = vadd.f32 0.0, %v2607
  %2609 = vdwg.mxu0
  %2610 = vmatprep.subr.mxu0 %v2075
  %2611 = vmatpush1.msra.mxu0 %v2074
  %2612 = vmatprep.subr.mxu0 %v2107
  %2613 = vmatpush1.msra.mxu0 %v2106
  %2614 = vmatprep.subr.mxu0 %v2139
  %2615 = vmatpush1.msra.mxu0 %v2138
  %2616 = vmatprep.subr.mxu0 %v2171
  %2617 = vmatpush1.msra.mxu0 %v2170
  %2618 = vmatprep.subr.mxu0 %v2258
  %2619 = vmatpush1.msra.mxu0 %v2255
  %2620 = vmatprep.subr.mxu0 0.0
  %2621 = vmatpush1.msra.mxu0 0.0
  %2622 = vmatprep.subr.mxu0 0.0
  %2623 = vmatpush1.msra.mxu0 0.0
  %2624 = vmatprep.subr.mxu0 0.0
  %2625 = vmatpush1.msra.mxu0 0.0
  %2626 = vmatprep.subr.mxu0 0.0
  %2627 = vmatpush1.msra.mxu0 0.0
  %2628 = vmatprep.subr.mxu0 0.0
  %2629 = vmatpush1.msra.mxu0 0.0
  %2630 = vmatprep.subr.mxu0 0.0
  %2631 = vmatpush1.msra.mxu0 0.0
  %2632 = vmatprep.subr.mxu0 0.0
  %2633 = vmatpush1.msra.mxu0 0.0
  %2634 = vmatprep.subr.mxu0 0.0
  %2635 = vmatpush1.msra.mxu0 0.0
  %2636 = vmatprep.subr.mxu0 0.0
  %2637 = vmatpush1.msra.mxu0 0.0
  %2638 = vmatprep.subr.mxu0 0.0
  %2639 = vmatpush1.msra.mxu0 0.0
  %2640 = vmatprep.subr.mxu0 0.0
  %2641 = vmatpush1.msra.mxu0 0.0
  %2642 = vmatprep.subr.mxu0 0.0
  %2643 = vmatpush1.msra.mxu0 0.0
  %2644 = vmatprep.subr.mxu0 0.0
  %2645 = vmatpush1.msra.mxu0 0.0
  %2646 = vmatprep.subr.mxu0 0.0
  %2647 = vmatpush1.msra.mxu0 0.0
  %2648 = vmatprep.subr.mxu0 0.0
  %2649 = vmatpush1.msra.mxu0 0.0
  %2650 = vmatprep.subr.mxu0 0.0
  %2651 = vmatpush1.msra.mxu0 0.0
  %2652 = vmatprep.subr.mxu0 0.0
  %2653 = vmatpush1.msra.mxu0 0.0
  %2654 = vmatprep.subr.mxu0 0.0
  %2655 = vmatpush1.msra.mxu0 0.0
  %2656 = vmatprep.subr.mxu0 0.0
  %2657 = vmatpush1.msra.mxu0 0.0
  %2658 = vmatprep.subr.mxu0 0.0
  %2659 = vmatpush1.msra.mxu0 0.0
  %2660 = vmatprep.subr.mxu0 0.0
  %2661 = vmatpush1.msra.mxu0 0.0
  %2662 = vmatprep.subr.mxu0 0.0
  %2663 = vmatpush1.msra.mxu0 0.0
  %2664 = vmatprep.subr.mxu0 0.0
  %2665 = vmatpush1.msra.mxu0 0.0
  %2666 = vmatprep.subr.mxu0 0.0
  %2667 = vmatpush1.msra.mxu0 0.0
  %2668 = vmatprep.subr.mxu0 0.0
  %2669 = vmatpush1.msra.mxu0 0.0
  %2670 = vmatprep.subr.mxu0 0.0
  %2671 = vmatpush1.msra.mxu0 0.0
  %2672 = vmatprep.subr.mxu0 0.0
  %2673 = vmatpush1.msra.mxu0 0.0
  %2674 = vmatprep.mubr.f32.mxu0 0.0
  %2675 = vmatmul.mubr.f32.gmra.mrb[0].mxu0 %v2228
  %v2676 = vpop.f32.mrb[0].mxu0
  %v2677 = vadd.f32 0.0, %v2676
  %v2678 = vpop.f32.mrb[0].mxu0
  %v2679 = vadd.f32 0.0, %v2678
  %2680 = vdwg.mxu0
  %2681 = vmatprep.subr.mxu0 %v2077
  %2682 = vmatpush1.msra.mxu0 %v2076
  %2683 = vmatprep.subr.mxu0 %v2109
  %2684 = vmatpush1.msra.mxu0 %v2108
  %2685 = vmatprep.subr.mxu0 %v2141
  %2686 = vmatpush1.msra.mxu0 %v2140
  %2687 = vmatprep.subr.mxu0 %v2173
  %2688 = vmatpush1.msra.mxu0 %v2172
  %2689 = vmatprep.subr.mxu0 %v2264
  %2690 = vmatpush1.msra.mxu0 %v2261
  %2691 = vmatprep.subr.mxu0 0.0
  %2692 = vmatpush1.msra.mxu0 0.0
  %2693 = vmatprep.subr.mxu0 0.0
  %2694 = vmatpush1.msra.mxu0 0.0
  %2695 = vmatprep.subr.mxu0 0.0
  %2696 = vmatpush1.msra.mxu0 0.0
  %2697 = vmatprep.subr.mxu0 0.0
  %2698 = vmatpush1.msra.mxu0 0.0
  %2699 = vmatprep.subr.mxu0 0.0
  %2700 = vmatpush1.msra.mxu0 0.0
  %2701 = vmatprep.subr.mxu0 0.0
  %2702 = vmatpush1.msra.mxu0 0.0
  %2703 = vmatprep.subr.mxu0 0.0
  %2704 = vmatpush1.msra.mxu0 0.0
  %2705 = vmatprep.subr.mxu0 0.0
  %2706 = vmatpush1.msra.mxu0 0.0
  %2707 = vmatprep.subr.mxu0 0.0
  %2708 = vmatpush1.msra.mxu0 0.0
  %2709 = vmatprep.subr.mxu0 0.0
  %2710 = vmatpush1.msra.mxu0 0.0
  %2711 = vmatprep.subr.mxu0 0.0
  %2712 = vmatpush1.msra.mxu0 0.0
  %2713 = vmatprep.subr.mxu0 0.0
  %2714 = vmatpush1.msra.mxu0 0.0
  %2715 = vmatprep.subr.mxu0 0.0
  %2716 = vmatpush1.msra.mxu0 0.0
  %2717 = vmatprep.subr.mxu0 0.0
  %2718 = vmatpush1.msra.mxu0 0.0
  %2719 = vmatprep.subr.mxu0 0.0
  %2720 = vmatpush1.msra.mxu0 0.0
  %2721 = vmatprep.subr.mxu0 0.0
  %2722 = vmatpush1.msra.mxu0 0.0
  %2723 = vmatprep.subr.mxu0 0.0
  %2724 = vmatpush1.msra.mxu0 0.0
  %2725 = vmatprep.subr.mxu0 0.0
  %2726 = vmatpush1.msra.mxu0 0.0
  %2727 = vmatprep.subr.mxu0 0.0
  %2728 = vmatpush1.msra.mxu0 0.0
  %2729 = vmatprep.subr.mxu0 0.0
  %2730 = vmatpush1.msra.mxu0 0.0
  %2731 = vmatprep.subr.mxu0 0.0
  %2732 = vmatpush1.msra.mxu0 0.0
  %2733 = vmatprep.subr.mxu0 0.0
  %2734 = vmatpush1.msra.mxu0 0.0
  %2735 = vmatprep.subr.mxu0 0.0
  %2736 = vmatpush1.msra.mxu0 0.0
  %2737 = vmatprep.subr.mxu0 0.0
  %2738 = vmatpush1.msra.mxu0 0.0
  %2739 = vmatprep.subr.mxu0 0.0
  %2740 = vmatpush1.msra.mxu0 0.0
  %2741 = vmatprep.subr.mxu0 0.0
  %2742 = vmatpush1.msra.mxu0 0.0
  %2743 = vmatprep.subr.mxu0 0.0
  %2744 = vmatpush1.msra.mxu0 0.0
  %2745 = vmatprep.mubr.f32.mxu0 0.0
  %2746 = vmatmul.mubr.f32.gmra.mrb[0].mxu0 %v2228
  %v2747 = vpop.f32.mrb[0].mxu0
  %v2748 = vadd.f32 0.0, %v2747
  %v2749 = vpop.f32.mrb[0].mxu0
  %v2750 = vadd.f32 0.0, %v2749
  %2751 = vdwg.mxu0
  %2752 = vmatprep.subr.mxu0 %v2079
  %2753 = vmatpush1.msra.mxu0 %v2078
  %2754 = vmatprep.subr.mxu0 %v2111
  %2755 = vmatpush1.msra.mxu0 %v2110
  %2756 = vmatprep.subr.mxu0 %v2143
  %2757 = vmatpush1.msra.mxu0 %v2142
  %2758 = vmatprep.subr.mxu0 %v2175
  %2759 = vmatpush1.msra.mxu0 %v2174
  %2760 = vmatprep.subr.mxu0 %v2270
  %2761 = vmatpush1.msra.mxu0 %v2267
  %2762 = vmatprep.subr.mxu0 0.0
  %2763 = vmatpush1.msra.mxu0 0.0
  %2764 = vmatprep.subr.mxu0 0.0
  %2765 = vmatpush1.msra.mxu0 0.0
  %2766 = vmatprep.subr.mxu0 0.0
  %2767 = vmatpush1.msra.mxu0 0.0
  %2768 = vmatprep.subr.mxu0 0.0
  %2769 = vmatpush1.msra.mxu0 0.0
  %2770 = vmatprep.subr.mxu0 0.0
  %2771 = vmatpush1.msra.mxu0 0.0
  %2772 = vmatprep.subr.mxu0 0.0
  %2773 = vmatpush1.msra.mxu0 0.0
  %2774 = vmatprep.subr.mxu0 0.0
  %2775 = vmatpush1.msra.mxu0 0.0
  %2776 = vmatprep.subr.mxu0 0.0
  %2777 = vmatpush1.msra.mxu0 0.0
  %2778 = vmatprep.subr.mxu0 0.0
  %2779 = vmatpush1.msra.mxu0 0.0
  %2780 = vmatprep.subr.mxu0 0.0
  %2781 = vmatpush1.msra.mxu0 0.0
  %2782 = vmatprep.subr.mxu0 0.0
  %2783 = vmatpush1.msra.mxu0 0.0
  %2784 = vmatprep.subr.mxu0 0.0
  %2785 = vmatpush1.msra.mxu0 0.0
  %2786 = vmatprep.subr.mxu0 0.0
  %2787 = vmatpush1.msra.mxu0 0.0
  %2788 = vmatprep.subr.mxu0 0.0
  %2789 = vmatpush1.msra.mxu0 0.0
  %2790 = vmatprep.subr.mxu0 0.0
  %2791 = vmatpush1.msra.mxu0 0.0
  %2792 = vmatprep.subr.mxu0 0.0
  %2793 = vmatpush1.msra.mxu0 0.0
  %2794 = vmatprep.subr.mxu0 0.0
  %2795 = vmatpush1.msra.mxu0 0.0
  %2796 = vmatprep.subr.mxu0 0.0
  %2797 = vmatpush1.msra.mxu0 0.0
  %2798 = vmatprep.subr.mxu0 0.0
  %2799 = vmatpush1.msra.mxu0 0.0
  %2800 = vmatprep.subr.mxu0 0.0
  %2801 = vmatpush1.msra.mxu0 0.0
  %2802 = vmatprep.subr.mxu0 0.0
  %2803 = vmatpush1.msra.mxu0 0.0
  %2804 = vmatprep.subr.mxu0 0.0
  %2805 = vmatpush1.msra.mxu0 0.0
  %2806 = vmatprep.subr.mxu0 0.0
  %2807 = vmatpush1.msra.mxu0 0.0
  %2808 = vmatprep.subr.mxu0 0.0
  %2809 = vmatpush1.msra.mxu0 0.0
  %2810 = vmatprep.subr.mxu0 0.0
  %2811 = vmatpush1.msra.mxu0 0.0
  %2812 = vmatprep.subr.mxu0 0.0
  %2813 = vmatpush1.msra.mxu0 0.0
  %2814 = vmatprep.subr.mxu0 0.0
  %2815 = vmatpush1.msra.mxu0 0.0
  %2816 = vmatprep.mubr.f32.mxu0 0.0
  %2817 = vmatmul.mubr.f32.gmra.mrb[0].mxu0 %v2228
  %v2818 = vpop.f32.mrb[0].mxu0
  %v2819 = vadd.f32 0.0, %v2818
  %v2820 = vpop.f32.mrb[0].mxu0
  %v2821 = vadd.f32 0.0, %v2820
  %2822 = vdwg.mxu0
  %2823 = vmatprep.subr.mxu0 %v2081
  %2824 = vmatpush1.msra.mxu0 %v2080
  %2825 = vmatprep.subr.mxu0 %v2113
  %2826 = vmatpush1.msra.mxu0 %v2112
  %2827 = vmatprep.subr.mxu0 %v2145
  %2828 = vmatpush1.msra.mxu0 %v2144
  %2829 = vmatprep.subr.mxu0 %v2177
  %2830 = vmatpush1.msra.mxu0 %v2176
  %2831 = vmatprep.subr.mxu0 %v2276
  %2832 = vmatpush1.msra.mxu0 %v2273
  %2833 = vmatprep.subr.mxu0 0.0
  %2834 = vmatpush1.msra.mxu0 0.0
  %2835 = vmatprep.subr.mxu0 0.0
  %2836 = vmatpush1.msra.mxu0 0.0
  %2837 = vmatprep.subr.mxu0 0.0
  %2838 = vmatpush1.msra.mxu0 0.0
  %2839 = vmatprep.subr.mxu0 0.0
  %2840 = vmatpush1.msra.mxu0 0.0
  %2841 = vmatprep.subr.mxu0 0.0
  %2842 = vmatpush1.msra.mxu0 0.0
  %2843 = vmatprep.subr.mxu0 0.0
  %2844 = vmatpush1.msra.mxu0 0.0
  %2845 = vmatprep.subr.mxu0 0.0
  %2846 = vmatpush1.msra.mxu0 0.0
  %2847 = vmatprep.subr.mxu0 0.0
  %2848 = vmatpush1.msra.mxu0 0.0
  %2849 = vmatprep.subr.mxu0 0.0
  %2850 = vmatpush1.msra.mxu0 0.0
  %2851 = vmatprep.subr.mxu0 0.0
  %2852 = vmatpush1.msra.mxu0 0.0
  %2853 = vmatprep.subr.mxu0 0.0
  %2854 = vmatpush1.msra.mxu0 0.0
  %2855 = vmatprep.subr.mxu0 0.0
  %2856 = vmatpush1.msra.mxu0 0.0
  %2857 = vmatprep.subr.mxu0 0.0
  %2858 = vmatpush1.msra.mxu0 0.0
  %2859 = vmatprep.subr.mxu0 0.0
  %2860 = vmatpush1.msra.mxu0 0.0
  %2861 = vmatprep.subr.mxu0 0.0
  %2862 = vmatpush1.msra.mxu0 0.0
  %2863 = vmatprep.subr.mxu0 0.0
  %2864 = vmatpush1.msra.mxu0 0.0
  %2865 = vmatprep.subr.mxu0 0.0
  %2866 = vmatpush1.msra.mxu0 0.0
  %2867 = vmatprep.subr.mxu0 0.0
  %2868 = vmatpush1.msra.mxu0 0.0
  %2869 = vmatprep.subr.mxu0 0.0
  %2870 = vmatpush1.msra.mxu0 0.0
  %2871 = vmatprep.subr.mxu0 0.0
  %2872 = vmatpush1.msra.mxu0 0.0
  %2873 = vmatprep.subr.mxu0 0.0
  %2874 = vmatpush1.msra.mxu0 0.0
  %2875 = vmatprep.subr.mxu0 0.0
  %2876 = vmatpush1.msra.mxu0 0.0
  %2877 = vmatprep.subr.mxu0 0.0
  %2878 = vmatpush1.msra.mxu0 0.0
  %2879 = vmatprep.subr.mxu0 0.0
  %2880 = vmatpush1.msra.mxu0 0.0
  %2881 = vmatprep.subr.mxu0 0.0
  %2882 = vmatpush1.msra.mxu0 0.0
  %2883 = vmatprep.subr.mxu0 0.0
  %2884 = vmatpush1.msra.mxu0 0.0
  %2885 = vmatprep.subr.mxu0 0.0
  %2886 = vmatpush1.msra.mxu0 0.0
  %2887 = vmatprep.mubr.f32.mxu0 0.0
  %2888 = vmatmul.mubr.f32.gmra.mrb[0].mxu0 %v2228
  %v2889 = vpop.f32.mrb[0].mxu0
  %v2890 = vadd.f32 0.0, %v2889
  %v2891 = vpop.f32.mrb[0].mxu0
  %v2892 = vadd.f32 0.0, %v2891
  %2893 = vdwg.mxu0
  %2894 = vmatprep.subr.mxu0 %v2083
  %2895 = vmatpush1.msra.mxu0 %v2082
  %2896 = vmatprep.subr.mxu0 %v2115
  %2897 = vmatpush1.msra.mxu0 %v2114
  %2898 = vmatprep.subr.mxu0 %v2147
  %2899 = vmatpush1.msra.mxu0 %v2146
  %2900 = vmatprep.subr.mxu0 %v2179
  %2901 = vmatpush1.msra.mxu0 %v2178
  %2902 = vmatprep.subr.mxu0 %v2282
  %2903 = vmatpush1.msra.mxu0 %v2279
  %2904 = vmatprep.subr.mxu0 0.0
  %2905 = vmatpush1.msra.mxu0 0.0
  %2906 = vmatprep.subr.mxu0 0.0
  %2907 = vmatpush1.msra.mxu0 0.0
  %2908 = vmatprep.subr.mxu0 0.0
  %2909 = vmatpush1.msra.mxu0 0.0
  %2910 = vmatprep.subr.mxu0 0.0
  %2911 = vmatpush1.msra.mxu0 0.0
  %2912 = vmatprep.subr.mxu0 0.0
  %2913 = vmatpush1.msra.mxu0 0.0
  %2914 = vmatprep.subr.mxu0 0.0
  %2915 = vmatpush1.msra.mxu0 0.0
  %2916 = vmatprep.subr.mxu0 0.0
  %2917 = vmatpush1.msra.mxu0 0.0
  %2918 = vmatprep.subr.mxu0 0.0
  %2919 = vmatpush1.msra.mxu0 0.0
  %2920 = vmatprep.subr.mxu0 0.0
  %2921 = vmatpush1.msra.mxu0 0.0
  %2922 = vmatprep.subr.mxu0 0.0
  %2923 = vmatpush1.msra.mxu0 0.0
  %2924 = vmatprep.subr.mxu0 0.0
  %2925 = vmatpush1.msra.mxu0 0.0
  %2926 = vmatprep.subr.mxu0 0.0
  %2927 = vmatpush1.msra.mxu0 0.0
  %2928 = vmatprep.subr.mxu0 0.0
  %2929 = vmatpush1.msra.mxu0 0.0
  %2930 = vmatprep.subr.mxu0 0.0
  %2931 = vmatpush1.msra.mxu0 0.0
  %2932 = vmatprep.subr.mxu0 0.0
  %2933 = vmatpush1.msra.mxu0 0.0
  %2934 = vmatprep.subr.mxu0 0.0
  %2935 = vmatpush1.msra.mxu0 0.0
  %2936 = vmatprep.subr.mxu0 0.0
  %2937 = vmatpush1.msra.mxu0 0.0
  %2938 = vmatprep.subr.mxu0 0.0
  %2939 = vmatpush1.msra.mxu0 0.0
  %2940 = vmatprep.subr.mxu0 0.0
  %2941 = vmatpush1.msra.mxu0 0.0
  %2942 = vmatprep.subr.mxu0 0.0
  %2943 = vmatpush1.msra.mxu0 0.0
  %2944 = vmatprep.subr.mxu0 0.0
  %2945 = vmatpush1.msra.mxu0 0.0
  %2946 = vmatprep.subr.mxu0 0.0
  %2947 = vmatpush1.msra.mxu0 0.0
  %2948 = vmatprep.subr.mxu0 0.0
  %2949 = vmatpush1.msra.mxu0 0.0
  %2950 = vmatprep.subr.mxu0 0.0
  %2951 = vmatpush1.msra.mxu0 0.0
  %2952 = vmatprep.subr.mxu0 0.0
  %2953 = vmatpush1.msra.mxu0 0.0
  %2954 = vmatprep.subr.mxu0 0.0
  %2955 = vmatpush1.msra.mxu0 0.0
  %2956 = vmatprep.subr.mxu0 0.0
  %2957 = vmatpush1.msra.mxu0 0.0
  %2958 = vmatprep.mubr.f32.mxu0 0.0
  %2959 = vmatmul.mubr.f32.gmra.mrb[0].mxu0 %v2228
  %v2960 = vpop.f32.mrb[0].mxu0
  %v2961 = vadd.f32 0.0, %v2960
  %v2962 = vpop.f32.mrb[0].mxu0
  %v2963 = vadd.f32 0.0, %v2962
  %2964 = vdwg.mxu0
  %2965 = vmatprep.subr.mxu0 %v2085
  %2966 = vmatpush1.msra.mxu0 %v2084
  %2967 = vmatprep.subr.mxu0 %v2117
  %2968 = vmatpush1.msra.mxu0 %v2116
  %2969 = vmatprep.subr.mxu0 %v2149
  %2970 = vmatpush1.msra.mxu0 %v2148
  %2971 = vmatprep.subr.mxu0 %v2181
  %2972 = vmatpush1.msra.mxu0 %v2180
  %2973 = vmatprep.subr.mxu0 %v2288
  %2974 = vmatpush1.msra.mxu0 %v2285
  %2975 = vmatprep.subr.mxu0 0.0
  %2976 = vmatpush1.msra.mxu0 0.0
  %2977 = vmatprep.subr.mxu0 0.0
  %2978 = vmatpush1.msra.mxu0 0.0
  %2979 = vmatprep.subr.mxu0 0.0
  %2980 = vmatpush1.msra.mxu0 0.0
  %2981 = vmatprep.subr.mxu0 0.0
  %2982 = vmatpush1.msra.mxu0 0.0
  %2983 = vmatprep.subr.mxu0 0.0
  %2984 = vmatpush1.msra.mxu0 0.0
  %2985 = vmatprep.subr.mxu0 0.0
  %2986 = vmatpush1.msra.mxu0 0.0
  %2987 = vmatprep.subr.mxu0 0.0
  %2988 = vmatpush1.msra.mxu0 0.0
  %2989 = vmatprep.subr.mxu0 0.0
  %2990 = vmatpush1.msra.mxu0 0.0
  %2991 = vmatprep.subr.mxu0 0.0
  %2992 = vmatpush1.msra.mxu0 0.0
  %2993 = vmatprep.subr.mxu0 0.0
  %2994 = vmatpush1.msra.mxu0 0.0
  %2995 = vmatprep.subr.mxu0 0.0
  %2996 = vmatpush1.msra.mxu0 0.0
  %2997 = vmatprep.subr.mxu0 0.0
  %2998 = vmatpush1.msra.mxu0 0.0
  %2999 = vmatprep.subr.mxu0 0.0
  %3000 = vmatpush1.msra.mxu0 0.0
  %3001 = vmatprep.subr.mxu0 0.0
  %3002 = vmatpush1.msra.mxu0 0.0
  %3003 = vmatprep.subr.mxu0 0.0
  %3004 = vmatpush1.msra.mxu0 0.0
  %3005 = vmatprep.subr.mxu0 0.0
  %3006 = vmatpush1.msra.mxu0 0.0
  %3007 = vmatprep.subr.mxu0 0.0
  %3008 = vmatpush1.msra.mxu0 0.0
  %3009 = vmatprep.subr.mxu0 0.0
  %3010 = vmatpush1.msra.mxu0 0.0
  %3011 = vmatprep.subr.mxu0 0.0
  %3012 = vmatpush1.msra.mxu0 0.0
  %3013 = vmatprep.subr.mxu0 0.0
  %3014 = vmatpush1.msra.mxu0 0.0
  %3015 = vmatprep.subr.mxu0 0.0
  %3016 = vmatpush1.msra.mxu0 0.0
  %3017 = vmatprep.subr.mxu0 0.0
  %3018 = vmatpush1.msra.mxu0 0.0
  %3019 = vmatprep.subr.mxu0 0.0
  %3020 = vmatpush1.msra.mxu0 0.0
  %3021 = vmatprep.subr.mxu0 0.0
  %3022 = vmatpush1.msra.mxu0 0.0
  %3023 = vmatprep.subr.mxu0 0.0
  %3024 = vmatpush1.msra.mxu0 0.0
  %3025 = vmatprep.subr.mxu0 0.0
  %3026 = vmatpush1.msra.mxu0 0.0
  %3027 = vmatprep.subr.mxu0 0.0
  %3028 = vmatpush1.msra.mxu0 0.0
  %3029 = vmatprep.mubr.f32.mxu0 0.0
  %3030 = vmatmul.mubr.f32.gmra.mrb[0].mxu0 %v2228
  %v3031 = vpop.f32.mrb[0].mxu0
  %v3032 = vadd.f32 0.0, %v3031
  %v3033 = vpop.f32.mrb[0].mxu0
  %v3034 = vadd.f32 0.0, %v3033
  %3035 = vdwg.mxu0
  %3036 = vmatprep.subr.mxu0 %v2087
  %3037 = vmatpush1.msra.mxu0 %v2086
  %3038 = vmatprep.subr.mxu0 %v2119
  %3039 = vmatpush1.msra.mxu0 %v2118
  %3040 = vmatprep.subr.mxu0 %v2151
  %3041 = vmatpush1.msra.mxu0 %v2150
  %3042 = vmatprep.subr.mxu0 %v2183
  %3043 = vmatpush1.msra.mxu0 %v2182
  %3044 = vmatprep.subr.mxu0 %v2294
  %3045 = vmatpush1.msra.mxu0 %v2291
  %3046 = vmatprep.subr.mxu0 0.0
  %3047 = vmatpush1.msra.mxu0 0.0
  %3048 = vmatprep.subr.mxu0 0.0
  %3049 = vmatpush1.msra.mxu0 0.0
  %3050 = vmatprep.subr.mxu0 0.0
  %3051 = vmatpush1.msra.mxu0 0.0
  %3052 = vmatprep.subr.mxu0 0.0
  %3053 = vmatpush1.msra.mxu0 0.0
  %3054 = vmatprep.subr.mxu0 0.0
  %3055 = vmatpush1.msra.mxu0 0.0
  %3056 = vmatprep.subr.mxu0 0.0
  %3057 = vmatpush1.msra.mxu0 0.0
  %3058 = vmatprep.subr.mxu0 0.0
  %3059 = vmatpush1.msra.mxu0 0.0
  %3060 = vmatprep.subr.mxu0 0.0
  %3061 = vmatpush1.msra.mxu0 0.0
  %3062 = vmatprep.subr.mxu0 0.0
  %3063 = vmatpush1.msra.mxu0 0.0
  %3064 = vmatprep.subr.mxu0 0.0
  %3065 = vmatpush1.msra.mxu0 0.0
  %3066 = vmatprep.subr.mxu0 0.0
  %3067 = vmatpush1.msra.mxu0 0.0
  %3068 = vmatprep.subr.mxu0 0.0
  %3069 = vmatpush1.msra.mxu0 0.0
  %3070 = vmatprep.subr.mxu0 0.0
  %3071 = vmatpush1.msra.mxu0 0.0
  %3072 = vmatprep.subr.mxu0 0.0
  %3073 = vmatpush1.msra.mxu0 0.0
  %3074 = vmatprep.subr.mxu0 0.0
  %3075 = vmatpush1.msra.mxu0 0.0
  %3076 = vmatprep.subr.mxu0 0.0
  %3077 = vmatpush1.msra.mxu0 0.0
  %3078 = vmatprep.subr.mxu0 0.0
  %3079 = vmatpush1.msra.mxu0 0.0
  %3080 = vmatprep.subr.mxu0 0.0
  %3081 = vmatpush1.msra.mxu0 0.0
  %3082 = vmatprep.subr.mxu0 0.0
  %3083 = vmatpush1.msra.mxu0 0.0
  %3084 = vmatprep.subr.mxu0 0.0
  %3085 = vmatpush1.msra.mxu0 0.0
  %3086 = vmatprep.subr.mxu0 0.0
  %3087 = vmatpush1.msra.mxu0 0.0
  %3088 = vmatprep.subr.mxu0 0.0
  %3089 = vmatpush1.msra.mxu0 0.0
  %3090 = vmatprep.subr.mxu0 0.0
  %3091 = vmatpush1.msra.mxu0 0.0
  %3092 = vmatprep.subr.mxu0 0.0
  %3093 = vmatpush1.msra.mxu0 0.0
  %3094 = vmatprep.subr.mxu0 0.0
  %3095 = vmatpush1.msra.mxu0 0.0
  %3096 = vmatprep.subr.mxu0 0.0
  %3097 = vmatpush1.msra.mxu0 0.0
  %3098 = vmatprep.subr.mxu0 0.0
  %3099 = vmatpush1.msra.mxu0 0.0
  %3100 = vmatprep.mubr.f32.mxu0 0.0
  %3101 = vmatmul.mubr.f32.gmra.mrb[0].mxu0 %v2228
  %v3102 = vpop.f32.mrb[0].mxu0
  %v3103 = vadd.f32 0.0, %v3102
  %v3104 = vpop.f32.mrb[0].mxu0
  %v3105 = vadd.f32 0.0, %v3104
  %3106 = vdwg.mxu0
  %3107 = vmatprep.subr.mxu0 %v2089
  %3108 = vmatpush1.msra.mxu0 %v2088
  %3109 = vmatprep.subr.mxu0 %v2121
  %3110 = vmatpush1.msra.mxu0 %v2120
  %3111 = vmatprep.subr.mxu0 %v2153
  %3112 = vmatpush1.msra.mxu0 %v2152
  %3113 = vmatprep.subr.mxu0 %v2185
  %3114 = vmatpush1.msra.mxu0 %v2184
  %3115 = vmatprep.subr.mxu0 %v2300
  %3116 = vmatpush1.msra.mxu0 %v2297
  %3117 = vmatprep.subr.mxu0 0.0
  %3118 = vmatpush1.msra.mxu0 0.0
  %3119 = vmatprep.subr.mxu0 0.0
  %3120 = vmatpush1.msra.mxu0 0.0
  %3121 = vmatprep.subr.mxu0 0.0
  %3122 = vmatpush1.msra.mxu0 0.0
  %3123 = vmatprep.subr.mxu0 0.0
  %3124 = vmatpush1.msra.mxu0 0.0
  %3125 = vmatprep.subr.mxu0 0.0
  %3126 = vmatpush1.msra.mxu0 0.0
  %3127 = vmatprep.subr.mxu0 0.0
  %3128 = vmatpush1.msra.mxu0 0.0
  %3129 = vmatprep.subr.mxu0 0.0
  %3130 = vmatpush1.msra.mxu0 0.0
  %3131 = vmatprep.subr.mxu0 0.0
  %3132 = vmatpush1.msra.mxu0 0.0
  %3133 = vmatprep.subr.mxu0 0.0
  %3134 = vmatpush1.msra.mxu0 0.0
  %3135 = vmatprep.subr.mxu0 0.0
  %3136 = vmatpush1.msra.mxu0 0.0
  %3137 = vmatprep.subr.mxu0 0.0
  %3138 = vmatpush1.msra.mxu0 0.0
  %3139 = vmatprep.subr.mxu0 0.0
  %3140 = vmatpush1.msra.mxu0 0.0
  %3141 = vmatprep.subr.mxu0 0.0
  %3142 = vmatpush1.msra.mxu0 0.0
  %3143 = vmatprep.subr.mxu0 0.0
  %3144 = vmatpush1.msra.mxu0 0.0
  %3145 = vmatprep.subr.mxu0 0.0
  %3146 = vmatpush1.msra.mxu0 0.0
  %3147 = vmatprep.subr.mxu0 0.0
  %3148 = vmatpush1.msra.mxu0 0.0
  %3149 = vmatprep.subr.mxu0 0.0
  %3150 = vmatpush1.msra.mxu0 0.0
  %3151 = vmatprep.subr.mxu0 0.0
  %3152 = vmatpush1.msra.mxu0 0.0
  %3153 = vmatprep.subr.mxu0 0.0
  %3154 = vmatpush1.msra.mxu0 0.0
  %3155 = vmatprep.subr.mxu0 0.0
  %3156 = vmatpush1.msra.mxu0 0.0
  %3157 = vmatprep.subr.mxu0 0.0
  %3158 = vmatpush1.msra.mxu0 0.0
  %3159 = vmatprep.subr.mxu0 0.0
  %3160 = vmatpush1.msra.mxu0 0.0
  %3161 = vmatprep.subr.mxu0 0.0
  %3162 = vmatpush1.msra.mxu0 0.0
  %3163 = vmatprep.subr.mxu0 0.0
  %3164 = vmatpush1.msra.mxu0 0.0
  %3165 = vmatprep.subr.mxu0 0.0
  %3166 = vmatpush1.msra.mxu0 0.0
  %3167 = vmatprep.subr.mxu0 0.0
  %3168 = vmatpush1.msra.mxu0 0.0
  %3169 = vmatprep.subr.mxu0 0.0
  %3170 = vmatpush1.msra.mxu0 0.0
  %3171 = vmatprep.mubr.f32.mxu0 0.0
  %3172 = vmatmul.mubr.f32.gmra.mrb[0].mxu0 %v2228
  %v3173 = vpop.f32.mrb[0].mxu0
  %v3174 = vadd.f32 0.0, %v3173
  %v3175 = vpop.f32.mrb[0].mxu0
  %v3176 = vadd.f32 0.0, %v3175
  %3177 = vdwg.mxu0
  %3178 = vmatprep.subr.mxu0 %v2091
  %3179 = vmatpush1.msra.mxu0 %v2090
  %3180 = vmatprep.subr.mxu0 %v2123
  %3181 = vmatpush1.msra.mxu0 %v2122
  %3182 = vmatprep.subr.mxu0 %v2155
  %3183 = vmatpush1.msra.mxu0 %v2154
  %3184 = vmatprep.subr.mxu0 %v2187
  %3185 = vmatpush1.msra.mxu0 %v2186
  %3186 = vmatprep.subr.mxu0 %v2306
  %3187 = vmatpush1.msra.mxu0 %v2303
  %3188 = vmatprep.subr.mxu0 0.0
  %3189 = vmatpush1.msra.mxu0 0.0
  %3190 = vmatprep.subr.mxu0 0.0
  %3191 = vmatpush1.msra.mxu0 0.0
  %3192 = vmatprep.subr.mxu0 0.0
  %3193 = vmatpush1.msra.mxu0 0.0
  %3194 = vmatprep.subr.mxu0 0.0
  %3195 = vmatpush1.msra.mxu0 0.0
  %3196 = vmatprep.subr.mxu0 0.0
  %3197 = vmatpush1.msra.mxu0 0.0
  %3198 = vmatprep.subr.mxu0 0.0
  %3199 = vmatpush1.msra.mxu0 0.0
  %3200 = vmatprep.subr.mxu0 0.0
  %3201 = vmatpush1.msra.mxu0 0.0
  %3202 = vmatprep.subr.mxu0 0.0
  %3203 = vmatpush1.msra.mxu0 0.0
  %3204 = vmatprep.subr.mxu0 0.0
  %3205 = vmatpush1.msra.mxu0 0.0
  %3206 = vmatprep.subr.mxu0 0.0
  %3207 = vmatpush1.msra.mxu0 0.0
  %3208 = vmatprep.subr.mxu0 0.0
  %3209 = vmatpush1.msra.mxu0 0.0
  %3210 = vmatprep.subr.mxu0 0.0
  %3211 = vmatpush1.msra.mxu0 0.0
  %3212 = vmatprep.subr.mxu0 0.0
  %3213 = vmatpush1.msra.mxu0 0.0
  %3214 = vmatprep.subr.mxu0 0.0
  %3215 = vmatpush1.msra.mxu0 0.0
  %3216 = vmatprep.subr.mxu0 0.0
  %3217 = vmatpush1.msra.mxu0 0.0
  %3218 = vmatprep.subr.mxu0 0.0
  %3219 = vmatpush1.msra.mxu0 0.0
  %3220 = vmatprep.subr.mxu0 0.0
  %3221 = vmatpush1.msra.mxu0 0.0
  %3222 = vmatprep.subr.mxu0 0.0
  %3223 = vmatpush1.msra.mxu0 0.0
  %3224 = vmatprep.subr.mxu0 0.0
  %3225 = vmatpush1.msra.mxu0 0.0
  %3226 = vmatprep.subr.mxu0 0.0
  %3227 = vmatpush1.msra.mxu0 0.0
  %3228 = vmatprep.subr.mxu0 0.0
  %3229 = vmatpush1.msra.mxu0 0.0
  %3230 = vmatprep.subr.mxu0 0.0
  %3231 = vmatpush1.msra.mxu0 0.0
  %3232 = vmatprep.subr.mxu0 0.0
  %3233 = vmatpush1.msra.mxu0 0.0
  %3234 = vmatprep.subr.mxu0 0.0
  %3235 = vmatpush1.msra.mxu0 0.0
  %3236 = vmatprep.subr.mxu0 0.0
  %3237 = vmatpush1.msra.mxu0 0.0
  %3238 = vmatprep.subr.mxu0 0.0
  %3239 = vmatpush1.msra.mxu0 0.0
  %3240 = vmatprep.subr.mxu0 0.0
  %3241 = vmatpush1.msra.mxu0 0.0
  %3242 = vmatprep.mubr.f32.mxu0 0.0
  %3243 = vmatmul.mubr.f32.gmra.mrb[0].mxu0 %v2228
  %v3244 = vpop.f32.mrb[0].mxu0
  %v3245 = vadd.f32 0.0, %v3244
  %v3246 = vpop.f32.mrb[0].mxu0
  %v3247 = vadd.f32 0.0, %v3246
  %3248 = vdwg.mxu0
  %3249 = vmatprep.subr.mxu0 %v2093
  %3250 = vmatpush1.msra.mxu0 %v2092
  %3251 = vmatprep.subr.mxu0 %v2125
  %3252 = vmatpush1.msra.mxu0 %v2124
  %3253 = vmatprep.subr.mxu0 %v2157
  %3254 = vmatpush1.msra.mxu0 %v2156
  %3255 = vmatprep.subr.mxu0 %v2189
  %3256 = vmatpush1.msra.mxu0 %v2188
  %3257 = vmatprep.subr.mxu0 %v2312
  %3258 = vmatpush1.msra.mxu0 %v2309
  %3259 = vmatprep.subr.mxu0 0.0
  %3260 = vmatpush1.msra.mxu0 0.0
  %3261 = vmatprep.subr.mxu0 0.0
  %3262 = vmatpush1.msra.mxu0 0.0
  %3263 = vmatprep.subr.mxu0 0.0
  %3264 = vmatpush1.msra.mxu0 0.0
  %3265 = vmatprep.subr.mxu0 0.0
  %3266 = vmatpush1.msra.mxu0 0.0
  %3267 = vmatprep.subr.mxu0 0.0
  %3268 = vmatpush1.msra.mxu0 0.0
  %3269 = vmatprep.subr.mxu0 0.0
  %3270 = vmatpush1.msra.mxu0 0.0
  %3271 = vmatprep.subr.mxu0 0.0
  %3272 = vmatpush1.msra.mxu0 0.0
  %3273 = vmatprep.subr.mxu0 0.0
  %3274 = vmatpush1.msra.mxu0 0.0
  %3275 = vmatprep.subr.mxu0 0.0
  %3276 = vmatpush1.msra.mxu0 0.0
  %3277 = vmatprep.subr.mxu0 0.0
  %3278 = vmatpush1.msra.mxu0 0.0
  %3279 = vmatprep.subr.mxu0 0.0
  %3280 = vmatpush1.msra.mxu0 0.0
  %3281 = vmatprep.subr.mxu0 0.0
  %3282 = vmatpush1.msra.mxu0 0.0
  %3283 = vmatprep.subr.mxu0 0.0
  %3284 = vmatpush1.msra.mxu0 0.0
  %3285 = vmatprep.subr.mxu0 0.0
  %3286 = vmatpush1.msra.mxu0 0.0
  %3287 = vmatprep.subr.mxu0 0.0
  %3288 = vmatpush1.msra.mxu0 0.0
  %3289 = vmatprep.subr.mxu0 0.0
  %3290 = vmatpush1.msra.mxu0 0.0
  %3291 = vmatprep.subr.mxu0 0.0
  %3292 = vmatpush1.msra.mxu0 0.0
  %3293 = vmatprep.subr.mxu0 0.0
  %3294 = vmatpush1.msra.mxu0 0.0
  %3295 = vmatprep.subr.mxu0 0.0
  %3296 = vmatpush1.msra.mxu0 0.0
  %3297 = vmatprep.subr.mxu0 0.0
  %3298 = vmatpush1.msra.mxu0 0.0
  %3299 = vmatprep.subr.mxu0 0.0
  %3300 = vmatpush1.msra.mxu0 0.0
  %3301 = vmatprep.subr.mxu0 0.0
  %3302 = vmatpush1.msra.mxu0 0.0
  %3303 = vmatprep.subr.mxu0 0.0
  %3304 = vmatpush1.msra.mxu0 0.0
  %3305 = vmatprep.subr.mxu0 0.0
  %3306 = vmatpush1.msra.mxu0 0.0
  %3307 = vmatprep.subr.mxu0 0.0
  %3308 = vmatpush1.msra.mxu0 0.0
  %3309 = vmatprep.subr.mxu0 0.0
  %3310 = vmatpush1.msra.mxu0 0.0
  %3311 = vmatprep.subr.mxu0 0.0
  %3312 = vmatpush1.msra.mxu0 0.0
  %3313 = vmatprep.mubr.f32.mxu0 0.0
  %3314 = vmatmul.mubr.f32.gmra.mrb[0].mxu0 %v2228
  %v3315 = vpop.f32.mrb[0].mxu0
  %v3316 = vadd.f32 0.0, %v3315
  %v3317 = vpop.f32.mrb[0].mxu0
  %v3318 = vadd.f32 0.0, %v3317
  %3319 = vdwg.mxu0
  %3320 = vmatprep.subr.mxu0 %v2095
  %3321 = vmatpush1.msra.mxu0 %v2094
  %3322 = vmatprep.subr.mxu0 %v2127
  %3323 = vmatpush1.msra.mxu0 %v2126
  %3324 = vmatprep.subr.mxu0 %v2159
  %3325 = vmatpush1.msra.mxu0 %v2158
  %3326 = vmatprep.subr.mxu0 %v2191
  %3327 = vmatpush1.msra.mxu0 %v2190
  %3328 = vmatprep.subr.mxu0 %v2318
  %3329 = vmatpush1.msra.mxu0 %v2315
  %3330 = vmatprep.subr.mxu0 0.0
  %3331 = vmatpush1.msra.mxu0 0.0
  %3332 = vmatprep.subr.mxu0 0.0
  %3333 = vmatpush1.msra.mxu0 0.0
  %3334 = vmatprep.subr.mxu0 0.0
  %3335 = vmatpush1.msra.mxu0 0.0
  %3336 = vmatprep.subr.mxu0 0.0
  %3337 = vmatpush1.msra.mxu0 0.0
  %3338 = vmatprep.subr.mxu0 0.0
  %3339 = vmatpush1.msra.mxu0 0.0
  %3340 = vmatprep.subr.mxu0 0.0
  %3341 = vmatpush1.msra.mxu0 0.0
  %3342 = vmatprep.subr.mxu0 0.0
  %3343 = vmatpush1.msra.mxu0 0.0
  %3344 = vmatprep.subr.mxu0 0.0
  %3345 = vmatpush1.msra.mxu0 0.0
  %3346 = vmatprep.subr.mxu0 0.0
  %3347 = vmatpush1.msra.mxu0 0.0
  %3348 = vmatprep.subr.mxu0 0.0
  %3349 = vmatpush1.msra.mxu0 0.0
  %3350 = vmatprep.subr.mxu0 0.0
  %3351 = vmatpush1.msra.mxu0 0.0
  %3352 = vmatprep.subr.mxu0 0.0
  %3353 = vmatpush1.msra.mxu0 0.0
  %3354 = vmatprep.subr.mxu0 0.0
  %3355 = vmatpush1.msra.mxu0 0.0
  %3356 = vmatprep.subr.mxu0 0.0
  %3357 = vmatpush1.msra.mxu0 0.0
  %3358 = vmatprep.subr.mxu0 0.0
  %3359 = vmatpush1.msra.mxu0 0.0
  %3360 = vmatprep.subr.mxu0 0.0
  %3361 = vmatpush1.msra.mxu0 0.0
  %3362 = vmatprep.subr.mxu0 0.0
  %3363 = vmatpush1.msra.mxu0 0.0
  %3364 = vmatprep.subr.mxu0 0.0
  %3365 = vmatpush1.msra.mxu0 0.0
  %3366 = vmatprep.subr.mxu0 0.0
  %3367 = vmatpush1.msra.mxu0 0.0
  %3368 = vmatprep.subr.mxu0 0.0
  %3369 = vmatpush1.msra.mxu0 0.0
  %3370 = vmatprep.subr.mxu0 0.0
  %3371 = vmatpush1.msra.mxu0 0.0
  %3372 = vmatprep.subr.mxu0 0.0
  %3373 = vmatpush1.msra.mxu0 0.0
  %3374 = vmatprep.subr.mxu0 0.0
  %3375 = vmatpush1.msra.mxu0 0.0
  %3376 = vmatprep.subr.mxu0 0.0
  %3377 = vmatpush1.msra.mxu0 0.0
  %3378 = vmatprep.subr.mxu0 0.0
  %3379 = vmatpush1.msra.mxu0 0.0
  %3380 = vmatprep.subr.mxu0 0.0
  %3381 = vmatpush1.msra.mxu0 0.0
  %3382 = vmatprep.subr.mxu0 0.0
  %3383 = vmatpush1.msra.mxu0 0.0
  %3384 = vmatprep.mubr.f32.mxu0 0.0
  %3385 = vmatmul.mubr.f32.gmra.mrb[0].mxu0 %v2228
  %v3386 = vpop.f32.mrb[0].mxu0
  %v3387 = vadd.f32 0.0, %v3386
  %v3388 = vpop.f32.mrb[0].mxu0
  %v3389 = vadd.f32 0.0, %v3388
  %3390 = vdwg.mxu0
  %3391 = vmatprep.subr.mxu0 %v2097
  %3392 = vmatpush1.msra.mxu0 %v2096
  %3393 = vmatprep.subr.mxu0 %v2129
  %3394 = vmatpush1.msra.mxu0 %v2128
  %3395 = vmatprep.subr.mxu0 %v2161
  %3396 = vmatpush1.msra.mxu0 %v2160
  %3397 = vmatprep.subr.mxu0 %v2193
  %3398 = vmatpush1.msra.mxu0 %v2192
  %3399 = vmatprep.subr.mxu0 %v2324
  %3400 = vmatpush1.msra.mxu0 %v2321
  %3401 = vmatprep.subr.mxu0 0.0
  %3402 = vmatpush1.msra.mxu0 0.0
  %3403 = vmatprep.subr.mxu0 0.0
  %3404 = vmatpush1.msra.mxu0 0.0
  %3405 = vmatprep.subr.mxu0 0.0
  %3406 = vmatpush1.msra.mxu0 0.0
  %3407 = vmatprep.subr.mxu0 0.0
  %3408 = vmatpush1.msra.mxu0 0.0
  %3409 = vmatprep.subr.mxu0 0.0
  %3410 = vmatpush1.msra.mxu0 0.0
  %3411 = vmatprep.subr.mxu0 0.0
  %3412 = vmatpush1.msra.mxu0 0.0
  %3413 = vmatprep.subr.mxu0 0.0
  %3414 = vmatpush1.msra.mxu0 0.0
  %3415 = vmatprep.subr.mxu0 0.0
  %3416 = vmatpush1.msra.mxu0 0.0
  %3417 = vmatprep.subr.mxu0 0.0
  %3418 = vmatpush1.msra.mxu0 0.0
  %3419 = vmatprep.subr.mxu0 0.0
  %3420 = vmatpush1.msra.mxu0 0.0
  %3421 = vmatprep.subr.mxu0 0.0
  %3422 = vmatpush1.msra.mxu0 0.0
  %3423 = vmatprep.subr.mxu0 0.0
  %3424 = vmatpush1.msra.mxu0 0.0
  %3425 = vmatprep.subr.mxu0 0.0
  %3426 = vmatpush1.msra.mxu0 0.0
  %3427 = vmatprep.subr.mxu0 0.0
  %3428 = vmatpush1.msra.mxu0 0.0
  %3429 = vmatprep.subr.mxu0 0.0
  %3430 = vmatpush1.msra.mxu0 0.0
  %3431 = vmatprep.subr.mxu0 0.0
  %3432 = vmatpush1.msra.mxu0 0.0
  %3433 = vmatprep.subr.mxu0 0.0
  %3434 = vmatpush1.msra.mxu0 0.0
  %3435 = vmatprep.subr.mxu0 0.0
  %3436 = vmatpush1.msra.mxu0 0.0
  %3437 = vmatprep.subr.mxu0 0.0
  %3438 = vmatpush1.msra.mxu0 0.0
  %3439 = vmatprep.subr.mxu0 0.0
  %3440 = vmatpush1.msra.mxu0 0.0
  %3441 = vmatprep.subr.mxu0 0.0
  %3442 = vmatpush1.msra.mxu0 0.0
  %3443 = vmatprep.subr.mxu0 0.0
  %3444 = vmatpush1.msra.mxu0 0.0
  %3445 = vmatprep.subr.mxu0 0.0
  %3446 = vmatpush1.msra.mxu0 0.0
  %3447 = vmatprep.subr.mxu0 0.0
  %3448 = vmatpush1.msra.mxu0 0.0
  %3449 = vmatprep.subr.mxu0 0.0
  %3450 = vmatpush1.msra.mxu0 0.0
  %3451 = vmatprep.subr.mxu0 0.0
  %3452 = vmatpush1.msra.mxu0 0.0
  %3453 = vmatprep.subr.mxu0 0.0
  %3454 = vmatpush1.msra.mxu0 0.0
  %3455 = vmatprep.mubr.f32.mxu0 0.0
  %3456 = vmatmul.mubr.f32.gmra.mrb[0].mxu0 %v2228
  %v3457 = vpop.f32.mrb[0].mxu0
  %v3458 = vadd.f32 0.0, %v3457
  %v3459 = vpop.f32.mrb[0].mxu0
  %v3460 = vadd.f32 0.0, %v3459
  %3461 = vdwg.mxu0
  %v3462 = vld [vmem:[%s6] sm:$0xff]
  %3464 = vset.pattern.permute.xlu0 0
  %3465 = vperm.xlu0 %3464, %v3462
  %v3466 = vpop.permute.xlu0 %3465
  %v3468 = vmul.f32 %v2393, %v3466
  %v3469 = vmul.f32 %v2395, %v3466
  %v3470 = vmul.f32 %v2464, %v3466
  %v3471 = vmul.f32 %v2466, %v3466
  %v3472 = vmul.f32 %v2535, %v3466
  %v3473 = vmul.f32 %v2537, %v3466
  %v3474 = vmul.f32 %v2606, %v3466
  %v3475 = vmul.f32 %v2608, %v3466
  %v3476 = vmul.f32 %v2677, %v3466
  %v3477 = vmul.f32 %v2679, %v3466
  %v3478 = vmul.f32 %v2748, %v3466
  %v3479 = vmul.f32 %v2750, %v3466
  %v3480 = vmul.f32 %v2819, %v3466
  %v3481 = vmul.f32 %v2821, %v3466
  %v3482 = vmul.f32 %v2890, %v3466
  %v3483 = vmul.f32 %v2892, %v3466
  %v3484 = vmul.f32 %v2961, %v3466
  %v3485 = vmul.f32 %v2963, %v3466
  %v3486 = vmul.f32 %v3032, %v3466
  %v3487 = vmul.f32 %v3034, %v3466
  %v3488 = vmul.f32 %v3103, %v3466
  %v3489 = vmul.f32 %v3105, %v3466
  %v3490 = vmul.f32 %v3174, %v3466
  %v3491 = vmul.f32 %v3176, %v3466
  %v3492 = vmul.f32 %v3245, %v3466
  %v3493 = vmul.f32 %v3247, %v3466
  %v3494 = vmul.f32 %v3316, %v3466
  %v3495 = vmul.f32 %v3318, %v3466
  %v3496 = vmul.f32 %v3387, %v3466
  %v3497 = vmul.f32 %v3389, %v3466
  %v3498 = vmul.f32 %v3458, %v3466
  %v3499 = vmul.f32 %v3460, %v3466
  %v3500 = vld [vmem:[%s7] sm:$0xff]
  %3502 = vset.pattern.permute.xlu0 0
  %3503 = vperm.xlu0 %3502, %v3500
  %v3504 = vpop.permute.xlu0 %3503
  %v3506 = vadd.f32 %v3468, %v3504
  %v3507 = vadd.f32 %v3469, %v3504
  %v3508 = vadd.f32 %v3470, %v3504
  %v3509 = vadd.f32 %v3471, %v3504
  %v3510 = vadd.f32 %v3472, %v3504
  %v3511 = vadd.f32 %v3473, %v3504
  %v3512 = vadd.f32 %v3474, %v3504
  %v3513 = vadd.f32 %v3475, %v3504
  %v3514 = vadd.f32 %v3476, %v3504
  %v3515 = vadd.f32 %v3477, %v3504
  %v3516 = vadd.f32 %v3478, %v3504
  %v3517 = vadd.f32 %v3479, %v3504
  %v3518 = vadd.f32 %v3480, %v3504
  %v3519 = vadd.f32 %v3481, %v3504
  %v3520 = vadd.f32 %v3482, %v3504
  %v3521 = vadd.f32 %v3483, %v3504
  %v3522 = vadd.f32 %v3484, %v3504
  %v3523 = vadd.f32 %v3485, %v3504
  %v3524 = vadd.f32 %v3486, %v3504
  %v3525 = vadd.f32 %v3487, %v3504
  %v3526 = vadd.f32 %v3488, %v3504
  %v3527 = vadd.f32 %v3489, %v3504
  %v3528 = vadd.f32 %v3490, %v3504
  %v3529 = vadd.f32 %v3491, %v3504
  %v3530 = vadd.f32 %v3492, %v3504
  %v3531 = vadd.f32 %v3493, %v3504
  %v3532 = vadd.f32 %v3494, %v3504
  %v3533 = vadd.f32 %v3495, %v3504
  %v3534 = vadd.f32 %v3496, %v3504
  %v3535 = vadd.f32 %v3497, %v3504
  %v3536 = vadd.f32 %v3498, %v3504
  %v3537 = vadd.f32 %v3499, %v3504
  %v3538 = vmax.f32 %v3506, 0.0
  %v3539 = vmax.f32 %v3507, 0.0
  %v3540 = vmax.f32 %v3508, 0.0
  %v3541 = vmax.f32 %v3509, 0.0
  %v3542 = vmax.f32 %v3510, 0.0
  %v3543 = vmax.f32 %v3511, 0.0
  %v3544 = vmax.f32 %v3512, 0.0
  %v3545 = vmax.f32 %v3513, 0.0
  %v3546 = vmax.f32 %v3514, 0.0
  %v3547 = vmax.f32 %v3515, 0.0
  %v3548 = vmax.f32 %v3516, 0.0
  %v3549 = vmax.f32 %v3517, 0.0
  %v3550 = vmax.f32 %v3518, 0.0
  %v3551 = vmax.f32 %v3519, 0.0
  %v3552 = vmax.f32 %v3520, 0.0
  %v3553 = vmax.f32 %v3521, 0.0
  %v3554 = vmax.f32 %v3522, 0.0
  %v3555 = vmax.f32 %v3523, 0.0
  %v3556 = vmax.f32 %v3524, 0.0
  %v3557 = vmax.f32 %v3525, 0.0
  %v3558 = vmax.f32 %v3526, 0.0
  %v3559 = vmax.f32 %v3527, 0.0
  %v3560 = vmax.f32 %v3528, 0.0
  %v3561 = vmax.f32 %v3529, 0.0
  %v3562 = vmax.f32 %v3530, 0.0
  %v3563 = vmax.f32 %v3531, 0.0
  %v3564 = vmax.f32 %v3532, 0.0
  %v3565 = vmax.f32 %v3533, 0.0
  %v3566 = vmax.f32 %v3534, 0.0
  %v3567 = vmax.f32 %v3535, 0.0
  %v3568 = vmax.f32 %v3536, 0.0
  %v3569 = vmax.f32 %v3537, 0.0
  %3570 = vst [vmem:[%s9] sm:$0xff] %v3538
  %3571 = vst [vmem:[%s9 + $0x8] sm:$0xff] %v3539
  %3572 = vst [vmem:[%s9 + $0x10] sm:$0xff] %v3540
  %3573 = vst [vmem:[%s9 + $0x18] sm:$0xff] %v3541
  %3574 = vst [vmem:[%s9 + $0x20] sm:$0xff] %v3542
  %3575 = vst [vmem:[%s9 + $0x28] sm:$0xff] %v3543
  %3576 = vst [vmem:[%s9 + $0x30] sm:$0xff] %v3544
  %3577 = vst [vmem:[%s9 + $0x38] sm:$0xff] %v3545
  %3578 = vst [vmem:[%s9 + $0x40] sm:$0xff] %v3546
  %3579 = vst [vmem:[%s9 + $0x48] sm:$0xff] %v3547
  %3580 = vst [vmem:[%s9 + $0x50] sm:$0xff] %v3548
  %3581 = vst [vmem:[%s9 + $0x58] sm:$0xff] %v3549
  %3582 = vst [vmem:[%s9 + $0x60] sm:$0xff] %v3550
  %3583 = vst [vmem:[%s9 + $0x68] sm:$0xff] %v3551
  %3584 = vst [vmem:[%s9 + $0x70] sm:$0xff] %v3552
  %3585 = vst [vmem:[%s9 + $0x78] sm:$0xff] %v3553
  %3586 = vst [vmem:[%s9 + $0x80] sm:$0xff] %v3554
  %3587 = vst [vmem:[%s9 + $0x88] sm:$0xff] %v3555
  %3588 = vst [vmem:[%s9 + $0x90] sm:$0xff] %v3556
  %3589 = vst [vmem:[%s9 + $0x98] sm:$0xff] %v3557
  %3590 = vst [vmem:[%s9 + $0xa0] sm:$0xff] %v3558
  %3591 = vst [vmem:[%s9 + $0xa8] sm:$0xff] %v3559
  %3592 = vst [vmem:[%s9 + $0xb0] sm:$0xff] %v3560
  %3593 = vst [vmem:[%s9 + $0xb8] sm:$0xff] %v3561
  %3594 = vst [vmem:[%s9 + $0xc0] sm:$0xff] %v3562
  %3595 = vst [vmem:[%s9 + $0xc8] sm:$0xff] %v3563
  %3596 = vst [vmem:[%s9 + $0xd0] sm:$0xff] %v3564
  %3597 = vst [vmem:[%s9 + $0xd8] sm:$0xff] %v3565
  %3598 = vst [vmem:[%s9 + $0xe0] sm:$0xff] %v3566
  %3599 = vst [vmem:[%s9 + $0xe8] sm:$0xff] %v3567
  %3600 = vst [vmem:[%s9 + $0xf0] sm:$0xff] %v3568
  %3601 = vst [vmem:[%s9 + $0xf8] sm:$0xff] %v3569
  // Predicated region
  $region34: #{conv2plus1d_forward.5} parent=0 // pred_check
    _
  $region35: #{conv2plus1d_forward.5} parent=0 // pred_check_branch
    %3603 = sbr.rel (0) target = $region37
  $region36: #{conv2plus1d_forward.5} parent=0 // pred_region
    _
  $region37: #{conv2plus1d_forward.5} parent=0 // pred_fallthru
    _
  // Predicated region
  $region38: #{conv2plus1d_forward.5} parent=0 // pred_check
    _
  $region39: #{conv2plus1d_forward.5} parent=0 // pred_check_branch
    %3605 = sbr.rel (0) target = $region41
  $region40: #{conv2plus1d_forward.5} parent=0 // pred_region
    _
  $region41: #{conv2plus1d_forward.5} parent=0 // pred_fallthru
    _
  // Predicated region
  $region42: #{conv2plus1d_forward.5} parent=0 // pred_check
    _
  $region43: #{conv2plus1d_forward.5} parent=0 // pred_check_branch
    %3607 = sbr.rel (0) target = $region45
  $region44: #{conv2plus1d_forward.5} parent=0 // pred_region
    _
  $region45: #{conv2plus1d_forward.5} parent=0 // pred_fallthru
    _
  // Predicated region
  $region46: #{conv2plus1d_forward.5} parent=0 // pred_check
    _
  $region47: #{conv2plus1d_forward.5} parent=0 // pred_check_branch
    %3609 = sbr.rel (0) target = $region49
  $region48: #{conv2plus1d_forward.5} parent=0 // pred_region
    _
  $region49: #{conv2plus1d_forward.5} parent=0 // pred_fallthru
    _

// kernel: conv2plus1d_forward.6
$region0: #{conv2plus1d_forward.6}
  #allocation0 [shape = 'u32[]', space=smem, size = 0x4, offset = 0x4, fixed_abs, tag = 'smem constant byte address 0x4 - core index']
  #allocation1 [shape = 'u32[144,128]{1,0:T(1,128)}', space=vmem, size = 0x12000, scoped, tag = 'internal scratch']
  %s0 = inlined_call_operand.vmem [shape: f32[72,4096], index: 0, kind: input, shape index: {}]
  %s1 = inlined_call_operand.vmem [shape: f32[8,72], index: 1, kind: input, shape index: {}]
  %s2 = inlined_call_operand.vmem [shape: f32[8,1], index: 2, kind: input, shape index: {}]
  %s3 = inlined_call_operand.vmem [shape: f32[8,1], index: 3, kind: input, shape index: {}]
  %s4 = inlined_call_operand.vmem [shape: f32[8,4096], index: 4, kind: output, shape index: {}]
  %s5 = sld [smem:[#allocation0]]
  $region26: #{conv2plus1d_forward.6} parent=0
    _
  %s7 = ssub.s32 1, %s5
  %s8 = scalar_select 0, %s7, %s5
  // Predicated region
  $region2: #{conv2plus1d_forward.6} parent=0 // pred_check
    _
  $region3: #{conv2plus1d_forward.6} parent=0 // pred_check_branch
    %10 = sbr.rel (0) target = $region5
  $region4: #{conv2plus1d_forward.6} parent=0 // pred_region
    _
  $region5: #{conv2plus1d_forward.6} parent=0 // pred_fallthru
    _
  // Predicated region
  $region6: #{conv2plus1d_forward.6} parent=0 // pred_check
    _
  $region7: #{conv2plus1d_forward.6} parent=0 // pred_check_branch
    %12 = sbr.rel (0) target = $region9
  $region8: #{conv2plus1d_forward.6} parent=0 // pred_region
    _
  $region9: #{conv2plus1d_forward.6} parent=0 // pred_fallthru
    _
  // Predicated region
  $region10: #{conv2plus1d_forward.6} parent=0 // pred_check
    _
  $region11: #{conv2plus1d_forward.6} parent=0 // pred_check_branch
    %14 = sbr.rel (0) target = $region13
  $region12: #{conv2plus1d_forward.6} parent=0 // pred_region
    _
  $region13: #{conv2plus1d_forward.6} parent=0 // pred_fallthru
    _
  // Predicated region
  $region14: #{conv2plus1d_forward.6} parent=0 // pred_check
    _
  $region15: #{conv2plus1d_forward.6} parent=0 // pred_check_branch
    %16 = sbr.rel (0) target = $region17
  $region16: #{conv2plus1d_forward.6} parent=0 // pred_region
    _
  $region17: #{conv2plus1d_forward.6} parent=0 // pred_fallthru
    _
  %v17 = vld [vmem:[%s1] sm:$0xff]
  %v18 = vld [vmem:[%s0] sm:$0xff]
  %v19 = vld [vmem:[%s0 + $0x8] sm:$0xff]
  %v20 = vld [vmem:[%s0 + $0x10] sm:$0xff]
  %v21 = vld [vmem:[%s0 + $0x18] sm:$0xff]
  %v22 = vld [vmem:[%s0 + $0x20] sm:$0xff]
  %v23 = vld [vmem:[%s0 + $0x28] sm:$0xff]
  %v24 = vld [vmem:[%s0 + $0x30] sm:$0xff]
  %v25 = vld [vmem:[%s0 + $0x38] sm:$0xff]
  %v26 = vld [vmem:[%s0 + $0x40] sm:$0xff]
  %v27 = vld [vmem:[%s0 + $0x48] sm:$0xff]
  %v28 = vld [vmem:[%s0 + $0x50] sm:$0xff]
  %v29 = vld [vmem:[%s0 + $0x58] sm:$0xff]
  %v30 = vld [vmem:[%s0 + $0x60] sm:$0xff]
  %v31 = vld [vmem:[%s0 + $0x68] sm:$0xff]
  %v32 = vld [vmem:[%s0 + $0x70] sm:$0xff]
  %v33 = vld [vmem:[%s0 + $0x78] sm:$0xff]
  %v34 = vld [vmem:[%s0 + $0x80] sm:$0xff]
  %v35 = vld [vmem:[%s0 + $0x88] sm:$0xff]
  %v36 = vld [vmem:[%s0 + $0x90] sm:$0xff]
  %v37 = vld [vmem:[%s0 + $0x98] sm:$0xff]
  %v38 = vld [vmem:[%s0 + $0xa0] sm:$0xff]
  %v39 = vld [vmem:[%s0 + $0xa8] sm:$0xff]
  %v40 = vld [vmem:[%s0 + $0xb0] sm:$0xff]
  %v41 = vld [vmem:[%s0 + $0xb8] sm:$0xff]
  %v42 = vld [vmem:[%s0 + $0xc0] sm:$0xff]
  %v43 = vld [vmem:[%s0 + $0xc8] sm:$0xff]
  %v44 = vld [vmem:[%s0 + $0xd0] sm:$0xff]
  %v45 = vld [vmem:[%s0 + $0xd8] sm:$0xff]
  %v46 = vld [vmem:[%s0 + $0xe0] sm:$0xff]
  %v47 = vld [vmem:[%s0 + $0xe8] sm:$0xff]
  %v48 = vld [vmem:[%s0 + $0xf0] sm:$0xff]
  %v49 = vld [vmem:[%s0 + $0xf8] sm:$0xff]
  %v50 = vld [vmem:[%s0 + $0x100] sm:$0xff]
  %v51 = vld [vmem:[%s0 + $0x108] sm:$0xff]
  %v52 = vld [vmem:[%s0 + $0x110] sm:$0xff]
  %v53 = vld [vmem:[%s0 + $0x118] sm:$0xff]
  %v54 = vld [vmem:[%s0 + $0x120] sm:$0xff]
  %v55 = vld [vmem:[%s0 + $0x128] sm:$0xff]
  %v56 = vld [vmem:[%s0 + $0x130] sm:$0xff]
  %v57 = vld [vmem:[%s0 + $0x138] sm:$0xff]
  %v58 = vld [vmem:[%s0 + $0x140] sm:$0xff]
  %v59 = vld [vmem:[%s0 + $0x148] sm:$0xff]
  %v60 = vld [vmem:[%s0 + $0x150] sm:$0xff]
  %v61 = vld [vmem:[%s0 + $0x158] sm:$0xff]
  %v62 = vld [vmem:[%s0 + $0x160] sm:$0xff]
  %v63 = vld [vmem:[%s0 + $0x168] sm:$0xff]
  %v64 = vld [vmem:[%s0 + $0x170] sm:$0xff]
  %v65 = vld [vmem:[%s0 + $0x178] sm:$0xff]
  %v66 = vld [vmem:[%s0 + $0x180] sm:$0xff]
  %v67 = vld [vmem:[%s0 + $0x188] sm:$0xff]
  %v68 = vld [vmem:[%s0 + $0x190] sm:$0xff]
  %v69 = vld [vmem:[%s0 + $0x198] sm:$0xff]
  %v70 = vld [vmem:[%s0 + $0x1a0] sm:$0xff]
  %v71 = vld [vmem:[%s0 + $0x1a8] sm:$0xff]
  %v72 = vld [vmem:[%s0 + $0x1b0] sm:$0xff]
  %v73 = vld [vmem:[%s0 + $0x1b8] sm:$0xff]
  %v74 = vld [vmem:[%s0 + $0x1c0] sm:$0xff]
  %v75 = vld [vmem:[%s0 + $0x1c8] sm:$0xff]
  %v76 = vld [vmem:[%s0 + $0x1d0] sm:$0xff]
  %v77 = vld [vmem:[%s0 + $0x1d8] sm:$0xff]
  %v78 = vld [vmem:[%s0 + $0x1e0] sm:$0xff]
  %v79 = vld [vmem:[%s0 + $0x1e8] sm:$0xff]
  %v80 = vld [vmem:[%s0 + $0x1f0] sm:$0xff]
  %v81 = vld [vmem:[%s0 + $0x1f8] sm:$0xff]
  %v82 = vld [vmem:[%s0 + $0x200] sm:$0xff]
  %v83 = vld [vmem:[%s0 + $0x208] sm:$0xff]
  %v84 = vld [vmem:[%s0 + $0x210] sm:$0xff]
  %v85 = vld [vmem:[%s0 + $0x218] sm:$0xff]
  %v86 = vld [vmem:[%s0 + $0x220] sm:$0xff]
  %v87 = vld [vmem:[%s0 + $0x228] sm:$0xff]
  %v88 = vld [vmem:[%s0 + $0x230] sm:$0xff]
  %v89 = vld [vmem:[%s0 + $0x238] sm:$0xff]
  %v90 = vld [vmem:[%s0 + $0x240] sm:$0xff]
  %v91 = vld [vmem:[%s0 + $0x248] sm:$0xff]
  %v92 = vld [vmem:[%s0 + $0x250] sm:$0xff]
  %v93 = vld [vmem:[%s0 + $0x258] sm:$0xff]
  %v94 = vld [vmem:[%s0 + $0x260] sm:$0xff]
  %v95 = vld [vmem:[%s0 + $0x268] sm:$0xff]
  %v96 = vld [vmem:[%s0 + $0x270] sm:$0xff]
  %v97 = vld [vmem:[%s0 + $0x278] sm:$0xff]
  %v98 = vld [vmem:[%s0 + $0x280] sm:$0xff]
  %v99 = vld [vmem:[%s0 + $0x288] sm:$0xff]
  %v100 = vld [vmem:[%s0 + $0x290] sm:$0xff]
  %v101 = vld [vmem:[%s0 + $0x298] sm:$0xff]
  %v102 = vld [vmem:[%s0 + $0x2a0] sm:$0xff]
  %v103 = vld [vmem:[%s0 + $0x2a8] sm:$0xff]
  %v104 = vld [vmem:[%s0 + $0x2b0] sm:$0xff]
  %v105 = vld [vmem:[%s0 + $0x2b8] sm:$0xff]
  %v106 = vld [vmem:[%s0 + $0x2c0] sm:$0xff]
  %v107 = vld [vmem:[%s0 + $0x2c8] sm:$0xff]
  %v108 = vld [vmem:[%s0 + $0x2d0] sm:$0xff]
  %v109 = vld [vmem:[%s0 + $0x2d8] sm:$0xff]
  %v110 = vld [vmem:[%s0 + $0x2e0] sm:$0xff]
  %v111 = vld [vmem:[%s0 + $0x2e8] sm:$0xff]
  %v112 = vld [vmem:[%s0 + $0x2f0] sm:$0xff]
  %v113 = vld [vmem:[%s0 + $0x2f8] sm:$0xff]
  %v114 = vld [vmem:[%s0 + $0x300] sm:$0xff]
  %v115 = vld [vmem:[%s0 + $0x308] sm:$0xff]
  %v116 = vld [vmem:[%s0 + $0x310] sm:$0xff]
  %v117 = vld [vmem:[%s0 + $0x318] sm:$0xff]
  %v118 = vld [vmem:[%s0 + $0x320] sm:$0xff]
  %v119 = vld [vmem:[%s0 + $0x328] sm:$0xff]
  %v120 = vld [vmem:[%s0 + $0x330] sm:$0xff]
  %v121 = vld [vmem:[%s0 + $0x338] sm:$0xff]
  %v122 = vld [vmem:[%s0 + $0x340] sm:$0xff]
  %v123 = vld [vmem:[%s0 + $0x348] sm:$0xff]
  %v124 = vld [vmem:[%s0 + $0x350] sm:$0xff]
  %v125 = vld [vmem:[%s0 + $0x358] sm:$0xff]
  %v126 = vld [vmem:[%s0 + $0x360] sm:$0xff]
  %v127 = vld [vmem:[%s0 + $0x368] sm:$0xff]
  %v128 = vld [vmem:[%s0 + $0x370] sm:$0xff]
  %v129 = vld [vmem:[%s0 + $0x378] sm:$0xff]
  %v130 = vld [vmem:[%s0 + $0x380] sm:$0xff]
  %v131 = vld [vmem:[%s0 + $0x388] sm:$0xff]
  %v132 = vld [vmem:[%s0 + $0x390] sm:$0xff]
  %v133 = vld [vmem:[%s0 + $0x398] sm:$0xff]
  %v134 = vld [vmem:[%s0 + $0x3a0] sm:$0xff]
  %v135 = vld [vmem:[%s0 + $0x3a8] sm:$0xff]
  %v136 = vld [vmem:[%s0 + $0x3b0] sm:$0xff]
  %v137 = vld [vmem:[%s0 + $0x3b8] sm:$0xff]
  %v138 = vld [vmem:[%s0 + $0x3c0] sm:$0xff]
  %v139 = vld [vmem:[%s0 + $0x3c8] sm:$0xff]
  %v140 = vld [vmem:[%s0 + $0x3d0] sm:$0xff]
  %v141 = vld [vmem:[%s0 + $0x3d8] sm:$0xff]
  %v142 = vld [vmem:[%s0 + $0x3e0] sm:$0xff]
  %v143 = vld [vmem:[%s0 + $0x3e8] sm:$0xff]
  %v144 = vld [vmem:[%s0 + $0x3f0] sm:$0xff]
  %v145 = vld [vmem:[%s0 + $0x3f8] sm:$0xff]
  %v146 = vld [vmem:[%s0 + $0x400] sm:$0xff]
  %v147 = vld [vmem:[%s0 + $0x408] sm:$0xff]
  %v148 = vld [vmem:[%s0 + $0x410] sm:$0xff]
  %v149 = vld [vmem:[%s0 + $0x418] sm:$0xff]
  %v150 = vld [vmem:[%s0 + $0x420] sm:$0xff]
  %v151 = vld [vmem:[%s0 + $0x428] sm:$0xff]
  %v152 = vld [vmem:[%s0 + $0x430] sm:$0xff]
  %v153 = vld [vmem:[%s0 + $0x438] sm:$0xff]
  %v154 = vld [vmem:[%s0 + $0x440] sm:$0xff]
  %v155 = vld [vmem:[%s0 + $0x448] sm:$0xff]
  %v156 = vld [vmem:[%s0 + $0x450] sm:$0xff]
  %v157 = vld [vmem:[%s0 + $0x458] sm:$0xff]
  %v158 = vld [vmem:[%s0 + $0x460] sm:$0xff]
  %v159 = vld [vmem:[%s0 + $0x468] sm:$0xff]
  %v160 = vld [vmem:[%s0 + $0x470] sm:$0xff]
  %v161 = vld [vmem:[%s0 + $0x478] sm:$0xff]
  %v162 = vld [vmem:[%s0 + $0x480] sm:$0xff]
  %v163 = vld [vmem:[%s0 + $0x488] sm:$0xff]
  %v164 = vld [vmem:[%s0 + $0x490] sm:$0xff]
  %v165 = vld [vmem:[%s0 + $0x498] sm:$0xff]
  %v166 = vld [vmem:[%s0 + $0x4a0] sm:$0xff]
  %v167 = vld [vmem:[%s0 + $0x4a8] sm:$0xff]
  %v168 = vld [vmem:[%s0 + $0x4b0] sm:$0xff]
  %v169 = vld [vmem:[%s0 + $0x4b8] sm:$0xff]
  %v170 = vld [vmem:[%s0 + $0x4c0] sm:$0xff]
  %v171 = vld [vmem:[%s0 + $0x4c8] sm:$0xff]
  %v172 = vld [vmem:[%s0 + $0x4d0] sm:$0xff]
  %v173 = vld [vmem:[%s0 + $0x4d8] sm:$0xff]
  %v174 = vld [vmem:[%s0 + $0x4e0] sm:$0xff]
  %v175 = vld [vmem:[%s0 + $0x4e8] sm:$0xff]
  %v176 = vld [vmem:[%s0 + $0x4f0] sm:$0xff]
  %v177 = vld [vmem:[%s0 + $0x4f8] sm:$0xff]
  %v178 = vld [vmem:[%s0 + $0x500] sm:$0xff]
  %v179 = vld [vmem:[%s0 + $0x508] sm:$0xff]
  %v180 = vld [vmem:[%s0 + $0x510] sm:$0xff]
  %v181 = vld [vmem:[%s0 + $0x518] sm:$0xff]
  %v182 = vld [vmem:[%s0 + $0x520] sm:$0xff]
  %v183 = vld [vmem:[%s0 + $0x528] sm:$0xff]
  %v184 = vld [vmem:[%s0 + $0x530] sm:$0xff]
  %v185 = vld [vmem:[%s0 + $0x538] sm:$0xff]
  %v186 = vld [vmem:[%s0 + $0x540] sm:$0xff]
  %v187 = vld [vmem:[%s0 + $0x548] sm:$0xff]
  %v188 = vld [vmem:[%s0 + $0x550] sm:$0xff]
  %v189 = vld [vmem:[%s0 + $0x558] sm:$0xff]
  %v190 = vld [vmem:[%s0 + $0x560] sm:$0xff]
  %v191 = vld [vmem:[%s0 + $0x568] sm:$0xff]
  %v192 = vld [vmem:[%s0 + $0x570] sm:$0xff]
  %v193 = vld [vmem:[%s0 + $0x578] sm:$0xff]
  %v194 = vld [vmem:[%s0 + $0x580] sm:$0xff]
  %v195 = vld [vmem:[%s0 + $0x588] sm:$0xff]
  %v196 = vld [vmem:[%s0 + $0x590] sm:$0xff]
  %v197 = vld [vmem:[%s0 + $0x598] sm:$0xff]
  %v198 = vld [vmem:[%s0 + $0x5a0] sm:$0xff]
  %v199 = vld [vmem:[%s0 + $0x5a8] sm:$0xff]
  %v200 = vld [vmem:[%s0 + $0x5b0] sm:$0xff]
  %v201 = vld [vmem:[%s0 + $0x5b8] sm:$0xff]
  %v202 = vld [vmem:[%s0 + $0x5c0] sm:$0xff]
  %v203 = vld [vmem:[%s0 + $0x5c8] sm:$0xff]
  %v204 = vld [vmem:[%s0 + $0x5d0] sm:$0xff]
  %v205 = vld [vmem:[%s0 + $0x5d8] sm:$0xff]
  %v206 = vld [vmem:[%s0 + $0x5e0] sm:$0xff]
  %v207 = vld [vmem:[%s0 + $0x5e8] sm:$0xff]
  %v208 = vld [vmem:[%s0 + $0x5f0] sm:$0xff]
  %v209 = vld [vmem:[%s0 + $0x5f8] sm:$0xff]
  %v210 = vld [vmem:[%s0 + $0x600] sm:$0xff]
  %v211 = vld [vmem:[%s0 + $0x608] sm:$0xff]
  %v212 = vld [vmem:[%s0 + $0x610] sm:$0xff]
  %v213 = vld [vmem:[%s0 + $0x618] sm:$0xff]
  %v214 = vld [vmem:[%s0 + $0x620] sm:$0xff]
  %v215 = vld [vmem:[%s0 + $0x628] sm:$0xff]
  %v216 = vld [vmem:[%s0 + $0x630] sm:$0xff]
  %v217 = vld [vmem:[%s0 + $0x638] sm:$0xff]
  %v218 = vld [vmem:[%s0 + $0x640] sm:$0xff]
  %v219 = vld [vmem:[%s0 + $0x648] sm:$0xff]
  %v220 = vld [vmem:[%s0 + $0x650] sm:$0xff]
  %v221 = vld [vmem:[%s0 + $0x658] sm:$0xff]
  %v222 = vld [vmem:[%s0 + $0x660] sm:$0xff]
  %v223 = vld [vmem:[%s0 + $0x668] sm:$0xff]
  %v224 = vld [vmem:[%s0 + $0x670] sm:$0xff]
  %v225 = vld [vmem:[%s0 + $0x678] sm:$0xff]
  %v226 = vld [vmem:[%s0 + $0x680] sm:$0xff]
  %v227 = vld [vmem:[%s0 + $0x688] sm:$0xff]
  %v228 = vld [vmem:[%s0 + $0x690] sm:$0xff]
  %v229 = vld [vmem:[%s0 + $0x698] sm:$0xff]
  %v230 = vld [vmem:[%s0 + $0x6a0] sm:$0xff]
  %v231 = vld [vmem:[%s0 + $0x6a8] sm:$0xff]
  %v232 = vld [vmem:[%s0 + $0x6b0] sm:$0xff]
  %v233 = vld [vmem:[%s0 + $0x6b8] sm:$0xff]
  %v234 = vld [vmem:[%s0 + $0x6c0] sm:$0xff]
  %v235 = vld [vmem:[%s0 + $0x6c8] sm:$0xff]
  %v236 = vld [vmem:[%s0 + $0x6d0] sm:$0xff]
  %v237 = vld [vmem:[%s0 + $0x6d8] sm:$0xff]
  %v238 = vld [vmem:[%s0 + $0x6e0] sm:$0xff]
  %v239 = vld [vmem:[%s0 + $0x6e8] sm:$0xff]
  %v240 = vld [vmem:[%s0 + $0x6f0] sm:$0xff]
  %v241 = vld [vmem:[%s0 + $0x6f8] sm:$0xff]
  %v242 = vld [vmem:[%s0 + $0x700] sm:$0xff]
  %v243 = vld [vmem:[%s0 + $0x708] sm:$0xff]
  %v244 = vld [vmem:[%s0 + $0x710] sm:$0xff]
  %v245 = vld [vmem:[%s0 + $0x718] sm:$0xff]
  %v246 = vld [vmem:[%s0 + $0x720] sm:$0xff]
  %v247 = vld [vmem:[%s0 + $0x728] sm:$0xff]
  %v248 = vld [vmem:[%s0 + $0x730] sm:$0xff]
  %v249 = vld [vmem:[%s0 + $0x738] sm:$0xff]
  %v250 = vld [vmem:[%s0 + $0x740] sm:$0xff]
  %v251 = vld [vmem:[%s0 + $0x748] sm:$0xff]
  %v252 = vld [vmem:[%s0 + $0x750] sm:$0xff]
  %v253 = vld [vmem:[%s0 + $0x758] sm:$0xff]
  %v254 = vld [vmem:[%s0 + $0x760] sm:$0xff]
  %v255 = vld [vmem:[%s0 + $0x768] sm:$0xff]
  %v256 = vld [vmem:[%s0 + $0x770] sm:$0xff]
  %v257 = vld [vmem:[%s0 + $0x778] sm:$0xff]
  %v258 = vld [vmem:[%s0 + $0x780] sm:$0xff]
  %v259 = vld [vmem:[%s0 + $0x788] sm:$0xff]
  %v260 = vld [vmem:[%s0 + $0x790] sm:$0xff]
  %v261 = vld [vmem:[%s0 + $0x798] sm:$0xff]
  %v262 = vld [vmem:[%s0 + $0x7a0] sm:$0xff]
  %v263 = vld [vmem:[%s0 + $0x7a8] sm:$0xff]
  %v264 = vld [vmem:[%s0 + $0x7b0] sm:$0xff]
  %v265 = vld [vmem:[%s0 + $0x7b8] sm:$0xff]
  %v266 = vld [vmem:[%s0 + $0x7c0] sm:$0xff]
  %v267 = vld [vmem:[%s0 + $0x7c8] sm:$0xff]
  %v268 = vld [vmem:[%s0 + $0x7d0] sm:$0xff]
  %v269 = vld [vmem:[%s0 + $0x7d8] sm:$0xff]
  %v270 = vld [vmem:[%s0 + $0x7e0] sm:$0xff]
  %v271 = vld [vmem:[%s0 + $0x7e8] sm:$0xff]
  %v272 = vld [vmem:[%s0 + $0x7f0] sm:$0xff]
  %v273 = vld [vmem:[%s0 + $0x7f8] sm:$0xff]
  %v274 = vld [vmem:[%s0 + $0x800] sm:$0xff]
  %v275 = vld [vmem:[%s0 + $0x808] sm:$0xff]
  %v276 = vld [vmem:[%s0 + $0x810] sm:$0xff]
  %v277 = vld [vmem:[%s0 + $0x818] sm:$0xff]
  %v278 = vld [vmem:[%s0 + $0x820] sm:$0xff]
  %v279 = vld [vmem:[%s0 + $0x828] sm:$0xff]
  %v280 = vld [vmem:[%s0 + $0x830] sm:$0xff]
  %v281 = vld [vmem:[%s0 + $0x838] sm:$0xff]
  %v282 = vld [vmem:[%s0 + $0x840] sm:$0xff]
  %v283 = vld [vmem:[%s0 + $0x848] sm:$0xff]
  %v284 = vld [vmem:[%s0 + $0x850] sm:$0xff]
  %v285 = vld [vmem:[%s0 + $0x858] sm:$0xff]
  %v286 = vld [vmem:[%s0 + $0x860] sm:$0xff]
  %v287 = vld [vmem:[%s0 + $0x868] sm:$0xff]
  %v288 = vld [vmem:[%s0 + $0x870] sm:$0xff]
  %v289 = vld [vmem:[%s0 + $0x878] sm:$0xff]
  %v290 = vld [vmem:[%s0 + $0x880] sm:$0xff]
  %v291 = vld [vmem:[%s0 + $0x888] sm:$0xff]
  %v292 = vld [vmem:[%s0 + $0x890] sm:$0xff]
  %v293 = vld [vmem:[%s0 + $0x898] sm:$0xff]
  %v294 = vld [vmem:[%s0 + $0x8a0] sm:$0xff]
  %v295 = vld [vmem:[%s0 + $0x8a8] sm:$0xff]
  %v296 = vld [vmem:[%s0 + $0x8b0] sm:$0xff]
  %v297 = vld [vmem:[%s0 + $0x8b8] sm:$0xff]
  %v298 = vld [vmem:[%s0 + $0x8c0] sm:$0xff]
  %v299 = vld [vmem:[%s0 + $0x8c8] sm:$0xff]
  %v300 = vld [vmem:[%s0 + $0x8d0] sm:$0xff]
  %v301 = vld [vmem:[%s0 + $0x8d8] sm:$0xff]
  %v302 = vld [vmem:[%s0 + $0x8e0] sm:$0xff]
  %v303 = vld [vmem:[%s0 + $0x8e8] sm:$0xff]
  %v304 = vld [vmem:[%s0 + $0x8f0] sm:$0xff]
  %v305 = vld [vmem:[%s0 + $0x8f8] sm:$0xff]
  %vm306 = vcmask 588800
  %v308 = vsel %vm306, %v17, 0
  %310 = vmatprep.subr.mxu0 %v19
  %311 = vmatpush1.msra.mxu0 %v18
  %312 = vmatprep.subr.mxu0 %v51
  %313 = vmatpush1.msra.mxu0 %v50
  %314 = vmatprep.subr.mxu0 %v83
  %315 = vmatpush1.msra.mxu0 %v82
  %316 = vmatprep.subr.mxu0 %v115
  %317 = vmatpush1.msra.mxu0 %v114
  %318 = vmatprep.subr.mxu0 %v147
  %319 = vmatpush1.msra.mxu0 %v146
  %320 = vmatprep.subr.mxu0 %v179
  %321 = vmatpush1.msra.mxu0 %v178
  %322 = vmatprep.subr.mxu0 %v211
  %323 = vmatpush1.msra.mxu0 %v210
  %324 = vmatprep.subr.mxu0 %v243
  %325 = vmatpush1.msra.mxu0 %v242
  %326 = vmatprep.subr.mxu0 %v275
  %327 = vmatpush1.msra.mxu0 %v274
  %328 = vmatprep.subr.mxu0 0.0
  %329 = vmatpush1.msra.mxu0 0.0
  %330 = vmatprep.subr.mxu0 0.0
  %331 = vmatpush1.msra.mxu0 0.0
  %332 = vmatprep.subr.mxu0 0.0
  %333 = vmatpush1.msra.mxu0 0.0
  %334 = vmatprep.subr.mxu0 0.0
  %335 = vmatpush1.msra.mxu0 0.0
  %336 = vmatprep.subr.mxu0 0.0
  %337 = vmatpush1.msra.mxu0 0.0
  %338 = vmatprep.subr.mxu0 0.0
  %339 = vmatpush1.msra.mxu0 0.0
  %340 = vmatprep.subr.mxu0 0.0
  %341 = vmatpush1.msra.mxu0 0.0
  %342 = vmatprep.subr.mxu0 0.0
  %343 = vmatpush1.msra.mxu0 0.0
  %344 = vmatprep.subr.mxu0 0.0
  %345 = vmatpush1.msra.mxu0 0.0
  %346 = vmatprep.subr.mxu0 0.0
  %347 = vmatpush1.msra.mxu0 0.0
  %348 = vmatprep.subr.mxu0 0.0
  %349 = vmatpush1.msra.mxu0 0.0
  %350 = vmatprep.subr.mxu0 0.0
  %351 = vmatpush1.msra.mxu0 0.0
  %352 = vmatprep.subr.mxu0 0.0
  %353 = vmatpush1.msra.mxu0 0.0
  %354 = vmatprep.subr.mxu0 0.0
  %355 = vmatpush1.msra.mxu0 0.0
  %356 = vmatprep.subr.mxu0 0.0
  %357 = vmatpush1.msra.mxu0 0.0
  %358 = vmatprep.subr.mxu0 0.0
  %359 = vmatpush1.msra.mxu0 0.0
  %360 = vmatprep.subr.mxu0 0.0
  %361 = vmatpush1.msra.mxu0 0.0
  %362 = vmatprep.subr.mxu0 0.0
  %363 = vmatpush1.msra.mxu0 0.0
  %364 = vmatprep.subr.mxu0 0.0
  %365 = vmatpush1.msra.mxu0 0.0
  %366 = vmatprep.subr.mxu0 0.0
  %367 = vmatpush1.msra.mxu0 0.0
  %368 = vmatprep.subr.mxu0 0.0
  %369 = vmatpush1.msra.mxu0 0.0
  %370 = vmatprep.subr.mxu0 0.0
  %371 = vmatpush1.msra.mxu0 0.0
  %372 = vmatprep.subr.mxu0 0.0
  %373 = vmatpush1.msra.mxu0 0.0
  %374 = vmatprep.mubr.f32.mxu0 0.0
  %375 = vmatmul.mubr.f32.gmra.mrb[0].mxu0 %v308
  %v376 = vpop.f32.mrb[0].mxu0
  %v377 = vadd.f32 0.0, %v376
  %v378 = vpop.f32.mrb[0].mxu0
  %v379 = vadd.f32 0.0, %v378
  %380 = vdwg.mxu0
  %381 = vmatprep.subr.mxu0 %v21
  %382 = vmatpush1.msra.mxu0 %v20
  %383 = vmatprep.subr.mxu0 %v53
  %384 = vmatpush1.msra.mxu0 %v52
  %385 = vmatprep.subr.mxu0 %v85
  %386 = vmatpush1.msra.mxu0 %v84
  %387 = vmatprep.subr.mxu0 %v117
  %388 = vmatpush1.msra.mxu0 %v116
  %389 = vmatprep.subr.mxu0 %v149
  %390 = vmatpush1.msra.mxu0 %v148
  %391 = vmatprep.subr.mxu0 %v181
  %392 = vmatpush1.msra.mxu0 %v180
  %393 = vmatprep.subr.mxu0 %v213
  %394 = vmatpush1.msra.mxu0 %v212
  %395 = vmatprep.subr.mxu0 %v245
  %396 = vmatpush1.msra.mxu0 %v244
  %397 = vmatprep.subr.mxu0 %v277
  %398 = vmatpush1.msra.mxu0 %v276
  %399 = vmatprep.subr.mxu0 0.0
  %400 = vmatpush1.msra.mxu0 0.0
  %401 = vmatprep.subr.mxu0 0.0
  %402 = vmatpush1.msra.mxu0 0.0
  %403 = vmatprep.subr.mxu0 0.0
  %404 = vmatpush1.msra.mxu0 0.0
  %405 = vmatprep.subr.mxu0 0.0
  %406 = vmatpush1.msra.mxu0 0.0
  %407 = vmatprep.subr.mxu0 0.0
  %408 = vmatpush1.msra.mxu0 0.0
  %409 = vmatprep.subr.mxu0 0.0
  %410 = vmatpush1.msra.mxu0 0.0
  %411 = vmatprep.subr.mxu0 0.0
  %412 = vmatpush1.msra.mxu0 0.0
  %413 = vmatprep.subr.mxu0 0.0
  %414 = vmatpush1.msra.mxu0 0.0
  %415 = vmatprep.subr.mxu0 0.0
  %416 = vmatpush1.msra.mxu0 0.0
  %417 = vmatprep.subr.mxu0 0.0
  %418 = vmatpush1.msra.mxu0 0.0
  %419 = vmatprep.subr.mxu0 0.0
  %420 = vmatpush1.msra.mxu0 0.0
  %421 = vmatprep.subr.mxu0 0.0
  %422 = vmatpush1.msra.mxu0 0.0
  %423 = vmatprep.subr.mxu0 0.0
  %424 = vmatpush1.msra.mxu0 0.0
  %425 = vmatprep.subr.mxu0 0.0
  %426 = vmatpush1.msra.mxu0 0.0
  %427 = vmatprep.subr.mxu0 0.0
  %428 = vmatpush1.msra.mxu0 0.0
  %429 = vmatprep.subr.mxu0 0.0
  %430 = vmatpush1.msra.mxu0 0.0
  %431 = vmatprep.subr.mxu0 0.0
  %432 = vmatpush1.msra.mxu0 0.0
  %433 = vmatprep.subr.mxu0 0.0
  %434 = vmatpush1.msra.mxu0 0.0
  %435 = vmatprep.subr.mxu0 0.0
  %436 = vmatpush1.msra.mxu0 0.0
  %437 = vmatprep.subr.mxu0 0.0
  %438 = vmatpush1.msra.mxu0 0.0
  %439 = vmatprep.subr.mxu0 0.0
  %440 = vmatpush1.msra.mxu0 0.0
  %441 = vmatprep.subr.mxu0 0.0
  %442 = vmatpush1.msra.mxu0 0.0
  %443 = vmatprep.subr.mxu0 0.0
  %444 = vmatpush1.msra.mxu0 0.0
  %445 = vmatprep.mubr.f32.mxu0 0.0
  %446 = vmatmul.mubr.f32.gmra.mrb[0].mxu0 %v308
  %v447 = vpop.f32.mrb[0].mxu0
  %v448 = vadd.f32 0.0, %v447
  %v449 = vpop.f32.mrb[0].mxu0
  %v450 = vadd.f32 0.0, %v449
  %451 = vdwg.mxu0
  %452 = vmatprep.subr.mxu0 %v23
  %453 = vmatpush1.msra.mxu0 %v22
  %454 = vmatprep.subr.mxu0 %v55
  %455 = vmatpush1.msra.mxu0 %v54
  %456 = vmatprep.subr.mxu0 %v87
  %457 = vmatpush1.msra.mxu0 %v86
  %458 = vmatprep.subr.mxu0 %v119
  %459 = vmatpush1.msra.mxu0 %v118
  %460 = vmatprep.subr.mxu0 %v151
  %461 = vmatpush1.msra.mxu0 %v150
  %462 = vmatprep.subr.mxu0 %v183
  %463 = vmatpush1.msra.mxu0 %v182
  %464 = vmatprep.subr.mxu0 %v215
  %465 = vmatpush1.msra.mxu0 %v214
  %466 = vmatprep.subr.mxu0 %v247
  %467 = vmatpush1.msra.mxu0 %v246
  %468 = vmatprep.subr.mxu0 %v279
  %469 = vmatpush1.msra.mxu0 %v278
  %470 = vmatprep.subr.mxu0 0.0
  %471 = vmatpush1.msra.mxu0 0.0
  %472 = vmatprep.subr.mxu0 0.0
  %473 = vmatpush1.msra.mxu0 0.0
  %474 = vmatprep.subr.mxu0 0.0
  %475 = vmatpush1.msra.mxu0 0.0
  %476 = vmatprep.subr.mxu0 0.0
  %477 = vmatpush1.msra.mxu0 0.0
  %478 = vmatprep.subr.mxu0 0.0
  %479 = vmatpush1.msra.mxu0 0.0
  %480 = vmatprep.subr.mxu0 0.0
  %481 = vmatpush1.msra.mxu0 0.0
  %482 = vmatprep.subr.mxu0 0.0
  %483 = vmatpush1.msra.mxu0 0.0
  %484 = vmatprep.subr.mxu0 0.0
  %485 = vmatpush1.msra.mxu0 0.0
  %486 = vmatprep.subr.mxu0 0.0
  %487 = vmatpush1.msra.mxu0 0.0
  %488 = vmatprep.subr.mxu0 0.0
  %489 = vmatpush1.msra.mxu0 0.0
  %490 = vmatprep.subr.mxu0 0.0
  %491 = vmatpush1.msra.mxu0 0.0
  %492 = vmatprep.subr.mxu0 0.0
  %493 = vmatpush1.msra.mxu0 0.0
  %494 = vmatprep.subr.mxu0 0.0
  %495 = vmatpush1.msra.mxu0 0.0
  %496 = vmatprep.subr.mxu0 0.0
  %497 = vmatpush1.msra.mxu0 0.0
  %498 = vmatprep.subr.mxu0 0.0
  %499 = vmatpush1.msra.mxu0 0.0
  %500 = vmatprep.subr.mxu0 0.0
  %501 = vmatpush1.msra.mxu0 0.0
  %502 = vmatprep.subr.mxu0 0.0
  %503 = vmatpush1.msra.mxu0 0.0
  %504 = vmatprep.subr.mxu0 0.0
  %505 = vmatpush1.msra.mxu0 0.0
  %506 = vmatprep.subr.mxu0 0.0
  %507 = vmatpush1.msra.mxu0 0.0
  %508 = vmatprep.subr.mxu0 0.0
  %509 = vmatpush1.msra.mxu0 0.0
  %510 = vmatprep.subr.mxu0 0.0
  %511 = vmatpush1.msra.mxu0 0.0
  %512 = vmatprep.subr.mxu0 0.0
  %513 = vmatpush1.msra.mxu0 0.0
  %514 = vmatprep.subr.mxu0 0.0
  %515 = vmatpush1.msra.mxu0 0.0
  %516 = vmatprep.mubr.f32.mxu0 0.0
  %517 = vmatmul.mubr.f32.gmra.mrb[0].mxu0 %v308
  %v518 = vpop.f32.mrb[0].mxu0
  %v519 = vadd.f32 0.0, %v518
  %v520 = vpop.f32.mrb[0].mxu0
  %v521 = vadd.f32 0.0, %v520
  %522 = vdwg.mxu0
  %523 = vmatprep.subr.mxu0 %v25
  %524 = vmatpush1.msra.mxu0 %v24
  %525 = vmatprep.subr.mxu0 %v57
  %526 = vmatpush1.msra.mxu0 %v56
  %527 = vmatprep.subr.mxu0 %v89
  %528 = vmatpush1.msra.mxu0 %v88
  %529 = vmatprep.subr.mxu0 %v121
  %530 = vmatpush1.msra.mxu0 %v120
  %531 = vmatprep.subr.mxu0 %v153
  %532 = vmatpush1.msra.mxu0 %v152
  %533 = vmatprep.subr.mxu0 %v185
  %534 = vmatpush1.msra.mxu0 %v184
  %535 = vmatprep.subr.mxu0 %v217
  %536 = vmatpush1.msra.mxu0 %v216
  %537 = vmatprep.subr.mxu0 %v249
  %538 = vmatpush1.msra.mxu0 %v248
  %539 = vmatprep.subr.mxu0 %v281
  %540 = vmatpush1.msra.mxu0 %v280
  %541 = vmatprep.subr.mxu0 0.0
  %542 = vmatpush1.msra.mxu0 0.0
  %543 = vmatprep.subr.mxu0 0.0
  %544 = vmatpush1.msra.mxu0 0.0
  %545 = vmatprep.subr.mxu0 0.0
  %546 = vmatpush1.msra.mxu0 0.0
  %547 = vmatprep.subr.mxu0 0.0
  %548 = vmatpush1.msra.mxu0 0.0
  %549 = vmatprep.subr.mxu0 0.0
  %550 = vmatpush1.msra.mxu0 0.0
  %551 = vmatprep.subr.mxu0 0.0
  %552 = vmatpush1.msra.mxu0 0.0
  %553 = vmatprep.subr.mxu0 0.0
  %554 = vmatpush1.msra.mxu0 0.0
  %555 = vmatprep.subr.mxu0 0.0
  %556 = vmatpush1.msra.mxu0 0.0
  %557 = vmatprep.subr.mxu0 0.0
  %558 = vmatpush1.msra.mxu0 0.0
  %559 = vmatprep.subr.mxu0 0.0
  %560 = vmatpush1.msra.mxu0 0.0
  %561 = vmatprep.subr.mxu0 0.0
  %562 = vmatpush1.msra.mxu0 0.0
  %563 = vmatprep.subr.mxu0 0.0
  %564 = vmatpush1.msra.mxu0 0.0
  %565 = vmatprep.subr.mxu0 0.0
  %566 = vmatpush1.msra.mxu0 0.0
  %567 = vmatprep.subr.mxu0 0.0
  %568 = vmatpush1.msra.mxu0 0.0
  %569 = vmatprep.subr.mxu0 0.0
  %570 = vmatpush1.msra.mxu0 0.0
  %571 = vmatprep.subr.mxu0 0.0
  %572 = vmatpush1.msra.mxu0 0.0
  %573 = vmatprep.subr.mxu0 0.0
  %574 = vmatpush1.msra.mxu0 0.0
  %575 = vmatprep.subr.mxu0 0.0
  %576 = vmatpush1.msra.mxu0 0.0
  %577 = vmatprep.subr.mxu0 0.0
  %578 = vmatpush1.msra.mxu0 0.0
  %579 = vmatprep.subr.mxu0 0.0
  %580 = vmatpush1.msra.mxu0 0.0
  %581 = vmatprep.subr.mxu0 0.0
  %582 = vmatpush1.msra.mxu0 0.0
  %583 = vmatprep.subr.mxu0 0.0
  %584 = vmatpush1.msra.mxu0 0.0
  %585 = vmatprep.subr.mxu0 0.0
  %586 = vmatpush1.msra.mxu0 0.0
  %587 = vmatprep.mubr.f32.mxu0 0.0
  %588 = vmatmul.mubr.f32.gmra.mrb[0].mxu0 %v308
  %v589 = vpop.f32.mrb[0].mxu0
  %v590 = vadd.f32 0.0, %v589
  %v591 = vpop.f32.mrb[0].mxu0
  %v592 = vadd.f32 0.0, %v591
  %593 = vdwg.mxu0
  %594 = vmatprep.subr.mxu0 %v27
  %595 = vmatpush1.msra.mxu0 %v26
  %596 = vmatprep.subr.mxu0 %v59
  %597 = vmatpush1.msra.mxu0 %v58
  %598 = vmatprep.subr.mxu0 %v91
  %599 = vmatpush1.msra.mxu0 %v90
  %600 = vmatprep.subr.mxu0 %v123
  %601 = vmatpush1.msra.mxu0 %v122
  %602 = vmatprep.subr.mxu0 %v155
  %603 = vmatpush1.msra.mxu0 %v154
  %604 = vmatprep.subr.mxu0 %v187
  %605 = vmatpush1.msra.mxu0 %v186
  %606 = vmatprep.subr.mxu0 %v219
  %607 = vmatpush1.msra.mxu0 %v218
  %608 = vmatprep.subr.mxu0 %v251
  %609 = vmatpush1.msra.mxu0 %v250
  %610 = vmatprep.subr.mxu0 %v283
  %611 = vmatpush1.msra.mxu0 %v282
  %612 = vmatprep.subr.mxu0 0.0
  %613 = vmatpush1.msra.mxu0 0.0
  %614 = vmatprep.subr.mxu0 0.0
  %615 = vmatpush1.msra.mxu0 0.0
  %616 = vmatprep.subr.mxu0 0.0
  %617 = vmatpush1.msra.mxu0 0.0
  %618 = vmatprep.subr.mxu0 0.0
  %619 = vmatpush1.msra.mxu0 0.0
  %620 = vmatprep.subr.mxu0 0.0
  %621 = vmatpush1.msra.mxu0 0.0
  %622 = vmatprep.subr.mxu0 0.0
  %623 = vmatpush1.msra.mxu0 0.0
  %624 = vmatprep.subr.mxu0 0.0
  %625 = vmatpush1.msra.mxu0 0.0
  %626 = vmatprep.subr.mxu0 0.0
  %627 = vmatpush1.msra.mxu0 0.0
  %628 = vmatprep.subr.mxu0 0.0
  %629 = vmatpush1.msra.mxu0 0.0
  %630 = vmatprep.subr.mxu0 0.0
  %631 = vmatpush1.msra.mxu0 0.0
  %632 = vmatprep.subr.mxu0 0.0
  %633 = vmatpush1.msra.mxu0 0.0
  %634 = vmatprep.subr.mxu0 0.0
  %635 = vmatpush1.msra.mxu0 0.0
  %636 = vmatprep.subr.mxu0 0.0
  %637 = vmatpush1.msra.mxu0 0.0
  %638 = vmatprep.subr.mxu0 0.0
  %639 = vmatpush1.msra.mxu0 0.0
  %640 = vmatprep.subr.mxu0 0.0
  %641 = vmatpush1.msra.mxu0 0.0
  %642 = vmatprep.subr.mxu0 0.0
  %643 = vmatpush1.msra.mxu0 0.0
  %644 = vmatprep.subr.mxu0 0.0
  %645 = vmatpush1.msra.mxu0 0.0
  %646 = vmatprep.subr.mxu0 0.0
  %647 = vmatpush1.msra.mxu0 0.0
  %648 = vmatprep.subr.mxu0 0.0
  %649 = vmatpush1.msra.mxu0 0.0
  %650 = vmatprep.subr.mxu0 0.0
  %651 = vmatpush1.msra.mxu0 0.0
  %652 = vmatprep.subr.mxu0 0.0
  %653 = vmatpush1.msra.mxu0 0.0
  %654 = vmatprep.subr.mxu0 0.0
  %655 = vmatpush1.msra.mxu0 0.0
  %656 = vmatprep.subr.mxu0 0.0
  %657 = vmatpush1.msra.mxu0 0.0
  %658 = vmatprep.mubr.f32.mxu0 0.0
  %659 = vmatmul.mubr.f32.gmra.mrb[0].mxu0 %v308
  %v660 = vpop.f32.mrb[0].mxu0
  %v661 = vadd.f32 0.0, %v660
  %v662 = vpop.f32.mrb[0].mxu0
  %v663 = vadd.f32 0.0, %v662
  %664 = vdwg.mxu0
  %665 = vmatprep.subr.mxu0 %v29
  %666 = vmatpush1.msra.mxu0 %v28
  %667 = vmatprep.subr.mxu0 %v61
  %668 = vmatpush1.msra.mxu0 %v60
  %669 = vmatprep.subr.mxu0 %v93
  %670 = vmatpush1.msra.mxu0 %v92
  %671 = vmatprep.subr.mxu0 %v125
  %672 = vmatpush1.msra.mxu0 %v124
  %673 = vmatprep.subr.mxu0 %v157
  %674 = vmatpush1.msra.mxu0 %v156
  %675 = vmatprep.subr.mxu0 %v189
  %676 = vmatpush1.msra.mxu0 %v188
  %677 = vmatprep.subr.mxu0 %v221
  %678 = vmatpush1.msra.mxu0 %v220
  %679 = vmatprep.subr.mxu0 %v253
  %680 = vmatpush1.msra.mxu0 %v252
  %681 = vmatprep.subr.mxu0 %v285
  %682 = vmatpush1.msra.mxu0 %v284
  %683 = vmatprep.subr.mxu0 0.0
  %684 = vmatpush1.msra.mxu0 0.0
  %685 = vmatprep.subr.mxu0 0.0
  %686 = vmatpush1.msra.mxu0 0.0
  %687 = vmatprep.subr.mxu0 0.0
  %688 = vmatpush1.msra.mxu0 0.0
  %689 = vmatprep.subr.mxu0 0.0
  %690 = vmatpush1.msra.mxu0 0.0
  %691 = vmatprep.subr.mxu0 0.0
  %692 = vmatpush1.msra.mxu0 0.0
  %693 = vmatprep.subr.mxu0 0.0
  %694 = vmatpush1.msra.mxu0 0.0
  %695 = vmatprep.subr.mxu0 0.0
  %696 = vmatpush1.msra.mxu0 0.0
  %697 = vmatprep.subr.mxu0 0.0
  %698 = vmatpush1.msra.mxu0 0.0
  %699 = vmatprep.subr.mxu0 0.0
  %700 = vmatpush1.msra.mxu0 0.0
  %701 = vmatprep.subr.mxu0 0.0
  %702 = vmatpush1.msra.mxu0 0.0
  %703 = vmatprep.subr.mxu0 0.0
  %704 = vmatpush1.msra.mxu0 0.0
  %705 = vmatprep.subr.mxu0 0.0
  %706 = vmatpush1.msra.mxu0 0.0
  %707 = vmatprep.subr.mxu0 0.0
  %708 = vmatpush1.msra.mxu0 0.0
  %709 = vmatprep.subr.mxu0 0.0
  %710 = vmatpush1.msra.mxu0 0.0
  %711 = vmatprep.subr.mxu0 0.0
  %712 = vmatpush1.msra.mxu0 0.0
  %713 = vmatprep.subr.mxu0 0.0
  %714 = vmatpush1.msra.mxu0 0.0
  %715 = vmatprep.subr.mxu0 0.0
  %716 = vmatpush1.msra.mxu0 0.0
  %717 = vmatprep.subr.mxu0 0.0
  %718 = vmatpush1.msra.mxu0 0.0
  %719 = vmatprep.subr.mxu0 0.0
  %720 = vmatpush1.msra.mxu0 0.0
  %721 = vmatprep.subr.mxu0 0.0
  %722 = vmatpush1.msra.mxu0 0.0
  %723 = vmatprep.subr.mxu0 0.0
  %724 = vmatpush1.msra.mxu0 0.0
  %725 = vmatprep.subr.mxu0 0.0
  %726 = vmatpush1.msra.mxu0 0.0
  %727 = vmatprep.subr.mxu0 0.0
  %728 = vmatpush1.msra.mxu0 0.0
  %729 = vmatprep.mubr.f32.mxu0 0.0
  %730 = vmatmul.mubr.f32.gmra.mrb[0].mxu0 %v308
  %v731 = vpop.f32.mrb[0].mxu0
  %v732 = vadd.f32 0.0, %v731
  %v733 = vpop.f32.mrb[0].mxu0
  %v734 = vadd.f32 0.0, %v733
  %735 = vdwg.mxu0
  %736 = vmatprep.subr.mxu0 %v31
  %737 = vmatpush1.msra.mxu0 %v30
  %738 = vmatprep.subr.mxu0 %v63
  %739 = vmatpush1.msra.mxu0 %v62
  %740 = vmatprep.subr.mxu0 %v95
  %741 = vmatpush1.msra.mxu0 %v94
  %742 = vmatprep.subr.mxu0 %v127
  %743 = vmatpush1.msra.mxu0 %v126
  %744 = vmatprep.subr.mxu0 %v159
  %745 = vmatpush1.msra.mxu0 %v158
  %746 = vmatprep.subr.mxu0 %v191
  %747 = vmatpush1.msra.mxu0 %v190
  %748 = vmatprep.subr.mxu0 %v223
  %749 = vmatpush1.msra.mxu0 %v222
  %750 = vmatprep.subr.mxu0 %v255
  %751 = vmatpush1.msra.mxu0 %v254
  %752 = vmatprep.subr.mxu0 %v287
  %753 = vmatpush1.msra.mxu0 %v286
  %754 = vmatprep.subr.mxu0 0.0
  %755 = vmatpush1.msra.mxu0 0.0
  %756 = vmatprep.subr.mxu0 0.0
  %757 = vmatpush1.msra.mxu0 0.0
  %758 = vmatprep.subr.mxu0 0.0
  %759 = vmatpush1.msra.mxu0 0.0
  %760 = vmatprep.subr.mxu0 0.0
  %761 = vmatpush1.msra.mxu0 0.0
  %762 = vmatprep.subr.mxu0 0.0
  %763 = vmatpush1.msra.mxu0 0.0
  %764 = vmatprep.subr.mxu0 0.0
  %765 = vmatpush1.msra.mxu0 0.0
  %766 = vmatprep.subr.mxu0 0.0
  %767 = vmatpush1.msra.mxu0 0.0
  %768 = vmatprep.subr.mxu0 0.0
  %769 = vmatpush1.msra.mxu0 0.0
  %770 = vmatprep.subr.mxu0 0.0
  %771 = vmatpush1.msra.mxu0 0.0
  %772 = vmatprep.subr.mxu0 0.0
  %773 = vmatpush1.msra.mxu0 0.0
  %774 = vmatprep.subr.mxu0 0.0
  %775 = vmatpush1.msra.mxu0 0.0
  %776 = vmatprep.subr.mxu0 0.0
  %777 = vmatpush1.msra.mxu0 0.0
  %778 = vmatprep.subr.mxu0 0.0
  %779 = vmatpush1.msra.mxu0 0.0
  %780 = vmatprep.subr.mxu0 0.0
  %781 = vmatpush1.msra.mxu0 0.0
  %782 = vmatprep.subr.mxu0 0.0
  %783 = vmatpush1.msra.mxu0 0.0
  %784 = vmatprep.subr.mxu0 0.0
  %785 = vmatpush1.msra.mxu0 0.0
  %786 = vmatprep.subr.mxu0 0.0
  %787 = vmatpush1.msra.mxu0 0.0
  %788 = vmatprep.subr.mxu0 0.0
  %789 = vmatpush1.msra.mxu0 0.0
  %790 = vmatprep.subr.mxu0 0.0
  %791 = vmatpush1.msra.mxu0 0.0
  %792 = vmatprep.subr.mxu0 0.0
  %793 = vmatpush1.msra.mxu0 0.0
  %794 = vmatprep.subr.mxu0 0.0
  %795 = vmatpush1.msra.mxu0 0.0
  %796 = vmatprep.subr.mxu0 0.0
  %797 = vmatpush1.msra.mxu0 0.0
  %798 = vmatprep.subr.mxu0 0.0
  %799 = vmatpush1.msra.mxu0 0.0
  %800 = vmatprep.mubr.f32.mxu0 0.0
  %801 = vmatmul.mubr.f32.gmra.mrb[0].mxu0 %v308
  %v802 = vpop.f32.mrb[0].mxu0
  %v803 = vadd.f32 0.0, %v802
  %v804 = vpop.f32.mrb[0].mxu0
  %v805 = vadd.f32 0.0, %v804
  %806 = vdwg.mxu0
  %807 = vmatprep.subr.mxu0 %v33
  %808 = vmatpush1.msra.mxu0 %v32
  %809 = vmatprep.subr.mxu0 %v65
  %810 = vmatpush1.msra.mxu0 %v64
  %811 = vmatprep.subr.mxu0 %v97
  %812 = vmatpush1.msra.mxu0 %v96
  %813 = vmatprep.subr.mxu0 %v129
  %814 = vmatpush1.msra.mxu0 %v128
  %815 = vmatprep.subr.mxu0 %v161
  %816 = vmatpush1.msra.mxu0 %v160
  %817 = vmatprep.subr.mxu0 %v193
  %818 = vmatpush1.msra.mxu0 %v192
  %819 = vmatprep.subr.mxu0 %v225
  %820 = vmatpush1.msra.mxu0 %v224
  %821 = vmatprep.subr.mxu0 %v257
  %822 = vmatpush1.msra.mxu0 %v256
  %823 = vmatprep.subr.mxu0 %v289
  %824 = vmatpush1.msra.mxu0 %v288
  %825 = vmatprep.subr.mxu0 0.0
  %826 = vmatpush1.msra.mxu0 0.0
  %827 = vmatprep.subr.mxu0 0.0
  %828 = vmatpush1.msra.mxu0 0.0
  %829 = vmatprep.subr.mxu0 0.0
  %830 = vmatpush1.msra.mxu0 0.0
  %831 = vmatprep.subr.mxu0 0.0
  %832 = vmatpush1.msra.mxu0 0.0
  %833 = vmatprep.subr.mxu0 0.0
  %834 = vmatpush1.msra.mxu0 0.0
  %835 = vmatprep.subr.mxu0 0.0
  %836 = vmatpush1.msra.mxu0 0.0
  %837 = vmatprep.subr.mxu0 0.0
  %838 = vmatpush1.msra.mxu0 0.0
  %839 = vmatprep.subr.mxu0 0.0
  %840 = vmatpush1.msra.mxu0 0.0
  %841 = vmatprep.subr.mxu0 0.0
  %842 = vmatpush1.msra.mxu0 0.0
  %843 = vmatprep.subr.mxu0 0.0
  %844 = vmatpush1.msra.mxu0 0.0
  %845 = vmatprep.subr.mxu0 0.0
  %846 = vmatpush1.msra.mxu0 0.0
  %847 = vmatprep.subr.mxu0 0.0
  %848 = vmatpush1.msra.mxu0 0.0
  %849 = vmatprep.subr.mxu0 0.0
  %850 = vmatpush1.msra.mxu0 0.0
  %851 = vmatprep.subr.mxu0 0.0
  %852 = vmatpush1.msra.mxu0 0.0
  %853 = vmatprep.subr.mxu0 0.0
  %854 = vmatpush1.msra.mxu0 0.0
  %855 = vmatprep.subr.mxu0 0.0
  %856 = vmatpush1.msra.mxu0 0.0
  %857 = vmatprep.subr.mxu0 0.0
  %858 = vmatpush1.msra.mxu0 0.0
  %859 = vmatprep.subr.mxu0 0.0
  %860 = vmatpush1.msra.mxu0 0.0
  %861 = vmatprep.subr.mxu0 0.0
  %862 = vmatpush1.msra.mxu0 0.0
  %863 = vmatprep.subr.mxu0 0.0
  %864 = vmatpush1.msra.mxu0 0.0
  %865 = vmatprep.subr.mxu0 0.0
  %866 = vmatpush1.msra.mxu0 0.0
  %867 = vmatprep.subr.mxu0 0.0
  %868 = vmatpush1.msra.mxu0 0.0
  %869 = vmatprep.subr.mxu0 0.0
  %870 = vmatpush1.msra.mxu0 0.0
  %871 = vmatprep.mubr.f32.mxu0 0.0
  %872 = vmatmul.mubr.f32.gmra.mrb[0].mxu0 %v308
  %v873 = vpop.f32.mrb[0].mxu0
  %v874 = vadd.f32 0.0, %v873
  %v875 = vpop.f32.mrb[0].mxu0
  %v876 = vadd.f32 0.0, %v875
  %877 = vdwg.mxu0
  %878 = vmatprep.subr.mxu0 %v35
  %879 = vmatpush1.msra.mxu0 %v34
  %880 = vmatprep.subr.mxu0 %v67
  %881 = vmatpush1.msra.mxu0 %v66
  %882 = vmatprep.subr.mxu0 %v99
  %883 = vmatpush1.msra.mxu0 %v98
  %884 = vmatprep.subr.mxu0 %v131
  %885 = vmatpush1.msra.mxu0 %v130
  %886 = vmatprep.subr.mxu0 %v163
  %887 = vmatpush1.msra.mxu0 %v162
  %888 = vmatprep.subr.mxu0 %v195
  %889 = vmatpush1.msra.mxu0 %v194
  %890 = vmatprep.subr.mxu0 %v227
  %891 = vmatpush1.msra.mxu0 %v226
  %892 = vmatprep.subr.mxu0 %v259
  %893 = vmatpush1.msra.mxu0 %v258
  %894 = vmatprep.subr.mxu0 %v291
  %895 = vmatpush1.msra.mxu0 %v290
  %896 = vmatprep.subr.mxu0 0.0
  %897 = vmatpush1.msra.mxu0 0.0
  %898 = vmatprep.subr.mxu0 0.0
  %899 = vmatpush1.msra.mxu0 0.0
  %900 = vmatprep.subr.mxu0 0.0
  %901 = vmatpush1.msra.mxu0 0.0
  %902 = vmatprep.subr.mxu0 0.0
  %903 = vmatpush1.msra.mxu0 0.0
  %904 = vmatprep.subr.mxu0 0.0
  %905 = vmatpush1.msra.mxu0 0.0
  %906 = vmatprep.subr.mxu0 0.0
  %907 = vmatpush1.msra.mxu0 0.0
  %908 = vmatprep.subr.mxu0 0.0
  %909 = vmatpush1.msra.mxu0 0.0
  %910 = vmatprep.subr.mxu0 0.0
  %911 = vmatpush1.msra.mxu0 0.0
  %912 = vmatprep.subr.mxu0 0.0
  %913 = vmatpush1.msra.mxu0 0.0
  %914 = vmatprep.subr.mxu0 0.0
  %915 = vmatpush1.msra.mxu0 0.0
  %916 = vmatprep.subr.mxu0 0.0
  %917 = vmatpush1.msra.mxu0 0.0
  %918 = vmatprep.subr.mxu0 0.0
  %919 = vmatpush1.msra.mxu0 0.0
  %920 = vmatprep.subr.mxu0 0.0
  %921 = vmatpush1.msra.mxu0 0.0
  %922 = vmatprep.subr.mxu0 0.0
  %923 = vmatpush1.msra.mxu0 0.0
  %924 = vmatprep.subr.mxu0 0.0
  %925 = vmatpush1.msra.mxu0 0.0
  %926 = vmatprep.subr.mxu0 0.0
  %927 = vmatpush1.msra.mxu0 0.0
  %928 = vmatprep.subr.mxu0 0.0
  %929 = vmatpush1.msra.mxu0 0.0
  %930 = vmatprep.subr.mxu0 0.0
  %931 = vmatpush1.msra.mxu0 0.0
  %932 = vmatprep.subr.mxu0 0.0
  %933 = vmatpush1.msra.mxu0 0.0
  %934 = vmatprep.subr.mxu0 0.0
  %935 = vmatpush1.msra.mxu0 0.0
  %936 = vmatprep.subr.mxu0 0.0
  %937 = vmatpush1.msra.mxu0 0.0
  %938 = vmatprep.subr.mxu0 0.0
  %939 = vmatpush1.msra.mxu0 0.0
  %940 = vmatprep.subr.mxu0 0.0
  %941 = vmatpush1.msra.mxu0 0.0
  %942 = vmatprep.mubr.f32.mxu0 0.0
  %943 = vmatmul.mubr.f32.gmra.mrb[0].mxu0 %v308
  %v944 = vpop.f32.mrb[0].mxu0
  %v945 = vadd.f32 0.0, %v944
  %v946 = vpop.f32.mrb[0].mxu0
  %v947 = vadd.f32 0.0, %v946
  %948 = vdwg.mxu0
  %949 = vmatprep.subr.mxu0 %v37
  %950 = vmatpush1.msra.mxu0 %v36
  %951 = vmatprep.subr.mxu0 %v69
  %952 = vmatpush1.msra.mxu0 %v68
  %953 = vmatprep.subr.mxu0 %v101
  %954 = vmatpush1.msra.mxu0 %v100
  %955 = vmatprep.subr.mxu0 %v133
  %956 = vmatpush1.msra.mxu0 %v132
  %957 = vmatprep.subr.mxu0 %v165
  %958 = vmatpush1.msra.mxu0 %v164
  %959 = vmatprep.subr.mxu0 %v197
  %960 = vmatpush1.msra.mxu0 %v196
  %961 = vmatprep.subr.mxu0 %v229
  %962 = vmatpush1.msra.mxu0 %v228
  %963 = vmatprep.subr.mxu0 %v261
  %964 = vmatpush1.msra.mxu0 %v260
  %965 = vmatprep.subr.mxu0 %v293
  %966 = vmatpush1.msra.mxu0 %v292
  %967 = vmatprep.subr.mxu0 0.0
  %968 = vmatpush1.msra.mxu0 0.0
  %969 = vmatprep.subr.mxu0 0.0
  %970 = vmatpush1.msra.mxu0 0.0
  %971 = vmatprep.subr.mxu0 0.0
  %972 = vmatpush1.msra.mxu0 0.0
  %973 = vmatprep.subr.mxu0 0.0
  %974 = vmatpush1.msra.mxu0 0.0
  %975 = vmatprep.subr.mxu0 0.0
  %976 = vmatpush1.msra.mxu0 0.0
  %977 = vmatprep.subr.mxu0 0.0
  %978 = vmatpush1.msra.mxu0 0.0
  %979 = vmatprep.subr.mxu0 0.0
  %980 = vmatpush1.msra.mxu0 0.0
  %981 = vmatprep.subr.mxu0 0.0
  %982 = vmatpush1.msra.mxu0 0.0
  %983 = vmatprep.subr.mxu0 0.0
  %984 = vmatpush1.msra.mxu0 0.0
  %985 = vmatprep.subr.mxu0 0.0
  %986 = vmatpush1.msra.mxu0 0.0
  %987 = vmatprep.subr.mxu0 0.0
  %988 = vmatpush1.msra.mxu0 0.0
  %989 = vmatprep.subr.mxu0 0.0
  %990 = vmatpush1.msra.mxu0 0.0
  %991 = vmatprep.subr.mxu0 0.0
  %992 = vmatpush1.msra.mxu0 0.0
  %993 = vmatprep.subr.mxu0 0.0
  %994 = vmatpush1.msra.mxu0 0.0
  %995 = vmatprep.subr.mxu0 0.0
  %996 = vmatpush1.msra.mxu0 0.0
  %997 = vmatprep.subr.mxu0 0.0
  %998 = vmatpush1.msra.mxu0 0.0
  %999 = vmatprep.subr.mxu0 0.0
  %1000 = vmatpush1.msra.mxu0 0.0
  %1001 = vmatprep.subr.mxu0 0.0
  %1002 = vmatpush1.msra.mxu0 0.0
  %1003 = vmatprep.subr.mxu0 0.0
  %1004 = vmatpush1.msra.mxu0 0.0
  %1005 = vmatprep.subr.mxu0 0.0
  %1006 = vmatpush1.msra.mxu0 0.0
  %1007 = vmatprep.subr.mxu0 0.0
  %1008 = vmatpush1.msra.mxu0 0.0
  %1009 = vmatprep.subr.mxu0 0.0
  %1010 = vmatpush1.msra.mxu0 0.0
  %1011 = vmatprep.subr.mxu0 0.0
  %1012 = vmatpush1.msra.mxu0 0.0
  %1013 = vmatprep.mubr.f32.mxu0 0.0
  %1014 = vmatmul.mubr.f32.gmra.mrb[0].mxu0 %v308
  %v1015 = vpop.f32.mrb[0].mxu0
  %v1016 = vadd.f32 0.0, %v1015
  %v1017 = vpop.f32.mrb[0].mxu0
  %v1018 = vadd.f32 0.0, %v1017
  %1019 = vdwg.mxu0
  %1020 = vmatprep.subr.mxu0 %v39
  %1021 = vmatpush1.msra.mxu0 %v38
  %1022 = vmatprep.subr.mxu0 %v71
  %1023 = vmatpush1.msra.mxu0 %v70
  %1024 = vmatprep.subr.mxu0 %v103
  %1025 = vmatpush1.msra.mxu0 %v102
  %1026 = vmatprep.subr.mxu0 %v135
  %1027 = vmatpush1.msra.mxu0 %v134
  %1028 = vmatprep.subr.mxu0 %v167
  %1029 = vmatpush1.msra.mxu0 %v166
  %1030 = vmatprep.subr.mxu0 %v199
  %1031 = vmatpush1.msra.mxu0 %v198
  %1032 = vmatprep.subr.mxu0 %v231
  %1033 = vmatpush1.msra.mxu0 %v230
  %1034 = vmatprep.subr.mxu0 %v263
  %1035 = vmatpush1.msra.mxu0 %v262
  %1036 = vmatprep.subr.mxu0 %v295
  %1037 = vmatpush1.msra.mxu0 %v294
  %1038 = vmatprep.subr.mxu0 0.0
  %1039 = vmatpush1.msra.mxu0 0.0
  %1040 = vmatprep.subr.mxu0 0.0
  %1041 = vmatpush1.msra.mxu0 0.0
  %1042 = vmatprep.subr.mxu0 0.0
  %1043 = vmatpush1.msra.mxu0 0.0
  %1044 = vmatprep.subr.mxu0 0.0
  %1045 = vmatpush1.msra.mxu0 0.0
  %1046 = vmatprep.subr.mxu0 0.0
  %1047 = vmatpush1.msra.mxu0 0.0
  %1048 = vmatprep.subr.mxu0 0.0
  %1049 = vmatpush1.msra.mxu0 0.0
  %1050 = vmatprep.subr.mxu0 0.0
  %1051 = vmatpush1.msra.mxu0 0.0
  %1052 = vmatprep.subr.mxu0 0.0
  %1053 = vmatpush1.msra.mxu0 0.0
  %1054 = vmatprep.subr.mxu0 0.0
  %1055 = vmatpush1.msra.mxu0 0.0
  %1056 = vmatprep.subr.mxu0 0.0
  %1057 = vmatpush1.msra.mxu0 0.0
  %1058 = vmatprep.subr.mxu0 0.0
  %1059 = vmatpush1.msra.mxu0 0.0
  %1060 = vmatprep.subr.mxu0 0.0
  %1061 = vmatpush1.msra.mxu0 0.0
  %1062 = vmatprep.subr.mxu0 0.0
  %1063 = vmatpush1.msra.mxu0 0.0
  %1064 = vmatprep.subr.mxu0 0.0
  %1065 = vmatpush1.msra.mxu0 0.0
  %1066 = vmatprep.subr.mxu0 0.0
  %1067 = vmatpush1.msra.mxu0 0.0
  %1068 = vmatprep.subr.mxu0 0.0
  %1069 = vmatpush1.msra.mxu0 0.0
  %1070 = vmatprep.subr.mxu0 0.0
  %1071 = vmatpush1.msra.mxu0 0.0
  %1072 = vmatprep.subr.mxu0 0.0
  %1073 = vmatpush1.msra.mxu0 0.0
  %1074 = vmatprep.subr.mxu0 0.0
  %1075 = vmatpush1.msra.mxu0 0.0
  %1076 = vmatprep.subr.mxu0 0.0
  %1077 = vmatpush1.msra.mxu0 0.0
  %1078 = vmatprep.subr.mxu0 0.0
  %1079 = vmatpush1.msra.mxu0 0.0
  %1080 = vmatprep.subr.mxu0 0.0
  %1081 = vmatpush1.msra.mxu0 0.0
  %1082 = vmatprep.subr.mxu0 0.0
  %1083 = vmatpush1.msra.mxu0 0.0
  %1084 = vmatprep.mubr.f32.mxu0 0.0
  %1085 = vmatmul.mubr.f32.gmra.mrb[0].mxu0 %v308
  %v1086 = vpop.f32.mrb[0].mxu0
  %v1087 = vadd.f32 0.0, %v1086
  %v1088 = vpop.f32.mrb[0].mxu0
  %v1089 = vadd.f32 0.0, %v1088
  %1090 = vdwg.mxu0
  %1091 = vmatprep.subr.mxu0 %v41
  %1092 = vmatpush1.msra.mxu0 %v40
  %1093 = vmatprep.subr.mxu0 %v73
  %1094 = vmatpush1.msra.mxu0 %v72
  %1095 = vmatprep.subr.mxu0 %v105
  %1096 = vmatpush1.msra.mxu0 %v104
  %1097 = vmatprep.subr.mxu0 %v137
  %1098 = vmatpush1.msra.mxu0 %v136
  %1099 = vmatprep.subr.mxu0 %v169
  %1100 = vmatpush1.msra.mxu0 %v168
  %1101 = vmatprep.subr.mxu0 %v201
  %1102 = vmatpush1.msra.mxu0 %v200
  %1103 = vmatprep.subr.mxu0 %v233
  %1104 = vmatpush1.msra.mxu0 %v232
  %1105 = vmatprep.subr.mxu0 %v265
  %1106 = vmatpush1.msra.mxu0 %v264
  %1107 = vmatprep.subr.mxu0 %v297
  %1108 = vmatpush1.msra.mxu0 %v296
  %1109 = vmatprep.subr.mxu0 0.0
  %1110 = vmatpush1.msra.mxu0 0.0
  %1111 = vmatprep.subr.mxu0 0.0
  %1112 = vmatpush1.msra.mxu0 0.0
  %1113 = vmatprep.subr.mxu0 0.0
  %1114 = vmatpush1.msra.mxu0 0.0
  %1115 = vmatprep.subr.mxu0 0.0
  %1116 = vmatpush1.msra.mxu0 0.0
  %1117 = vmatprep.subr.mxu0 0.0
  %1118 = vmatpush1.msra.mxu0 0.0
  %1119 = vmatprep.subr.mxu0 0.0
  %1120 = vmatpush1.msra.mxu0 0.0
  %1121 = vmatprep.subr.mxu0 0.0
  %1122 = vmatpush1.msra.mxu0 0.0
  %1123 = vmatprep.subr.mxu0 0.0
  %1124 = vmatpush1.msra.mxu0 0.0
  %1125 = vmatprep.subr.mxu0 0.0
  %1126 = vmatpush1.msra.mxu0 0.0
  %1127 = vmatprep.subr.mxu0 0.0
  %1128 = vmatpush1.msra.mxu0 0.0
  %1129 = vmatprep.subr.mxu0 0.0
  %1130 = vmatpush1.msra.mxu0 0.0
  %1131 = vmatprep.subr.mxu0 0.0
  %1132 = vmatpush1.msra.mxu0 0.0
  %1133 = vmatprep.subr.mxu0 0.0
  %1134 = vmatpush1.msra.mxu0 0.0
  %1135 = vmatprep.subr.mxu0 0.0
  %1136 = vmatpush1.msra.mxu0 0.0
  %1137 = vmatprep.subr.mxu0 0.0
  %1138 = vmatpush1.msra.mxu0 0.0
  %1139 = vmatprep.subr.mxu0 0.0
  %1140 = vmatpush1.msra.mxu0 0.0
  %1141 = vmatprep.subr.mxu0 0.0
  %1142 = vmatpush1.msra.mxu0 0.0
  %1143 = vmatprep.subr.mxu0 0.0
  %1144 = vmatpush1.msra.mxu0 0.0
  %1145 = vmatprep.subr.mxu0 0.0
  %1146 = vmatpush1.msra.mxu0 0.0
  %1147 = vmatprep.subr.mxu0 0.0
  %1148 = vmatpush1.msra.mxu0 0.0
  %1149 = vmatprep.subr.mxu0 0.0
  %1150 = vmatpush1.msra.mxu0 0.0
  %1151 = vmatprep.subr.mxu0 0.0
  %1152 = vmatpush1.msra.mxu0 0.0
  %1153 = vmatprep.subr.mxu0 0.0
  %1154 = vmatpush1.msra.mxu0 0.0
  %1155 = vmatprep.mubr.f32.mxu0 0.0
  %1156 = vmatmul.mubr.f32.gmra.mrb[0].mxu0 %v308
  %v1157 = vpop.f32.mrb[0].mxu0
  %v1158 = vadd.f32 0.0, %v1157
  %v1159 = vpop.f32.mrb[0].mxu0
  %v1160 = vadd.f32 0.0, %v1159
  %1161 = vdwg.mxu0
  %1162 = vmatprep.subr.mxu0 %v43
  %1163 = vmatpush1.msra.mxu0 %v42
  %1164 = vmatprep.subr.mxu0 %v75
  %1165 = vmatpush1.msra.mxu0 %v74
  %1166 = vmatprep.subr.mxu0 %v107
  %1167 = vmatpush1.msra.mxu0 %v106
  %1168 = vmatprep.subr.mxu0 %v139
  %1169 = vmatpush1.msra.mxu0 %v138
  %1170 = vmatprep.subr.mxu0 %v171
  %1171 = vmatpush1.msra.mxu0 %v170
  %1172 = vmatprep.subr.mxu0 %v203
  %1173 = vmatpush1.msra.mxu0 %v202
  %1174 = vmatprep.subr.mxu0 %v235
  %1175 = vmatpush1.msra.mxu0 %v234
  %1176 = vmatprep.subr.mxu0 %v267
  %1177 = vmatpush1.msra.mxu0 %v266
  %1178 = vmatprep.subr.mxu0 %v299
  %1179 = vmatpush1.msra.mxu0 %v298
  %1180 = vmatprep.subr.mxu0 0.0
  %1181 = vmatpush1.msra.mxu0 0.0
  %1182 = vmatprep.subr.mxu0 0.0
  %1183 = vmatpush1.msra.mxu0 0.0
  %1184 = vmatprep.subr.mxu0 0.0
  %1185 = vmatpush1.msra.mxu0 0.0
  %1186 = vmatprep.subr.mxu0 0.0
  %1187 = vmatpush1.msra.mxu0 0.0
  %1188 = vmatprep.subr.mxu0 0.0
  %1189 = vmatpush1.msra.mxu0 0.0
  %1190 = vmatprep.subr.mxu0 0.0
  %1191 = vmatpush1.msra.mxu0 0.0
  %1192 = vmatprep.subr.mxu0 0.0
  %1193 = vmatpush1.msra.mxu0 0.0
  %1194 = vmatprep.subr.mxu0 0.0
  %1195 = vmatpush1.msra.mxu0 0.0
  %1196 = vmatprep.subr.mxu0 0.0
  %1197 = vmatpush1.msra.mxu0 0.0
  %1198 = vmatprep.subr.mxu0 0.0
  %1199 = vmatpush1.msra.mxu0 0.0
  %1200 = vmatprep.subr.mxu0 0.0
  %1201 = vmatpush1.msra.mxu0 0.0
  %1202 = vmatprep.subr.mxu0 0.0
  %1203 = vmatpush1.msra.mxu0 0.0
  %1204 = vmatprep.subr.mxu0 0.0
  %1205 = vmatpush1.msra.mxu0 0.0
  %1206 = vmatprep.subr.mxu0 0.0
  %1207 = vmatpush1.msra.mxu0 0.0
  %1208 = vmatprep.subr.mxu0 0.0
  %1209 = vmatpush1.msra.mxu0 0.0
  %1210 = vmatprep.subr.mxu0 0.0
  %1211 = vmatpush1.msra.mxu0 0.0
  %1212 = vmatprep.subr.mxu0 0.0
  %1213 = vmatpush1.msra.mxu0 0.0
  %1214 = vmatprep.subr.mxu0 0.0
  %1215 = vmatpush1.msra.mxu0 0.0
  %1216 = vmatprep.subr.mxu0 0.0
  %1217 = vmatpush1.msra.mxu0 0.0
  %1218 = vmatprep.subr.mxu0 0.0
  %1219 = vmatpush1.msra.mxu0 0.0
  %1220 = vmatprep.subr.mxu0 0.0
  %1221 = vmatpush1.msra.mxu0 0.0
  %1222 = vmatprep.subr.mxu0 0.0
  %1223 = vmatpush1.msra.mxu0 0.0
  %1224 = vmatprep.subr.mxu0 0.0
  %1225 = vmatpush1.msra.mxu0 0.0
  %1226 = vmatprep.mubr.f32.mxu0 0.0
  %1227 = vmatmul.mubr.f32.gmra.mrb[0].mxu0 %v308
  %v1228 = vpop.f32.mrb[0].mxu0
  %v1229 = vadd.f32 0.0, %v1228
  %v1230 = vpop.f32.mrb[0].mxu0
  %v1231 = vadd.f32 0.0, %v1230
  %1232 = vdwg.mxu0
  %1233 = vmatprep.subr.mxu0 %v45
  %1234 = vmatpush1.msra.mxu0 %v44
  %1235 = vmatprep.subr.mxu0 %v77
  %1236 = vmatpush1.msra.mxu0 %v76
  %1237 = vmatprep.subr.mxu0 %v109
  %1238 = vmatpush1.msra.mxu0 %v108
  %1239 = vmatprep.subr.mxu0 %v141
  %1240 = vmatpush1.msra.mxu0 %v140
  %1241 = vmatprep.subr.mxu0 %v173
  %1242 = vmatpush1.msra.mxu0 %v172
  %1243 = vmatprep.subr.mxu0 %v205
  %1244 = vmatpush1.msra.mxu0 %v204
  %1245 = vmatprep.subr.mxu0 %v237
  %1246 = vmatpush1.msra.mxu0 %v236
  %1247 = vmatprep.subr.mxu0 %v269
  %1248 = vmatpush1.msra.mxu0 %v268
  %1249 = vmatprep.subr.mxu0 %v301
  %1250 = vmatpush1.msra.mxu0 %v300
  %1251 = vmatprep.subr.mxu0 0.0
  %1252 = vmatpush1.msra.mxu0 0.0
  %1253 = vmatprep.subr.mxu0 0.0
  %1254 = vmatpush1.msra.mxu0 0.0
  %1255 = vmatprep.subr.mxu0 0.0
  %1256 = vmatpush1.msra.mxu0 0.0
  %1257 = vmatprep.subr.mxu0 0.0
  %1258 = vmatpush1.msra.mxu0 0.0
  %1259 = vmatprep.subr.mxu0 0.0
  %1260 = vmatpush1.msra.mxu0 0.0
  %1261 = vmatprep.subr.mxu0 0.0
  %1262 = vmatpush1.msra.mxu0 0.0
  %1263 = vmatprep.subr.mxu0 0.0
  %1264 = vmatpush1.msra.mxu0 0.0
  %1265 = vmatprep.subr.mxu0 0.0
  %1266 = vmatpush1.msra.mxu0 0.0
  %1267 = vmatprep.subr.mxu0 0.0
  %1268 = vmatpush1.msra.mxu0 0.0
  %1269 = vmatprep.subr.mxu0 0.0
  %1270 = vmatpush1.msra.mxu0 0.0
  %1271 = vmatprep.subr.mxu0 0.0
  %1272 = vmatpush1.msra.mxu0 0.0
  %1273 = vmatprep.subr.mxu0 0.0
  %1274 = vmatpush1.msra.mxu0 0.0
  %1275 = vmatprep.subr.mxu0 0.0
  %1276 = vmatpush1.msra.mxu0 0.0
  %1277 = vmatprep.subr.mxu0 0.0
  %1278 = vmatpush1.msra.mxu0 0.0
  %1279 = vmatprep.subr.mxu0 0.0
  %1280 = vmatpush1.msra.mxu0 0.0
  %1281 = vmatprep.subr.mxu0 0.0
  %1282 = vmatpush1.msra.mxu0 0.0
  %1283 = vmatprep.subr.mxu0 0.0
  %1284 = vmatpush1.msra.mxu0 0.0
  %1285 = vmatprep.subr.mxu0 0.0
  %1286 = vmatpush1.msra.mxu0 0.0
  %1287 = vmatprep.subr.mxu0 0.0
  %1288 = vmatpush1.msra.mxu0 0.0
  %1289 = vmatprep.subr.mxu0 0.0
  %1290 = vmatpush1.msra.mxu0 0.0
  %1291 = vmatprep.subr.mxu0 0.0
  %1292 = vmatpush1.msra.mxu0 0.0
  %1293 = vmatprep.subr.mxu0 0.0
  %1294 = vmatpush1.msra.mxu0 0.0
  %1295 = vmatprep.subr.mxu0 0.0
  %1296 = vmatpush1.msra.mxu0 0.0
  %1297 = vmatprep.mubr.f32.mxu0 0.0
  %1298 = vmatmul.mubr.f32.gmra.mrb[0].mxu0 %v308
  %v1299 = vpop.f32.mrb[0].mxu0
  %v1300 = vadd.f32 0.0, %v1299
  %v1301 = vpop.f32.mrb[0].mxu0
  %v1302 = vadd.f32 0.0, %v1301
  %1303 = vdwg.mxu0
  %1304 = vmatprep.subr.mxu0 %v47
  %1305 = vmatpush1.msra.mxu0 %v46
  %1306 = vmatprep.subr.mxu0 %v79
  %1307 = vmatpush1.msra.mxu0 %v78
  %1308 = vmatprep.subr.mxu0 %v111
  %1309 = vmatpush1.msra.mxu0 %v110
  %1310 = vmatprep.subr.mxu0 %v143
  %1311 = vmatpush1.msra.mxu0 %v142
  %1312 = vmatprep.subr.mxu0 %v175
  %1313 = vmatpush1.msra.mxu0 %v174
  %1314 = vmatprep.subr.mxu0 %v207
  %1315 = vmatpush1.msra.mxu0 %v206
  %1316 = vmatprep.subr.mxu0 %v239
  %1317 = vmatpush1.msra.mxu0 %v238
  %1318 = vmatprep.subr.mxu0 %v271
  %1319 = vmatpush1.msra.mxu0 %v270
  %1320 = vmatprep.subr.mxu0 %v303
  %1321 = vmatpush1.msra.mxu0 %v302
  %1322 = vmatprep.subr.mxu0 0.0
  %1323 = vmatpush1.msra.mxu0 0.0
  %1324 = vmatprep.subr.mxu0 0.0
  %1325 = vmatpush1.msra.mxu0 0.0
  %1326 = vmatprep.subr.mxu0 0.0
  %1327 = vmatpush1.msra.mxu0 0.0
  %1328 = vmatprep.subr.mxu0 0.0
  %1329 = vmatpush1.msra.mxu0 0.0
  %1330 = vmatprep.subr.mxu0 0.0
  %1331 = vmatpush1.msra.mxu0 0.0
  %1332 = vmatprep.subr.mxu0 0.0
  %1333 = vmatpush1.msra.mxu0 0.0
  %1334 = vmatprep.subr.mxu0 0.0
  %1335 = vmatpush1.msra.mxu0 0.0
  %1336 = vmatprep.subr.mxu0 0.0
  %1337 = vmatpush1.msra.mxu0 0.0
  %1338 = vmatprep.subr.mxu0 0.0
  %1339 = vmatpush1.msra.mxu0 0.0
  %1340 = vmatprep.subr.mxu0 0.0
  %1341 = vmatpush1.msra.mxu0 0.0
  %1342 = vmatprep.subr.mxu0 0.0
  %1343 = vmatpush1.msra.mxu0 0.0
  %1344 = vmatprep.subr.mxu0 0.0
  %1345 = vmatpush1.msra.mxu0 0.0
  %1346 = vmatprep.subr.mxu0 0.0
  %1347 = vmatpush1.msra.mxu0 0.0
  %1348 = vmatprep.subr.mxu0 0.0
  %1349 = vmatpush1.msra.mxu0 0.0
  %1350 = vmatprep.subr.mxu0 0.0
  %1351 = vmatpush1.msra.mxu0 0.0
  %1352 = vmatprep.subr.mxu0 0.0
  %1353 = vmatpush1.msra.mxu0 0.0
  %1354 = vmatprep.subr.mxu0 0.0
  %1355 = vmatpush1.msra.mxu0 0.0
  %1356 = vmatprep.subr.mxu0 0.0
  %1357 = vmatpush1.msra.mxu0 0.0
  %1358 = vmatprep.subr.mxu0 0.0
  %1359 = vmatpush1.msra.mxu0 0.0
  %1360 = vmatprep.subr.mxu0 0.0
  %1361 = vmatpush1.msra.mxu0 0.0
  %1362 = vmatprep.subr.mxu0 0.0
  %1363 = vmatpush1.msra.mxu0 0.0
  %1364 = vmatprep.subr.mxu0 0.0
  %1365 = vmatpush1.msra.mxu0 0.0
  %1366 = vmatprep.subr.mxu0 0.0
  %1367 = vmatpush1.msra.mxu0 0.0
  %1368 = vmatprep.mubr.f32.mxu0 0.0
  %1369 = vmatmul.mubr.f32.gmra.mrb[0].mxu0 %v308
  %v1370 = vpop.f32.mrb[0].mxu0
  %v1371 = vadd.f32 0.0, %v1370
  %v1372 = vpop.f32.mrb[0].mxu0
  %v1373 = vadd.f32 0.0, %v1372
  %1374 = vdwg.mxu0
  %1375 = vmatprep.subr.mxu0 %v49
  %1376 = vmatpush1.msra.mxu0 %v48
  %1377 = vmatprep.subr.mxu0 %v81
  %1378 = vmatpush1.msra.mxu0 %v80
  %1379 = vmatprep.subr.mxu0 %v113
  %1380 = vmatpush1.msra.mxu0 %v112
  %1381 = vmatprep.subr.mxu0 %v145
  %1382 = vmatpush1.msra.mxu0 %v144
  %1383 = vmatprep.subr.mxu0 %v177
  %1384 = vmatpush1.msra.mxu0 %v176
  %1385 = vmatprep.subr.mxu0 %v209
  %1386 = vmatpush1.msra.mxu0 %v208
  %1387 = vmatprep.subr.mxu0 %v241
  %1388 = vmatpush1.msra.mxu0 %v240
  %1389 = vmatprep.subr.mxu0 %v273
  %1390 = vmatpush1.msra.mxu0 %v272
  %1391 = vmatprep.subr.mxu0 %v305
  %1392 = vmatpush1.msra.mxu0 %v304
  %1393 = vmatprep.subr.mxu0 0.0
  %1394 = vmatpush1.msra.mxu0 0.0
  %1395 = vmatprep.subr.mxu0 0.0
  %1396 = vmatpush1.msra.mxu0 0.0
  %1397 = vmatprep.subr.mxu0 0.0
  %1398 = vmatpush1.msra.mxu0 0.0
  %1399 = vmatprep.subr.mxu0 0.0
  %1400 = vmatpush1.msra.mxu0 0.0
  %1401 = vmatprep.subr.mxu0 0.0
  %1402 = vmatpush1.msra.mxu0 0.0
  %1403 = vmatprep.subr.mxu0 0.0
  %1404 = vmatpush1.msra.mxu0 0.0
  %1405 = vmatprep.subr.mxu0 0.0
  %1406 = vmatpush1.msra.mxu0 0.0
  %1407 = vmatprep.subr.mxu0 0.0
  %1408 = vmatpush1.msra.mxu0 0.0
  %1409 = vmatprep.subr.mxu0 0.0
  %1410 = vmatpush1.msra.mxu0 0.0
  %1411 = vmatprep.subr.mxu0 0.0
  %1412 = vmatpush1.msra.mxu0 0.0
  %1413 = vmatprep.subr.mxu0 0.0
  %1414 = vmatpush1.msra.mxu0 0.0
  %1415 = vmatprep.subr.mxu0 0.0
  %1416 = vmatpush1.msra.mxu0 0.0
  %1417 = vmatprep.subr.mxu0 0.0
  %1418 = vmatpush1.msra.mxu0 0.0
  %1419 = vmatprep.subr.mxu0 0.0
  %1420 = vmatpush1.msra.mxu0 0.0
  %1421 = vmatprep.subr.mxu0 0.0
  %1422 = vmatpush1.msra.mxu0 0.0
  %1423 = vmatprep.subr.mxu0 0.0
  %1424 = vmatpush1.msra.mxu0 0.0
  %1425 = vmatprep.subr.mxu0 0.0
  %1426 = vmatpush1.msra.mxu0 0.0
  %1427 = vmatprep.subr.mxu0 0.0
  %1428 = vmatpush1.msra.mxu0 0.0
  %1429 = vmatprep.subr.mxu0 0.0
  %1430 = vmatpush1.msra.mxu0 0.0
  %1431 = vmatprep.subr.mxu0 0.0
  %1432 = vmatpush1.msra.mxu0 0.0
  %1433 = vmatprep.subr.mxu0 0.0
  %1434 = vmatpush1.msra.mxu0 0.0
  %1435 = vmatprep.subr.mxu0 0.0
  %1436 = vmatpush1.msra.mxu0 0.0
  %1437 = vmatprep.subr.mxu0 0.0
  %1438 = vmatpush1.msra.mxu0 0.0
  %1439 = vmatprep.mubr.f32.mxu0 0.0
  %1440 = vmatmul.mubr.f32.gmra.mrb[0].mxu0 %v308
  %v1441 = vpop.f32.mrb[0].mxu0
  %v1442 = vadd.f32 0.0, %v1441
  %v1443 = vpop.f32.mrb[0].mxu0
  %v1444 = vadd.f32 0.0, %v1443
  %1445 = vdwg.mxu0
  %v1446 = vld [vmem:[%s2] sm:$0xff]
  %1448 = vset.pattern.permute.xlu0 0
  %1449 = vperm.xlu0 %1448, %v1446
  %v1450 = vpop.permute.xlu0 %1449
  %v1452 = vmul.f32 %v377, %v1450
  %v1453 = vmul.f32 %v379, %v1450
  %v1454 = vmul.f32 %v448, %v1450
  %v1455 = vmul.f32 %v450, %v1450
  %v1456 = vmul.f32 %v519, %v1450
  %v1457 = vmul.f32 %v521, %v1450
  %v1458 = vmul.f32 %v590, %v1450
  %v1459 = vmul.f32 %v592, %v1450
  %v1460 = vmul.f32 %v661, %v1450
  %v1461 = vmul.f32 %v663, %v1450
  %v1462 = vmul.f32 %v732, %v1450
  %v1463 = vmul.f32 %v734, %v1450
  %v1464 = vmul.f32 %v803, %v1450
  %v1465 = vmul.f32 %v805, %v1450
  %v1466 = vmul.f32 %v874, %v1450
  %v1467 = vmul.f32 %v876, %v1450
  %v1468 = vmul.f32 %v945, %v1450
  %v1469 = vmul.f32 %v947, %v1450
  %v1470 = vmul.f32 %v1016, %v1450
  %v1471 = vmul.f32 %v1018, %v1450
  %v1472 = vmul.f32 %v1087, %v1450
  %v1473 = vmul.f32 %v1089, %v1450
  %v1474 = vmul.f32 %v1158, %v1450
  %v1475 = vmul.f32 %v1160, %v1450
  %v1476 = vmul.f32 %v1229, %v1450
  %v1477 = vmul.f32 %v1231, %v1450
  %v1478 = vmul.f32 %v1300, %v1450
  %v1479 = vmul.f32 %v1302, %v1450
  %v1480 = vmul.f32 %v1371, %v1450
  %v1481 = vmul.f32 %v1373, %v1450
  %v1482 = vmul.f32 %v1442, %v1450
  %v1483 = vmul.f32 %v1444, %v1450
  %v1484 = vld [vmem:[%s3] sm:$0xff]
  %1486 = vset.pattern.permute.xlu0 0
  %1487 = vperm.xlu0 %1486, %v1484
  %v1488 = vpop.permute.xlu0 %1487
  %v1490 = vadd.f32 %v1452, %v1488
  %v1491 = vadd.f32 %v1453, %v1488
  %v1492 = vadd.f32 %v1454, %v1488
  %v1493 = vadd.f32 %v1455, %v1488
  %v1494 = vadd.f32 %v1456, %v1488
  %v1495 = vadd.f32 %v1457, %v1488
  %v1496 = vadd.f32 %v1458, %v1488
  %v1497 = vadd.f32 %v1459, %v1488
  %v1498 = vadd.f32 %v1460, %v1488
  %v1499 = vadd.f32 %v1461, %v1488
  %v1500 = vadd.f32 %v1462, %v1488
  %v1501 = vadd.f32 %v1463, %v1488
  %v1502 = vadd.f32 %v1464, %v1488
  %v1503 = vadd.f32 %v1465, %v1488
  %v1504 = vadd.f32 %v1466, %v1488
  %v1505 = vadd.f32 %v1467, %v1488
  %v1506 = vadd.f32 %v1468, %v1488
  %v1507 = vadd.f32 %v1469, %v1488
  %v1508 = vadd.f32 %v1470, %v1488
  %v1509 = vadd.f32 %v1471, %v1488
  %v1510 = vadd.f32 %v1472, %v1488
  %v1511 = vadd.f32 %v1473, %v1488
  %v1512 = vadd.f32 %v1474, %v1488
  %v1513 = vadd.f32 %v1475, %v1488
  %v1514 = vadd.f32 %v1476, %v1488
  %v1515 = vadd.f32 %v1477, %v1488
  %v1516 = vadd.f32 %v1478, %v1488
  %v1517 = vadd.f32 %v1479, %v1488
  %v1518 = vadd.f32 %v1480, %v1488
  %v1519 = vadd.f32 %v1481, %v1488
  %v1520 = vadd.f32 %v1482, %v1488
  %v1521 = vadd.f32 %v1483, %v1488
  %v1522 = vmax.f32 %v1490, 0.0
  %v1523 = vmax.f32 %v1491, 0.0
  %v1524 = vmax.f32 %v1492, 0.0
  %v1525 = vmax.f32 %v1493, 0.0
  %v1526 = vmax.f32 %v1494, 0.0
  %v1527 = vmax.f32 %v1495, 0.0
  %v1528 = vmax.f32 %v1496, 0.0
  %v1529 = vmax.f32 %v1497, 0.0
  %v1530 = vmax.f32 %v1498, 0.0
  %v1531 = vmax.f32 %v1499, 0.0
  %v1532 = vmax.f32 %v1500, 0.0
  %v1533 = vmax.f32 %v1501, 0.0
  %v1534 = vmax.f32 %v1502, 0.0
  %v1535 = vmax.f32 %v1503, 0.0
  %v1536 = vmax.f32 %v1504, 0.0
  %v1537 = vmax.f32 %v1505, 0.0
  %v1538 = vmax.f32 %v1506, 0.0
  %v1539 = vmax.f32 %v1507, 0.0
  %v1540 = vmax.f32 %v1508, 0.0
  %v1541 = vmax.f32 %v1509, 0.0
  %v1542 = vmax.f32 %v1510, 0.0
  %v1543 = vmax.f32 %v1511, 0.0
  %v1544 = vmax.f32 %v1512, 0.0
  %v1545 = vmax.f32 %v1513, 0.0
  %v1546 = vmax.f32 %v1514, 0.0
  %v1547 = vmax.f32 %v1515, 0.0
  %v1548 = vmax.f32 %v1516, 0.0
  %v1549 = vmax.f32 %v1517, 0.0
  %v1550 = vmax.f32 %v1518, 0.0
  %v1551 = vmax.f32 %v1519, 0.0
  %v1552 = vmax.f32 %v1520, 0.0
  %v1553 = vmax.f32 %v1521, 0.0
  %1554 = vst [vmem:[%s4] sm:$0xff] %v1522
  %1555 = vst [vmem:[%s4 + $0x8] sm:$0xff] %v1523
  %1556 = vst [vmem:[%s4 + $0x10] sm:$0xff] %v1524
  %1557 = vst [vmem:[%s4 + $0x18] sm:$0xff] %v1525
  %1558 = vst [vmem:[%s4 + $0x20] sm:$0xff] %v1526
  %1559 = vst [vmem:[%s4 + $0x28] sm:$0xff] %v1527
  %1560 = vst [vmem:[%s4 + $0x30] sm:$0xff] %v1528
  %1561 = vst [vmem:[%s4 + $0x38] sm:$0xff] %v1529
  %1562 = vst [vmem:[%s4 + $0x40] sm:$0xff] %v1530
  %1563 = vst [vmem:[%s4 + $0x48] sm:$0xff] %v1531
  %1564 = vst [vmem:[%s4 + $0x50] sm:$0xff] %v1532
  %1565 = vst [vmem:[%s4 + $0x58] sm:$0xff] %v1533
  %1566 = vst [vmem:[%s4 + $0x60] sm:$0xff] %v1534
  %1567 = vst [vmem:[%s4 + $0x68] sm:$0xff] %v1535
  %1568 = vst [vmem:[%s4 + $0x70] sm:$0xff] %v1536
  %1569 = vst [vmem:[%s4 + $0x78] sm:$0xff] %v1537
  %1570 = vst [vmem:[%s4 + $0x80] sm:$0xff] %v1538
  %1571 = vst [vmem:[%s4 + $0x88] sm:$0xff] %v1539
  %1572 = vst [vmem:[%s4 + $0x90] sm:$0xff] %v1540
  %1573 = vst [vmem:[%s4 + $0x98] sm:$0xff] %v1541
  %1574 = vst [vmem:[%s4 + $0xa0] sm:$0xff] %v1542
  %1575 = vst [vmem:[%s4 + $0xa8] sm:$0xff] %v1543
  %1576 = vst [vmem:[%s4 + $0xb0] sm:$0xff] %v1544
  %1577 = vst [vmem:[%s4 + $0xb8] sm:$0xff] %v1545
  %1578 = vst [vmem:[%s4 + $0xc0] sm:$0xff] %v1546
  %1579 = vst [vmem:[%s4 + $0xc8] sm:$0xff] %v1547
  %1580 = vst [vmem:[%s4 + $0xd0] sm:$0xff] %v1548
  %1581 = vst [vmem:[%s4 + $0xd8] sm:$0xff] %v1549
  %1582 = vst [vmem:[%s4 + $0xe0] sm:$0xff] %v1550
  %1583 = vst [vmem:[%s4 + $0xe8] sm:$0xff] %v1551
  %1584 = vst [vmem:[%s4 + $0xf0] sm:$0xff] %v1552
  %1585 = vst [vmem:[%s4 + $0xf8] sm:$0xff] %v1553
  // Predicated region
  $region18: #{conv2plus1d_forward.6} parent=0 // pred_check
    _
  $region19: #{conv2plus1d_forward.6} parent=0 // pred_check_branch
    %1587 = sbr.rel (0) target = $region21
  $region20: #{conv2plus1d_forward.6} parent=0 // pred_region
    _
  $region21: #{conv2plus1d_forward.6} parent=0 // pred_fallthru
    _
  // Predicated region
  $region22: #{conv2plus1d_forward.6} parent=0 // pred_check
    _
  $region23: #{conv2plus1d_forward.6} parent=0 // pred_check_branch
    %1589 = sbr.rel (0) target = $region25
  $region24: #{conv2plus1d_forward.6} parent=0 // pred_region
    _
  $region25: #{conv2plus1d_forward.6} parent=0 // pred_fallthru
    _

// kernel: conv2plus1d_forward.7
$region0: #{conv2plus1d_forward.7}
  #allocation0 [shape = 'u32[]', space=smem, size = 0x4, offset = 0x4, fixed_abs, tag = 'smem constant byte address 0x4 - core index']
  #allocation1 [shape = 'u32[144,128]{1,0:T(1,128)}', space=vmem, size = 0x12000, scoped, tag = 'internal scratch']
  #allocation2 [shape = 'f32[320,512]{1,0:T(8,128)}', space=vmem, size = 0xa0000, scoped, tag = 'scratch operand']
  %s0 = inlined_call_operand.vmem [shape: f32[8,32,512], index: 0, kind: input, shape index: {}]
  %s1 = inlined_call_operand.vmem [shape: f32[32,96], index: 1, kind: input, shape index: {}]
  %s2 = inlined_call_operand.vmem [shape: f32[32,1], index: 2, kind: input, shape index: {}]
  %s3 = inlined_call_operand.vmem [shape: f32[32,1], index: 3, kind: input, shape index: {}]
  %s4 = inlined_call_operand.vmem [shape: f32[8,32,512], index: 4, kind: output, shape index: {}]
  %s5 = sld [smem:[#allocation0]]
  $region26: #{conv2plus1d_forward.7} parent=0
    _
  %s7 = ssub.s32 1, %s5
  %s8 = scalar_select 0, %s7, %s5
  // Predicated region
  $region2: #{conv2plus1d_forward.7} parent=0 // pred_check
    _
  $region3: #{conv2plus1d_forward.7} parent=0 // pred_check_branch
    %10 = sbr.rel (0) target = $region5
  $region4: #{conv2plus1d_forward.7} parent=0 // pred_region
    _
  $region5: #{conv2plus1d_forward.7} parent=0 // pred_fallthru
    _
  // Predicated region
  $region6: #{conv2plus1d_forward.7} parent=0 // pred_check
    _
  $region7: #{conv2plus1d_forward.7} parent=0 // pred_check_branch
    %12 = sbr.rel (0) target = $region9
  $region8: #{conv2plus1d_forward.7} parent=0 // pred_region
    _
  $region9: #{conv2plus1d_forward.7} parent=0 // pred_fallthru
    _
  // Predicated region
  $region10: #{conv2plus1d_forward.7} parent=0 // pred_check
    _
  $region11: #{conv2plus1d_forward.7} parent=0 // pred_check_branch
    %14 = sbr.rel (0) target = $region13
  $region12: #{conv2plus1d_forward.7} parent=0 // pred_region
    _
  $region13: #{conv2plus1d_forward.7} parent=0 // pred_fallthru
    _
  // Predicated region
  $region14: #{conv2plus1d_forward.7} parent=0 // pred_check
    _
  $region15: #{conv2plus1d_forward.7} parent=0 // pred_check_branch
    %16 = sbr.rel (0) target = $region17
  $region16: #{conv2plus1d_forward.7} parent=0 // pred_region
    _
  $region17: #{conv2plus1d_forward.7} parent=0 // pred_fallthru
    _
  %v17 = vld [vmem:[%s2] sm:$0xff]
  %v18 = vld [vmem:[%s2 + $0x8] sm:$0xff]
  %v19 = vld [vmem:[%s2 + $0x10] sm:$0xff]
  %v20 = vld [vmem:[%s2 + $0x18] sm:$0xff]
  %22 = vset.pattern.permute.xlu0 0
  %23 = vperm.xlu0 %22, %v17
  %v24 = vpop.permute.xlu0 %23
  %27 = vset.pattern.permute.xlu0 0
  %28 = vperm.xlu0 %27, %v18
  %v29 = vpop.permute.xlu0 %28
  %32 = vset.pattern.permute.xlu0 0
  %33 = vperm.xlu0 %32, %v19
  %v34 = vpop.permute.xlu0 %33
  %37 = vset.pattern.permute.xlu0 0
  %38 = vperm.xlu0 %37, %v20
  %v39 = vpop.permute.xlu0 %38
  %v41 = vld [vmem:[%s3] sm:$0xff]
  %v42 = vld [vmem:[%s3 + $0x8] sm:$0xff]
  %v43 = vld [vmem:[%s3 + $0x10] sm:$0xff]
  %v44 = vld [vmem:[%s3 + $0x18] sm:$0xff]
  %46 = vset.pattern.permute.xlu0 0
  %47 = vperm.xlu0 %46, %v41
  %v48 = vpop.permute.xlu0 %47
  %51 = vset.pattern.permute.xlu0 0
  %52 = vperm.xlu0 %51, %v42
  %v53 = vpop.permute.xlu0 %52
  %56 = vset.pattern.permute.xlu0 0
  %57 = vperm.xlu0 %56, %v43
  %v58 = vpop.permute.xlu0 %57
  %61 = vset.pattern.permute.xlu0 0
  %62 = vperm.xlu0 %61, %v44
  %v63 = vpop.permute.xlu0 %62
  %65 = vst [vmem:[#allocation2] sm:$0xff] 0.0
  %66 = vst [vmem:[#allocation2 + $0x8] sm:$0xff] 0.0
  %67 = vst [vmem:[#allocation2 + $0x10] sm:$0xff] 0.0
  %68 = vst [vmem:[#allocation2 + $0x18] sm:$0xff] 0.0
  %69 = vst [vmem:[#allocation2 + $0x20] sm:$0xff] 0.0
  %70 = vst [vmem:[#allocation2 + $0x28] sm:$0xff] 0.0
  %71 = vst [vmem:[#allocation2 + $0x30] sm:$0xff] 0.0
  %72 = vst [vmem:[#allocation2 + $0x38] sm:$0xff] 0.0
  %73 = vst [vmem:[#allocation2 + $0x40] sm:$0xff] 0.0
  %74 = vst [vmem:[#allocation2 + $0x48] sm:$0xff] 0.0
  %75 = vst [vmem:[#allocation2 + $0x50] sm:$0xff] 0.0
  %76 = vst [vmem:[#allocation2 + $0x58] sm:$0xff] 0.0
  %77 = vst [vmem:[#allocation2 + $0x60] sm:$0xff] 0.0
  %78 = vst [vmem:[#allocation2 + $0x68] sm:$0xff] 0.0
  %79 = vst [vmem:[#allocation2 + $0x70] sm:$0xff] 0.0
  %80 = vst [vmem:[#allocation2 + $0x78] sm:$0xff] 0.0
  %81 = vst [vmem:[#allocation2 + $0x480] sm:$0xff] 0.0
  %82 = vst [vmem:[#allocation2 + $0x488] sm:$0xff] 0.0
  %83 = vst [vmem:[#allocation2 + $0x490] sm:$0xff] 0.0
  %84 = vst [vmem:[#allocation2 + $0x498] sm:$0xff] 0.0
  %85 = vst [vmem:[#allocation2 + $0x4a0] sm:$0xff] 0.0
  %86 = vst [vmem:[#allocation2 + $0x4a8] sm:$0xff] 0.0
  %87 = vst [vmem:[#allocation2 + $0x4b0] sm:$0xff] 0.0
  %88 = vst [vmem:[#allocation2 + $0x4b8] sm:$0xff] 0.0
  %89 = vst [vmem:[#allocation2 + $0x4c0] sm:$0xff] 0.0
  %90 = vst [vmem:[#allocation2 + $0x4c8] sm:$0xff] 0.0
  %91 = vst [vmem:[#allocation2 + $0x4d0] sm:$0xff] 0.0
  %92 = vst [vmem:[#allocation2 + $0x4d8] sm:$0xff] 0.0
  %93 = vst [vmem:[#allocation2 + $0x4e0] sm:$0xff] 0.0
  %94 = vst [vmem:[#allocation2 + $0x4e8] sm:$0xff] 0.0
  %95 = vst [vmem:[#allocation2 + $0x4f0] sm:$0xff] 0.0
  %96 = vst [vmem:[#allocation2 + $0x4f8] sm:$0xff] 0.0
  %v97 = vld [vmem:[%s0] sm:$0xff]
  %v98 = vld [vmem:[%s0 + $0x8] sm:$0xff]
  %v99 = vld [vmem:[%s0 + $0x10] sm:$0xff]
  %v100 = vld [vmem:[%s0 + $0x18] sm:$0xff]
  %v101 = vld [vmem:[%s0 + $0x20] sm:$0xff]
  %v102 = vld [vmem:[%s0 + $0x28] sm:$0xff]
  %v103 = vld [vmem:[%s0 + $0x30] sm:$0xff]
  %v104 = vld [vmem:[%s0 + $0x38] sm:$0xff]
  %v105 = vld [vmem:[%s0 + $0x40] sm:$0xff]
  %v106 = vld [vmem:[%s0 + $0x48] sm:$0xff]
  %v107 = vld [vmem:[%s0 + $0x50] sm:$0xff]
  %v108 = vld [vmem:[%s0 + $0x58] sm:$0xff]
  %v109 = vld [vmem:[%s0 + $0x60] sm:$0xff]
  %v110 = vld [vmem:[%s0 + $0x68] sm:$0xff]
  %v111 = vld [vmem:[%s0 + $0x70] sm:$0xff]
  %v112 = vld [vmem:[%s0 + $0x78] sm:$0xff]
  %v113 = vmul.f32 %v97, %v24
  %v114 = vmul.f32 %v98, %v24
  %v115 = vmul.f32 %v99, %v24
  %v116 = vmul.f32 %v100, %v24
  %v117 = vmul.f32 %v101, %v29
  %v118 = vmul.f32 %v102, %v29
  %v119 = vmul.f32 %v103, %v29
  %v120 = vmul.f32 %v104, %v29
  %v121 = vmul.f32 %v105, %v34
  %v122 = vmul.f32 %v106, %v34
  %v123 = vmul.f32 %v107, %v34
  %v124 = vmul.f32 %v108, %v34
  %v125 = vmul.f32 %v109, %v39
  %v126 = vmul.f32 %v110, %v39
  %v127 = vmul.f32 %v111, %v39
  %v128 = vmul.f32 %v112, %v39
  %v129 = vadd.f32 %v113, %v48
  %v130 = vadd.f32 %v114, %v48
  %v131 = vadd.f32 %v115, %v48
  %v132 = vadd.f32 %v116, %v48
  %v133 = vadd.f32 %v117, %v53
  %v134 = vadd.f32 %v118, %v53
  %v135 = vadd.f32 %v119, %v53
  %v136 = vadd.f32 %v120, %v53
  %v137 = vadd.f32 %v121, %v58
  %v138 = vadd.f32 %v122, %v58
  %v139 = vadd.f32 %v123, %v58
  %v140 = vadd.f32 %v124, %v58
  %v141 = vadd.f32 %v125, %v63
  %v142 = vadd.f32 %v126, %v63
  %v143 = vadd.f32 %v127, %v63
  %v144 = vadd.f32 %v128, %v63
  %v145 = vmax.f32 %v129, 0.0
  %v146 = vmax.f32 %v130, 0.0
  %v147 = vmax.f32 %v131, 0.0
  %v148 = vmax.f32 %v132, 0.0
  %v149 = vmax.f32 %v133, 0.0
  %v150 = vmax.f32 %v134, 0.0
  %v151 = vmax.f32 %v135, 0.0
  %v152 = vmax.f32 %v136, 0.0
  %v153 = vmax.f32 %v137, 0.0
  %v154 = vmax.f32 %v138, 0.0
  %v155 = vmax.f32 %v139, 0.0
  %v156 = vmax.f32 %v140, 0.0
  %v157 = vmax.f32 %v141, 0.0
  %v158 = vmax.f32 %v142, 0.0
  %v159 = vmax.f32 %v143, 0.0
  %v160 = vmax.f32 %v144, 0.0
  %161 = vst [vmem:[#allocation2 + $0x80] sm:$0xff] %v145
  %162 = vst [vmem:[#allocation2 + $0x88] sm:$0xff] %v146
  %163 = vst [vmem:[#allocation2 + $0x90] sm:$0xff] %v147
  %164 = vst [vmem:[#allocation2 + $0x98] sm:$0xff] %v148
  %165 = vst [vmem:[#allocation2 + $0xa0] sm:$0xff] %v149
  %166 = vst [vmem:[#allocation2 + $0xa8] sm:$0xff] %v150
  %167 = vst [vmem:[#allocation2 + $0xb0] sm:$0xff] %v151
  %168 = vst [vmem:[#allocation2 + $0xb8] sm:$0xff] %v152
  %169 = vst [vmem:[#allocation2 + $0xc0] sm:$0xff] %v153
  %170 = vst [vmem:[#allocation2 + $0xc8] sm:$0xff] %v154
  %171 = vst [vmem:[#allocation2 + $0xd0] sm:$0xff] %v155
  %172 = vst [vmem:[#allocation2 + $0xd8] sm:$0xff] %v156
  %173 = vst [vmem:[#allocation2 + $0xe0] sm:$0xff] %v157
  %174 = vst [vmem:[#allocation2 + $0xe8] sm:$0xff] %v158
  %175 = vst [vmem:[#allocation2 + $0xf0] sm:$0xff] %v159
  %176 = vst [vmem:[#allocation2 + $0xf8] sm:$0xff] %v160
  %s177 = scalar_lea.vmem %s0, 128
  %v178 = vld [vmem:[%s177] sm:$0xff]
  %v179 = vld [vmem:[%s177 + $0x8] sm:$0xff]
  %v180 = vld [vmem:[%s177 + $0x10] sm:$0xff]
  %v181 = vld [vmem:[%s177 + $0x18] sm:$0xff]
  %v182 = vld [vmem:[%s177 + $0x20] sm:$0xff]
  %v183 = vld [vmem:[%s177 + $0x28] sm:$0xff]
  %v184 = vld [vmem:[%s177 + $0x30] sm:$0xff]
  %v185 = vld [vmem:[%s177 + $0x38] sm:$0xff]
  %v186 = vld [vmem:[%s177 + $0x40] sm:$0xff]
  %v187 = vld [vmem:[%s177 + $0x48] sm:$0xff]
  %v188 = vld [vmem:[%s177 + $0x50] sm:$0xff]
  %v189 = vld [vmem:[%s177 + $0x58] sm:$0xff]
  %v190 = vld [vmem:[%s177 + $0x60] sm:$0xff]
  %v191 = vld [vmem:[%s177 + $0x68] sm:$0xff]
  %v192 = vld [vmem:[%s177 + $0x70] sm:$0xff]
  %v193 = vld [vmem:[%s177 + $0x78] sm:$0xff]
  %v194 = vmul.f32 %v178, %v24
  %v195 = vmul.f32 %v179, %v24
  %v196 = vmul.f32 %v180, %v24
  %v197 = vmul.f32 %v181, %v24
  %v198 = vmul.f32 %v182, %v29
  %v199 = vmul.f32 %v183, %v29
  %v200 = vmul.f32 %v184, %v29
  %v201 = vmul.f32 %v185, %v29
  %v202 = vmul.f32 %v186, %v34
  %v203 = vmul.f32 %v187, %v34
  %v204 = vmul.f32 %v188, %v34
  %v205 = vmul.f32 %v189, %v34
  %v206 = vmul.f32 %v190, %v39
  %v207 = vmul.f32 %v191, %v39
  %v208 = vmul.f32 %v192, %v39
  %v209 = vmul.f32 %v193, %v39
  %v210 = vadd.f32 %v194, %v48
  %v211 = vadd.f32 %v195, %v48
  %v212 = vadd.f32 %v196, %v48
  %v213 = vadd.f32 %v197, %v48
  %v214 = vadd.f32 %v198, %v53
  %v215 = vadd.f32 %v199, %v53
  %v216 = vadd.f32 %v200, %v53
  %v217 = vadd.f32 %v201, %v53
  %v218 = vadd.f32 %v202, %v58
  %v219 = vadd.f32 %v203, %v58
  %v220 = vadd.f32 %v204, %v58
  %v221 = vadd.f32 %v205, %v58
  %v222 = vadd.f32 %v206, %v63
  %v223 = vadd.f32 %v207, %v63
  %v224 = vadd.f32 %v208, %v63
  %v225 = vadd.f32 %v209, %v63
  %v226 = vmax.f32 %v210, 0.0
  %v227 = vmax.f32 %v211, 0.0
  %v228 = vmax.f32 %v212, 0.0
  %v229 = vmax.f32 %v213, 0.0
  %v230 = vmax.f32 %v214, 0.0
  %v231 = vmax.f32 %v215, 0.0
  %v232 = vmax.f32 %v216, 0.0
  %v233 = vmax.f32 %v217, 0.0
  %v234 = vmax.f32 %v218, 0.0
  %v235 = vmax.f32 %v219, 0.0
  %v236 = vmax.f32 %v220, 0.0
  %v237 = vmax.f32 %v221, 0.0
  %v238 = vmax.f32 %v222, 0.0
  %v239 = vmax.f32 %v223, 0.0
  %v240 = vmax.f32 %v224, 0.0
  %v241 = vmax.f32 %v225, 0.0
  %242 = vst [vmem:[#allocation2 + $0x100] sm:$0xff] %v226
  %243 = vst [vmem:[#allocation2 + $0x108] sm:$0xff] %v227
  %244 = vst [vmem:[#allocation2 + $0x110] sm:$0xff] %v228
  %245 = vst [vmem:[#allocation2 + $0x118] sm:$0xff] %v229
  %246 = vst [vmem:[#allocation2 + $0x120] sm:$0xff] %v230
  %247 = vst [vmem:[#allocation2 + $0x128] sm:$0xff] %v231
  %248 = vst [vmem:[#allocation2 + $0x130] sm:$0xff] %v232
  %249 = vst [vmem:[#allocation2 + $0x138] sm:$0xff] %v233
  %250 = vst [vmem:[#allocation2 + $0x140] sm:$0xff] %v234
  %251 = vst [vmem:[#allocation2 + $0x148] sm:$0xff] %v235
  %252 = vst [vmem:[#allocation2 + $0x150] sm:$0xff] %v236
  %253 = vst [vmem:[#allocation2 + $0x158] sm:$0xff] %v237
  %254 = vst [vmem:[#allocation2 + $0x160] sm:$0xff] %v238
  %255 = vst [vmem:[#allocation2 + $0x168] sm:$0xff] %v239
  %256 = vst [vmem:[#allocation2 + $0x170] sm:$0xff] %v240
  %257 = vst [vmem:[#allocation2 + $0x178] sm:$0xff] %v241
  %s258 = scalar_lea.vmem %s0, 256
  %v259 = vld [vmem:[%s258] sm:$0xff]
  %v260 = vld [vmem:[%s258 + $0x8] sm:$0xff]
  %v261 = vld [vmem:[%s258 + $0x10] sm:$0xff]
  %v262 = vld [vmem:[%s258 + $0x18] sm:$0xff]
  %v263 = vld [vmem:[%s258 + $0x20] sm:$0xff]
  %v264 = vld [vmem:[%s258 + $0x28] sm:$0xff]
  %v265 = vld [vmem:[%s258 + $0x30] sm:$0xff]
  %v266 = vld [vmem:[%s258 + $0x38] sm:$0xff]
  %v267 = vld [vmem:[%s258 + $0x40] sm:$0xff]
  %v268 = vld [vmem:[%s258 + $0x48] sm:$0xff]
  %v269 = vld [vmem:[%s258 + $0x50] sm:$0xff]
  %v270 = vld [vmem:[%s258 + $0x58] sm:$0xff]
  %v271 = vld [vmem:[%s258 + $0x60] sm:$0xff]
  %v272 = vld [vmem:[%s258 + $0x68] sm:$0xff]
  %v273 = vld [vmem:[%s258 + $0x70] sm:$0xff]
  %v274 = vld [vmem:[%s258 + $0x78] sm:$0xff]
  %v275 = vmul.f32 %v259, %v24
  %v276 = vmul.f32 %v260, %v24
  %v277 = vmul.f32 %v261, %v24
  %v278 = vmul.f32 %v262, %v24
  %v279 = vmul.f32 %v263, %v29
  %v280 = vmul.f32 %v264, %v29
  %v281 = vmul.f32 %v265, %v29
  %v282 = vmul.f32 %v266, %v29
  %v283 = vmul.f32 %v267, %v34
  %v284 = vmul.f32 %v268, %v34
  %v285 = vmul.f32 %v269, %v34
  %v286 = vmul.f32 %v270, %v34
  %v287 = vmul.f32 %v271, %v39
  %v288 = vmul.f32 %v272, %v39
  %v289 = vmul.f32 %v273, %v39
  %v290 = vmul.f32 %v274, %v39
  %v291 = vadd.f32 %v275, %v48
  %v292 = vadd.f32 %v276, %v48
  %v293 = vadd.f32 %v277, %v48
  %v294 = vadd.f32 %v278, %v48
  %v295 = vadd.f32 %v279, %v53
  %v296 = vadd.f32 %v280, %v53
  %v297 = vadd.f32 %v281, %v53
  %v298 = vadd.f32 %v282, %v53
  %v299 = vadd.f32 %v283, %v58
  %v300 = vadd.f32 %v284, %v58
  %v301 = vadd.f32 %v285, %v58
  %v302 = vadd.f32 %v286, %v58
  %v303 = vadd.f32 %v287, %v63
  %v304 = vadd.f32 %v288, %v63
  %v305 = vadd.f32 %v289, %v63
  %v306 = vadd.f32 %v290, %v63
  %v307 = vmax.f32 %v291, 0.0
  %v308 = vmax.f32 %v292, 0.0
  %v309 = vmax.f32 %v293, 0.0
  %v310 = vmax.f32 %v294, 0.0
  %v311 = vmax.f32 %v295, 0.0
  %v312 = vmax.f32 %v296, 0.0
  %v313 = vmax.f32 %v297, 0.0
  %v314 = vmax.f32 %v298, 0.0
  %v315 = vmax.f32 %v299, 0.0
  %v316 = vmax.f32 %v300, 0.0
  %v317 = vmax.f32 %v301, 0.0
  %v318 = vmax.f32 %v302, 0.0
  %v319 = vmax.f32 %v303, 0.0
  %v320 = vmax.f32 %v304, 0.0
  %v321 = vmax.f32 %v305, 0.0
  %v322 = vmax.f32 %v306, 0.0
  %323 = vst [vmem:[#allocation2 + $0x180] sm:$0xff] %v307
  %324 = vst [vmem:[#allocation2 + $0x188] sm:$0xff] %v308
  %325 = vst [vmem:[#allocation2 + $0x190] sm:$0xff] %v309
  %326 = vst [vmem:[#allocation2 + $0x198] sm:$0xff] %v310
  %327 = vst [vmem:[#allocation2 + $0x1a0] sm:$0xff] %v311
  %328 = vst [vmem:[#allocation2 + $0x1a8] sm:$0xff] %v312
  %329 = vst [vmem:[#allocation2 + $0x1b0] sm:$0xff] %v313
  %330 = vst [vmem:[#allocation2 + $0x1b8] sm:$0xff] %v314
  %331 = vst [vmem:[#allocation2 + $0x1c0] sm:$0xff] %v315
  %332 = vst [vmem:[#allocation2 + $0x1c8] sm:$0xff] %v316
  %333 = vst [vmem:[#allocation2 + $0x1d0] sm:$0xff] %v317
  %334 = vst [vmem:[#allocation2 + $0x1d8] sm:$0xff] %v318
  %335 = vst [vmem:[#allocation2 + $0x1e0] sm:$0xff] %v319
  %336 = vst [vmem:[#allocation2 + $0x1e8] sm:$0xff] %v320
  %337 = vst [vmem:[#allocation2 + $0x1f0] sm:$0xff] %v321
  %338 = vst [vmem:[#allocation2 + $0x1f8] sm:$0xff] %v322
  %s339 = scalar_lea.vmem %s0, 384
  %v340 = vld [vmem:[%s339] sm:$0xff]
  %v341 = vld [vmem:[%s339 + $0x8] sm:$0xff]
  %v342 = vld [vmem:[%s339 + $0x10] sm:$0xff]
  %v343 = vld [vmem:[%s339 + $0x18] sm:$0xff]
  %v344 = vld [vmem:[%s339 + $0x20] sm:$0xff]
  %v345 = vld [vmem:[%s339 + $0x28] sm:$0xff]
  %v346 = vld [vmem:[%s339 + $0x30] sm:$0xff]
  %v347 = vld [vmem:[%s339 + $0x38] sm:$0xff]
  %v348 = vld [vmem:[%s339 + $0x40] sm:$0xff]
  %v349 = vld [vmem:[%s339 + $0x48] sm:$0xff]
  %v350 = vld [vmem:[%s339 + $0x50] sm:$0xff]
  %v351 = vld [vmem:[%s339 + $0x58] sm:$0xff]
  %v352 = vld [vmem:[%s339 + $0x60] sm:$0xff]
  %v353 = vld [vmem:[%s339 + $0x68] sm:$0xff]
  %v354 = vld [vmem:[%s339 + $0x70] sm:$0xff]
  %v355 = vld [vmem:[%s339 + $0x78] sm:$0xff]
  %v356 = vmul.f32 %v340, %v24
  %v357 = vmul.f32 %v341, %v24
  %v358 = vmul.f32 %v342, %v24
  %v359 = vmul.f32 %v343, %v24
  %v360 = vmul.f32 %v344, %v29
  %v361 = vmul.f32 %v345, %v29
  %v362 = vmul.f32 %v346, %v29
  %v363 = vmul.f32 %v347, %v29
  %v364 = vmul.f32 %v348, %v34
  %v365 = vmul.f32 %v349, %v34
  %v366 = vmul.f32 %v350, %v34
  %v367 = vmul.f32 %v351, %v34
  %v368 = vmul.f32 %v352, %v39
  %v369 = vmul.f32 %v353, %v39
  %v370 = vmul.f32 %v354, %v39
  %v371 = vmul.f32 %v355, %v39
  %v372 = vadd.f32 %v356, %v48
  %v373 = vadd.f32 %v357, %v48
  %v374 = vadd.f32 %v358, %v48
  %v375 = vadd.f32 %v359, %v48
  %v376 = vadd.f32 %v360, %v53
  %v377 = vadd.f32 %v361, %v53
  %v378 = vadd.f32 %v362, %v53
  %v379 = vadd.f32 %v363, %v53
  %v380 = vadd.f32 %v364, %v58
  %v381 = vadd.f32 %v365, %v58
  %v382 = vadd.f32 %v366, %v58
  %v383 = vadd.f32 %v367, %v58
  %v384 = vadd.f32 %v368, %v63
  %v385 = vadd.f32 %v369, %v63
  %v386 = vadd.f32 %v370, %v63
  %v387 = vadd.f32 %v371, %v63
  %v388 = vmax.f32 %v372, 0.0
  %v389 = vmax.f32 %v373, 0.0
  %v390 = vmax.f32 %v374, 0.0
  %v391 = vmax.f32 %v375, 0.0
  %v392 = vmax.f32 %v376, 0.0
  %v393 = vmax.f32 %v377, 0.0
  %v394 = vmax.f32 %v378, 0.0
  %v395 = vmax.f32 %v379, 0.0
  %v396 = vmax.f32 %v380, 0.0
  %v397 = vmax.f32 %v381, 0.0
  %v398 = vmax.f32 %v382, 0.0
  %v399 = vmax.f32 %v383, 0.0
  %v400 = vmax.f32 %v384, 0.0
  %v401 = vmax.f32 %v385, 0.0
  %v402 = vmax.f32 %v386, 0.0
  %v403 = vmax.f32 %v387, 0.0
  %404 = vst [vmem:[#allocation2 + $0x200] sm:$0xff] %v388
  %405 = vst [vmem:[#allocation2 + $0x208] sm:$0xff] %v389
  %406 = vst [vmem:[#allocation2 + $0x210] sm:$0xff] %v390
  %407 = vst [vmem:[#allocation2 + $0x218] sm:$0xff] %v391
  %408 = vst [vmem:[#allocation2 + $0x220] sm:$0xff] %v392
  %409 = vst [vmem:[#allocation2 + $0x228] sm:$0xff] %v393
  %410 = vst [vmem:[#allocation2 + $0x230] sm:$0xff] %v394
  %411 = vst [vmem:[#allocation2 + $0x238] sm:$0xff] %v395
  %412 = vst [vmem:[#allocation2 + $0x240] sm:$0xff] %v396
  %413 = vst [vmem:[#allocation2 + $0x248] sm:$0xff] %v397
  %414 = vst [vmem:[#allocation2 + $0x250] sm:$0xff] %v398
  %415 = vst [vmem:[#allocation2 + $0x258] sm:$0xff] %v399
  %416 = vst [vmem:[#allocation2 + $0x260] sm:$0xff] %v400
  %417 = vst [vmem:[#allocation2 + $0x268] sm:$0xff] %v401
  %418 = vst [vmem:[#allocation2 + $0x270] sm:$0xff] %v402
  %419 = vst [vmem:[#allocation2 + $0x278] sm:$0xff] %v403
  %s420 = scalar_lea.vmem %s0, 512
  %v421 = vld [vmem:[%s420] sm:$0xff]
  %v422 = vld [vmem:[%s420 + $0x8] sm:$0xff]
  %v423 = vld [vmem:[%s420 + $0x10] sm:$0xff]
  %v424 = vld [vmem:[%s420 + $0x18] sm:$0xff]
  %v425 = vld [vmem:[%s420 + $0x20] sm:$0xff]
  %v426 = vld [vmem:[%s420 + $0x28] sm:$0xff]
  %v427 = vld [vmem:[%s420 + $0x30] sm:$0xff]
  %v428 = vld [vmem:[%s420 + $0x38] sm:$0xff]
  %v429 = vld [vmem:[%s420 + $0x40] sm:$0xff]
  %v430 = vld [vmem:[%s420 + $0x48] sm:$0xff]
  %v431 = vld [vmem:[%s420 + $0x50] sm:$0xff]
  %v432 = vld [vmem:[%s420 + $0x58] sm:$0xff]
  %v433 = vld [vmem:[%s420 + $0x60] sm:$0xff]
  %v434 = vld [vmem:[%s420 + $0x68] sm:$0xff]
  %v435 = vld [vmem:[%s420 + $0x70] sm:$0xff]
  %v436 = vld [vmem:[%s420 + $0x78] sm:$0xff]
  %v437 = vmul.f32 %v421, %v24
  %v438 = vmul.f32 %v422, %v24
  %v439 = vmul.f32 %v423, %v24
  %v440 = vmul.f32 %v424, %v24
  %v441 = vmul.f32 %v425, %v29
  %v442 = vmul.f32 %v426, %v29
  %v443 = vmul.f32 %v427, %v29
  %v444 = vmul.f32 %v428, %v29
  %v445 = vmul.f32 %v429, %v34
  %v446 = vmul.f32 %v430, %v34
  %v447 = vmul.f32 %v431, %v34
  %v448 = vmul.f32 %v432, %v34
  %v449 = vmul.f32 %v433, %v39
  %v450 = vmul.f32 %v434, %v39
  %v451 = vmul.f32 %v435, %v39
  %v452 = vmul.f32 %v436, %v39
  %v453 = vadd.f32 %v437, %v48
  %v454 = vadd.f32 %v438, %v48
  %v455 = vadd.f32 %v439, %v48
  %v456 = vadd.f32 %v440, %v48
  %v457 = vadd.f32 %v441, %v53
  %v458 = vadd.f32 %v442, %v53
  %v459 = vadd.f32 %v443, %v53
  %v460 = vadd.f32 %v444, %v53
  %v461 = vadd.f32 %v445, %v58
  %v462 = vadd.f32 %v446, %v58
  %v463 = vadd.f32 %v447, %v58
  %v464 = vadd.f32 %v448, %v58
  %v465 = vadd.f32 %v449, %v63
  %v466 = vadd.f32 %v450, %v63
  %v467 = vadd.f32 %v451, %v63
  %v468 = vadd.f32 %v452, %v63
  %v469 = vmax.f32 %v453, 0.0
  %v470 = vmax.f32 %v454, 0.0
  %v471 = vmax.f32 %v455, 0.0
  %v472 = vmax.f32 %v456, 0.0
  %v473 = vmax.f32 %v457, 0.0
  %v474 = vmax.f32 %v458, 0.0
  %v475 = vmax.f32 %v459, 0.0
  %v476 = vmax.f32 %v460, 0.0
  %v477 = vmax.f32 %v461, 0.0
  %v478 = vmax.f32 %v462, 0.0
  %v479 = vmax.f32 %v463, 0.0
  %v480 = vmax.f32 %v464, 0.0
  %v481 = vmax.f32 %v465, 0.0
  %v482 = vmax.f32 %v466, 0.0
  %v483 = vmax.f32 %v467, 0.0
  %v484 = vmax.f32 %v468, 0.0
  %485 = vst [vmem:[#allocation2 + $0x280] sm:$0xff] %v469
  %486 = vst [vmem:[#allocation2 + $0x288] sm:$0xff] %v470
  %487 = vst [vmem:[#allocation2 + $0x290] sm:$0xff] %v471
  %488 = vst [vmem:[#allocation2 + $0x298] sm:$0xff] %v472
  %489 = vst [vmem:[#allocation2 + $0x2a0] sm:$0xff] %v473
  %490 = vst [vmem:[#allocation2 + $0x2a8] sm:$0xff] %v474
  %491 = vst [vmem:[#allocation2 + $0x2b0] sm:$0xff] %v475
  %492 = vst [vmem:[#allocation2 + $0x2b8] sm:$0xff] %v476
  %493 = vst [vmem:[#allocation2 + $0x2c0] sm:$0xff] %v477
  %494 = vst [vmem:[#allocation2 + $0x2c8] sm:$0xff] %v478
  %495 = vst [vmem:[#allocation2 + $0x2d0] sm:$0xff] %v479
  %496 = vst [vmem:[#allocation2 + $0x2d8] sm:$0xff] %v480
  %497 = vst [vmem:[#allocation2 + $0x2e0] sm:$0xff] %v481
  %498 = vst [vmem:[#allocation2 + $0x2e8] sm:$0xff] %v482
  %499 = vst [vmem:[#allocation2 + $0x2f0] sm:$0xff] %v483
  %500 = vst [vmem:[#allocation2 + $0x2f8] sm:$0xff] %v484
  %s501 = scalar_lea.vmem %s0, 640
  %v502 = vld [vmem:[%s501] sm:$0xff]
  %v503 = vld [vmem:[%s501 + $0x8] sm:$0xff]
  %v504 = vld [vmem:[%s501 + $0x10] sm:$0xff]
  %v505 = vld [vmem:[%s501 + $0x18] sm:$0xff]
  %v506 = vld [vmem:[%s501 + $0x20] sm:$0xff]
  %v507 = vld [vmem:[%s501 + $0x28] sm:$0xff]
  %v508 = vld [vmem:[%s501 + $0x30] sm:$0xff]
  %v509 = vld [vmem:[%s501 + $0x38] sm:$0xff]
  %v510 = vld [vmem:[%s501 + $0x40] sm:$0xff]
  %v511 = vld [vmem:[%s501 + $0x48] sm:$0xff]
  %v512 = vld [vmem:[%s501 + $0x50] sm:$0xff]
  %v513 = vld [vmem:[%s501 + $0x58] sm:$0xff]
  %v514 = vld [vmem:[%s501 + $0x60] sm:$0xff]
  %v515 = vld [vmem:[%s501 + $0x68] sm:$0xff]
  %v516 = vld [vmem:[%s501 + $0x70] sm:$0xff]
  %v517 = vld [vmem:[%s501 + $0x78] sm:$0xff]
  %v518 = vmul.f32 %v502, %v24
  %v519 = vmul.f32 %v503, %v24
  %v520 = vmul.f32 %v504, %v24
  %v521 = vmul.f32 %v505, %v24
  %v522 = vmul.f32 %v506, %v29
  %v523 = vmul.f32 %v507, %v29
  %v524 = vmul.f32 %v508, %v29
  %v525 = vmul.f32 %v509, %v29
  %v526 = vmul.f32 %v510, %v34
  %v527 = vmul.f32 %v511, %v34
  %v528 = vmul.f32 %v512, %v34
  %v529 = vmul.f32 %v513, %v34
  %v530 = vmul.f32 %v514, %v39
  %v531 = vmul.f32 %v515, %v39
  %v532 = vmul.f32 %v516, %v39
  %v533 = vmul.f32 %v517, %v39
  %v534 = vadd.f32 %v518, %v48
  %v535 = vadd.f32 %v519, %v48
  %v536 = vadd.f32 %v520, %v48
  %v537 = vadd.f32 %v521, %v48
  %v538 = vadd.f32 %v522, %v53
  %v539 = vadd.f32 %v523, %v53
  %v540 = vadd.f32 %v524, %v53
  %v541 = vadd.f32 %v525, %v53
  %v542 = vadd.f32 %v526, %v58
  %v543 = vadd.f32 %v527, %v58
  %v544 = vadd.f32 %v528, %v58
  %v545 = vadd.f32 %v529, %v58
  %v546 = vadd.f32 %v530, %v63
  %v547 = vadd.f32 %v531, %v63
  %v548 = vadd.f32 %v532, %v63
  %v549 = vadd.f32 %v533, %v63
  %v550 = vmax.f32 %v534, 0.0
  %v551 = vmax.f32 %v535, 0.0
  %v552 = vmax.f32 %v536, 0.0
  %v553 = vmax.f32 %v537, 0.0
  %v554 = vmax.f32 %v538, 0.0
  %v555 = vmax.f32 %v539, 0.0
  %v556 = vmax.f32 %v540, 0.0
  %v557 = vmax.f32 %v541, 0.0
  %v558 = vmax.f32 %v542, 0.0
  %v559 = vmax.f32 %v543, 0.0
  %v560 = vmax.f32 %v544, 0.0
  %v561 = vmax.f32 %v545, 0.0
  %v562 = vmax.f32 %v546, 0.0
  %v563 = vmax.f32 %v547, 0.0
  %v564 = vmax.f32 %v548, 0.0
  %v565 = vmax.f32 %v549, 0.0
  %566 = vst [vmem:[#allocation2 + $0x300] sm:$0xff] %v550
  %567 = vst [vmem:[#allocation2 + $0x308] sm:$0xff] %v551
  %568 = vst [vmem:[#allocation2 + $0x310] sm:$0xff] %v552
  %569 = vst [vmem:[#allocation2 + $0x318] sm:$0xff] %v553
  %570 = vst [vmem:[#allocation2 + $0x320] sm:$0xff] %v554
  %571 = vst [vmem:[#allocation2 + $0x328] sm:$0xff] %v555
  %572 = vst [vmem:[#allocation2 + $0x330] sm:$0xff] %v556
  %573 = vst [vmem:[#allocation2 + $0x338] sm:$0xff] %v557
  %574 = vst [vmem:[#allocation2 + $0x340] sm:$0xff] %v558
  %575 = vst [vmem:[#allocation2 + $0x348] sm:$0xff] %v559
  %576 = vst [vmem:[#allocation2 + $0x350] sm:$0xff] %v560
  %577 = vst [vmem:[#allocation2 + $0x358] sm:$0xff] %v561
  %578 = vst [vmem:[#allocation2 + $0x360] sm:$0xff] %v562
  %579 = vst [vmem:[#allocation2 + $0x368] sm:$0xff] %v563
  %580 = vst [vmem:[#allocation2 + $0x370] sm:$0xff] %v564
  %581 = vst [vmem:[#allocation2 + $0x378] sm:$0xff] %v565
  %s582 = scalar_lea.vmem %s0, 768
  %v583 = vld [vmem:[%s582] sm:$0xff]
  %v584 = vld [vmem:[%s582 + $0x8] sm:$0xff]
  %v585 = vld [vmem:[%s582 + $0x10] sm:$0xff]
  %v586 = vld [vmem:[%s582 + $0x18] sm:$0xff]
  %v587 = vld [vmem:[%s582 + $0x20] sm:$0xff]
  %v588 = vld [vmem:[%s582 + $0x28] sm:$0xff]
  %v589 = vld [vmem:[%s582 + $0x30] sm:$0xff]
  %v590 = vld [vmem:[%s582 + $0x38] sm:$0xff]
  %v591 = vld [vmem:[%s582 + $0x40] sm:$0xff]
  %v592 = vld [vmem:[%s582 + $0x48] sm:$0xff]
  %v593 = vld [vmem:[%s582 + $0x50] sm:$0xff]
  %v594 = vld [vmem:[%s582 + $0x58] sm:$0xff]
  %v595 = vld [vmem:[%s582 + $0x60] sm:$0xff]
  %v596 = vld [vmem:[%s582 + $0x68] sm:$0xff]
  %v597 = vld [vmem:[%s582 + $0x70] sm:$0xff]
  %v598 = vld [vmem:[%s582 + $0x78] sm:$0xff]
  %v599 = vmul.f32 %v583, %v24
  %v600 = vmul.f32 %v584, %v24
  %v601 = vmul.f32 %v585, %v24
  %v602 = vmul.f32 %v586, %v24
  %v603 = vmul.f32 %v587, %v29
  %v604 = vmul.f32 %v588, %v29
  %v605 = vmul.f32 %v589, %v29
  %v606 = vmul.f32 %v590, %v29
  %v607 = vmul.f32 %v591, %v34
  %v608 = vmul.f32 %v592, %v34
  %v609 = vmul.f32 %v593, %v34
  %v610 = vmul.f32 %v594, %v34
  %v611 = vmul.f32 %v595, %v39
  %v612 = vmul.f32 %v596, %v39
  %v613 = vmul.f32 %v597, %v39
  %v614 = vmul.f32 %v598, %v39
  %v615 = vadd.f32 %v599, %v48
  %v616 = vadd.f32 %v600, %v48
  %v617 = vadd.f32 %v601, %v48
  %v618 = vadd.f32 %v602, %v48
  %v619 = vadd.f32 %v603, %v53
  %v620 = vadd.f32 %v604, %v53
  %v621 = vadd.f32 %v605, %v53
  %v622 = vadd.f32 %v606, %v53
  %v623 = vadd.f32 %v607, %v58
  %v624 = vadd.f32 %v608, %v58
  %v625 = vadd.f32 %v609, %v58
  %v626 = vadd.f32 %v610, %v58
  %v627 = vadd.f32 %v611, %v63
  %v628 = vadd.f32 %v612, %v63
  %v629 = vadd.f32 %v613, %v63
  %v630 = vadd.f32 %v614, %v63
  %v631 = vmax.f32 %v615, 0.0
  %v632 = vmax.f32 %v616, 0.0
  %v633 = vmax.f32 %v617, 0.0
  %v634 = vmax.f32 %v618, 0.0
  %v635 = vmax.f32 %v619, 0.0
  %v636 = vmax.f32 %v620, 0.0
  %v637 = vmax.f32 %v621, 0.0
  %v638 = vmax.f32 %v622, 0.0
  %v639 = vmax.f32 %v623, 0.0
  %v640 = vmax.f32 %v624, 0.0
  %v641 = vmax.f32 %v625, 0.0
  %v642 = vmax.f32 %v626, 0.0
  %v643 = vmax.f32 %v627, 0.0
  %v644 = vmax.f32 %v628, 0.0
  %v645 = vmax.f32 %v629, 0.0
  %v646 = vmax.f32 %v630, 0.0
  %647 = vst [vmem:[#allocation2 + $0x380] sm:$0xff] %v631
  %648 = vst [vmem:[#allocation2 + $0x388] sm:$0xff] %v632
  %649 = vst [vmem:[#allocation2 + $0x390] sm:$0xff] %v633
  %650 = vst [vmem:[#allocation2 + $0x398] sm:$0xff] %v634
  %651 = vst [vmem:[#allocation2 + $0x3a0] sm:$0xff] %v635
  %652 = vst [vmem:[#allocation2 + $0x3a8] sm:$0xff] %v636
  %653 = vst [vmem:[#allocation2 + $0x3b0] sm:$0xff] %v637
  %654 = vst [vmem:[#allocation2 + $0x3b8] sm:$0xff] %v638
  %655 = vst [vmem:[#allocation2 + $0x3c0] sm:$0xff] %v639
  %656 = vst [vmem:[#allocation2 + $0x3c8] sm:$0xff] %v640
  %657 = vst [vmem:[#allocation2 + $0x3d0] sm:$0xff] %v641
  %658 = vst [vmem:[#allocation2 + $0x3d8] sm:$0xff] %v642
  %659 = vst [vmem:[#allocation2 + $0x3e0] sm:$0xff] %v643
  %660 = vst [vmem:[#allocation2 + $0x3e8] sm:$0xff] %v644
  %661 = vst [vmem:[#allocation2 + $0x3f0] sm:$0xff] %v645
  %662 = vst [vmem:[#allocation2 + $0x3f8] sm:$0xff] %v646
  %s663 = scalar_lea.vmem %s0, 896
  %v664 = vld [vmem:[%s663] sm:$0xff]
  %v665 = vld [vmem:[%s663 + $0x8] sm:$0xff]
  %v666 = vld [vmem:[%s663 + $0x10] sm:$0xff]
  %v667 = vld [vmem:[%s663 + $0x18] sm:$0xff]
  %v668 = vld [vmem:[%s663 + $0x20] sm:$0xff]
  %v669 = vld [vmem:[%s663 + $0x28] sm:$0xff]
  %v670 = vld [vmem:[%s663 + $0x30] sm:$0xff]
  %v671 = vld [vmem:[%s663 + $0x38] sm:$0xff]
  %v672 = vld [vmem:[%s663 + $0x40] sm:$0xff]
  %v673 = vld [vmem:[%s663 + $0x48] sm:$0xff]
  %v674 = vld [vmem:[%s663 + $0x50] sm:$0xff]
  %v675 = vld [vmem:[%s663 + $0x58] sm:$0xff]
  %v676 = vld [vmem:[%s663 + $0x60] sm:$0xff]
  %v677 = vld [vmem:[%s663 + $0x68] sm:$0xff]
  %v678 = vld [vmem:[%s663 + $0x70] sm:$0xff]
  %v679 = vld [vmem:[%s663 + $0x78] sm:$0xff]
  %v680 = vmul.f32 %v664, %v24
  %v681 = vmul.f32 %v665, %v24
  %v682 = vmul.f32 %v666, %v24
  %v683 = vmul.f32 %v667, %v24
  %v684 = vmul.f32 %v668, %v29
  %v685 = vmul.f32 %v669, %v29
  %v686 = vmul.f32 %v670, %v29
  %v687 = vmul.f32 %v671, %v29
  %v688 = vmul.f32 %v672, %v34
  %v689 = vmul.f32 %v673, %v34
  %v690 = vmul.f32 %v674, %v34
  %v691 = vmul.f32 %v675, %v34
  %v692 = vmul.f32 %v676, %v39
  %v693 = vmul.f32 %v677, %v39
  %v694 = vmul.f32 %v678, %v39
  %v695 = vmul.f32 %v679, %v39
  %v696 = vadd.f32 %v680, %v48
  %v697 = vadd.f32 %v681, %v48
  %v698 = vadd.f32 %v682, %v48
  %v699 = vadd.f32 %v683, %v48
  %v700 = vadd.f32 %v684, %v53
  %v701 = vadd.f32 %v685, %v53
  %v702 = vadd.f32 %v686, %v53
  %v703 = vadd.f32 %v687, %v53
  %v704 = vadd.f32 %v688, %v58
  %v705 = vadd.f32 %v689, %v58
  %v706 = vadd.f32 %v690, %v58
  %v707 = vadd.f32 %v691, %v58
  %v708 = vadd.f32 %v692, %v63
  %v709 = vadd.f32 %v693, %v63
  %v710 = vadd.f32 %v694, %v63
  %v711 = vadd.f32 %v695, %v63
  %v712 = vmax.f32 %v696, 0.0
  %v713 = vmax.f32 %v697, 0.0
  %v714 = vmax.f32 %v698, 0.0
  %v715 = vmax.f32 %v699, 0.0
  %v716 = vmax.f32 %v700, 0.0
  %v717 = vmax.f32 %v701, 0.0
  %v718 = vmax.f32 %v702, 0.0
  %v719 = vmax.f32 %v703, 0.0
  %v720 = vmax.f32 %v704, 0.0
  %v721 = vmax.f32 %v705, 0.0
  %v722 = vmax.f32 %v706, 0.0
  %v723 = vmax.f32 %v707, 0.0
  %v724 = vmax.f32 %v708, 0.0
  %v725 = vmax.f32 %v709, 0.0
  %v726 = vmax.f32 %v710, 0.0
  %v727 = vmax.f32 %v711, 0.0
  %728 = vst [vmem:[#allocation2 + $0x400] sm:$0xff] %v712
  %729 = vst [vmem:[#allocation2 + $0x408] sm:$0xff] %v713
  %730 = vst [vmem:[#allocation2 + $0x410] sm:$0xff] %v714
  %731 = vst [vmem:[#allocation2 + $0x418] sm:$0xff] %v715
  %732 = vst [vmem:[#allocation2 + $0x420] sm:$0xff] %v716
  %733 = vst [vmem:[#allocation2 + $0x428] sm:$0xff] %v717
  %734 = vst [vmem:[#allocation2 + $0x430] sm:$0xff] %v718
  %735 = vst [vmem:[#allocation2 + $0x438] sm:$0xff] %v719
  %736 = vst [vmem:[#allocation2 + $0x440] sm:$0xff] %v720
  %737 = vst [vmem:[#allocation2 + $0x448] sm:$0xff] %v721
  %738 = vst [vmem:[#allocation2 + $0x450] sm:$0xff] %v722
  %739 = vst [vmem:[#allocation2 + $0x458] sm:$0xff] %v723
  %740 = vst [vmem:[#allocation2 + $0x460] sm:$0xff] %v724
  %741 = vst [vmem:[#allocation2 + $0x468] sm:$0xff] %v725
  %742 = vst [vmem:[#allocation2 + $0x470] sm:$0xff] %v726
  %743 = vst [vmem:[#allocation2 + $0x478] sm:$0xff] %v727
  %v744 = vld [vmem:[%s1] sm:$0xff]
  %v745 = vld [vmem:[%s1 + $0x8] sm:$0xff]
  %v746 = vld [vmem:[%s1 + $0x10] sm:$0xff]
  %v747 = vld [vmem:[%s1 + $0x18] sm:$0xff]
  %v748 = vld [vmem:[#allocation2] sm:$0xff]
  %v749 = vld [vmem:[#allocation2 + $0x8] sm:$0xff]
  %v750 = vld [vmem:[#allocation2 + $0x10] sm:$0xff]
  %v751 = vld [vmem:[#allocation2 + $0x18] sm:$0xff]
  %v752 = vld [vmem:[#allocation2 + $0x20] sm:$0xff]
  %v753 = vld [vmem:[#allocation2 + $0x28] sm:$0xff]
  %v754 = vld [vmem:[#allocation2 + $0x30] sm:$0xff]
  %v755 = vld [vmem:[#allocation2 + $0x38] sm:$0xff]
  %v756 = vld [vmem:[#allocation2 + $0x40] sm:$0xff]
  %v757 = vld [vmem:[#allocation2 + $0x48] sm:$0xff]
  %v758 = vld [vmem:[#allocation2 + $0x50] sm:$0xff]
  %v759 = vld [vmem:[#allocation2 + $0x58] sm:$0xff]
  %v760 = vld [vmem:[#allocation2 + $0x60] sm:$0xff]
  %v761 = vld [vmem:[#allocation2 + $0x68] sm:$0xff]
  %v762 = vld [vmem:[#allocation2 + $0x70] sm:$0xff]
  %v763 = vld [vmem:[#allocation2 + $0x78] sm:$0xff]
  %v764 = vld [vmem:[#allocation2 + $0x80] sm:$0xff]
  %v765 = vld [vmem:[#allocation2 + $0x88] sm:$0xff]
  %v766 = vld [vmem:[#allocation2 + $0x90] sm:$0xff]
  %v767 = vld [vmem:[#allocation2 + $0x98] sm:$0xff]
  %v768 = vld [vmem:[#allocation2 + $0xa0] sm:$0xff]
  %v769 = vld [vmem:[#allocation2 + $0xa8] sm:$0xff]
  %v770 = vld [vmem:[#allocation2 + $0xb0] sm:$0xff]
  %v771 = vld [vmem:[#allocation2 + $0xb8] sm:$0xff]
  %v772 = vld [vmem:[#allocation2 + $0xc0] sm:$0xff]
  %v773 = vld [vmem:[#allocation2 + $0xc8] sm:$0xff]
  %v774 = vld [vmem:[#allocation2 + $0xd0] sm:$0xff]
  %v775 = vld [vmem:[#allocation2 + $0xd8] sm:$0xff]
  %v776 = vld [vmem:[#allocation2 + $0xe0] sm:$0xff]
  %v777 = vld [vmem:[#allocation2 + $0xe8] sm:$0xff]
  %v778 = vld [vmem:[#allocation2 + $0xf0] sm:$0xff]
  %v779 = vld [vmem:[#allocation2 + $0xf8] sm:$0xff]
  %v780 = vld [vmem:[#allocation2 + $0x100] sm:$0xff]
  %v781 = vld [vmem:[#allocation2 + $0x108] sm:$0xff]
  %v782 = vld [vmem:[#allocation2 + $0x110] sm:$0xff]
  %v783 = vld [vmem:[#allocation2 + $0x118] sm:$0xff]
  %v784 = vld [vmem:[#allocation2 + $0x120] sm:$0xff]
  %v785 = vld [vmem:[#allocation2 + $0x128] sm:$0xff]
  %v786 = vld [vmem:[#allocation2 + $0x130] sm:$0xff]
  %v787 = vld [vmem:[#allocation2 + $0x138] sm:$0xff]
  %v788 = vld [vmem:[#allocation2 + $0x140] sm:$0xff]
  %v789 = vld [vmem:[#allocation2 + $0x148] sm:$0xff]
  %v790 = vld [vmem:[#allocation2 + $0x150] sm:$0xff]
  %v791 = vld [vmem:[#allocation2 + $0x158] sm:$0xff]
  %v792 = vld [vmem:[#allocation2 + $0x160] sm:$0xff]
  %v793 = vld [vmem:[#allocation2 + $0x168] sm:$0xff]
  %v794 = vld [vmem:[#allocation2 + $0x170] sm:$0xff]
  %v795 = vld [vmem:[#allocation2 + $0x178] sm:$0xff]
  %vm796 = vcmask 785408
  %v798 = vsel %vm796, %v744, 0
  %v801 = vsel %vm796, %v745, 0
  %v804 = vsel %vm796, %v746, 0
  %v807 = vsel %vm796, %v747, 0
  %809 = vmatprep.subr.mxu0 %v749
  %810 = vmatpush1.msra.mxu0 %v748
  %811 = vmatprep.subr.mxu0 %v753
  %812 = vmatpush1.msra.mxu0 %v752
  %813 = vmatprep.subr.mxu0 %v757
  %814 = vmatpush1.msra.mxu0 %v756
  %815 = vmatprep.subr.mxu0 %v761
  %816 = vmatpush1.msra.mxu0 %v760
  %817 = vmatprep.subr.mxu0 %v765
  %818 = vmatpush1.msra.mxu0 %v764
  %819 = vmatprep.subr.mxu0 %v769
  %820 = vmatpush1.msra.mxu0 %v768
  %821 = vmatprep.subr.mxu0 %v773
  %822 = vmatpush1.msra.mxu0 %v772
  %823 = vmatprep.subr.mxu0 %v777
  %824 = vmatpush1.msra.mxu0 %v776
  %825 = vmatprep.subr.mxu0 %v781
  %826 = vmatpush1.msra.mxu0 %v780
  %827 = vmatprep.subr.mxu0 %v785
  %828 = vmatpush1.msra.mxu0 %v784
  %829 = vmatprep.subr.mxu0 %v789
  %830 = vmatpush1.msra.mxu0 %v788
  %831 = vmatprep.subr.mxu0 %v793
  %832 = vmatpush1.msra.mxu0 %v792
  %833 = vmatprep.subr.mxu0 0.0
  %834 = vmatpush1.msra.mxu0 0.0
  %835 = vmatprep.subr.mxu0 0.0
  %836 = vmatpush1.msra.mxu0 0.0
  %837 = vmatprep.subr.mxu0 0.0
  %838 = vmatpush1.msra.mxu0 0.0
  %839 = vmatprep.subr.mxu0 0.0
  %840 = vmatpush1.msra.mxu0 0.0
  %841 = vmatprep.subr.mxu0 0.0
  %842 = vmatpush1.msra.mxu0 0.0
  %843 = vmatprep.subr.mxu0 0.0
  %844 = vmatpush1.msra.mxu0 0.0
  %845 = vmatprep.subr.mxu0 0.0
  %846 = vmatpush1.msra.mxu0 0.0
  %847 = vmatprep.subr.mxu0 0.0
  %848 = vmatpush1.msra.mxu0 0.0
  %849 = vmatprep.subr.mxu0 0.0
  %850 = vmatpush1.msra.mxu0 0.0
  %851 = vmatprep.subr.mxu0 0.0
  %852 = vmatpush1.msra.mxu0 0.0
  %853 = vmatprep.subr.mxu0 0.0
  %854 = vmatpush1.msra.mxu0 0.0
  %855 = vmatprep.subr.mxu0 0.0
  %856 = vmatpush1.msra.mxu0 0.0
  %857 = vmatprep.subr.mxu0 0.0
  %858 = vmatpush1.msra.mxu0 0.0
  %859 = vmatprep.subr.mxu0 0.0
  %860 = vmatpush1.msra.mxu0 0.0
  %861 = vmatprep.subr.mxu0 0.0
  %862 = vmatpush1.msra.mxu0 0.0
  %863 = vmatprep.subr.mxu0 0.0
  %864 = vmatpush1.msra.mxu0 0.0
  %865 = vmatprep.subr.mxu0 0.0
  %866 = vmatpush1.msra.mxu0 0.0
  %867 = vmatprep.subr.mxu0 0.0
  %868 = vmatpush1.msra.mxu0 0.0
  %869 = vmatprep.subr.mxu0 0.0
  %870 = vmatpush1.msra.mxu0 0.0
  %871 = vmatprep.subr.mxu0 0.0
  %872 = vmatpush1.msra.mxu0 0.0
  %873 = vmatprep.mubr.f32.mxu0 0.0
  %874 = vmatmul.mubr.f32.gmra.mrb[0].mxu0 %v798
  %v875 = vpop.f32.mrb[0].mxu0
  %v876 = vadd.f32 0.0, %v875
  %v877 = vpop.f32.mrb[0].mxu0
  %v878 = vadd.f32 0.0, %v877
  %879 = vmatprep.mubr.f32.mxu0 0.0
  %880 = vmatmul.mubr.f32.gmra.mrb[0].mxu0 %v801
  %v881 = vpop.f32.mrb[0].mxu0
  %v882 = vadd.f32 0.0, %v881
  %v883 = vpop.f32.mrb[0].mxu0
  %v884 = vadd.f32 0.0, %v883
  %885 = vmatprep.mubr.f32.mxu0 0.0
  %886 = vmatmul.mubr.f32.gmra.mrb[0].mxu0 %v804
  %v887 = vpop.f32.mrb[0].mxu0
  %v888 = vadd.f32 0.0, %v887
  %v889 = vpop.f32.mrb[0].mxu0
  %v890 = vadd.f32 0.0, %v889
  %891 = vmatprep.mubr.f32.mxu0 0.0
  %892 = vmatmul.mubr.f32.gmra.mrb[0].mxu0 %v807
  %v893 = vpop.f32.mrb[0].mxu0
  %v894 = vadd.f32 0.0, %v893
  %v895 = vpop.f32.mrb[0].mxu0
  %v896 = vadd.f32 0.0, %v895
  %897 = vdwg.mxu0
  %898 = vmatprep.subr.mxu0 %v751
  %899 = vmatpush1.msra.mxu0 %v750
  %900 = vmatprep.subr.mxu0 %v755
  %901 = vmatpush1.msra.mxu0 %v754
  %902 = vmatprep.subr.mxu0 %v759
  %903 = vmatpush1.msra.mxu0 %v758
  %904 = vmatprep.subr.mxu0 %v763
  %905 = vmatpush1.msra.mxu0 %v762
  %906 = vmatprep.subr.mxu0 %v767
  %907 = vmatpush1.msra.mxu0 %v766
  %908 = vmatprep.subr.mxu0 %v771
  %909 = vmatpush1.msra.mxu0 %v770
  %910 = vmatprep.subr.mxu0 %v775
  %911 = vmatpush1.msra.mxu0 %v774
  %912 = vmatprep.subr.mxu0 %v779
  %913 = vmatpush1.msra.mxu0 %v778
  %914 = vmatprep.subr.mxu0 %v783
  %915 = vmatpush1.msra.mxu0 %v782
  %916 = vmatprep.subr.mxu0 %v787
  %917 = vmatpush1.msra.mxu0 %v786
  %918 = vmatprep.subr.mxu0 %v791
  %919 = vmatpush1.msra.mxu0 %v790
  %920 = vmatprep.subr.mxu0 %v795
  %921 = vmatpush1.msra.mxu0 %v794
  %922 = vmatprep.subr.mxu0 0.0
  %923 = vmatpush1.msra.mxu0 0.0
  %924 = vmatprep.subr.mxu0 0.0
  %925 = vmatpush1.msra.mxu0 0.0
  %926 = vmatprep.subr.mxu0 0.0
  %927 = vmatpush1.msra.mxu0 0.0
  %928 = vmatprep.subr.mxu0 0.0
  %929 = vmatpush1.msra.mxu0 0.0
  %930 = vmatprep.subr.mxu0 0.0
  %931 = vmatpush1.msra.mxu0 0.0
  %932 = vmatprep.subr.mxu0 0.0
  %933 = vmatpush1.msra.mxu0 0.0
  %934 = vmatprep.subr.mxu0 0.0
  %935 = vmatpush1.msra.mxu0 0.0
  %936 = vmatprep.subr.mxu0 0.0
  %937 = vmatpush1.msra.mxu0 0.0
  %938 = vmatprep.subr.mxu0 0.0
  %939 = vmatpush1.msra.mxu0 0.0
  %940 = vmatprep.subr.mxu0 0.0
  %941 = vmatpush1.msra.mxu0 0.0
  %942 = vmatprep.subr.mxu0 0.0
  %943 = vmatpush1.msra.mxu0 0.0
  %944 = vmatprep.subr.mxu0 0.0
  %945 = vmatpush1.msra.mxu0 0.0
  %946 = vmatprep.subr.mxu0 0.0
  %947 = vmatpush1.msra.mxu0 0.0
  %948 = vmatprep.subr.mxu0 0.0
  %949 = vmatpush1.msra.mxu0 0.0
  %950 = vmatprep.subr.mxu0 0.0
  %951 = vmatpush1.msra.mxu0 0.0
  %952 = vmatprep.subr.mxu0 0.0
  %953 = vmatpush1.msra.mxu0 0.0
  %954 = vmatprep.subr.mxu0 0.0
  %955 = vmatpush1.msra.mxu0 0.0
  %956 = vmatprep.subr.mxu0 0.0
  %957 = vmatpush1.msra.mxu0 0.0
  %958 = vmatprep.subr.mxu0 0.0
  %959 = vmatpush1.msra.mxu0 0.0
  %960 = vmatprep.subr.mxu0 0.0
  %961 = vmatpush1.msra.mxu0 0.0
  %962 = vmatprep.mubr.f32.mxu0 0.0
  %963 = vmatmul.mubr.f32.gmra.mrb[0].mxu0 %v798
  %v964 = vpop.f32.mrb[0].mxu0
  %v965 = vadd.f32 0.0, %v964
  %v966 = vpop.f32.mrb[0].mxu0
  %v967 = vadd.f32 0.0, %v966
  %968 = vmatprep.mubr.f32.mxu0 0.0
  %969 = vmatmul.mubr.f32.gmra.mrb[0].mxu0 %v801
  %v970 = vpop.f32.mrb[0].mxu0
  %v971 = vadd.f32 0.0, %v970
  %v972 = vpop.f32.mrb[0].mxu0
  %v973 = vadd.f32 0.0, %v972
  %974 = vmatprep.mubr.f32.mxu0 0.0
  %975 = vmatmul.mubr.f32.gmra.mrb[0].mxu0 %v804
  %v976 = vpop.f32.mrb[0].mxu0
  %v977 = vadd.f32 0.0, %v976
  %v978 = vpop.f32.mrb[0].mxu0
  %v979 = vadd.f32 0.0, %v978
  %980 = vmatprep.mubr.f32.mxu0 0.0
  %981 = vmatmul.mubr.f32.gmra.mrb[0].mxu0 %v807
  %v982 = vpop.f32.mrb[0].mxu0
  %v983 = vadd.f32 0.0, %v982
  %v984 = vpop.f32.mrb[0].mxu0
  %v985 = vadd.f32 0.0, %v984
  %986 = vdwg.mxu0
  %987 = vst [vmem:[%s4] sm:$0xff] %v876
  %988 = vst [vmem:[%s4 + $0x8] sm:$0xff] %v878
  %989 = vst [vmem:[%s4 + $0x10] sm:$0xff] %v965
  %990 = vst [vmem:[%s4 + $0x18] sm:$0xff] %v967
  %991 = vst [vmem:[%s4 + $0x20] sm:$0xff] %v882
  %992 = vst [vmem:[%s4 + $0x28] sm:$0xff] %v884
  %993 = vst [vmem:[%s4 + $0x30] sm:$0xff] %v971
  %994 = vst [vmem:[%s4 + $0x38] sm:$0xff] %v973
  %995 = vst [vmem:[%s4 + $0x40] sm:$0xff] %v888
  %996 = vst [vmem:[%s4 + $0x48] sm:$0xff] %v890
  %997 = vst [vmem:[%s4 + $0x50] sm:$0xff] %v977
  %998 = vst [vmem:[%s4 + $0x58] sm:$0xff] %v979
  %999 = vst [vmem:[%s4 + $0x60] sm:$0xff] %v894
  %1000 = vst [vmem:[%s4 + $0x68] sm:$0xff] %v896
  %1001 = vst [vmem:[%s4 + $0x70] sm:$0xff] %v983
  %1002 = vst [vmem:[%s4 + $0x78] sm:$0xff] %v985
  %v1003 = vld [vmem:[#allocation2 + $0x80] sm:$0xff]
  %v1004 = vld [vmem:[#allocation2 + $0x88] sm:$0xff]
  %v1005 = vld [vmem:[#allocation2 + $0x90] sm:$0xff]
  %v1006 = vld [vmem:[#allocation2 + $0x98] sm:$0xff]
  %v1007 = vld [vmem:[#allocation2 + $0xa0] sm:$0xff]
  %v1008 = vld [vmem:[#allocation2 + $0xa8] sm:$0xff]
  %v1009 = vld [vmem:[#allocation2 + $0xb0] sm:$0xff]
  %v1010 = vld [vmem:[#allocation2 + $0xb8] sm:$0xff]
  %v1011 = vld [vmem:[#allocation2 + $0xc0] sm:$0xff]
  %v1012 = vld [vmem:[#allocation2 + $0xc8] sm:$0xff]
  %v1013 = vld [vmem:[#allocation2 + $0xd0] sm:$0xff]
  %v1014 = vld [vmem:[#allocation2 + $0xd8] sm:$0xff]
  %v1015 = vld [vmem:[#allocation2 + $0xe0] sm:$0xff]
  %v1016 = vld [vmem:[#allocation2 + $0xe8] sm:$0xff]
  %v1017 = vld [vmem:[#allocation2 + $0xf0] sm:$0xff]
  %v1018 = vld [vmem:[#allocation2 + $0xf8] sm:$0xff]
  %v1019 = vld [vmem:[#allocation2 + $0x100] sm:$0xff]
  %v1020 = vld [vmem:[#allocation2 + $0x108] sm:$0xff]
  %v1021 = vld [vmem:[#allocation2 + $0x110] sm:$0xff]
  %v1022 = vld [vmem:[#allocation2 + $0x118] sm:$0xff]
  %v1023 = vld [vmem:[#allocation2 + $0x120] sm:$0xff]
  %v1024 = vld [vmem:[#allocation2 + $0x128] sm:$0xff]
  %v1025 = vld [vmem:[#allocation2 + $0x130] sm:$0xff]
  %v1026 = vld [vmem:[#allocation2 + $0x138] sm:$0xff]
  %v1027 = vld [vmem:[#allocation2 + $0x140] sm:$0xff]
  %v1028 = vld [vmem:[#allocation2 + $0x148] sm:$0xff]
  %v1029 = vld [vmem:[#allocation2 + $0x150] sm:$0xff]
  %v1030 = vld [vmem:[#allocation2 + $0x158] sm:$0xff]
  %v1031 = vld [vmem:[#allocation2 + $0x160] sm:$0xff]
  %v1032 = vld [vmem:[#allocation2 + $0x168] sm:$0xff]
  %v1033 = vld [vmem:[#allocation2 + $0x170] sm:$0xff]
  %v1034 = vld [vmem:[#allocation2 + $0x178] sm:$0xff]
  %v1035 = vld [vmem:[#allocation2 + $0x180] sm:$0xff]
  %v1036 = vld [vmem:[#allocation2 + $0x188] sm:$0xff]
  %v1037 = vld [vmem:[#allocation2 + $0x190] sm:$0xff]
  %v1038 = vld [vmem:[#allocation2 + $0x198] sm:$0xff]
  %v1039 = vld [vmem:[#allocation2 + $0x1a0] sm:$0xff]
  %v1040 = vld [vmem:[#allocation2 + $0x1a8] sm:$0xff]
  %v1041 = vld [vmem:[#allocation2 + $0x1b0] sm:$0xff]
  %v1042 = vld [vmem:[#allocation2 + $0x1b8] sm:$0xff]
  %v1043 = vld [vmem:[#allocation2 + $0x1c0] sm:$0xff]
  %v1044 = vld [vmem:[#allocation2 + $0x1c8] sm:$0xff]
  %v1045 = vld [vmem:[#allocation2 + $0x1d0] sm:$0xff]
  %v1046 = vld [vmem:[#allocation2 + $0x1d8] sm:$0xff]
  %v1047 = vld [vmem:[#allocation2 + $0x1e0] sm:$0xff]
  %v1048 = vld [vmem:[#allocation2 + $0x1e8] sm:$0xff]
  %v1049 = vld [vmem:[#allocation2 + $0x1f0] sm:$0xff]
  %v1050 = vld [vmem:[#allocation2 + $0x1f8] sm:$0xff]
  %1051 = vmatprep.subr.mxu0 %v1004
  %1052 = vmatpush1.msra.mxu0 %v1003
  %1053 = vmatprep.subr.mxu0 %v1008
  %1054 = vmatpush1.msra.mxu0 %v1007
  %1055 = vmatprep.subr.mxu0 %v1012
  %1056 = vmatpush1.msra.mxu0 %v1011
  %1057 = vmatprep.subr.mxu0 %v1016
  %1058 = vmatpush1.msra.mxu0 %v1015
  %1059 = vmatprep.subr.mxu0 %v1020
  %1060 = vmatpush1.msra.mxu0 %v1019
  %1061 = vmatprep.subr.mxu0 %v1024
  %1062 = vmatpush1.msra.mxu0 %v1023
  %1063 = vmatprep.subr.mxu0 %v1028
  %1064 = vmatpush1.msra.mxu0 %v1027
  %1065 = vmatprep.subr.mxu0 %v1032
  %1066 = vmatpush1.msra.mxu0 %v1031
  %1067 = vmatprep.subr.mxu0 %v1036
  %1068 = vmatpush1.msra.mxu0 %v1035
  %1069 = vmatprep.subr.mxu0 %v1040
  %1070 = vmatpush1.msra.mxu0 %v1039
  %1071 = vmatprep.subr.mxu0 %v1044
  %1072 = vmatpush1.msra.mxu0 %v1043
  %1073 = vmatprep.subr.mxu0 %v1048
  %1074 = vmatpush1.msra.mxu0 %v1047
  %1075 = vmatprep.subr.mxu0 0.0
  %1076 = vmatpush1.msra.mxu0 0.0
  %1077 = vmatprep.subr.mxu0 0.0
  %1078 = vmatpush1.msra.mxu0 0.0
  %1079 = vmatprep.subr.mxu0 0.0
  %1080 = vmatpush1.msra.mxu0 0.0
  %1081 = vmatprep.subr.mxu0 0.0
  %1082 = vmatpush1.msra.mxu0 0.0
  %1083 = vmatprep.subr.mxu0 0.0
  %1084 = vmatpush1.msra.mxu0 0.0
  %1085 = vmatprep.subr.mxu0 0.0
  %1086 = vmatpush1.msra.mxu0 0.0
  %1087 = vmatprep.subr.mxu0 0.0
  %1088 = vmatpush1.msra.mxu0 0.0
  %1089 = vmatprep.subr.mxu0 0.0
  %1090 = vmatpush1.msra.mxu0 0.0
  %1091 = vmatprep.subr.mxu0 0.0
  %1092 = vmatpush1.msra.mxu0 0.0
  %1093 = vmatprep.subr.mxu0 0.0
  %1094 = vmatpush1.msra.mxu0 0.0
  %1095 = vmatprep.subr.mxu0 0.0
  %1096 = vmatpush1.msra.mxu0 0.0
  %1097 = vmatprep.subr.mxu0 0.0
  %1098 = vmatpush1.msra.mxu0 0.0
  %1099 = vmatprep.subr.mxu0 0.0
  %1100 = vmatpush1.msra.mxu0 0.0
  %1101 = vmatprep.subr.mxu0 0.0
  %1102 = vmatpush1.msra.mxu0 0.0
  %1103 = vmatprep.subr.mxu0 0.0
  %1104 = vmatpush1.msra.mxu0 0.0
  %1105 = vmatprep.subr.mxu0 0.0
  %1106 = vmatpush1.msra.mxu0 0.0
  %1107 = vmatprep.subr.mxu0 0.0
  %1108 = vmatpush1.msra.mxu0 0.0
  %1109 = vmatprep.subr.mxu0 0.0
  %1110 = vmatpush1.msra.mxu0 0.0
  %1111 = vmatprep.subr.mxu0 0.0
  %1112 = vmatpush1.msra.mxu0 0.0
  %1113 = vmatprep.subr.mxu0 0.0
  %1114 = vmatpush1.msra.mxu0 0.0
  %1115 = vmatprep.mubr.f32.mxu0 0.0
  %1116 = vmatmul.mubr.f32.gmra.mrb[0].mxu0 %v798
  %v1117 = vpop.f32.mrb[0].mxu0
  %v1118 = vadd.f32 0.0, %v1117
  %v1119 = vpop.f32.mrb[0].mxu0
  %v1120 = vadd.f32 0.0, %v1119
  %1121 = vmatprep.mubr.f32.mxu0 0.0
  %1122 = vmatmul.mubr.f32.gmra.mrb[0].mxu0 %v801
  %v1123 = vpop.f32.mrb[0].mxu0
  %v1124 = vadd.f32 0.0, %v1123
  %v1125 = vpop.f32.mrb[0].mxu0
  %v1126 = vadd.f32 0.0, %v1125
  %1127 = vmatprep.mubr.f32.mxu0 0.0
  %1128 = vmatmul.mubr.f32.gmra.mrb[0].mxu0 %v804
  %v1129 = vpop.f32.mrb[0].mxu0
  %v1130 = vadd.f32 0.0, %v1129
  %v1131 = vpop.f32.mrb[0].mxu0
  %v1132 = vadd.f32 0.0, %v1131
  %1133 = vmatprep.mubr.f32.mxu0 0.0
  %1134 = vmatmul.mubr.f32.gmra.mrb[0].mxu0 %v807
  %v1135 = vpop.f32.mrb[0].mxu0
  %v1136 = vadd.f32 0.0, %v1135
  %v1137 = vpop.f32.mrb[0].mxu0
  %v1138 = vadd.f32 0.0, %v1137
  %1139 = vdwg.mxu0
  %1140 = vmatprep.subr.mxu0 %v1006
  %1141 = vmatpush1.msra.mxu0 %v1005
  %1142 = vmatprep.subr.mxu0 %v1010
  %1143 = vmatpush1.msra.mxu0 %v1009
  %1144 = vmatprep.subr.mxu0 %v1014
  %1145 = vmatpush1.msra.mxu0 %v1013
  %1146 = vmatprep.subr.mxu0 %v1018
  %1147 = vmatpush1.msra.mxu0 %v1017
  %1148 = vmatprep.subr.mxu0 %v1022
  %1149 = vmatpush1.msra.mxu0 %v1021
  %1150 = vmatprep.subr.mxu0 %v1026
  %1151 = vmatpush1.msra.mxu0 %v1025
  %1152 = vmatprep.subr.mxu0 %v1030
  %1153 = vmatpush1.msra.mxu0 %v1029
  %1154 = vmatprep.subr.mxu0 %v1034
  %1155 = vmatpush1.msra.mxu0 %v1033
  %1156 = vmatprep.subr.mxu0 %v1038
  %1157 = vmatpush1.msra.mxu0 %v1037
  %1158 = vmatprep.subr.mxu0 %v1042
  %1159 = vmatpush1.msra.mxu0 %v1041
  %1160 = vmatprep.subr.mxu0 %v1046
  %1161 = vmatpush1.msra.mxu0 %v1045
  %1162 = vmatprep.subr.mxu0 %v1050
  %1163 = vmatpush1.msra.mxu0 %v1049
  %1164 = vmatprep.subr.mxu0 0.0
  %1165 = vmatpush1.msra.mxu0 0.0
  %1166 = vmatprep.subr.mxu0 0.0
  %1167 = vmatpush1.msra.mxu0 0.0
  %1168 = vmatprep.subr.mxu0 0.0
  %1169 = vmatpush1.msra.mxu0 0.0
  %1170 = vmatprep.subr.mxu0 0.0
  %1171 = vmatpush1.msra.mxu0 0.0
  %1172 = vmatprep.subr.mxu0 0.0
  %1173 = vmatpush1.msra.mxu0 0.0
  %1174 = vmatprep.subr.mxu0 0.0
  %1175 = vmatpush1.msra.mxu0 0.0
  %1176 = vmatprep.subr.mxu0 0.0
  %1177 = vmatpush1.msra.mxu0 0.0
  %1178 = vmatprep.subr.mxu0 0.0
  %1179 = vmatpush1.msra.mxu0 0.0
  %1180 = vmatprep.subr.mxu0 0.0
  %1181 = vmatpush1.msra.mxu0 0.0
  %1182 = vmatprep.subr.mxu0 0.0
  %1183 = vmatpush1.msra.mxu0 0.0
  %1184 = vmatprep.subr.mxu0 0.0
  %1185 = vmatpush1.msra.mxu0 0.0
  %1186 = vmatprep.subr.mxu0 0.0
  %1187 = vmatpush1.msra.mxu0 0.0
  %1188 = vmatprep.subr.mxu0 0.0
  %1189 = vmatpush1.msra.mxu0 0.0
  %1190 = vmatprep.subr.mxu0 0.0
  %1191 = vmatpush1.msra.mxu0 0.0
  %1192 = vmatprep.subr.mxu0 0.0
  %1193 = vmatpush1.msra.mxu0 0.0
  %1194 = vmatprep.subr.mxu0 0.0
  %1195 = vmatpush1.msra.mxu0 0.0
  %1196 = vmatprep.subr.mxu0 0.0
  %1197 = vmatpush1.msra.mxu0 0.0
  %1198 = vmatprep.subr.mxu0 0.0
  %1199 = vmatpush1.msra.mxu0 0.0
  %1200 = vmatprep.subr.mxu0 0.0
  %1201 = vmatpush1.msra.mxu0 0.0
  %1202 = vmatprep.subr.mxu0 0.0
  %1203 = vmatpush1.msra.mxu0 0.0
  %1204 = vmatprep.mubr.f32.mxu0 0.0
  %1205 = vmatmul.mubr.f32.gmra.mrb[0].mxu0 %v798
  %v1206 = vpop.f32.mrb[0].mxu0
  %v1207 = vadd.f32 0.0, %v1206
  %v1208 = vpop.f32.mrb[0].mxu0
  %v1209 = vadd.f32 0.0, %v1208
  %1210 = vmatprep.mubr.f32.mxu0 0.0
  %1211 = vmatmul.mubr.f32.gmra.mrb[0].mxu0 %v801
  %v1212 = vpop.f32.mrb[0].mxu0
  %v1213 = vadd.f32 0.0, %v1212
  %v1214 = vpop.f32.mrb[0].mxu0
  %v1215 = vadd.f32 0.0, %v1214
  %1216 = vmatprep.mubr.f32.mxu0 0.0
  %1217 = vmatmul.mubr.f32.gmra.mrb[0].mxu0 %v804
  %v1218 = vpop.f32.mrb[0].mxu0
  %v1219 = vadd.f32 0.0, %v1218
  %v1220 = vpop.f32.mrb[0].mxu0
  %v1221 = vadd.f32 0.0, %v1220
  %1222 = vmatprep.mubr.f32.mxu0 0.0
  %1223 = vmatmul.mubr.f32.gmra.mrb[0].mxu0 %v807
  %v1224 = vpop.f32.mrb[0].mxu0
  %v1225 = vadd.f32 0.0, %v1224
  %v1226 = vpop.f32.mrb[0].mxu0
  %v1227 = vadd.f32 0.0, %v1226
  %1228 = vdwg.mxu0
  %s1229 = scalar_lea.vmem %s4, 128
  %1230 = vst [vmem:[%s1229] sm:$0xff] %v1118
  %1231 = vst [vmem:[%s1229 + $0x8] sm:$0xff] %v1120
  %1232 = vst [vmem:[%s1229 + $0x10] sm:$0xff] %v1207
  %1233 = vst [vmem:[%s1229 + $0x18] sm:$0xff] %v1209
  %1234 = vst [vmem:[%s1229 + $0x20] sm:$0xff] %v1124
  %1235 = vst [vmem:[%s1229 + $0x28] sm:$0xff] %v1126
  %1236 = vst [vmem:[%s1229 + $0x30] sm:$0xff] %v1213
  %1237 = vst [vmem:[%s1229 + $0x38] sm:$0xff] %v1215
  %1238 = vst [vmem:[%s1229 + $0x40] sm:$0xff] %v1130
  %1239 = vst [vmem:[%s1229 + $0x48] sm:$0xff] %v1132
  %1240 = vst [vmem:[%s1229 + $0x50] sm:$0xff] %v1219
  %1241 = vst [vmem:[%s1229 + $0x58] sm:$0xff] %v1221
  %1242 = vst [vmem:[%s1229 + $0x60] sm:$0xff] %v1136
  %1243 = vst [vmem:[%s1229 + $0x68] sm:$0xff] %v1138
  %1244 = vst [vmem:[%s1229 + $0x70] sm:$0xff] %v1225
  %1245 = vst [vmem:[%s1229 + $0x78] sm:$0xff] %v1227
  %v1246 = vld [vmem:[#allocation2 + $0x100] sm:$0xff]
  %v1247 = vld [vmem:[#allocation2 + $0x108] sm:$0xff]
  %v1248 = vld [vmem:[#allocation2 + $0x110] sm:$0xff]
  %v1249 = vld [vmem:[#allocation2 + $0x118] sm:$0xff]
  %v1250 = vld [vmem:[#allocation2 + $0x120] sm:$0xff]
  %v1251 = vld [vmem:[#allocation2 + $0x128] sm:$0xff]
  %v1252 = vld [vmem:[#allocation2 + $0x130] sm:$0xff]
  %v1253 = vld [vmem:[#allocation2 + $0x138] sm:$0xff]
  %v1254 = vld [vmem:[#allocation2 + $0x140] sm:$0xff]
  %v1255 = vld [vmem:[#allocation2 + $0x148] sm:$0xff]
  %v1256 = vld [vmem:[#allocation2 + $0x150] sm:$0xff]
  %v1257 = vld [vmem:[#allocation2 + $0x158] sm:$0xff]
  %v1258 = vld [vmem:[#allocation2 + $0x160] sm:$0xff]
  %v1259 = vld [vmem:[#allocation2 + $0x168] sm:$0xff]
  %v1260 = vld [vmem:[#allocation2 + $0x170] sm:$0xff]
  %v1261 = vld [vmem:[#allocation2 + $0x178] sm:$0xff]
  %v1262 = vld [vmem:[#allocation2 + $0x180] sm:$0xff]
  %v1263 = vld [vmem:[#allocation2 + $0x188] sm:$0xff]
  %v1264 = vld [vmem:[#allocation2 + $0x190] sm:$0xff]
  %v1265 = vld [vmem:[#allocation2 + $0x198] sm:$0xff]
  %v1266 = vld [vmem:[#allocation2 + $0x1a0] sm:$0xff]
  %v1267 = vld [vmem:[#allocation2 + $0x1a8] sm:$0xff]
  %v1268 = vld [vmem:[#allocation2 + $0x1b0] sm:$0xff]
  %v1269 = vld [vmem:[#allocation2 + $0x1b8] sm:$0xff]
  %v1270 = vld [vmem:[#allocation2 + $0x1c0] sm:$0xff]
  %v1271 = vld [vmem:[#allocation2 + $0x1c8] sm:$0xff]
  %v1272 = vld [vmem:[#allocation2 + $0x1d0] sm:$0xff]
  %v1273 = vld [vmem:[#allocation2 + $0x1d8] sm:$0xff]
  %v1274 = vld [vmem:[#allocation2 + $0x1e0] sm:$0xff]
  %v1275 = vld [vmem:[#allocation2 + $0x1e8] sm:$0xff]
  %v1276 = vld [vmem:[#allocation2 + $0x1f0] sm:$0xff]
  %v1277 = vld [vmem:[#allocation2 + $0x1f8] sm:$0xff]
  %v1278 = vld [vmem:[#allocation2 + $0x200] sm:$0xff]
  %v1279 = vld [vmem:[#allocation2 + $0x208] sm:$0xff]
  %v1280 = vld [vmem:[#allocation2 + $0x210] sm:$0xff]
  %v1281 = vld [vmem:[#allocation2 + $0x218] sm:$0xff]
  %v1282 = vld [vmem:[#allocation2 + $0x220] sm:$0xff]
  %v1283 = vld [vmem:[#allocation2 + $0x228] sm:$0xff]
  %v1284 = vld [vmem:[#allocation2 + $0x230] sm:$0xff]
  %v1285 = vld [vmem:[#allocation2 + $0x238] sm:$0xff]
  %v1286 = vld [vmem:[#allocation2 + $0x240] sm:$0xff]
  %v1287 = vld [vmem:[#allocation2 + $0x248] sm:$0xff]
  %v1288 = vld [vmem:[#allocation2 + $0x250] sm:$0xff]
  %v1289 = vld [vmem:[#allocation2 + $0x258] sm:$0xff]
  %v1290 = vld [vmem:[#allocation2 + $0x260] sm:$0xff]
  %v1291 = vld [vmem:[#allocation2 + $0x268] sm:$0xff]
  %v1292 = vld [vmem:[#allocation2 + $0x270] sm:$0xff]
  %v1293 = vld [vmem:[#allocation2 + $0x278] sm:$0xff]
  %1294 = vmatprep.subr.mxu0 %v1247
  %1295 = vmatpush1.msra.mxu0 %v1246
  %1296 = vmatprep.subr.mxu0 %v1251
  %1297 = vmatpush1.msra.mxu0 %v1250
  %1298 = vmatprep.subr.mxu0 %v1255
  %1299 = vmatpush1.msra.mxu0 %v1254
  %1300 = vmatprep.subr.mxu0 %v1259
  %1301 = vmatpush1.msra.mxu0 %v1258
  %1302 = vmatprep.subr.mxu0 %v1263
  %1303 = vmatpush1.msra.mxu0 %v1262
  %1304 = vmatprep.subr.mxu0 %v1267
  %1305 = vmatpush1.msra.mxu0 %v1266
  %1306 = vmatprep.subr.mxu0 %v1271
  %1307 = vmatpush1.msra.mxu0 %v1270
  %1308 = vmatprep.subr.mxu0 %v1275
  %1309 = vmatpush1.msra.mxu0 %v1274
  %1310 = vmatprep.subr.mxu0 %v1279
  %1311 = vmatpush1.msra.mxu0 %v1278
  %1312 = vmatprep.subr.mxu0 %v1283
  %1313 = vmatpush1.msra.mxu0 %v1282
  %1314 = vmatprep.subr.mxu0 %v1287
  %1315 = vmatpush1.msra.mxu0 %v1286
  %1316 = vmatprep.subr.mxu0 %v1291
  %1317 = vmatpush1.msra.mxu0 %v1290
  %1318 = vmatprep.subr.mxu0 0.0
  %1319 = vmatpush1.msra.mxu0 0.0
  %1320 = vmatprep.subr.mxu0 0.0
  %1321 = vmatpush1.msra.mxu0 0.0
  %1322 = vmatprep.subr.mxu0 0.0
  %1323 = vmatpush1.msra.mxu0 0.0
  %1324 = vmatprep.subr.mxu0 0.0
  %1325 = vmatpush1.msra.mxu0 0.0
  %1326 = vmatprep.subr.mxu0 0.0
  %1327 = vmatpush1.msra.mxu0 0.0
  %1328 = vmatprep.subr.mxu0 0.0
  %1329 = vmatpush1.msra.mxu0 0.0
  %1330 = vmatprep.subr.mxu0 0.0
  %1331 = vmatpush1.msra.mxu0 0.0
  %1332 = vmatprep.subr.mxu0 0.0
  %1333 = vmatpush1.msra.mxu0 0.0
  %1334 = vmatprep.subr.mxu0 0.0
  %1335 = vmatpush1.msra.mxu0 0.0
  %1336 = vmatprep.subr.mxu0 0.0
  %1337 = vmatpush1.msra.mxu0 0.0
  %1338 = vmatprep.subr.mxu0 0.0
  %1339 = vmatpush1.msra.mxu0 0.0
  %1340 = vmatprep.subr.mxu0 0.0
  %1341 = vmatpush1.msra.mxu0 0.0
  %1342 = vmatprep.subr.mxu0 0.0
  %1343 = vmatpush1.msra.mxu0 0.0
  %1344 = vmatprep.subr.mxu0 0.0
  %1345 = vmatpush1.msra.mxu0 0.0
  %1346 = vmatprep.subr.mxu0 0.0
  %1347 = vmatpush1.msra.mxu0 0.0
  %1348 = vmatprep.subr.mxu0 0.0
  %1349 = vmatpush1.msra.mxu0 0.0
  %1350 = vmatprep.subr.mxu0 0.0
  %1351 = vmatpush1.msra.mxu0 0.0
  %1352 = vmatprep.subr.mxu0 0.0
  %1353 = vmatpush1.msra.mxu0 0.0
  %1354 = vmatprep.subr.mxu0 0.0
  %1355 = vmatpush1.msra.mxu0 0.0
  %1356 = vmatprep.subr.mxu0 0.0
  %1357 = vmatpush1.msra.mxu0 0.0
  %1358 = vmatprep.mubr.f32.mxu0 0.0
  %1359 = vmatmul.mubr.f32.gmra.mrb[0].mxu0 %v798
  %v1360 = vpop.f32.mrb[0].mxu0
  %v1361 = vadd.f32 0.0, %v1360
  %v1362 = vpop.f32.mrb[0].mxu0
  %v1363 = vadd.f32 0.0, %v1362
  %1364 = vmatprep.mubr.f32.mxu0 0.0
  %1365 = vmatmul.mubr.f32.gmra.mrb[0].mxu0 %v801
  %v1366 = vpop.f32.mrb[0].mxu0
  %v1367 = vadd.f32 0.0, %v1366
  %v1368 = vpop.f32.mrb[0].mxu0
  %v1369 = vadd.f32 0.0, %v1368
  %1370 = vmatprep.mubr.f32.mxu0 0.0
  %1371 = vmatmul.mubr.f32.gmra.mrb[0].mxu0 %v804
  %v1372 = vpop.f32.mrb[0].mxu0
  %v1373 = vadd.f32 0.0, %v1372
  %v1374 = vpop.f32.mrb[0].mxu0
  %v1375 = vadd.f32 0.0, %v1374
  %1376 = vmatprep.mubr.f32.mxu0 0.0
  %1377 = vmatmul.mubr.f32.gmra.mrb[0].mxu0 %v807
  %v1378 = vpop.f32.mrb[0].mxu0
  %v1379 = vadd.f32 0.0, %v1378
  %v1380 = vpop.f32.mrb[0].mxu0
  %v1381 = vadd.f32 0.0, %v1380
  %1382 = vdwg.mxu0
  %1383 = vmatprep.subr.mxu0 %v1249
  %1384 = vmatpush1.msra.mxu0 %v1248
  %1385 = vmatprep.subr.mxu0 %v1253
  %1386 = vmatpush1.msra.mxu0 %v1252
  %1387 = vmatprep.subr.mxu0 %v1257
  %1388 = vmatpush1.msra.mxu0 %v1256
  %1389 = vmatprep.subr.mxu0 %v1261
  %1390 = vmatpush1.msra.mxu0 %v1260
  %1391 = vmatprep.subr.mxu0 %v1265
  %1392 = vmatpush1.msra.mxu0 %v1264
  %1393 = vmatprep.subr.mxu0 %v1269
  %1394 = vmatpush1.msra.mxu0 %v1268
  %1395 = vmatprep.subr.mxu0 %v1273
  %1396 = vmatpush1.msra.mxu0 %v1272
  %1397 = vmatprep.subr.mxu0 %v1277
  %1398 = vmatpush1.msra.mxu0 %v1276
  %1399 = vmatprep.subr.mxu0 %v1281
  %1400 = vmatpush1.msra.mxu0 %v1280
  %1401 = vmatprep.subr.mxu0 %v1285
  %1402 = vmatpush1.msra.mxu0 %v1284
  %1403 = vmatprep.subr.mxu0 %v1289
  %1404 = vmatpush1.msra.mxu0 %v1288
  %1405 = vmatprep.subr.mxu0 %v1293
  %1406 = vmatpush1.msra.mxu0 %v1292
  %1407 = vmatprep.subr.mxu0 0.0
  %1408 = vmatpush1.msra.mxu0 0.0
  %1409 = vmatprep.subr.mxu0 0.0
  %1410 = vmatpush1.msra.mxu0 0.0
  %1411 = vmatprep.subr.mxu0 0.0
  %1412 = vmatpush1.msra.mxu0 0.0
  %1413 = vmatprep.subr.mxu0 0.0
  %1414 = vmatpush1.msra.mxu0 0.0
  %1415 = vmatprep.subr.mxu0 0.0
  %1416 = vmatpush1.msra.mxu0 0.0
  %1417 = vmatprep.subr.mxu0 0.0
  %1418 = vmatpush1.msra.mxu0 0.0
  %1419 = vmatprep.subr.mxu0 0.0
  %1420 = vmatpush1.msra.mxu0 0.0
  %1421 = vmatprep.subr.mxu0 0.0
  %1422 = vmatpush1.msra.mxu0 0.0
  %1423 = vmatprep.subr.mxu0 0.0
  %1424 = vmatpush1.msra.mxu0 0.0
  %1425 = vmatprep.subr.mxu0 0.0
  %1426 = vmatpush1.msra.mxu0 0.0
  %1427 = vmatprep.subr.mxu0 0.0
  %1428 = vmatpush1.msra.mxu0 0.0
  %1429 = vmatprep.subr.mxu0 0.0
  %1430 = vmatpush1.msra.mxu0 0.0
  %1431 = vmatprep.subr.mxu0 0.0
  %1432 = vmatpush1.msra.mxu0 0.0
  %1433 = vmatprep.subr.mxu0 0.0
  %1434 = vmatpush1.msra.mxu0 0.0
  %1435 = vmatprep.subr.mxu0 0.0
  %1436 = vmatpush1.msra.mxu0 0.0
  %1437 = vmatprep.subr.mxu0 0.0
  %1438 = vmatpush1.msra.mxu0 0.0
  %1439 = vmatprep.subr.mxu0 0.0
  %1440 = vmatpush1.msra.mxu0 0.0
  %1441 = vmatprep.subr.mxu0 0.0
  %1442 = vmatpush1.msra.mxu0 0.0
  %1443 = vmatprep.subr.mxu0 0.0
  %1444 = vmatpush1.msra.mxu0 0.0
  %1445 = vmatprep.subr.mxu0 0.0
  %1446 = vmatpush1.msra.mxu0 0.0
  %1447 = vmatprep.mubr.f32.mxu0 0.0
  %1448 = vmatmul.mubr.f32.gmra.mrb[0].mxu0 %v798
  %v1449 = vpop.f32.mrb[0].mxu0
  %v1450 = vadd.f32 0.0, %v1449
  %v1451 = vpop.f32.mrb[0].mxu0
  %v1452 = vadd.f32 0.0, %v1451
  %1453 = vmatprep.mubr.f32.mxu0 0.0
  %1454 = vmatmul.mubr.f32.gmra.mrb[0].mxu0 %v801
  %v1455 = vpop.f32.mrb[0].mxu0
  %v1456 = vadd.f32 0.0, %v1455
  %v1457 = vpop.f32.mrb[0].mxu0
  %v1458 = vadd.f32 0.0, %v1457
  %1459 = vmatprep.mubr.f32.mxu0 0.0
  %1460 = vmatmul.mubr.f32.gmra.mrb[0].mxu0 %v804
  %v1461 = vpop.f32.mrb[0].mxu0
  %v1462 = vadd.f32 0.0, %v1461
  %v1463 = vpop.f32.mrb[0].mxu0
  %v1464 = vadd.f32 0.0, %v1463
  %1465 = vmatprep.mubr.f32.mxu0 0.0
  %1466 = vmatmul.mubr.f32.gmra.mrb[0].mxu0 %v807
  %v1467 = vpop.f32.mrb[0].mxu0
  %v1468 = vadd.f32 0.0, %v1467
  %v1469 = vpop.f32.mrb[0].mxu0
  %v1470 = vadd.f32 0.0, %v1469
  %1471 = vdwg.mxu0
  %s1472 = scalar_lea.vmem %s4, 256
  %1473 = vst [vmem:[%s1472] sm:$0xff] %v1361
  %1474 = vst [vmem:[%s1472 + $0x8] sm:$0xff] %v1363
  %1475 = vst [vmem:[%s1472 + $0x10] sm:$0xff] %v1450
  %1476 = vst [vmem:[%s1472 + $0x18] sm:$0xff] %v1452
  %1477 = vst [vmem:[%s1472 + $0x20] sm:$0xff] %v1367
  %1478 = vst [vmem:[%s1472 + $0x28] sm:$0xff] %v1369
  %1479 = vst [vmem:[%s1472 + $0x30] sm:$0xff] %v1456
  %1480 = vst [vmem:[%s1472 + $0x38] sm:$0xff] %v1458
  %1481 = vst [vmem:[%s1472 + $0x40] sm:$0xff] %v1373
  %1482 = vst [vmem:[%s1472 + $0x48] sm:$0xff] %v1375
  %1483 = vst [vmem:[%s1472 + $0x50] sm:$0xff] %v1462
  %1484 = vst [vmem:[%s1472 + $0x58] sm:$0xff] %v1464
  %1485 = vst [vmem:[%s1472 + $0x60] sm:$0xff] %v1379
  %1486 = vst [vmem:[%s1472 + $0x68] sm:$0xff] %v1381
  %1487 = vst [vmem:[%s1472 + $0x70] sm:$0xff] %v1468
  %1488 = vst [vmem:[%s1472 + $0x78] sm:$0xff] %v1470
  %v1489 = vld [vmem:[#allocation2 + $0x180] sm:$0xff]
  %v1490 = vld [vmem:[#allocation2 + $0x188] sm:$0xff]
  %v1491 = vld [vmem:[#allocation2 + $0x190] sm:$0xff]
  %v1492 = vld [vmem:[#allocation2 + $0x198] sm:$0xff]
  %v1493 = vld [vmem:[#allocation2 + $0x1a0] sm:$0xff]
  %v1494 = vld [vmem:[#allocation2 + $0x1a8] sm:$0xff]
  %v1495 = vld [vmem:[#allocation2 + $0x1b0] sm:$0xff]
  %v1496 = vld [vmem:[#allocation2 + $0x1b8] sm:$0xff]
  %v1497 = vld [vmem:[#allocation2 + $0x1c0] sm:$0xff]
  %v1498 = vld [vmem:[#allocation2 + $0x1c8] sm:$0xff]
  %v1499 = vld [vmem:[#allocation2 + $0x1d0] sm:$0xff]
  %v1500 = vld [vmem:[#allocation2 + $0x1d8] sm:$0xff]
  %v1501 = vld [vmem:[#allocation2 + $0x1e0] sm:$0xff]
  %v1502 = vld [vmem:[#allocation2 + $0x1e8] sm:$0xff]
  %v1503 = vld [vmem:[#allocation2 + $0x1f0] sm:$0xff]
  %v1504 = vld [vmem:[#allocation2 + $0x1f8] sm:$0xff]
  %v1505 = vld [vmem:[#allocation2 + $0x200] sm:$0xff]
  %v1506 = vld [vmem:[#allocation2 + $0x208] sm:$0xff]
  %v1507 = vld [vmem:[#allocation2 + $0x210] sm:$0xff]
  %v1508 = vld [vmem:[#allocation2 + $0x218] sm:$0xff]
  %v1509 = vld [vmem:[#allocation2 + $0x220] sm:$0xff]
  %v1510 = vld [vmem:[#allocation2 + $0x228] sm:$0xff]
  %v1511 = vld [vmem:[#allocation2 + $0x230] sm:$0xff]
  %v1512 = vld [vmem:[#allocation2 + $0x238] sm:$0xff]
  %v1513 = vld [vmem:[#allocation2 + $0x240] sm:$0xff]
  %v1514 = vld [vmem:[#allocation2 + $0x248] sm:$0xff]
  %v1515 = vld [vmem:[#allocation2 + $0x250] sm:$0xff]
  %v1516 = vld [vmem:[#allocation2 + $0x258] sm:$0xff]
  %v1517 = vld [vmem:[#allocation2 + $0x260] sm:$0xff]
  %v1518 = vld [vmem:[#allocation2 + $0x268] sm:$0xff]
  %v1519 = vld [vmem:[#allocation2 + $0x270] sm:$0xff]
  %v1520 = vld [vmem:[#allocation2 + $0x278] sm:$0xff]
  %v1521 = vld [vmem:[#allocation2 + $0x280] sm:$0xff]
  %v1522 = vld [vmem:[#allocation2 + $0x288] sm:$0xff]
  %v1523 = vld [vmem:[#allocation2 + $0x290] sm:$0xff]
  %v1524 = vld [vmem:[#allocation2 + $0x298] sm:$0xff]
  %v1525 = vld [vmem:[#allocation2 + $0x2a0] sm:$0xff]
  %v1526 = vld [vmem:[#allocation2 + $0x2a8] sm:$0xff]
  %v1527 = vld [vmem:[#allocation2 + $0x2b0] sm:$0xff]
  %v1528 = vld [vmem:[#allocation2 + $0x2b8] sm:$0xff]
  %v1529 = vld [vmem:[#allocation2 + $0x2c0] sm:$0xff]
  %v1530 = vld [vmem:[#allocation2 + $0x2c8] sm:$0xff]
  %v1531 = vld [vmem:[#allocation2 + $0x2d0] sm:$0xff]
  %v1532 = vld [vmem:[#allocation2 + $0x2d8] sm:$0xff]
  %v1533 = vld [vmem:[#allocation2 + $0x2e0] sm:$0xff]
  %v1534 = vld [vmem:[#allocation2 + $0x2e8] sm:$0xff]
  %v1535 = vld [vmem:[#allocation2 + $0x2f0] sm:$0xff]
  %v1536 = vld [vmem:[#allocation2 + $0x2f8] sm:$0xff]
  %1537 = vmatprep.subr.mxu0 %v1490
  %1538 = vmatpush1.msra.mxu0 %v1489
  %1539 = vmatprep.subr.mxu0 %v1494
  %1540 = vmatpush1.msra.mxu0 %v1493
  %1541 = vmatprep.subr.mxu0 %v1498
  %1542 = vmatpush1.msra.mxu0 %v1497
  %1543 = vmatprep.subr.mxu0 %v1502
  %1544 = vmatpush1.msra.mxu0 %v1501
  %1545 = vmatprep.subr.mxu0 %v1506
  %1546 = vmatpush1.msra.mxu0 %v1505
  %1547 = vmatprep.subr.mxu0 %v1510
  %1548 = vmatpush1.msra.mxu0 %v1509
  %1549 = vmatprep.subr.mxu0 %v1514
  %1550 = vmatpush1.msra.mxu0 %v1513
  %1551 = vmatprep.subr.mxu0 %v1518
  %1552 = vmatpush1.msra.mxu0 %v1517
  %1553 = vmatprep.subr.mxu0 %v1522
  %1554 = vmatpush1.msra.mxu0 %v1521
  %1555 = vmatprep.subr.mxu0 %v1526
  %1556 = vmatpush1.msra.mxu0 %v1525
  %1557 = vmatprep.subr.mxu0 %v1530
  %1558 = vmatpush1.msra.mxu0 %v1529
  %1559 = vmatprep.subr.mxu0 %v1534
  %1560 = vmatpush1.msra.mxu0 %v1533
  %1561 = vmatprep.subr.mxu0 0.0
  %1562 = vmatpush1.msra.mxu0 0.0
  %1563 = vmatprep.subr.mxu0 0.0
  %1564 = vmatpush1.msra.mxu0 0.0
  %1565 = vmatprep.subr.mxu0 0.0
  %1566 = vmatpush1.msra.mxu0 0.0
  %1567 = vmatprep.subr.mxu0 0.0
  %1568 = vmatpush1.msra.mxu0 0.0
  %1569 = vmatprep.subr.mxu0 0.0
  %1570 = vmatpush1.msra.mxu0 0.0
  %1571 = vmatprep.subr.mxu0 0.0
  %1572 = vmatpush1.msra.mxu0 0.0
  %1573 = vmatprep.subr.mxu0 0.0
  %1574 = vmatpush1.msra.mxu0 0.0
  %1575 = vmatprep.subr.mxu0 0.0
  %1576 = vmatpush1.msra.mxu0 0.0
  %1577 = vmatprep.subr.mxu0 0.0
  %1578 = vmatpush1.msra.mxu0 0.0
  %1579 = vmatprep.subr.mxu0 0.0
  %1580 = vmatpush1.msra.mxu0 0.0
  %1581 = vmatprep.subr.mxu0 0.0
  %1582 = vmatpush1.msra.mxu0 0.0
  %1583 = vmatprep.subr.mxu0 0.0
  %1584 = vmatpush1.msra.mxu0 0.0
  %1585 = vmatprep.subr.mxu0 0.0
  %1586 = vmatpush1.msra.mxu0 0.0
  %1587 = vmatprep.subr.mxu0 0.0
  %1588 = vmatpush1.msra.mxu0 0.0
  %1589 = vmatprep.subr.mxu0 0.0
  %1590 = vmatpush1.msra.mxu0 0.0
  %1591 = vmatprep.subr.mxu0 0.0
  %1592 = vmatpush1.msra.mxu0 0.0
  %1593 = vmatprep.subr.mxu0 0.0
  %1594 = vmatpush1.msra.mxu0 0.0
  %1595 = vmatprep.subr.mxu0 0.0
  %1596 = vmatpush1.msra.mxu0 0.0
  %1597 = vmatprep.subr.mxu0 0.0
  %1598 = vmatpush1.msra.mxu0 0.0
  %1599 = vmatprep.subr.mxu0 0.0
  %1600 = vmatpush1.msra.mxu0 0.0
  %1601 = vmatprep.mubr.f32.mxu0 0.0
  %1602 = vmatmul.mubr.f32.gmra.mrb[0].mxu0 %v798
  %v1603 = vpop.f32.mrb[0].mxu0
  %v1604 = vadd.f32 0.0, %v1603
  %v1605 = vpop.f32.mrb[0].mxu0
  %v1606 = vadd.f32 0.0, %v1605
  %1607 = vmatprep.mubr.f32.mxu0 0.0
  %1608 = vmatmul.mubr.f32.gmra.mrb[0].mxu0 %v801
  %v1609 = vpop.f32.mrb[0].mxu0
  %v1610 = vadd.f32 0.0, %v1609
  %v1611 = vpop.f32.mrb[0].mxu0
  %v1612 = vadd.f32 0.0, %v1611
  %1613 = vmatprep.mubr.f32.mxu0 0.0
  %1614 = vmatmul.mubr.f32.gmra.mrb[0].mxu0 %v804
  %v1615 = vpop.f32.mrb[0].mxu0
  %v1616 = vadd.f32 0.0, %v1615
  %v1617 = vpop.f32.mrb[0].mxu0
  %v1618 = vadd.f32 0.0, %v1617
  %1619 = vmatprep.mubr.f32.mxu0 0.0
  %1620 = vmatmul.mubr.f32.gmra.mrb[0].mxu0 %v807
  %v1621 = vpop.f32.mrb[0].mxu0
  %v1622 = vadd.f32 0.0, %v1621
  %v1623 = vpop.f32.mrb[0].mxu0
  %v1624 = vadd.f32 0.0, %v1623
  %1625 = vdwg.mxu0
  %1626 = vmatprep.subr.mxu0 %v1492
  %1627 = vmatpush1.msra.mxu0 %v1491
  %1628 = vmatprep.subr.mxu0 %v1496
  %1629 = vmatpush1.msra.mxu0 %v1495
  %1630 = vmatprep.subr.mxu0 %v1500
  %1631 = vmatpush1.msra.mxu0 %v1499
  %1632 = vmatprep.subr.mxu0 %v1504
  %1633 = vmatpush1.msra.mxu0 %v1503
  %1634 = vmatprep.subr.mxu0 %v1508
  %1635 = vmatpush1.msra.mxu0 %v1507
  %1636 = vmatprep.subr.mxu0 %v1512
  %1637 = vmatpush1.msra.mxu0 %v1511
  %1638 = vmatprep.subr.mxu0 %v1516
  %1639 = vmatpush1.msra.mxu0 %v1515
  %1640 = vmatprep.subr.mxu0 %v1520
  %1641 = vmatpush1.msra.mxu0 %v1519
  %1642 = vmatprep.subr.mxu0 %v1524
  %1643 = vmatpush1.msra.mxu0 %v1523
  %1644 = vmatprep.subr.mxu0 %v1528
  %1645 = vmatpush1.msra.mxu0 %v1527
  %1646 = vmatprep.subr.mxu0 %v1532
  %1647 = vmatpush1.msra.mxu0 %v1531
  %1648 = vmatprep.subr.mxu0 %v1536
  %1649 = vmatpush1.msra.mxu0 %v1535
  %1650 = vmatprep.subr.mxu0 0.0
  %1651 = vmatpush1.msra.mxu0 0.0
  %1652 = vmatprep.subr.mxu0 0.0
  %1653 = vmatpush1.msra.mxu0 0.0
  %1654 = vmatprep.subr.mxu0 0.0
  %1655 = vmatpush1.msra.mxu0 0.0
  %1656 = vmatprep.subr.mxu0 0.0
  %1657 = vmatpush1.msra.mxu0 0.0
  %1658 = vmatprep.subr.mxu0 0.0
  %1659 = vmatpush1.msra.mxu0 0.0
  %1660 = vmatprep.subr.mxu0 0.0
  %1661 = vmatpush1.msra.mxu0 0.0
  %1662 = vmatprep.subr.mxu0 0.0
  %1663 = vmatpush1.msra.mxu0 0.0
  %1664 = vmatprep.subr.mxu0 0.0
  %1665 = vmatpush1.msra.mxu0 0.0
  %1666 = vmatprep.subr.mxu0 0.0
  %1667 = vmatpush1.msra.mxu0 0.0
  %1668 = vmatprep.subr.mxu0 0.0
  %1669 = vmatpush1.msra.mxu0 0.0
  %1670 = vmatprep.subr.mxu0 0.0
  %1671 = vmatpush1.msra.mxu0 0.0
  %1672 = vmatprep.subr.mxu0 0.0
  %1673 = vmatpush1.msra.mxu0 0.0
  %1674 = vmatprep.subr.mxu0 0.0
  %1675 = vmatpush1.msra.mxu0 0.0
  %1676 = vmatprep.subr.mxu0 0.0
  %1677 = vmatpush1.msra.mxu0 0.0
  %1678 = vmatprep.subr.mxu0 0.0
  %1679 = vmatpush1.msra.mxu0 0.0
  %1680 = vmatprep.subr.mxu0 0.0
  %1681 = vmatpush1.msra.mxu0 0.0
  %1682 = vmatprep.subr.mxu0 0.0
  %1683 = vmatpush1.msra.mxu0 0.0
  %1684 = vmatprep.subr.mxu0 0.0
  %1685 = vmatpush1.msra.mxu0 0.0
  %1686 = vmatprep.subr.mxu0 0.0
  %1687 = vmatpush1.msra.mxu0 0.0
  %1688 = vmatprep.subr.mxu0 0.0
  %1689 = vmatpush1.msra.mxu0 0.0
  %1690 = vmatprep.mubr.f32.mxu0 0.0
  %1691 = vmatmul.mubr.f32.gmra.mrb[0].mxu0 %v798
  %v1692 = vpop.f32.mrb[0].mxu0
  %v1693 = vadd.f32 0.0, %v1692
  %v1694 = vpop.f32.mrb[0].mxu0
  %v1695 = vadd.f32 0.0, %v1694
  %1696 = vmatprep.mubr.f32.mxu0 0.0
  %1697 = vmatmul.mubr.f32.gmra.mrb[0].mxu0 %v801
  %v1698 = vpop.f32.mrb[0].mxu0
  %v1699 = vadd.f32 0.0, %v1698
  %v1700 = vpop.f32.mrb[0].mxu0
  %v1701 = vadd.f32 0.0, %v1700
  %1702 = vmatprep.mubr.f32.mxu0 0.0
  %1703 = vmatmul.mubr.f32.gmra.mrb[0].mxu0 %v804
  %v1704 = vpop.f32.mrb[0].mxu0
  %v1705 = vadd.f32 0.0, %v1704
  %v1706 = vpop.f32.mrb[0].mxu0
  %v1707 = vadd.f32 0.0, %v1706
  %1708 = vmatprep.mubr.f32.mxu0 0.0
  %1709 = vmatmul.mubr.f32.gmra.mrb[0].mxu0 %v807
  %v1710 = vpop.f32.mrb[0].mxu0
  %v1711 = vadd.f32 0.0, %v1710
  %v1712 = vpop.f32.mrb[0].mxu0
  %v1713 = vadd.f32 0.0, %v1712
  %1714 = vdwg.mxu0
  %s1715 = scalar_lea.vmem %s4, 384
  %1716 = vst [vmem:[%s1715] sm:$0xff] %v1604
  %1717 = vst [vmem:[%s1715 + $0x8] sm:$0xff] %v1606
  %1718 = vst [vmem:[%s1715 + $0x10] sm:$0xff] %v1693
  %1719 = vst [vmem:[%s1715 + $0x18] sm:$0xff] %v1695
  %1720 = vst [vmem:[%s1715 + $0x20] sm:$0xff] %v1610
  %1721 = vst [vmem:[%s1715 + $0x28] sm:$0xff] %v1612
  %1722 = vst [vmem:[%s1715 + $0x30] sm:$0xff] %v1699
  %1723 = vst [vmem:[%s1715 + $0x38] sm:$0xff] %v1701
  %1724 = vst [vmem:[%s1715 + $0x40] sm:$0xff] %v1616
  %1725 = vst [vmem:[%s1715 + $0x48] sm:$0xff] %v1618
  %1726 = vst [vmem:[%s1715 + $0x50] sm:$0xff] %v1705
  %1727 = vst [vmem:[%s1715 + $0x58] sm:$0xff] %v1707
  %1728 = vst [vmem:[%s1715 + $0x60] sm:$0xff] %v1622
  %1729 = vst [vmem:[%s1715 + $0x68] sm:$0xff] %v1624
  %1730 = vst [vmem:[%s1715 + $0x70] sm:$0xff] %v1711
  %1731 = vst [vmem:[%s1715 + $0x78] sm:$0xff] %v1713
  %v1732 = vld [vmem:[#allocation2 + $0x200] sm:$0xff]
  %v1733 = vld [vmem:[#allocation2 + $0x208] sm:$0xff]
  %v1734 = vld [vmem:[#allocation2 + $0x210] sm:$0xff]
  %v1735 = vld [vmem:[#allocation2 + $0x218] sm:$0xff]
  %v1736 = vld [vmem:[#allocation2 + $0x220] sm:$0xff]
  %v1737 = vld [vmem:[#allocation2 + $0x228] sm:$0xff]
  %v1738 = vld [vmem:[#allocation2 + $0x230] sm:$0xff]
  %v1739 = vld [vmem:[#allocation2 + $0x238] sm:$0xff]
  %v1740 = vld [vmem:[#allocation2 + $0x240] sm:$0xff]
  %v1741 = vld [vmem:[#allocation2 + $0x248] sm:$0xff]
  %v1742 = vld [vmem:[#allocation2 + $0x250] sm:$0xff]
  %v1743 = vld [vmem:[#allocation2 + $0x258] sm:$0xff]
  %v1744 = vld [vmem:[#allocation2 + $0x260] sm:$0xff]
  %v1745 = vld [vmem:[#allocation2 + $0x268] sm:$0xff]
  %v1746 = vld [vmem:[#allocation2 + $0x270] sm:$0xff]
  %v1747 = vld [vmem:[#allocation2 + $0x278] sm:$0xff]
  %v1748 = vld [vmem:[#allocation2 + $0x280] sm:$0xff]
  %v1749 = vld [vmem:[#allocation2 + $0x288] sm:$0xff]
  %v1750 = vld [vmem:[#allocation2 + $0x290] sm:$0xff]
  %v1751 = vld [vmem:[#allocation2 + $0x298] sm:$0xff]
  %v1752 = vld [vmem:[#allocation2 + $0x2a0] sm:$0xff]
  %v1753 = vld [vmem:[#allocation2 + $0x2a8] sm:$0xff]
  %v1754 = vld [vmem:[#allocation2 + $0x2b0] sm:$0xff]
  %v1755 = vld [vmem:[#allocation2 + $0x2b8] sm:$0xff]
  %v1756 = vld [vmem:[#allocation2 + $0x2c0] sm:$0xff]
  %v1757 = vld [vmem:[#allocation2 + $0x2c8] sm:$0xff]
  %v1758 = vld [vmem:[#allocation2 + $0x2d0] sm:$0xff]
  %v1759 = vld [vmem:[#allocation2 + $0x2d8] sm:$0xff]
  %v1760 = vld [vmem:[#allocation2 + $0x2e0] sm:$0xff]
  %v1761 = vld [vmem:[#allocation2 + $0x2e8] sm:$0xff]
  %v1762 = vld [vmem:[#allocation2 + $0x2f0] sm:$0xff]
  %v1763 = vld [vmem:[#allocation2 + $0x2f8] sm:$0xff]
  %v1764 = vld [vmem:[#allocation2 + $0x300] sm:$0xff]
  %v1765 = vld [vmem:[#allocation2 + $0x308] sm:$0xff]
  %v1766 = vld [vmem:[#allocation2 + $0x310] sm:$0xff]
  %v1767 = vld [vmem:[#allocation2 + $0x318] sm:$0xff]
  %v1768 = vld [vmem:[#allocation2 + $0x320] sm:$0xff]
  %v1769 = vld [vmem:[#allocation2 + $0x328] sm:$0xff]
  %v1770 = vld [vmem:[#allocation2 + $0x330] sm:$0xff]
  %v1771 = vld [vmem:[#allocation2 + $0x338] sm:$0xff]
  %v1772 = vld [vmem:[#allocation2 + $0x340] sm:$0xff]
  %v1773 = vld [vmem:[#allocation2 + $0x348] sm:$0xff]
  %v1774 = vld [vmem:[#allocation2 + $0x350] sm:$0xff]
  %v1775 = vld [vmem:[#allocation2 + $0x358] sm:$0xff]
  %v1776 = vld [vmem:[#allocation2 + $0x360] sm:$0xff]
  %v1777 = vld [vmem:[#allocation2 + $0x368] sm:$0xff]
  %v1778 = vld [vmem:[#allocation2 + $0x370] sm:$0xff]
  %v1779 = vld [vmem:[#allocation2 + $0x378] sm:$0xff]
  %1780 = vmatprep.subr.mxu0 %v1733
  %1781 = vmatpush1.msra.mxu0 %v1732
  %1782 = vmatprep.subr.mxu0 %v1737
  %1783 = vmatpush1.msra.mxu0 %v1736
  %1784 = vmatprep.subr.mxu0 %v1741
  %1785 = vmatpush1.msra.mxu0 %v1740
  %1786 = vmatprep.subr.mxu0 %v1745
  %1787 = vmatpush1.msra.mxu0 %v1744
  %1788 = vmatprep.subr.mxu0 %v1749
  %1789 = vmatpush1.msra.mxu0 %v1748
  %1790 = vmatprep.subr.mxu0 %v1753
  %1791 = vmatpush1.msra.mxu0 %v1752
  %1792 = vmatprep.subr.mxu0 %v1757
  %1793 = vmatpush1.msra.mxu0 %v1756
  %1794 = vmatprep.subr.mxu0 %v1761
  %1795 = vmatpush1.msra.mxu0 %v1760
  %1796 = vmatprep.subr.mxu0 %v1765
  %1797 = vmatpush1.msra.mxu0 %v1764
  %1798 = vmatprep.subr.mxu0 %v1769
  %1799 = vmatpush1.msra.mxu0 %v1768
  %1800 = vmatprep.subr.mxu0 %v1773
  %1801 = vmatpush1.msra.mxu0 %v1772
  %1802 = vmatprep.subr.mxu0 %v1777
  %1803 = vmatpush1.msra.mxu0 %v1776
  %1804 = vmatprep.subr.mxu0 0.0
  %1805 = vmatpush1.msra.mxu0 0.0
  %1806 = vmatprep.subr.mxu0 0.0
  %1807 = vmatpush1.msra.mxu0 0.0
  %1808 = vmatprep.subr.mxu0 0.0
  %1809 = vmatpush1.msra.mxu0 0.0
  %1810 = vmatprep.subr.mxu0 0.0
  %1811 = vmatpush1.msra.mxu0 0.0
  %1812 = vmatprep.subr.mxu0 0.0
  %1813 = vmatpush1.msra.mxu0 0.0
  %1814 = vmatprep.subr.mxu0 0.0
  %1815 = vmatpush1.msra.mxu0 0.0
  %1816 = vmatprep.subr.mxu0 0.0
  %1817 = vmatpush1.msra.mxu0 0.0
  %1818 = vmatprep.subr.mxu0 0.0
  %1819 = vmatpush1.msra.mxu0 0.0
  %1820 = vmatprep.subr.mxu0 0.0
  %1821 = vmatpush1.msra.mxu0 0.0
  %1822 = vmatprep.subr.mxu0 0.0
  %1823 = vmatpush1.msra.mxu0 0.0
  %1824 = vmatprep.subr.mxu0 0.0
  %1825 = vmatpush1.msra.mxu0 0.0
  %1826 = vmatprep.subr.mxu0 0.0
  %1827 = vmatpush1.msra.mxu0 0.0
  %1828 = vmatprep.subr.mxu0 0.0
  %1829 = vmatpush1.msra.mxu0 0.0
  %1830 = vmatprep.subr.mxu0 0.0
  %1831 = vmatpush1.msra.mxu0 0.0
  %1832 = vmatprep.subr.mxu0 0.0
  %1833 = vmatpush1.msra.mxu0 0.0
  %1834 = vmatprep.subr.mxu0 0.0
  %1835 = vmatpush1.msra.mxu0 0.0
  %1836 = vmatprep.subr.mxu0 0.0
  %1837 = vmatpush1.msra.mxu0 0.0
  %1838 = vmatprep.subr.mxu0 0.0
  %1839 = vmatpush1.msra.mxu0 0.0
  %1840 = vmatprep.subr.mxu0 0.0
  %1841 = vmatpush1.msra.mxu0 0.0
  %1842 = vmatprep.subr.mxu0 0.0
  %1843 = vmatpush1.msra.mxu0 0.0
  %1844 = vmatprep.mubr.f32.mxu0 0.0
  %1845 = vmatmul.mubr.f32.gmra.mrb[0].mxu0 %v798
  %v1846 = vpop.f32.mrb[0].mxu0
  %v1847 = vadd.f32 0.0, %v1846
  %v1848 = vpop.f32.mrb[0].mxu0
  %v1849 = vadd.f32 0.0, %v1848
  %1850 = vmatprep.mubr.f32.mxu0 0.0
  %1851 = vmatmul.mubr.f32.gmra.mrb[0].mxu0 %v801
  %v1852 = vpop.f32.mrb[0].mxu0
  %v1853 = vadd.f32 0.0, %v1852
  %v1854 = vpop.f32.mrb[0].mxu0
  %v1855 = vadd.f32 0.0, %v1854
  %1856 = vmatprep.mubr.f32.mxu0 0.0
  %1857 = vmatmul.mubr.f32.gmra.mrb[0].mxu0 %v804
  %v1858 = vpop.f32.mrb[0].mxu0
  %v1859 = vadd.f32 0.0, %v1858
  %v1860 = vpop.f32.mrb[0].mxu0
  %v1861 = vadd.f32 0.0, %v1860
  %1862 = vmatprep.mubr.f32.mxu0 0.0
  %1863 = vmatmul.mubr.f32.gmra.mrb[0].mxu0 %v807
  %v1864 = vpop.f32.mrb[0].mxu0
  %v1865 = vadd.f32 0.0, %v1864
  %v1866 = vpop.f32.mrb[0].mxu0
  %v1867 = vadd.f32 0.0, %v1866
  %1868 = vdwg.mxu0
  %1869 = vmatprep.subr.mxu0 %v1735
  %1870 = vmatpush1.msra.mxu0 %v1734
  %1871 = vmatprep.subr.mxu0 %v1739
  %1872 = vmatpush1.msra.mxu0 %v1738
  %1873 = vmatprep.subr.mxu0 %v1743
  %1874 = vmatpush1.msra.mxu0 %v1742
  %1875 = vmatprep.subr.mxu0 %v1747
  %1876 = vmatpush1.msra.mxu0 %v1746
  %1877 = vmatprep.subr.mxu0 %v1751
  %1878 = vmatpush1.msra.mxu0 %v1750
  %1879 = vmatprep.subr.mxu0 %v1755
  %1880 = vmatpush1.msra.mxu0 %v1754
  %1881 = vmatprep.subr.mxu0 %v1759
  %1882 = vmatpush1.msra.mxu0 %v1758
  %1883 = vmatprep.subr.mxu0 %v1763
  %1884 = vmatpush1.msra.mxu0 %v1762
  %1885 = vmatprep.subr.mxu0 %v1767
  %1886 = vmatpush1.msra.mxu0 %v1766
  %1887 = vmatprep.subr.mxu0 %v1771
  %1888 = vmatpush1.msra.mxu0 %v1770
  %1889 = vmatprep.subr.mxu0 %v1775
  %1890 = vmatpush1.msra.mxu0 %v1774
  %1891 = vmatprep.subr.mxu0 %v1779
  %1892 = vmatpush1.msra.mxu0 %v1778
  %1893 = vmatprep.subr.mxu0 0.0
  %1894 = vmatpush1.msra.mxu0 0.0
  %1895 = vmatprep.subr.mxu0 0.0
  %1896 = vmatpush1.msra.mxu0 0.0
  %1897 = vmatprep.subr.mxu0 0.0
  %1898 = vmatpush1.msra.mxu0 0.0
  %1899 = vmatprep.subr.mxu0 0.0
  %1900 = vmatpush1.msra.mxu0 0.0
  %1901 = vmatprep.subr.mxu0 0.0
  %1902 = vmatpush1.msra.mxu0 0.0
  %1903 = vmatprep.subr.mxu0 0.0
  %1904 = vmatpush1.msra.mxu0 0.0
  %1905 = vmatprep.subr.mxu0 0.0
  %1906 = vmatpush1.msra.mxu0 0.0
  %1907 = vmatprep.subr.mxu0 0.0
  %1908 = vmatpush1.msra.mxu0 0.0
  %1909 = vmatprep.subr.mxu0 0.0
  %1910 = vmatpush1.msra.mxu0 0.0
  %1911 = vmatprep.subr.mxu0 0.0
  %1912 = vmatpush1.msra.mxu0 0.0
  %1913 = vmatprep.subr.mxu0 0.0
  %1914 = vmatpush1.msra.mxu0 0.0
  %1915 = vmatprep.subr.mxu0 0.0
  %1916 = vmatpush1.msra.mxu0 0.0
  %1917 = vmatprep.subr.mxu0 0.0
  %1918 = vmatpush1.msra.mxu0 0.0
  %1919 = vmatprep.subr.mxu0 0.0
  %1920 = vmatpush1.msra.mxu0 0.0
  %1921 = vmatprep.subr.mxu0 0.0
  %1922 = vmatpush1.msra.mxu0 0.0
  %1923 = vmatprep.subr.mxu0 0.0
  %1924 = vmatpush1.msra.mxu0 0.0
  %1925 = vmatprep.subr.mxu0 0.0
  %1926 = vmatpush1.msra.mxu0 0.0
  %1927 = vmatprep.subr.mxu0 0.0
  %1928 = vmatpush1.msra.mxu0 0.0
  %1929 = vmatprep.subr.mxu0 0.0
  %1930 = vmatpush1.msra.mxu0 0.0
  %1931 = vmatprep.subr.mxu0 0.0
  %1932 = vmatpush1.msra.mxu0 0.0
  %1933 = vmatprep.mubr.f32.mxu0 0.0
  %1934 = vmatmul.mubr.f32.gmra.mrb[0].mxu0 %v798
  %v1935 = vpop.f32.mrb[0].mxu0
  %v1936 = vadd.f32 0.0, %v1935
  %v1937 = vpop.f32.mrb[0].mxu0
  %v1938 = vadd.f32 0.0, %v1937
  %1939 = vmatprep.mubr.f32.mxu0 0.0
  %1940 = vmatmul.mubr.f32.gmra.mrb[0].mxu0 %v801
  %v1941 = vpop.f32.mrb[0].mxu0
  %v1942 = vadd.f32 0.0, %v1941
  %v1943 = vpop.f32.mrb[0].mxu0
  %v1944 = vadd.f32 0.0, %v1943
  %1945 = vmatprep.mubr.f32.mxu0 0.0
  %1946 = vmatmul.mubr.f32.gmra.mrb[0].mxu0 %v804
  %v1947 = vpop.f32.mrb[0].mxu0
  %v1948 = vadd.f32 0.0, %v1947
  %v1949 = vpop.f32.mrb[0].mxu0
  %v1950 = vadd.f32 0.0, %v1949
  %1951 = vmatprep.mubr.f32.mxu0 0.0
  %1952 = vmatmul.mubr.f32.gmra.mrb[0].mxu0 %v807
  %v1953 = vpop.f32.mrb[0].mxu0
  %v1954 = vadd.f32 0.0, %v1953
  %v1955 = vpop.f32.mrb[0].mxu0
  %v1956 = vadd.f32 0.0, %v1955
  %1957 = vdwg.mxu0
  %s1958 = scalar_lea.vmem %s4, 512
  %1959 = vst [vmem:[%s1958] sm:$0xff] %v1847
  %1960 = vst [vmem:[%s1958 + $0x8] sm:$0xff] %v1849
  %1961 = vst [vmem:[%s1958 + $0x10] sm:$0xff] %v1936
  %1962 = vst [vmem:[%s1958 + $0x18] sm:$0xff] %v1938
  %1963 = vst [vmem:[%s1958 + $0x20] sm:$0xff] %v1853
  %1964 = vst [vmem:[%s1958 + $0x28] sm:$0xff] %v1855
  %1965 = vst [vmem:[%s1958 + $0x30] sm:$0xff] %v1942
  %1966 = vst [vmem:[%s1958 + $0x38] sm:$0xff] %v1944
  %1967 = vst [vmem:[%s1958 + $0x40] sm:$0xff] %v1859
  %1968 = vst [vmem:[%s1958 + $0x48] sm:$0xff] %v1861
  %1969 = vst [vmem:[%s1958 + $0x50] sm:$0xff] %v1948
  %1970 = vst [vmem:[%s1958 + $0x58] sm:$0xff] %v1950
  %1971 = vst [vmem:[%s1958 + $0x60] sm:$0xff] %v1865
  %1972 = vst [vmem:[%s1958 + $0x68] sm:$0xff] %v1867
  %1973 = vst [vmem:[%s1958 + $0x70] sm:$0xff] %v1954
  %1974 = vst [vmem:[%s1958 + $0x78] sm:$0xff] %v1956
  %v1975 = vld [vmem:[#allocation2 + $0x280] sm:$0xff]
  %v1976 = vld [vmem:[#allocation2 + $0x288] sm:$0xff]
  %v1977 = vld [vmem:[#allocation2 + $0x290] sm:$0xff]
  %v1978 = vld [vmem:[#allocation2 + $0x298] sm:$0xff]
  %v1979 = vld [vmem:[#allocation2 + $0x2a0] sm:$0xff]
  %v1980 = vld [vmem:[#allocation2 + $0x2a8] sm:$0xff]
  %v1981 = vld [vmem:[#allocation2 + $0x2b0] sm:$0xff]
  %v1982 = vld [vmem:[#allocation2 + $0x2b8] sm:$0xff]
  %v1983 = vld [vmem:[#allocation2 + $0x2c0] sm:$0xff]
  %v1984 = vld [vmem:[#allocation2 + $0x2c8] sm:$0xff]
  %v1985 = vld [vmem:[#allocation2 + $0x2d0] sm:$0xff]
  %v1986 = vld [vmem:[#allocation2 + $0x2d8] sm:$0xff]
  %v1987 = vld [vmem:[#allocation2 + $0x2e0] sm:$0xff]
  %v1988 = vld [vmem:[#allocation2 + $0x2e8] sm:$0xff]
  %v1989 = vld [vmem:[#allocation2 + $0x2f0] sm:$0xff]
  %v1990 = vld [vmem:[#allocation2 + $0x2f8] sm:$0xff]
  %v1991 = vld [vmem:[#allocation2 + $0x300] sm:$0xff]
  %v1992 = vld [vmem:[#allocation2 + $0x308] sm:$0xff]
  %v1993 = vld [vmem:[#allocation2 + $0x310] sm:$0xff]
  %v1994 = vld [vmem:[#allocation2 + $0x318] sm:$0xff]
  %v1995 = vld [vmem:[#allocation2 + $0x320] sm:$0xff]
  %v1996 = vld [vmem:[#allocation2 + $0x328] sm:$0xff]
  %v1997 = vld [vmem:[#allocation2 + $0x330] sm:$0xff]
  %v1998 = vld [vmem:[#allocation2 + $0x338] sm:$0xff]
  %v1999 = vld [vmem:[#allocation2 + $0x340] sm:$0xff]
  %v2000 = vld [vmem:[#allocation2 + $0x348] sm:$0xff]
  %v2001 = vld [vmem:[#allocation2 + $0x350] sm:$0xff]
  %v2002 = vld [vmem:[#allocation2 + $0x358] sm:$0xff]
  %v2003 = vld [vmem:[#allocation2 + $0x360] sm:$0xff]
  %v2004 = vld [vmem:[#allocation2 + $0x368] sm:$0xff]
  %v2005 = vld [vmem:[#allocation2 + $0x370] sm:$0xff]
  %v2006 = vld [vmem:[#allocation2 + $0x378] sm:$0xff]
  %v2007 = vld [vmem:[#allocation2 + $0x380] sm:$0xff]
  %v2008 = vld [vmem:[#allocation2 + $0x388] sm:$0xff]
  %v2009 = vld [vmem:[#allocation2 + $0x390] sm:$0xff]
  %v2010 = vld [vmem:[#allocation2 + $0x398] sm:$0xff]
  %v2011 = vld [vmem:[#allocation2 + $0x3a0] sm:$0xff]
  %v2012 = vld [vmem:[#allocation2 + $0x3a8] sm:$0xff]
  %v2013 = vld [vmem:[#allocation2 + $0x3b0] sm:$0xff]
  %v2014 = vld [vmem:[#allocation2 + $0x3b8] sm:$0xff]
  %v2015 = vld [vmem:[#allocation2 + $0x3c0] sm:$0xff]
  %v2016 = vld [vmem:[#allocation2 + $0x3c8] sm:$0xff]
  %v2017 = vld [vmem:[#allocation2 + $0x3d0] sm:$0xff]
  %v2018 = vld [vmem:[#allocation2 + $0x3d8] sm:$0xff]
  %v2019 = vld [vmem:[#allocation2 + $0x3e0] sm:$0xff]
  %v2020 = vld [vmem:[#allocation2 + $0x3e8] sm:$0xff]
  %v2021 = vld [vmem:[#allocation2 + $0x3f0] sm:$0xff]
  %v2022 = vld [vmem:[#allocation2 + $0x3f8] sm:$0xff]
  %2023 = vmatprep.subr.mxu0 %v1976
  %2024 = vmatpush1.msra.mxu0 %v1975
  %2025 = vmatprep.subr.mxu0 %v1980
  %2026 = vmatpush1.msra.mxu0 %v1979
  %2027 = vmatprep.subr.mxu0 %v1984
  %2028 = vmatpush1.msra.mxu0 %v1983
  %2029 = vmatprep.subr.mxu0 %v1988
  %2030 = vmatpush1.msra.mxu0 %v1987
  %2031 = vmatprep.subr.mxu0 %v1992
  %2032 = vmatpush1.msra.mxu0 %v1991
  %2033 = vmatprep.subr.mxu0 %v1996
  %2034 = vmatpush1.msra.mxu0 %v1995
  %2035 = vmatprep.subr.mxu0 %v2000
  %2036 = vmatpush1.msra.mxu0 %v1999
  %2037 = vmatprep.subr.mxu0 %v2004
  %2038 = vmatpush1.msra.mxu0 %v2003
  %2039 = vmatprep.subr.mxu0 %v2008
  %2040 = vmatpush1.msra.mxu0 %v2007
  %2041 = vmatprep.subr.mxu0 %v2012
  %2042 = vmatpush1.msra.mxu0 %v2011
  %2043 = vmatprep.subr.mxu0 %v2016
  %2044 = vmatpush1.msra.mxu0 %v2015
  %2045 = vmatprep.subr.mxu0 %v2020
  %2046 = vmatpush1.msra.mxu0 %v2019
  %2047 = vmatprep.subr.mxu0 0.0
  %2048 = vmatpush1.msra.mxu0 0.0
  %2049 = vmatprep.subr.mxu0 0.0
  %2050 = vmatpush1.msra.mxu0 0.0
  %2051 = vmatprep.subr.mxu0 0.0
  %2052 = vmatpush1.msra.mxu0 0.0
  %2053 = vmatprep.subr.mxu0 0.0
  %2054 = vmatpush1.msra.mxu0 0.0
  %2055 = vmatprep.subr.mxu0 0.0
  %2056 = vmatpush1.msra.mxu0 0.0
  %2057 = vmatprep.subr.mxu0 0.0
  %2058 = vmatpush1.msra.mxu0 0.0
  %2059 = vmatprep.subr.mxu0 0.0
  %2060 = vmatpush1.msra.mxu0 0.0
  %2061 = vmatprep.subr.mxu0 0.0
  %2062 = vmatpush1.msra.mxu0 0.0
  %2063 = vmatprep.subr.mxu0 0.0
  %2064 = vmatpush1.msra.mxu0 0.0
  %2065 = vmatprep.subr.mxu0 0.0
  %2066 = vmatpush1.msra.mxu0 0.0
  %2067 = vmatprep.subr.mxu0 0.0
  %2068 = vmatpush1.msra.mxu0 0.0
  %2069 = vmatprep.subr.mxu0 0.0
  %2070 = vmatpush1.msra.mxu0 0.0
  %2071 = vmatprep.subr.mxu0 0.0
  %2072 = vmatpush1.msra.mxu0 0.0
  %2073 = vmatprep.subr.mxu0 0.0
  %2074 = vmatpush1.msra.mxu0 0.0
  %2075 = vmatprep.subr.mxu0 0.0
  %2076 = vmatpush1.msra.mxu0 0.0
  %2077 = vmatprep.subr.mxu0 0.0
  %2078 = vmatpush1.msra.mxu0 0.0
  %2079 = vmatprep.subr.mxu0 0.0
  %2080 = vmatpush1.msra.mxu0 0.0
  %2081 = vmatprep.subr.mxu0 0.0
  %2082 = vmatpush1.msra.mxu0 0.0
  %2083 = vmatprep.subr.mxu0 0.0
  %2084 = vmatpush1.msra.mxu0 0.0
  %2085 = vmatprep.subr.mxu0 0.0
  %2086 = vmatpush1.msra.mxu0 0.0
  %2087 = vmatprep.mubr.f32.mxu0 0.0
  %2088 = vmatmul.mubr.f32.gmra.mrb[0].mxu0 %v798
  %v2089 = vpop.f32.mrb[0].mxu0
  %v2090 = vadd.f32 0.0, %v2089
  %v2091 = vpop.f32.mrb[0].mxu0
  %v2092 = vadd.f32 0.0, %v2091
  %2093 = vmatprep.mubr.f32.mxu0 0.0
  %2094 = vmatmul.mubr.f32.gmra.mrb[0].mxu0 %v801
  %v2095 = vpop.f32.mrb[0].mxu0
  %v2096 = vadd.f32 0.0, %v2095
  %v2097 = vpop.f32.mrb[0].mxu0
  %v2098 = vadd.f32 0.0, %v2097
  %2099 = vmatprep.mubr.f32.mxu0 0.0
  %2100 = vmatmul.mubr.f32.gmra.mrb[0].mxu0 %v804
  %v2101 = vpop.f32.mrb[0].mxu0
  %v2102 = vadd.f32 0.0, %v2101
  %v2103 = vpop.f32.mrb[0].mxu0
  %v2104 = vadd.f32 0.0, %v2103
  %2105 = vmatprep.mubr.f32.mxu0 0.0
  %2106 = vmatmul.mubr.f32.gmra.mrb[0].mxu0 %v807
  %v2107 = vpop.f32.mrb[0].mxu0
  %v2108 = vadd.f32 0.0, %v2107
  %v2109 = vpop.f32.mrb[0].mxu0
  %v2110 = vadd.f32 0.0, %v2109
  %2111 = vdwg.mxu0
  %2112 = vmatprep.subr.mxu0 %v1978
  %2113 = vmatpush1.msra.mxu0 %v1977
  %2114 = vmatprep.subr.mxu0 %v1982
  %2115 = vmatpush1.msra.mxu0 %v1981
  %2116 = vmatprep.subr.mxu0 %v1986
  %2117 = vmatpush1.msra.mxu0 %v1985
  %2118 = vmatprep.subr.mxu0 %v1990
  %2119 = vmatpush1.msra.mxu0 %v1989
  %2120 = vmatprep.subr.mxu0 %v1994
  %2121 = vmatpush1.msra.mxu0 %v1993
  %2122 = vmatprep.subr.mxu0 %v1998
  %2123 = vmatpush1.msra.mxu0 %v1997
  %2124 = vmatprep.subr.mxu0 %v2002
  %2125 = vmatpush1.msra.mxu0 %v2001
  %2126 = vmatprep.subr.mxu0 %v2006
  %2127 = vmatpush1.msra.mxu0 %v2005
  %2128 = vmatprep.subr.mxu0 %v2010
  %2129 = vmatpush1.msra.mxu0 %v2009
  %2130 = vmatprep.subr.mxu0 %v2014
  %2131 = vmatpush1.msra.mxu0 %v2013
  %2132 = vmatprep.subr.mxu0 %v2018
  %2133 = vmatpush1.msra.mxu0 %v2017
  %2134 = vmatprep.subr.mxu0 %v2022
  %2135 = vmatpush1.msra.mxu0 %v2021
  %2136 = vmatprep.subr.mxu0 0.0
  %2137 = vmatpush1.msra.mxu0 0.0
  %2138 = vmatprep.subr.mxu0 0.0
  %2139 = vmatpush1.msra.mxu0 0.0
  %2140 = vmatprep.subr.mxu0 0.0
  %2141 = vmatpush1.msra.mxu0 0.0
  %2142 = vmatprep.subr.mxu0 0.0
  %2143 = vmatpush1.msra.mxu0 0.0
  %2144 = vmatprep.subr.mxu0 0.0
  %2145 = vmatpush1.msra.mxu0 0.0
  %2146 = vmatprep.subr.mxu0 0.0
  %2147 = vmatpush1.msra.mxu0 0.0
  %2148 = vmatprep.subr.mxu0 0.0
  %2149 = vmatpush1.msra.mxu0 0.0
  %2150 = vmatprep.subr.mxu0 0.0
  %2151 = vmatpush1.msra.mxu0 0.0
  %2152 = vmatprep.subr.mxu0 0.0
  %2153 = vmatpush1.msra.mxu0 0.0
  %2154 = vmatprep.subr.mxu0 0.0
  %2155 = vmatpush1.msra.mxu0 0.0
  %2156 = vmatprep.subr.mxu0 0.0
  %2157 = vmatpush1.msra.mxu0 0.0
  %2158 = vmatprep.subr.mxu0 0.0
  %2159 = vmatpush1.msra.mxu0 0.0
  %2160 = vmatprep.subr.mxu0 0.0
  %2161 = vmatpush1.msra.mxu0 0.0
  %2162 = vmatprep.subr.mxu0 0.0
  %2163 = vmatpush1.msra.mxu0 0.0
  %2164 = vmatprep.subr.mxu0 0.0
  %2165 = vmatpush1.msra.mxu0 0.0
  %2166 = vmatprep.subr.mxu0 0.0
  %2167 = vmatpush1.msra.mxu0 0.0
  %2168 = vmatprep.subr.mxu0 0.0
  %2169 = vmatpush1.msra.mxu0 0.0
  %2170 = vmatprep.subr.mxu0 0.0
  %2171 = vmatpush1.msra.mxu0 0.0
  %2172 = vmatprep.subr.mxu0 0.0
  %2173 = vmatpush1.msra.mxu0 0.0
  %2174 = vmatprep.subr.mxu0 0.0
  %2175 = vmatpush1.msra.mxu0 0.0
  %2176 = vmatprep.mubr.f32.mxu0 0.0
  %2177 = vmatmul.mubr.f32.gmra.mrb[0].mxu0 %v798
  %v2178 = vpop.f32.mrb[0].mxu0
  %v2179 = vadd.f32 0.0, %v2178
  %v2180 = vpop.f32.mrb[0].mxu0
  %v2181 = vadd.f32 0.0, %v2180
  %2182 = vmatprep.mubr.f32.mxu0 0.0
  %2183 = vmatmul.mubr.f32.gmra.mrb[0].mxu0 %v801
  %v2184 = vpop.f32.mrb[0].mxu0
  %v2185 = vadd.f32 0.0, %v2184
  %v2186 = vpop.f32.mrb[0].mxu0
  %v2187 = vadd.f32 0.0, %v2186
  %2188 = vmatprep.mubr.f32.mxu0 0.0
  %2189 = vmatmul.mubr.f32.gmra.mrb[0].mxu0 %v804
  %v2190 = vpop.f32.mrb[0].mxu0
  %v2191 = vadd.f32 0.0, %v2190
  %v2192 = vpop.f32.mrb[0].mxu0
  %v2193 = vadd.f32 0.0, %v2192
  %2194 = vmatprep.mubr.f32.mxu0 0.0
  %2195 = vmatmul.mubr.f32.gmra.mrb[0].mxu0 %v807
  %v2196 = vpop.f32.mrb[0].mxu0
  %v2197 = vadd.f32 0.0, %v2196
  %v2198 = vpop.f32.mrb[0].mxu0
  %v2199 = vadd.f32 0.0, %v2198
  %2200 = vdwg.mxu0
  %s2201 = scalar_lea.vmem %s4, 640
  %2202 = vst [vmem:[%s2201] sm:$0xff] %v2090
  %2203 = vst [vmem:[%s2201 + $0x8] sm:$0xff] %v2092
  %2204 = vst [vmem:[%s2201 + $0x10] sm:$0xff] %v2179
  %2205 = vst [vmem:[%s2201 + $0x18] sm:$0xff] %v2181
  %2206 = vst [vmem:[%s2201 + $0x20] sm:$0xff] %v2096
  %2207 = vst [vmem:[%s2201 + $0x28] sm:$0xff] %v2098
  %2208 = vst [vmem:[%s2201 + $0x30] sm:$0xff] %v2185
  %2209 = vst [vmem:[%s2201 + $0x38] sm:$0xff] %v2187
  %2210 = vst [vmem:[%s2201 + $0x40] sm:$0xff] %v2102
  %2211 = vst [vmem:[%s2201 + $0x48] sm:$0xff] %v2104
  %2212 = vst [vmem:[%s2201 + $0x50] sm:$0xff] %v2191
  %2213 = vst [vmem:[%s2201 + $0x58] sm:$0xff] %v2193
  %2214 = vst [vmem:[%s2201 + $0x60] sm:$0xff] %v2108
  %2215 = vst [vmem:[%s2201 + $0x68] sm:$0xff] %v2110
  %2216 = vst [vmem:[%s2201 + $0x70] sm:$0xff] %v2197
  %2217 = vst [vmem:[%s2201 + $0x78] sm:$0xff] %v2199
  %v2218 = vld [vmem:[#allocation2 + $0x300] sm:$0xff]
  %v2219 = vld [vmem:[#allocation2 + $0x308] sm:$0xff]
  %v2220 = vld [vmem:[#allocation2 + $0x310] sm:$0xff]
  %v2221 = vld [vmem:[#allocation2 + $0x318] sm:$0xff]
  %v2222 = vld [vmem:[#allocation2 + $0x320] sm:$0xff]
  %v2223 = vld [vmem:[#allocation2 + $0x328] sm:$0xff]
  %v2224 = vld [vmem:[#allocation2 + $0x330] sm:$0xff]
  %v2225 = vld [vmem:[#allocation2 + $0x338] sm:$0xff]
  %v2226 = vld [vmem:[#allocation2 + $0x340] sm:$0xff]
  %v2227 = vld [vmem:[#allocation2 + $0x348] sm:$0xff]
  %v2228 = vld [vmem:[#allocation2 + $0x350] sm:$0xff]
  %v2229 = vld [vmem:[#allocation2 + $0x358] sm:$0xff]
  %v2230 = vld [vmem:[#allocation2 + $0x360] sm:$0xff]
  %v2231 = vld [vmem:[#allocation2 + $0x368] sm:$0xff]
  %v2232 = vld [vmem:[#allocation2 + $0x370] sm:$0xff]
  %v2233 = vld [vmem:[#allocation2 + $0x378] sm:$0xff]
  %v2234 = vld [vmem:[#allocation2 + $0x380] sm:$0xff]
  %v2235 = vld [vmem:[#allocation2 + $0x388] sm:$0xff]
  %v2236 = vld [vmem:[#allocation2 + $0x390] sm:$0xff]
  %v2237 = vld [vmem:[#allocation2 + $0x398] sm:$0xff]
  %v2238 = vld [vmem:[#allocation2 + $0x3a0] sm:$0xff]
  %v2239 = vld [vmem:[#allocation2 + $0x3a8] sm:$0xff]
  %v2240 = vld [vmem:[#allocation2 + $0x3b0] sm:$0xff]
  %v2241 = vld [vmem:[#allocation2 + $0x3b8] sm:$0xff]
  %v2242 = vld [vmem:[#allocation2 + $0x3c0] sm:$0xff]
  %v2243 = vld [vmem:[#allocation2 + $0x3c8] sm:$0xff]
  %v2244 = vld [vmem:[#allocation2 + $0x3d0] sm:$0xff]
  %v2245 = vld [vmem:[#allocation2 + $0x3d8] sm:$0xff]
  %v2246 = vld [vmem:[#allocation2 + $0x3e0] sm:$0xff]
  %v2247 = vld [vmem:[#allocation2 + $0x3e8] sm:$0xff]
  %v2248 = vld [vmem:[#allocation2 + $0x3f0] sm:$0xff]
  %v2249 = vld [vmem:[#allocation2 + $0x3f8] sm:$0xff]
  %v2250 = vld [vmem:[#allocation2 + $0x400] sm:$0xff]
  %v2251 = vld [vmem:[#allocation2 + $0x408] sm:$0xff]
  %v2252 = vld [vmem:[#allocation2 + $0x410] sm:$0xff]
  %v2253 = vld [vmem:[#allocation2 + $0x418] sm:$0xff]
  %v2254 = vld [vmem:[#allocation2 + $0x420] sm:$0xff]
  %v2255 = vld [vmem:[#allocation2 + $0x428] sm:$0xff]
  %v2256 = vld [vmem:[#allocation2 + $0x430] sm:$0xff]
  %v2257 = vld [vmem:[#allocation2 + $0x438] sm:$0xff]
  %v2258 = vld [vmem:[#allocation2 + $0x440] sm:$0xff]
  %v2259 = vld [vmem:[#allocation2 + $0x448] sm:$0xff]
  %v2260 = vld [vmem:[#allocation2 + $0x450] sm:$0xff]
  %v2261 = vld [vmem:[#allocation2 + $0x458] sm:$0xff]
  %v2262 = vld [vmem:[#allocation2 + $0x460] sm:$0xff]
  %v2263 = vld [vmem:[#allocation2 + $0x468] sm:$0xff]
  %v2264 = vld [vmem:[#allocation2 + $0x470] sm:$0xff]
  %v2265 = vld [vmem:[#allocation2 + $0x478] sm:$0xff]
  %2266 = vmatprep.subr.mxu0 %v2219
  %2267 = vmatpush1.msra.mxu0 %v2218
  %2268 = vmatprep.subr.mxu0 %v2223
  %2269 = vmatpush1.msra.mxu0 %v2222
  %2270 = vmatprep.subr.mxu0 %v2227
  %2271 = vmatpush1.msra.mxu0 %v2226
  %2272 = vmatprep.subr.mxu0 %v2231
  %2273 = vmatpush1.msra.mxu0 %v2230
  %2274 = vmatprep.subr.mxu0 %v2235
  %2275 = vmatpush1.msra.mxu0 %v2234
  %2276 = vmatprep.subr.mxu0 %v2239
  %2277 = vmatpush1.msra.mxu0 %v2238
  %2278 = vmatprep.subr.mxu0 %v2243
  %2279 = vmatpush1.msra.mxu0 %v2242
  %2280 = vmatprep.subr.mxu0 %v2247
  %2281 = vmatpush1.msra.mxu0 %v2246
  %2282 = vmatprep.subr.mxu0 %v2251
  %2283 = vmatpush1.msra.mxu0 %v2250
  %2284 = vmatprep.subr.mxu0 %v2255
  %2285 = vmatpush1.msra.mxu0 %v2254
  %2286 = vmatprep.subr.mxu0 %v2259
  %2287 = vmatpush1.msra.mxu0 %v2258
  %2288 = vmatprep.subr.mxu0 %v2263
  %2289 = vmatpush1.msra.mxu0 %v2262
  %2290 = vmatprep.subr.mxu0 0.0
  %2291 = vmatpush1.msra.mxu0 0.0
  %2292 = vmatprep.subr.mxu0 0.0
  %2293 = vmatpush1.msra.mxu0 0.0
  %2294 = vmatprep.subr.mxu0 0.0
  %2295 = vmatpush1.msra.mxu0 0.0
  %2296 = vmatprep.subr.mxu0 0.0
  %2297 = vmatpush1.msra.mxu0 0.0
  %2298 = vmatprep.subr.mxu0 0.0
  %2299 = vmatpush1.msra.mxu0 0.0
  %2300 = vmatprep.subr.mxu0 0.0
  %2301 = vmatpush1.msra.mxu0 0.0
  %2302 = vmatprep.subr.mxu0 0.0
  %2303 = vmatpush1.msra.mxu0 0.0
  %2304 = vmatprep.subr.mxu0 0.0
  %2305 = vmatpush1.msra.mxu0 0.0
  %2306 = vmatprep.subr.mxu0 0.0
  %2307 = vmatpush1.msra.mxu0 0.0
  %2308 = vmatprep.subr.mxu0 0.0
  %2309 = vmatpush1.msra.mxu0 0.0
  %2310 = vmatprep.subr.mxu0 0.0
  %2311 = vmatpush1.msra.mxu0 0.0
  %2312 = vmatprep.subr.mxu0 0.0
  %2313 = vmatpush1.msra.mxu0 0.0
  %2314 = vmatprep.subr.mxu0 0.0
  %2315 = vmatpush1.msra.mxu0 0.0
  %2316 = vmatprep.subr.mxu0 0.0
  %2317 = vmatpush1.msra.mxu0 0.0
  %2318 = vmatprep.subr.mxu0 0.0
  %2319 = vmatpush1.msra.mxu0 0.0
  %2320 = vmatprep.subr.mxu0 0.0
  %2321 = vmatpush1.msra.mxu0 0.0
  %2322 = vmatprep.subr.mxu0 0.0
  %2323 = vmatpush1.msra.mxu0 0.0
  %2324 = vmatprep.subr.mxu0 0.0
  %2325 = vmatpush1.msra.mxu0 0.0
  %2326 = vmatprep.subr.mxu0 0.0
  %2327 = vmatpush1.msra.mxu0 0.0
  %2328 = vmatprep.subr.mxu0 0.0
  %2329 = vmatpush1.msra.mxu0 0.0
  %2330 = vmatprep.mubr.f32.mxu0 0.0
  %2331 = vmatmul.mubr.f32.gmra.mrb[0].mxu0 %v798
  %v2332 = vpop.f32.mrb[0].mxu0
  %v2333 = vadd.f32 0.0, %v2332
  %v2334 = vpop.f32.mrb[0].mxu0
  %v2335 = vadd.f32 0.0, %v2334
  %2336 = vmatprep.mubr.f32.mxu0 0.0
  %2337 = vmatmul.mubr.f32.gmra.mrb[0].mxu0 %v801
  %v2338 = vpop.f32.mrb[0].mxu0
  %v2339 = vadd.f32 0.0, %v2338
  %v2340 = vpop.f32.mrb[0].mxu0
  %v2341 = vadd.f32 0.0, %v2340
  %2342 = vmatprep.mubr.f32.mxu0 0.0
  %2343 = vmatmul.mubr.f32.gmra.mrb[0].mxu0 %v804
  %v2344 = vpop.f32.mrb[0].mxu0
  %v2345 = vadd.f32 0.0, %v2344
  %v2346 = vpop.f32.mrb[0].mxu0
  %v2347 = vadd.f32 0.0, %v2346
  %2348 = vmatprep.mubr.f32.mxu0 0.0
  %2349 = vmatmul.mubr.f32.gmra.mrb[0].mxu0 %v807
  %v2350 = vpop.f32.mrb[0].mxu0
  %v2351 = vadd.f32 0.0, %v2350
  %v2352 = vpop.f32.mrb[0].mxu0
  %v2353 = vadd.f32 0.0, %v2352
  %2354 = vdwg.mxu0
  %2355 = vmatprep.subr.mxu0 %v2221
  %2356 = vmatpush1.msra.mxu0 %v2220
  %2357 = vmatprep.subr.mxu0 %v2225
  %2358 = vmatpush1.msra.mxu0 %v2224
  %2359 = vmatprep.subr.mxu0 %v2229
  %2360 = vmatpush1.msra.mxu0 %v2228
  %2361 = vmatprep.subr.mxu0 %v2233
  %2362 = vmatpush1.msra.mxu0 %v2232
  %2363 = vmatprep.subr.mxu0 %v2237
  %2364 = vmatpush1.msra.mxu0 %v2236
  %2365 = vmatprep.subr.mxu0 %v2241
  %2366 = vmatpush1.msra.mxu0 %v2240
  %2367 = vmatprep.subr.mxu0 %v2245
  %2368 = vmatpush1.msra.mxu0 %v2244
  %2369 = vmatprep.subr.mxu0 %v2249
  %2370 = vmatpush1.msra.mxu0 %v2248
  %2371 = vmatprep.subr.mxu0 %v2253
  %2372 = vmatpush1.msra.mxu0 %v2252
  %2373 = vmatprep.subr.mxu0 %v2257
  %2374 = vmatpush1.msra.mxu0 %v2256
  %2375 = vmatprep.subr.mxu0 %v2261
  %2376 = vmatpush1.msra.mxu0 %v2260
  %2377 = vmatprep.subr.mxu0 %v2265
  %2378 = vmatpush1.msra.mxu0 %v2264
  %2379 = vmatprep.subr.mxu0 0.0
  %2380 = vmatpush1.msra.mxu0 0.0
  %2381 = vmatprep.subr.mxu0 0.0
  %2382 = vmatpush1.msra.mxu0 0.0
  %2383 = vmatprep.subr.mxu0 0.0
  %2384 = vmatpush1.msra.mxu0 0.0
  %2385 = vmatprep.subr.mxu0 0.0
  %2386 = vmatpush1.msra.mxu0 0.0
  %2387 = vmatprep.subr.mxu0 0.0
  %2388 = vmatpush1.msra.mxu0 0.0
  %2389 = vmatprep.subr.mxu0 0.0
  %2390 = vmatpush1.msra.mxu0 0.0
  %2391 = vmatprep.subr.mxu0 0.0
  %2392 = vmatpush1.msra.mxu0 0.0
  %2393 = vmatprep.subr.mxu0 0.0
  %2394 = vmatpush1.msra.mxu0 0.0
  %2395 = vmatprep.subr.mxu0 0.0
  %2396 = vmatpush1.msra.mxu0 0.0
  %2397 = vmatprep.subr.mxu0 0.0
  %2398 = vmatpush1.msra.mxu0 0.0
  %2399 = vmatprep.subr.mxu0 0.0
  %2400 = vmatpush1.msra.mxu0 0.0
  %2401 = vmatprep.subr.mxu0 0.0
  %2402 = vmatpush1.msra.mxu0 0.0
  %2403 = vmatprep.subr.mxu0 0.0
  %2404 = vmatpush1.msra.mxu0 0.0
  %2405 = vmatprep.subr.mxu0 0.0
  %2406 = vmatpush1.msra.mxu0 0.0
  %2407 = vmatprep.subr.mxu0 0.0
  %2408 = vmatpush1.msra.mxu0 0.0
  %2409 = vmatprep.subr.mxu0 0.0
  %2410 = vmatpush1.msra.mxu0 0.0
  %2411 = vmatprep.subr.mxu0 0.0
  %2412 = vmatpush1.msra.mxu0 0.0
  %2413 = vmatprep.subr.mxu0 0.0
  %2414 = vmatpush1.msra.mxu0 0.0
  %2415 = vmatprep.subr.mxu0 0.0
  %2416 = vmatpush1.msra.mxu0 0.0
  %2417 = vmatprep.subr.mxu0 0.0
  %2418 = vmatpush1.msra.mxu0 0.0
  %2419 = vmatprep.mubr.f32.mxu0 0.0
  %2420 = vmatmul.mubr.f32.gmra.mrb[0].mxu0 %v798
  %v2421 = vpop.f32.mrb[0].mxu0
  %v2422 = vadd.f32 0.0, %v2421
  %v2423 = vpop.f32.mrb[0].mxu0
  %v2424 = vadd.f32 0.0, %v2423
  %2425 = vmatprep.mubr.f32.mxu0 0.0
  %2426 = vmatmul.mubr.f32.gmra.mrb[0].mxu0 %v801
  %v2427 = vpop.f32.mrb[0].mxu0
  %v2428 = vadd.f32 0.0, %v2427
  %v2429 = vpop.f32.mrb[0].mxu0
  %v2430 = vadd.f32 0.0, %v2429
  %2431 = vmatprep.mubr.f32.mxu0 0.0
  %2432 = vmatmul.mubr.f32.gmra.mrb[0].mxu0 %v804
  %v2433 = vpop.f32.mrb[0].mxu0
  %v2434 = vadd.f32 0.0, %v2433
  %v2435 = vpop.f32.mrb[0].mxu0
  %v2436 = vadd.f32 0.0, %v2435
  %2437 = vmatprep.mubr.f32.mxu0 0.0
  %2438 = vmatmul.mubr.f32.gmra.mrb[0].mxu0 %v807
  %v2439 = vpop.f32.mrb[0].mxu0
  %v2440 = vadd.f32 0.0, %v2439
  %v2441 = vpop.f32.mrb[0].mxu0
  %v2442 = vadd.f32 0.0, %v2441
  %2443 = vdwg.mxu0
  %s2444 = scalar_lea.vmem %s4, 768
  %2445 = vst [vmem:[%s2444] sm:$0xff] %v2333
  %2446 = vst [vmem:[%s2444 + $0x8] sm:$0xff] %v2335
  %2447 = vst [vmem:[%s2444 + $0x10] sm:$0xff] %v2422
  %2448 = vst [vmem:[%s2444 + $0x18] sm:$0xff] %v2424
  %2449 = vst [vmem:[%s2444 + $0x20] sm:$0xff] %v2339
  %2450 = vst [vmem:[%s2444 + $0x28] sm:$0xff] %v2341
  %2451 = vst [vmem:[%s2444 + $0x30] sm:$0xff] %v2428
  %2452 = vst [vmem:[%s2444 + $0x38] sm:$0xff] %v2430
  %2453 = vst [vmem:[%s2444 + $0x40] sm:$0xff] %v2345
  %2454 = vst [vmem:[%s2444 + $0x48] sm:$0xff] %v2347
  %2455 = vst [vmem:[%s2444 + $0x50] sm:$0xff] %v2434
  %2456 = vst [vmem:[%s2444 + $0x58] sm:$0xff] %v2436
  %2457 = vst [vmem:[%s2444 + $0x60] sm:$0xff] %v2351
  %2458 = vst [vmem:[%s2444 + $0x68] sm:$0xff] %v2353
  %2459 = vst [vmem:[%s2444 + $0x70] sm:$0xff] %v2440
  %2460 = vst [vmem:[%s2444 + $0x78] sm:$0xff] %v2442
  %v2461 = vld [vmem:[#allocation2 + $0x380] sm:$0xff]
  %v2462 = vld [vmem:[#allocation2 + $0x388] sm:$0xff]
  %v2463 = vld [vmem:[#allocation2 + $0x390] sm:$0xff]
  %v2464 = vld [vmem:[#allocation2 + $0x398] sm:$0xff]
  %v2465 = vld [vmem:[#allocation2 + $0x3a0] sm:$0xff]
  %v2466 = vld [vmem:[#allocation2 + $0x3a8] sm:$0xff]
  %v2467 = vld [vmem:[#allocation2 + $0x3b0] sm:$0xff]
  %v2468 = vld [vmem:[#allocation2 + $0x3b8] sm:$0xff]
  %v2469 = vld [vmem:[#allocation2 + $0x3c0] sm:$0xff]
  %v2470 = vld [vmem:[#allocation2 + $0x3c8] sm:$0xff]
  %v2471 = vld [vmem:[#allocation2 + $0x3d0] sm:$0xff]
  %v2472 = vld [vmem:[#allocation2 + $0x3d8] sm:$0xff]
  %v2473 = vld [vmem:[#allocation2 + $0x3e0] sm:$0xff]
  %v2474 = vld [vmem:[#allocation2 + $0x3e8] sm:$0xff]
  %v2475 = vld [vmem:[#allocation2 + $0x3f0] sm:$0xff]
  %v2476 = vld [vmem:[#allocation2 + $0x3f8] sm:$0xff]
  %v2477 = vld [vmem:[#allocation2 + $0x400] sm:$0xff]
  %v2478 = vld [vmem:[#allocation2 + $0x408] sm:$0xff]
  %v2479 = vld [vmem:[#allocation2 + $0x410] sm:$0xff]
  %v2480 = vld [vmem:[#allocation2 + $0x418] sm:$0xff]
  %v2481 = vld [vmem:[#allocation2 + $0x420] sm:$0xff]
  %v2482 = vld [vmem:[#allocation2 + $0x428] sm:$0xff]
  %v2483 = vld [vmem:[#allocation2 + $0x430] sm:$0xff]
  %v2484 = vld [vmem:[#allocation2 + $0x438] sm:$0xff]
  %v2485 = vld [vmem:[#allocation2 + $0x440] sm:$0xff]
  %v2486 = vld [vmem:[#allocation2 + $0x448] sm:$0xff]
  %v2487 = vld [vmem:[#allocation2 + $0x450] sm:$0xff]
  %v2488 = vld [vmem:[#allocation2 + $0x458] sm:$0xff]
  %v2489 = vld [vmem:[#allocation2 + $0x460] sm:$0xff]
  %v2490 = vld [vmem:[#allocation2 + $0x468] sm:$0xff]
  %v2491 = vld [vmem:[#allocation2 + $0x470] sm:$0xff]
  %v2492 = vld [vmem:[#allocation2 + $0x478] sm:$0xff]
  %v2493 = vld [vmem:[#allocation2 + $0x480] sm:$0xff]
  %v2494 = vld [vmem:[#allocation2 + $0x488] sm:$0xff]
  %v2495 = vld [vmem:[#allocation2 + $0x490] sm:$0xff]
  %v2496 = vld [vmem:[#allocation2 + $0x498] sm:$0xff]
  %v2497 = vld [vmem:[#allocation2 + $0x4a0] sm:$0xff]
  %v2498 = vld [vmem:[#allocation2 + $0x4a8] sm:$0xff]
  %v2499 = vld [vmem:[#allocation2 + $0x4b0] sm:$0xff]
  %v2500 = vld [vmem:[#allocation2 + $0x4b8] sm:$0xff]
  %v2501 = vld [vmem:[#allocation2 + $0x4c0] sm:$0xff]
  %v2502 = vld [vmem:[#allocation2 + $0x4c8] sm:$0xff]
  %v2503 = vld [vmem:[#allocation2 + $0x4d0] sm:$0xff]
  %v2504 = vld [vmem:[#allocation2 + $0x4d8] sm:$0xff]
  %v2505 = vld [vmem:[#allocation2 + $0x4e0] sm:$0xff]
  %v2506 = vld [vmem:[#allocation2 + $0x4e8] sm:$0xff]
  %v2507 = vld [vmem:[#allocation2 + $0x4f0] sm:$0xff]
  %v2508 = vld [vmem:[#allocation2 + $0x4f8] sm:$0xff]
  %2509 = vmatprep.subr.mxu0 %v2462
  %2510 = vmatpush1.msra.mxu0 %v2461
  %2511 = vmatprep.subr.mxu0 %v2466
  %2512 = vmatpush1.msra.mxu0 %v2465
  %2513 = vmatprep.subr.mxu0 %v2470
  %2514 = vmatpush1.msra.mxu0 %v2469
  %2515 = vmatprep.subr.mxu0 %v2474
  %2516 = vmatpush1.msra.mxu0 %v2473
  %2517 = vmatprep.subr.mxu0 %v2478
  %2518 = vmatpush1.msra.mxu0 %v2477
  %2519 = vmatprep.subr.mxu0 %v2482
  %2520 = vmatpush1.msra.mxu0 %v2481
  %2521 = vmatprep.subr.mxu0 %v2486
  %2522 = vmatpush1.msra.mxu0 %v2485
  %2523 = vmatprep.subr.mxu0 %v2490
  %2524 = vmatpush1.msra.mxu0 %v2489
  %2525 = vmatprep.subr.mxu0 %v2494
  %2526 = vmatpush1.msra.mxu0 %v2493
  %2527 = vmatprep.subr.mxu0 %v2498
  %2528 = vmatpush1.msra.mxu0 %v2497
  %2529 = vmatprep.subr.mxu0 %v2502
  %2530 = vmatpush1.msra.mxu0 %v2501
  %2531 = vmatprep.subr.mxu0 %v2506
  %2532 = vmatpush1.msra.mxu0 %v2505
  %2533 = vmatprep.subr.mxu0 0.0
  %2534 = vmatpush1.msra.mxu0 0.0
  %2535 = vmatprep.subr.mxu0 0.0
  %2536 = vmatpush1.msra.mxu0 0.0
  %2537 = vmatprep.subr.mxu0 0.0
  %2538 = vmatpush1.msra.mxu0 0.0
  %2539 = vmatprep.subr.mxu0 0.0
  %2540 = vmatpush1.msra.mxu0 0.0
  %2541 = vmatprep.subr.mxu0 0.0
  %2542 = vmatpush1.msra.mxu0 0.0
  %2543 = vmatprep.subr.mxu0 0.0
  %2544 = vmatpush1.msra.mxu0 0.0
  %2545 = vmatprep.subr.mxu0 0.0
  %2546 = vmatpush1.msra.mxu0 0.0
  %2547 = vmatprep.subr.mxu0 0.0
  %2548 = vmatpush1.msra.mxu0 0.0
  %2549 = vmatprep.subr.mxu0 0.0
  %2550 = vmatpush1.msra.mxu0 0.0
  %2551 = vmatprep.subr.mxu0 0.0
  %2552 = vmatpush1.msra.mxu0 0.0
  %2553 = vmatprep.subr.mxu0 0.0
  %2554 = vmatpush1.msra.mxu0 0.0
  %2555 = vmatprep.subr.mxu0 0.0
  %2556 = vmatpush1.msra.mxu0 0.0
  %2557 = vmatprep.subr.mxu0 0.0
  %2558 = vmatpush1.msra.mxu0 0.0
  %2559 = vmatprep.subr.mxu0 0.0
  %2560 = vmatpush1.msra.mxu0 0.0
  %2561 = vmatprep.subr.mxu0 0.0
  %2562 = vmatpush1.msra.mxu0 0.0
  %2563 = vmatprep.subr.mxu0 0.0
  %2564 = vmatpush1.msra.mxu0 0.0
  %2565 = vmatprep.subr.mxu0 0.0
  %2566 = vmatpush1.msra.mxu0 0.0
  %2567 = vmatprep.subr.mxu0 0.0
  %2568 = vmatpush1.msra.mxu0 0.0
  %2569 = vmatprep.subr.mxu0 0.0
  %2570 = vmatpush1.msra.mxu0 0.0
  %2571 = vmatprep.subr.mxu0 0.0
  %2572 = vmatpush1.msra.mxu0 0.0
  %2573 = vmatprep.mubr.f32.mxu0 0.0
  %2574 = vmatmul.mubr.f32.gmra.mrb[0].mxu0 %v798
  %v2575 = vpop.f32.mrb[0].mxu0
  %v2576 = vadd.f32 0.0, %v2575
  %v2577 = vpop.f32.mrb[0].mxu0
  %v2578 = vadd.f32 0.0, %v2577
  %2579 = vmatprep.mubr.f32.mxu0 0.0
  %2580 = vmatmul.mubr.f32.gmra.mrb[0].mxu0 %v801
  %v2581 = vpop.f32.mrb[0].mxu0
  %v2582 = vadd.f32 0.0, %v2581
  %v2583 = vpop.f32.mrb[0].mxu0
  %v2584 = vadd.f32 0.0, %v2583
  %2585 = vmatprep.mubr.f32.mxu0 0.0
  %2586 = vmatmul.mubr.f32.gmra.mrb[0].mxu0 %v804
  %v2587 = vpop.f32.mrb[0].mxu0
  %v2588 = vadd.f32 0.0, %v2587
  %v2589 = vpop.f32.mrb[0].mxu0
  %v2590 = vadd.f32 0.0, %v2589
  %2591 = vmatprep.mubr.f32.mxu0 0.0
  %2592 = vmatmul.mubr.f32.gmra.mrb[0].mxu0 %v807
  %v2593 = vpop.f32.mrb[0].mxu0
  %v2594 = vadd.f32 0.0, %v2593
  %v2595 = vpop.f32.mrb[0].mxu0
  %v2596 = vadd.f32 0.0, %v2595
  %2597 = vdwg.mxu0
  %2598 = vmatprep.subr.mxu0 %v2464
  %2599 = vmatpush1.msra.mxu0 %v2463
  %2600 = vmatprep.subr.mxu0 %v2468
  %2601 = vmatpush1.msra.mxu0 %v2467
  %2602 = vmatprep.subr.mxu0 %v2472
  %2603 = vmatpush1.msra.mxu0 %v2471
  %2604 = vmatprep.subr.mxu0 %v2476
  %2605 = vmatpush1.msra.mxu0 %v2475
  %2606 = vmatprep.subr.mxu0 %v2480
  %2607 = vmatpush1.msra.mxu0 %v2479
  %2608 = vmatprep.subr.mxu0 %v2484
  %2609 = vmatpush1.msra.mxu0 %v2483
  %2610 = vmatprep.subr.mxu0 %v2488
  %2611 = vmatpush1.msra.mxu0 %v2487
  %2612 = vmatprep.subr.mxu0 %v2492
  %2613 = vmatpush1.msra.mxu0 %v2491
  %2614 = vmatprep.subr.mxu0 %v2496
  %2615 = vmatpush1.msra.mxu0 %v2495
  %2616 = vmatprep.subr.mxu0 %v2500
  %2617 = vmatpush1.msra.mxu0 %v2499
  %2618 = vmatprep.subr.mxu0 %v2504
  %2619 = vmatpush1.msra.mxu0 %v2503
  %2620 = vmatprep.subr.mxu0 %v2508
  %2621 = vmatpush1.msra.mxu0 %v2507
  %2622 = vmatprep.subr.mxu0 0.0
  %2623 = vmatpush1.msra.mxu0 0.0
  %2624 = vmatprep.subr.mxu0 0.0
  %2625 = vmatpush1.msra.mxu0 0.0
  %2626 = vmatprep.subr.mxu0 0.0
  %2627 = vmatpush1.msra.mxu0 0.0
  %2628 = vmatprep.subr.mxu0 0.0
  %2629 = vmatpush1.msra.mxu0 0.0
  %2630 = vmatprep.subr.mxu0 0.0
  %2631 = vmatpush1.msra.mxu0 0.0
  %2632 = vmatprep.subr.mxu0 0.0
  %2633 = vmatpush1.msra.mxu0 0.0
  %2634 = vmatprep.subr.mxu0 0.0
  %2635 = vmatpush1.msra.mxu0 0.0
  %2636 = vmatprep.subr.mxu0 0.0
  %2637 = vmatpush1.msra.mxu0 0.0
  %2638 = vmatprep.subr.mxu0 0.0
  %2639 = vmatpush1.msra.mxu0 0.0
  %2640 = vmatprep.subr.mxu0 0.0
  %2641 = vmatpush1.msra.mxu0 0.0
  %2642 = vmatprep.subr.mxu0 0.0
  %2643 = vmatpush1.msra.mxu0 0.0
  %2644 = vmatprep.subr.mxu0 0.0
  %2645 = vmatpush1.msra.mxu0 0.0
  %2646 = vmatprep.subr.mxu0 0.0
  %2647 = vmatpush1.msra.mxu0 0.0
  %2648 = vmatprep.subr.mxu0 0.0
  %2649 = vmatpush1.msra.mxu0 0.0
  %2650 = vmatprep.subr.mxu0 0.0
  %2651 = vmatpush1.msra.mxu0 0.0
  %2652 = vmatprep.subr.mxu0 0.0
  %2653 = vmatpush1.msra.mxu0 0.0
  %2654 = vmatprep.subr.mxu0 0.0
  %2655 = vmatpush1.msra.mxu0 0.0
  %2656 = vmatprep.subr.mxu0 0.0
  %2657 = vmatpush1.msra.mxu0 0.0
  %2658 = vmatprep.subr.mxu0 0.0
  %2659 = vmatpush1.msra.mxu0 0.0
  %2660 = vmatprep.subr.mxu0 0.0
  %2661 = vmatpush1.msra.mxu0 0.0
  %2662 = vmatprep.mubr.f32.mxu0 0.0
  %2663 = vmatmul.mubr.f32.gmra.mrb[0].mxu0 %v798
  %v2664 = vpop.f32.mrb[0].mxu0
  %v2665 = vadd.f32 0.0, %v2664
  %v2666 = vpop.f32.mrb[0].mxu0
  %v2667 = vadd.f32 0.0, %v2666
  %2668 = vmatprep.mubr.f32.mxu0 0.0
  %2669 = vmatmul.mubr.f32.gmra.mrb[0].mxu0 %v801
  %v2670 = vpop.f32.mrb[0].mxu0
  %v2671 = vadd.f32 0.0, %v2670
  %v2672 = vpop.f32.mrb[0].mxu0
  %v2673 = vadd.f32 0.0, %v2672
  %2674 = vmatprep.mubr.f32.mxu0 0.0
  %2675 = vmatmul.mubr.f32.gmra.mrb[0].mxu0 %v804
  %v2676 = vpop.f32.mrb[0].mxu0
  %v2677 = vadd.f32 0.0, %v2676
  %v2678 = vpop.f32.mrb[0].mxu0
  %v2679 = vadd.f32 0.0, %v2678
  %2680 = vmatprep.mubr.f32.mxu0 0.0
  %2681 = vmatmul.mubr.f32.gmra.mrb[0].mxu0 %v807
  %v2682 = vpop.f32.mrb[0].mxu0
  %v2683 = vadd.f32 0.0, %v2682
  %v2684 = vpop.f32.mrb[0].mxu0
  %v2685 = vadd.f32 0.0, %v2684
  %2686 = vdwg.mxu0
  %s2687 = scalar_lea.vmem %s4, 896
  %2688 = vst [vmem:[%s2687] sm:$0xff] %v2576
  %2689 = vst [vmem:[%s2687 + $0x8] sm:$0xff] %v2578
  %2690 = vst [vmem:[%s2687 + $0x10] sm:$0xff] %v2665
  %2691 = vst [vmem:[%s2687 + $0x18] sm:$0xff] %v2667
  %2692 = vst [vmem:[%s2687 + $0x20] sm:$0xff] %v2582
  %2693 = vst [vmem:[%s2687 + $0x28] sm:$0xff] %v2584
  %2694 = vst [vmem:[%s2687 + $0x30] sm:$0xff] %v2671
  %2695 = vst [vmem:[%s2687 + $0x38] sm:$0xff] %v2673
  %2696 = vst [vmem:[%s2687 + $0x40] sm:$0xff] %v2588
  %2697 = vst [vmem:[%s2687 + $0x48] sm:$0xff] %v2590
  %2698 = vst [vmem:[%s2687 + $0x50] sm:$0xff] %v2677
  %2699 = vst [vmem:[%s2687 + $0x58] sm:$0xff] %v2679
  %2700 = vst [vmem:[%s2687 + $0x60] sm:$0xff] %v2594
  %2701 = vst [vmem:[%s2687 + $0x68] sm:$0xff] %v2596
  %2702 = vst [vmem:[%s2687 + $0x70] sm:$0xff] %v2683
  %2703 = vst [vmem:[%s2687 + $0x78] sm:$0xff] %v2685
  // Predicated region
  $region18: #{conv2plus1d_forward.7} parent=0 // pred_check
    _
  $region19: #{conv2plus1d_forward.7} parent=0 // pred_check_branch
    %2705 = sbr.rel (0) target = $region21
  $region20: #{conv2plus1d_forward.7} parent=0 // pred_region
    _
  $region21: #{conv2plus1d_forward.7} parent=0 // pred_fallthru
    _
  // Predicated region
  $region22: #{conv2plus1d_forward.7} parent=0 // pred_check
    _
  $region23: #{conv2plus1d_forward.7} parent=0 // pred_check_branch
    %2707 = sbr.rel (0) target = $region25
  $region24: #{conv2plus1d_forward.7} parent=0 // pred_region
    _
  $region25: #{conv2plus1d_forward.7} parent=0 // pred_fallthru
    _

</llo_original>
